<compile_context>
chip_gen: v7x
topology: tpu7x:2x2x1
jax: 0.10.0
libtpu: 0.0.40
codegen_flags: <defaults>
</compile_context>

<pallas_src>
import functools

import numpy as np

import jax
import jax.numpy as jnp
from jax.experimental import pallas as pl
from jax.experimental.pallas import tpu as pltpu


def _round_up(x, m):
    return (x + m - 1) // m * m


def _num_tensorcores():
    """v7x has 2 TensorCores per chip; v5e/v6e have 1."""
    try:
        kind = jax.devices()[0].device_kind.lower()
    except Exception:
        return 1
    return 2 if "7" in kind else 1


_NUM_TC = _num_tensorcores()


# --------------------------------------------------------------------------
# Static layer configuration (mirrors the PyTorch module definition)
# --------------------------------------------------------------------------
CONV_CFG = {
    "Block1":  dict(cin=1,  cout=32, kh=3, kw=3, stride=(1, 1), pad=(1, 1), pool=(2, 2)),
    "Block2":  dict(cin=32, cout=32, kh=3, kw=3, stride=(1, 1), pad=(1, 1), pool=(2, 2)),
    "Block3":  dict(cin=32, cout=64, kh=3, kw=3, stride=(1, 1), pad=(1, 1), pool=(2, 2)),
    "Block_1": dict(cin=1,  cout=32, kh=5, kw=2, stride=(1, 2), pad=(2, 1), pool=(2, 2)),
    "Block_2": dict(cin=32, cout=32, kh=5, kw=1, stride=(1, 1), pad=(2, 0), pool=(2, 1)),
    "Block_3": dict(cin=32, cout=16, kh=5, kw=1, stride=(1, 1), pad=(0, 0), pool=(2, 1)),
}

# The two branches are independent, so their layers are fused pairwise into a
# single pallas_call per stage.
STAGES = (("Block1", "Block_1"), ("Block2", "Block_2"), ("Block3", "Block_3"))


# --------------------------------------------------------------------------
# Pallas kernel 1: one stage = BOTH branches' fused conv+BN+bias+ReLU matmuls
# (bf16 in / bf16 out, f32 accumulate; BN scale pre-folded into the weights)
# --------------------------------------------------------------------------
def _conv_pair_kernel(xa_ref, wa_ref, ba_ref, xb_ref, wb_ref, bb_ref,
                      oa_ref, ob_ref):
    acc_a = jnp.dot(xa_ref[...], wa_ref[...], preferred_element_type=jnp.float32)
    oa_ref[...] = jnp.maximum(acc_a + ba_ref[...], 0.0).astype(oa_ref.dtype)
    acc_b = jnp.dot(xb_ref[...], wb_ref[...], preferred_element_type=jnp.float32)
    ob_ref[...] = jnp.maximum(acc_b + bb_ref[...], 0.0).astype(ob_ref.dtype)


def _run_conv_pair(xa, wa, ba, xb, wb, bb, *, grid):
    Ma, Ka = xa.shape
    Mb, Kb = xb.shape
    Na, Nb = wa.shape[1], wb.shape[1]
    tma, tmb = Ma // grid, Mb // grid
    return pl.pallas_call(
        _conv_pair_kernel,
        out_shape=(jax.ShapeDtypeStruct((Ma, Na), jnp.bfloat16),
                   jax.ShapeDtypeStruct((Mb, Nb), jnp.bfloat16)),
        grid_spec=pltpu.PrefetchScalarGridSpec(
            num_scalar_prefetch=0,
            grid=(grid,),
            in_specs=[
                pl.BlockSpec((tma, Ka), lambda i: (i, 0)),
                pl.BlockSpec((Ka, Na), lambda i: (0, 0)),
                pl.BlockSpec((1, Na), lambda i: (0, 0)),
                pl.BlockSpec((tmb, Kb), lambda i: (i, 0)),
                pl.BlockSpec((Kb, Nb), lambda i: (0, 0)),
                pl.BlockSpec((1, Nb), lambda i: (0, 0)),
            ],
            out_specs=(pl.BlockSpec((tma, Na), lambda i: (i, 0)),
                       pl.BlockSpec((tmb, Nb), lambda i: (i, 0))),
        ),
        compiler_params=pltpu.CompilerParams(
            dimension_semantics=("parallel",)),
    )(xa, wa, ba, xb, wb, bb)


# --------------------------------------------------------------------------
# Pallas kernel 2: fused fc1 -> ReLU -> fc2 -> ReLU -> fc3 in one launch.
# fc1 is split into an x-part and a y-part (its rows pre-permuted to NHWC
# flatten order) so no concat/transpose is needed in front of it.
# --------------------------------------------------------------------------
def _fc_chain_kernel(x_ref, y_ref, wx_ref, wy_ref, b1_ref,
                     w2_ref, b2_ref, w3_ref, b3_ref, o_ref):
    h = (jnp.dot(x_ref[...], wx_ref[...], preferred_element_type=jnp.float32)
         + jnp.dot(y_ref[...], wy_ref[...], preferred_element_type=jnp.float32)
         + b1_ref[...])
    h = jnp.maximum(h, 0.0)
    # Dropout(0.8): eval-mode identity (inference semantics).
    h = jnp.dot(h.astype(jnp.bfloat16), w2_ref[...],
                preferred_element_type=jnp.float32) + b2_ref[...]
    h = jnp.maximum(h, 0.0)
    # Dropout(0.8): eval-mode identity (inference semantics).
    o_ref[...] = (jnp.dot(h.astype(jnp.bfloat16), w3_ref[...],
                          preferred_element_type=jnp.float32) + b3_ref[...])


def fc_chain(x_flat, y_flat, fcp, num_classes):
    B = x_flat.shape[0]
    Mp = _round_up(B, 16)
    Kx, N1 = fcp["wx"].shape
    Ky = fcp["wy"].shape[0]
    N2 = fcp["w2"].shape[1]
    N3 = fcp["w3"].shape[1]
    xp = jnp.pad(x_flat, ((0, Mp - B), (0, Kx - x_flat.shape[1])))
    yp = jnp.pad(y_flat, ((0, Mp - B), (0, Ky - y_flat.shape[1])))
    out = pl.pallas_call(
        _fc_chain_kernel,
        out_shape=jax.ShapeDtypeStruct((Mp, N3), jnp.float32),
        grid_spec=pltpu.PrefetchScalarGridSpec(
            num_scalar_prefetch=0,
            grid=(1,),
            in_specs=[
                pl.BlockSpec((Mp, Kx), lambda i: (0, 0)),
                pl.BlockSpec((Mp, Ky), lambda i: (0, 0)),
                pl.BlockSpec((Kx, N1), lambda i: (0, 0)),
                pl.BlockSpec((Ky, N1), lambda i: (0, 0)),
                pl.BlockSpec((1, N1), lambda i: (0, 0)),
                pl.BlockSpec((N1, N2), lambda i: (0, 0)),
                pl.BlockSpec((1, N2), lambda i: (0, 0)),
                pl.BlockSpec((N2, N3), lambda i: (0, 0)),
                pl.BlockSpec((1, N3), lambda i: (0, 0)),
            ],
            out_specs=pl.BlockSpec((Mp, N3), lambda i: (0, 0)),
        ),
        compiler_params=pltpu.CompilerParams(
            dimension_semantics=("arbitrary",)),
    )(xp, yp, fcp["wx"], fcp["wy"], fcp["b1"],
      fcp["w2"], fcp["b2"], fcp["w3"], fcp["b3"])
    return out[:B, :num_classes]


# --------------------------------------------------------------------------
# Plain-JAX glue: im2col (K pad fused into the concat), stage driver, maxpool
# --------------------------------------------------------------------------
def im2col(x, cfg, Kp):
    """x: NHWC bf16 -> (B*Ho*Wo, Kp) patches; zero K-pad folded into the concat."""
    B, H, W, C = x.shape
    kh, kw = cfg["kh"], cfg["kw"]
    sh, sw = cfg["stride"]
    ph, pw = cfg["pad"]
    xp = jnp.pad(x, ((0, 0), (ph, ph), (pw, pw), (0, 0)))
    Ho = (H + 2 * ph - kh) // sh + 1
    Wo = (W + 2 * pw - kw) // sw + 1
    cols = []
    for i in range(kh):
        for j in range(kw):
            cols.append(xp[:, i:i + sh * Ho:sh, j:j + sw * Wo:sw, :])
    K = kh * kw * C
    if Kp > K:
        cols.append(jnp.zeros((B, Ho, Wo, Kp - K), x.dtype))
    patches = jnp.concatenate(cols, axis=-1)        # (B, Ho, Wo, Kp), (kh, kw, C) order
    return patches.reshape(B * Ho * Wo, Kp), Ho, Wo


def maxpool(x, ph, pw):
    B, H, W, C = x.shape
    return x.reshape(B, H // ph, ph, W // pw, pw, C).max(axis=(2, 4))


def conv_stage(x, y, prep, xname, yname):
    """One fused stage: both branches' conv+BN+ReLU in a single pallas_call."""
    cfg_x, cfg_y = CONV_CFG[xname], CONV_CFG[yname]
    wx, bx = prep[xname]["w"], prep[xname]["b"]
    wy, by = prep[yname]["w"], prep[yname]["b"]
    B = x.shape[0]
    px, xHo, xWo = im2col(x, cfg_x, wx.shape[0])
    py, yHo, yWo = im2col(y, cfg_y, wy.shape[0])
    Mx, My = B * xHo * xWo, B * yHo * yWo
    # grid=1 on single-TC chips (v5e/v6e); split big stages across v7x's 2 TCs.
    grid = _NUM_TC if (_NUM_TC > 1 and Mx >= 512) else 1
    Mxp, Myp = _round_up(Mx, 16 * grid), _round_up(My, 16 * grid)
    if Mxp > Mx:
        px = jnp.pad(px, ((0, Mxp - Mx), (0, 0)))
    if Myp > My:
        py = jnp.pad(py, ((0, Myp - My), (0, 0)))
    ox, oy = _run_conv_pair(px, wx, bx, py, wy, by, grid=grid)
    xo = ox[:Mx, :cfg_x["cout"]].reshape(B, xHo, xWo, cfg_x["cout"])
    yo = oy[:My, :cfg_y["cout"]].reshape(B, yHo, yWo, cfg_y["cout"])
    return maxpool(xo, *cfg_x["pool"]), maxpool(yo, *cfg_y["pool"])


# --------------------------------------------------------------------------
# Parameters: synthetic init (torch layout) + one-time hoisted preprocessing
# --------------------------------------------------------------------------
def init_params(key, num_classes):
    keys = iter(jax.random.split(key, 64))

    def conv(cout, cin, kh, kw):
        return {
            "w": 0.05 * jax.random.normal(next(keys), (cout, cin, kh, kw), jnp.float32),
            "b": 0.05 * jax.random.normal(next(keys), (cout,), jnp.float32),
            "gamma": 1.0 + 0.1 * jax.random.normal(next(keys), (cout,), jnp.float32),
            "beta": 0.1 * jax.random.normal(next(keys), (cout,), jnp.float32),
            "mean": 0.1 * jax.random.normal(next(keys), (cout,), jnp.float32),
            "var": 1.0 + 0.1 * jax.random.uniform(next(keys), (cout,), jnp.float32),
        }

    def lin(fin, fout):
        return {
            "w": 0.05 * jax.random.normal(next(keys), (fout, fin), jnp.float32),
            "b": 0.05 * jax.random.normal(next(keys), (fout,), jnp.float32),
        }

    params = {name: conv(cfg["cout"], cfg["cin"], cfg["kh"], cfg["kw"])
              for name, cfg in CONV_CFG.items()}
    params["fc1"] = lin(1248, 512)
    params["fc2"] = lin(512, 256)
    params["fc3"] = lin(256, num_classes)
    return params


def preprocess_params(params, eps=1e-5):
    """One-time weight prep: BN eval-mode fold, (K, N) transpose, zero-pad to
    lane-aligned shapes, bf16 cast, fc1 row-permutation fold.  Biases stay f32."""
    prep = {}
    for name, cfg in CONV_CFG.items():
        p = params[name]
        cout, cin, kh, kw = cfg["cout"], cfg["cin"], cfg["kh"], cfg["kw"]
        s = p["gamma"] / jnp.sqrt(p["var"] + eps)          # BN eval-mode scale
        bias = (p["b"] - p["mean"]) * s + p["beta"]        # conv bias folded through BN
        w2d = jnp.transpose(p["w"], (2, 3, 1, 0)).reshape(kh * kw * cin, cout)
        w2d = w2d * s[None, :]                             # fold BN scale into weights
        K = kh * kw * cin
        Kp, Np = _round_up(K, 128), _round_up(cout, 128)
        wpad = jnp.zeros((Kp, Np), jnp.bfloat16).at[:K, :cout].set(w2d.astype(jnp.bfloat16))
        bpad = jnp.zeros((1, Np), jnp.float32).at[0, :cout].set(bias.astype(jnp.float32))
        prep[name] = {"w": wpad, "b": bpad}

    # fc1: fold the NCHW-flatten permutation into the weight rows, and split the
    # (1248 -> 512) matmul into an x-part (1024 rows) and a y-part (224 -> 256
    # rows, kept 128-aligned) so no transpose/concat is needed at runtime.
    hx, wxs, cx = 4, 4, 64      # x after Block3 + pool, NHWC
    perm_x = (np.arange(cx)[None, None, :] * (hx * wxs)
              + np.arange(hx)[:, None, None] * wxs
              + np.arange(wxs)[None, :, None]).reshape(-1)       # NHWC idx -> torch idx
    hy, wys, cy = 14, 1, 16     # y after Block_3 + pool, NHWC
    perm_y = (np.arange(cy)[None, None, :] * (hy * wys)
              + np.arange(hy)[:, None, None] * wys
              + np.arange(wys)[None, :, None]).reshape(-1)
    w1 = params["fc1"]["w"]                                  # (512, 1248) torch (out, in)
    w1x = w1[:, :hx * wxs * cx].T[perm_x]                    # (1024, 512) NHWC-row order
    w1y = w1[:, hx * wxs * cx:].T[perm_y]                    # (224, 512)  NHWC-row order
    Ky = _round_up(w1y.shape[0], 128)                        # 256
    fcp = {
        "wx": w1x.astype(jnp.bfloat16),
        "wy": jnp.zeros((Ky, w1y.shape[1]), jnp.bfloat16).at[:w1y.shape[0]].set(
            w1y.astype(jnp.bfloat16)),
        "b1": params["fc1"]["b"].astype(jnp.float32).reshape(1, -1),
    }
    for idx, name in ((2, "fc2"), (3, "fc3")):
        p = params[name]
        fout, fin = p["w"].shape
        Np = _round_up(fout, 128)
        fcp[f"w{idx}"] = jnp.zeros((fin, Np), jnp.bfloat16).at[:, :fout].set(
            p["w"].T.astype(jnp.bfloat16))
        fcp[f"b{idx}"] = jnp.zeros((1, Np), jnp.float32).at[0, :fout].set(
            p["b"].astype(jnp.float32))
    prep["fc"] = fcp
    return prep


# --------------------------------------------------------------------------
# Forward pass (conv_net.forward semantics, inference mode)
# --------------------------------------------------------------------------
def forward(prep, data, num_classes):
    # data[:, :, :1024] -> torch (B,1,32,32) NCHW == (B,32,32,1) NHWC (C == 1).
    x = data[:, :, :1024].reshape(-1, 32, 32, 1).astype(jnp.bfloat16)
    # data[:, :, 1024:] -> torch (B,1,128,2) NCHW == (B,128,2,1) NHWC.
    y = data[:, :, 1024:].reshape(-1, 128, 2, 1).astype(jnp.bfloat16)

    for xname, yname in STAGES:
        x, y = conv_stage(x, y, prep, xname, yname)

    B = x.shape[0]
    # NHWC flatten; the torch NCHW-flatten permutation lives in fc1's rows.
    x_flat = x.reshape(B, -1)          # (B, 1024)
    y_flat = y.reshape(B, -1)          # (B, 224)

    # fc1 -> ReLU -> (Dropout: identity) -> fc2 -> ReLU -> (Dropout: identity) -> fc3
    return fc_chain(x_flat, y_flat, prep["fc"], num_classes)


if __name__ == "__main__":
    num_classes = 10
    batch = 2

    key = jax.random.PRNGKey(0)
    k_param, k_data = jax.random.split(key)
    params = init_params(k_param, num_classes)

    # One-time, hoisted weight preprocessing (not part of the per-call path).
    prep = preprocess_params(params)

    # data: (B, 1, 1024 + 256) -- same layout the PyTorch forward slices.
    data = jax.random.normal(k_data, (batch, 1, 1024 + 256), jnp.float32)

    fwd = jax.jit(functools.partial(forward, num_classes=num_classes))
    out = fwd(prep, data)
    jax.block_until_ready(out)
    assert out.shape == (batch, num_classes)
    assert bool(jnp.isfinite(out).all())
    print("KERNEL_OK")
</pallas_src>

<mosaic_0001>
module attributes {stable_mosaic.version = 11 : i64} {
  func.func @_conv_pair_kernel(%arg0: i32, %arg1: memref<2048x128xbf16, #tpu.memory_space<vmem>>, %arg2: memref<128x128xbf16, #tpu.memory_space<vmem>>, %arg3: memref<1x128xf32, #tpu.memory_space<vmem>>, %arg4: memref<512x128xbf16, #tpu.memory_space<vmem>>, %arg5: memref<128x128xbf16, #tpu.memory_space<vmem>>, %arg6: memref<1x128xf32, #tpu.memory_space<vmem>>, %arg7: memref<2048x128xbf16, #tpu.memory_space<vmem>>, %arg8: memref<512x128xbf16, #tpu.memory_space<vmem>>) attributes {dimension_semantics = [#tpu.dimension_semantics<parallel>], iteration_bounds = array<i64: 1>, scalar_prefetch = 0 : i64, scratch_operands = 0 : i64, tpu.core_type = #tpu.core_type<tc>, window_params = [{transform_indices = @transform_0, window_bounds = array<i64: 2048, 128>}, {pipeline_mode = #tpu.pipeline_mode<synchronous>, transform_indices = @transform_1, window_bounds = array<i64: 128, 128>}, {pipeline_mode = #tpu.pipeline_mode<synchronous>, transform_indices = @transform_2, window_bounds = array<i64: 1, 128>}, {transform_indices = @transform_3, window_bounds = array<i64: 512, 128>}, {pipeline_mode = #tpu.pipeline_mode<synchronous>, transform_indices = @transform_4, window_bounds = array<i64: 128, 128>}, {pipeline_mode = #tpu.pipeline_mode<synchronous>, transform_indices = @transform_5, window_bounds = array<i64: 1, 128>}, {transform_indices = @transform_6, window_bounds = array<i64: 2048, 128>}, {transform_indices = @transform_7, window_bounds = array<i64: 512, 128>}]} {
    %c0 = arith.constant 0 : index
    %c0_0 = arith.constant 0 : index
    %0 = vector.load %arg1[%c0, %c0_0] : memref<2048x128xbf16, #tpu.memory_space<vmem>>, vector<2048x128xbf16>
    %c0_1 = arith.constant 0 : index
    %c0_2 = arith.constant 0 : index
    %1 = vector.load %arg2[%c0_1, %c0_2] : memref<128x128xbf16, #tpu.memory_space<vmem>>, vector<128x128xbf16>
    %cst = arith.constant dense<0.000000e+00> : vector<2048x128xf32>
    %2 = tpu.matmul %0, %1, %cst {dimension_numbers = #tpu.dot_dimension_numbers<[1], [0], [0], [1], [0, 0, 1, 1], [], []>} : vector<2048x128xbf16>, vector<128x128xbf16>, vector<2048x128xf32> -> vector<2048x128xf32>
    %c0_3 = arith.constant 0 : index
    %c0_4 = arith.constant 0 : index
    %3 = vector.load %arg3[%c0_3, %c0_4] : memref<1x128xf32, #tpu.memory_space<vmem>>, vector<1x128xf32>
    %4 = vector.broadcast %3 : vector<1x128xf32> to vector<2048x128xf32>
    %5 = arith.addf %2, %4 : vector<2048x128xf32>
    %cst_5 = arith.constant 0.000000e+00 : f32
    %6 = vector.broadcast %cst_5 : f32 to vector<2048x128xf32>
    %7 = arith.maximumf %5, %6 : vector<2048x128xf32>
    %8 = arith.truncf %7 : vector<2048x128xf32> to vector<2048x128xbf16>
    %c0_6 = arith.constant 0 : index
    %c0_7 = arith.constant 0 : index
    %9 = vector.load %arg7[%c0_6, %c0_7] : memref<2048x128xbf16, #tpu.memory_space<vmem>>, vector<2048x128xbf16>
    tpu.vector_store %arg7[%c0_6, %c0_7], %8 {strides = array<i32>} : memref<2048x128xbf16, #tpu.memory_space<vmem>>, vector<2048x128xbf16>,
    %c0_8 = arith.constant 0 : index
    %c0_9 = arith.constant 0 : index
    %10 = vector.load %arg4[%c0_8, %c0_9] : memref<512x128xbf16, #tpu.memory_space<vmem>>, vector<512x128xbf16>
    %c0_10 = arith.constant 0 : index
    %c0_11 = arith.constant 0 : index
    %11 = vector.load %arg5[%c0_10, %c0_11] : memref<128x128xbf16, #tpu.memory_space<vmem>>, vector<128x128xbf16>
    %cst_12 = arith.constant dense<0.000000e+00> : vector<512x128xf32>
    %12 = tpu.matmul %10, %11, %cst_12 {dimension_numbers = #tpu.dot_dimension_numbers<[1], [0], [0], [1], [0, 0, 1, 1], [], []>} : vector<512x128xbf16>, vector<128x128xbf16>, vector<512x128xf32> -> vector<512x128xf32>
    %c0_13 = arith.constant 0 : index
    %c0_14 = arith.constant 0 : index
    %13 = vector.load %arg6[%c0_13, %c0_14] : memref<1x128xf32, #tpu.memory_space<vmem>>, vector<1x128xf32>
    %14 = vector.broadcast %13 : vector<1x128xf32> to vector<512x128xf32>
    %15 = arith.addf %12, %14 : vector<512x128xf32>
    %cst_15 = arith.constant 0.000000e+00 : f32
    %16 = vector.broadcast %cst_15 : f32 to vector<512x128xf32>
    %17 = arith.maximumf %15, %16 : vector<512x128xf32>
    %18 = arith.truncf %17 : vector<512x128xf32> to vector<512x128xbf16>
    %c0_16 = arith.constant 0 : index
    %c0_17 = arith.constant 0 : index
    %19 = vector.load %arg8[%c0_16, %c0_17] : memref<512x128xbf16, #tpu.memory_space<vmem>>, vector<512x128xbf16>
    tpu.vector_store %arg8[%c0_16, %c0_17], %18 {strides = array<i32>} : memref<512x128xbf16, #tpu.memory_space<vmem>>, vector<512x128xbf16>,
    return
  }
  func.func @transform_0(%arg0: i32) -> (i32, i32) {
    %c0_i32 = arith.constant 0 : i32
    %c0_i32_0 = arith.constant 0 : i32
    return %arg0, %c0_i32 : i32, i32
  }
  func.func @transform_1(%arg0: i32) -> (i32, i32) {
    %c0_i32 = arith.constant 0 : i32
    %c0_i32_0 = arith.constant 0 : i32
    %c0_i32_1 = arith.constant 0 : i32
    return %c0_i32, %c0_i32_0 : i32, i32
  }
  func.func @transform_2(%arg0: i32) -> (i32, i32) {
    %c0_i32 = arith.constant 0 : i32
    %c0_i32_0 = arith.constant 0 : i32
    %c0_i32_1 = arith.constant 0 : i32
    return %c0_i32, %c0_i32_0 : i32, i32
  }
  func.func @transform_3(%arg0: i32) -> (i32, i32) {
    %c0_i32 = arith.constant 0 : i32
    %c0_i32_0 = arith.constant 0 : i32
    return %arg0, %c0_i32 : i32, i32
  }
  func.func @transform_4(%arg0: i32) -> (i32, i32) {
    %c0_i32 = arith.constant 0 : i32
    %c0_i32_0 = arith.constant 0 : i32
    %c0_i32_1 = arith.constant 0 : i32
    return %c0_i32, %c0_i32_0 : i32, i32
  }
  func.func @transform_5(%arg0: i32) -> (i32, i32) {
    %c0_i32 = arith.constant 0 : i32
    %c0_i32_0 = arith.constant 0 : i32
    %c0_i32_1 = arith.constant 0 : i32
    return %c0_i32, %c0_i32_0 : i32, i32
  }
  func.func @transform_6(%arg0: i32) -> (i32, i32) {
    %c0_i32 = arith.constant 0 : i32
    %c0_i32_0 = arith.constant 0 : i32
    return %arg0, %c0_i32 : i32, i32
  }
  func.func @transform_7(%arg0: i32) -> (i32, i32) {
    %c0_i32 = arith.constant 0 : i32
    %c0_i32_0 = arith.constant 0 : i32
    return %arg0, %c0_i32 : i32, i32
  }
}

module attributes {stable_mosaic.version = 11 : i64} {
  func.func @_conv_pair_kernel(%arg0: i32, %arg1: memref<512x384xbf16, #tpu.memory_space<vmem>>, %arg2: memref<384x128xbf16, #tpu.memory_space<vmem>>, %arg3: memref<1x128xf32, #tpu.memory_space<vmem>>, %arg4: memref<128x256xbf16, #tpu.memory_space<vmem>>, %arg5: memref<256x128xbf16, #tpu.memory_space<vmem>>, %arg6: memref<1x128xf32, #tpu.memory_space<vmem>>, %arg7: memref<512x128xbf16, #tpu.memory_space<vmem>>, %arg8: memref<128x128xbf16, #tpu.memory_space<vmem>>) attributes {dimension_semantics = [#tpu.dimension_semantics<parallel>], iteration_bounds = array<i64: 1>, scalar_prefetch = 0 : i64, scratch_operands = 0 : i64, tpu.core_type = #tpu.core_type<tc>, window_params = [{transform_indices = @transform_0, window_bounds = array<i64: 512, 384>}, {pipeline_mode = #tpu.pipeline_mode<synchronous>, transform_indices = @transform_1, window_bounds = array<i64: 384, 128>}, {pipeline_mode = #tpu.pipeline_mode<synchronous>, transform_indices = @transform_2, window_bounds = array<i64: 1, 128>}, {transform_indices = @transform_3, window_bounds = array<i64: 128, 256>}, {pipeline_mode = #tpu.pipeline_mode<synchronous>, transform_indices = @transform_4, window_bounds = array<i64: 256, 128>}, {pipeline_mode = #tpu.pipeline_mode<synchronous>, transform_indices = @transform_5, window_bounds = array<i64: 1, 128>}, {transform_indices = @transform_6, window_bounds = array<i64: 512, 128>}, {transform_indices = @transform_7, window_bounds = array<i64: 128, 128>}]} {
    %c0 = arith.constant 0 : index
    %c0_0 = arith.constant 0 : index
    %0 = vector.load %arg1[%c0, %c0_0] : memref<512x384xbf16, #tpu.memory_space<vmem>>, vector<512x384xbf16>
    %c0_1 = arith.constant 0 : index
    %c0_2 = arith.constant 0 : index
    %1 = vector.load %arg2[%c0_1, %c0_2] : memref<384x128xbf16, #tpu.memory_space<vmem>>, vector<384x128xbf16>
    %cst = arith.constant dense<0.000000e+00> : vector<512x128xf32>
    %2 = tpu.matmul %0, %1, %cst {dimension_numbers = #tpu.dot_dimension_numbers<[1], [0], [0], [1], [0, 0, 1, 1], [], []>} : vector<512x384xbf16>, vector<384x128xbf16>, vector<512x128xf32> -> vector<512x128xf32>
    %c0_3 = arith.constant 0 : index
    %c0_4 = arith.constant 0 : index
    %3 = vector.load %arg3[%c0_3, %c0_4] : memref<1x128xf32, #tpu.memory_space<vmem>>, vector<1x128xf32>
    %4 = vector.broadcast %3 : vector<1x128xf32> to vector<512x128xf32>
    %5 = arith.addf %2, %4 : vector<512x128xf32>
    %cst_5 = arith.constant 0.000000e+00 : f32
    %6 = vector.broadcast %cst_5 : f32 to vector<512x128xf32>
    %7 = arith.maximumf %5, %6 : vector<512x128xf32>
    %8 = arith.truncf %7 : vector<512x128xf32> to vector<512x128xbf16>
    %c0_6 = arith.constant 0 : index
    %c0_7 = arith.constant 0 : index
    %9 = vector.load %arg7[%c0_6, %c0_7] : memref<512x128xbf16, #tpu.memory_space<vmem>>, vector<512x128xbf16>
    tpu.vector_store %arg7[%c0_6, %c0_7], %8 {strides = array<i32>} : memref<512x128xbf16, #tpu.memory_space<vmem>>, vector<512x128xbf16>,
    %c0_8 = arith.constant 0 : index
    %c0_9 = arith.constant 0 : index
    %10 = vector.load %arg4[%c0_8, %c0_9] : memref<128x256xbf16, #tpu.memory_space<vmem>>, vector<128x256xbf16>
    %c0_10 = arith.constant 0 : index
    %c0_11 = arith.constant 0 : index
    %11 = vector.load %arg5[%c0_10, %c0_11] : memref<256x128xbf16, #tpu.memory_space<vmem>>, vector<256x128xbf16>
    %cst_12 = arith.constant dense<0.000000e+00> : vector<128x128xf32>
    %12 = tpu.matmul %10, %11, %cst_12 {dimension_numbers = #tpu.dot_dimension_numbers<[1], [0], [0], [1], [0, 0, 1, 1], [], []>} : vector<128x256xbf16>, vector<256x128xbf16>, vector<128x128xf32> -> vector<128x128xf32>
    %c0_13 = arith.constant 0 : index
    %c0_14 = arith.constant 0 : index
    %13 = vector.load %arg6[%c0_13, %c0_14] : memref<1x128xf32, #tpu.memory_space<vmem>>, vector<1x128xf32>
    %14 = vector.broadcast %13 : vector<1x128xf32> to vector<128x128xf32>
    %15 = arith.addf %12, %14 : vector<128x128xf32>
    %cst_15 = arith.constant 0.000000e+00 : f32
    %16 = vector.broadcast %cst_15 : f32 to vector<128x128xf32>
    %17 = arith.maximumf %15, %16 : vector<128x128xf32>
    %18 = arith.truncf %17 : vector<128x128xf32> to vector<128x128xbf16>
    %c0_16 = arith.constant 0 : index
    %c0_17 = arith.constant 0 : index
    %19 = vector.load %arg8[%c0_16, %c0_17] : memref<128x128xbf16, #tpu.memory_space<vmem>>, vector<128x128xbf16>
    tpu.vector_store %arg8[%c0_16, %c0_17], %18 {strides = array<i32>} : memref<128x128xbf16, #tpu.memory_space<vmem>>, vector<128x128xbf16>,
    return
  }
  func.func @transform_0(%arg0: i32) -> (i32, i32) {
    %c0_i32 = arith.constant 0 : i32
    %c0_i32_0 = arith.constant 0 : i32
    return %arg0, %c0_i32 : i32, i32
  }
  func.func @transform_1(%arg0: i32) -> (i32, i32) {
    %c0_i32 = arith.constant 0 : i32
    %c0_i32_0 = arith.constant 0 : i32
    %c0_i32_1 = arith.constant 0 : i32
    return %c0_i32, %c0_i32_0 : i32, i32
  }
  func.func @transform_2(%arg0: i32) -> (i32, i32) {
    %c0_i32 = arith.constant 0 : i32
    %c0_i32_0 = arith.constant 0 : i32
    %c0_i32_1 = arith.constant 0 : i32
    return %c0_i32, %c0_i32_0 : i32, i32
  }
  func.func @transform_3(%arg0: i32) -> (i32, i32) {
    %c0_i32 = arith.constant 0 : i32
    %c0_i32_0 = arith.constant 0 : i32
    return %arg0, %c0_i32 : i32, i32
  }
  func.func @transform_4(%arg0: i32) -> (i32, i32) {
    %c0_i32 = arith.constant 0 : i32
    %c0_i32_0 = arith.constant 0 : i32
    %c0_i32_1 = arith.constant 0 : i32
    return %c0_i32, %c0_i32_0 : i32, i32
  }
  func.func @transform_5(%arg0: i32) -> (i32, i32) {
    %c0_i32 = arith.constant 0 : i32
    %c0_i32_0 = arith.constant 0 : i32
    %c0_i32_1 = arith.constant 0 : i32
    return %c0_i32, %c0_i32_0 : i32, i32
  }
  func.func @transform_6(%arg0: i32) -> (i32, i32) {
    %c0_i32 = arith.constant 0 : i32
    %c0_i32_0 = arith.constant 0 : i32
    return %arg0, %c0_i32 : i32, i32
  }
  func.func @transform_7(%arg0: i32) -> (i32, i32) {
    %c0_i32 = arith.constant 0 : i32
    %c0_i32_0 = arith.constant 0 : i32
    return %arg0, %c0_i32 : i32, i32
  }
}

module attributes {stable_mosaic.version = 11 : i64} {
  func.func @_conv_pair_kernel(%arg0: i32, %arg1: memref<128x384xbf16, #tpu.memory_space<vmem>>, %arg2: memref<384x128xbf16, #tpu.memory_space<vmem>>, %arg3: memref<1x128xf32, #tpu.memory_space<vmem>>, %arg4: memref<64x256xbf16, #tpu.memory_space<vmem>>, %arg5: memref<256x128xbf16, #tpu.memory_space<vmem>>, %arg6: memref<1x128xf32, #tpu.memory_space<vmem>>, %arg7: memref<128x128xbf16, #tpu.memory_space<vmem>>, %arg8: memref<64x128xbf16, #tpu.memory_space<vmem>>) attributes {dimension_semantics = [#tpu.dimension_semantics<parallel>], iteration_bounds = array<i64: 1>, scalar_prefetch = 0 : i64, scratch_operands = 0 : i64, tpu.core_type = #tpu.core_type<tc>, window_params = [{transform_indices = @transform_0, window_bounds = array<i64: 128, 384>}, {pipeline_mode = #tpu.pipeline_mode<synchronous>, transform_indices = @transform_1, window_bounds = array<i64: 384, 128>}, {pipeline_mode = #tpu.pipeline_mode<synchronous>, transform_indices = @transform_2, window_bounds = array<i64: 1, 128>}, {transform_indices = @transform_3, window_bounds = array<i64: 64, 256>}, {pipeline_mode = #tpu.pipeline_mode<synchronous>, transform_indices = @transform_4, window_bounds = array<i64: 256, 128>}, {pipeline_mode = #tpu.pipeline_mode<synchronous>, transform_indices = @transform_5, window_bounds = array<i64: 1, 128>}, {transform_indices = @transform_6, window_bounds = array<i64: 128, 128>}, {transform_indices = @transform_7, window_bounds = array<i64: 64, 128>}]} {
    %c0 = arith.constant 0 : index
    %c0_0 = arith.constant 0 : index
    %0 = vector.load %arg1[%c0, %c0_0] : memref<128x384xbf16, #tpu.memory_space<vmem>>, vector<128x384xbf16>
    %c0_1 = arith.constant 0 : index
    %c0_2 = arith.constant 0 : index
    %1 = vector.load %arg2[%c0_1, %c0_2] : memref<384x128xbf16, #tpu.memory_space<vmem>>, vector<384x128xbf16>
    %cst = arith.constant dense<0.000000e+00> : vector<128x128xf32>
    %2 = tpu.matmul %0, %1, %cst {dimension_numbers = #tpu.dot_dimension_numbers<[1], [0], [0], [1], [0, 0, 1, 1], [], []>} : vector<128x384xbf16>, vector<384x128xbf16>, vector<128x128xf32> -> vector<128x128xf32>
    %c0_3 = arith.constant 0 : index
    %c0_4 = arith.constant 0 : index
    %3 = vector.load %arg3[%c0_3, %c0_4] : memref<1x128xf32, #tpu.memory_space<vmem>>, vector<1x128xf32>
    %4 = vector.broadcast %3 : vector<1x128xf32> to vector<128x128xf32>
    %5 = arith.addf %2, %4 : vector<128x128xf32>
    %cst_5 = arith.constant 0.000000e+00 : f32
    %6 = vector.broadcast %cst_5 : f32 to vector<128x128xf32>
    %7 = arith.maximumf %5, %6 : vector<128x128xf32>
    %8 = arith.truncf %7 : vector<128x128xf32> to vector<128x128xbf16>
    %c0_6 = arith.constant 0 : index
    %c0_7 = arith.constant 0 : index
    %9 = vector.load %arg7[%c0_6, %c0_7] : memref<128x128xbf16, #tpu.memory_space<vmem>>, vector<128x128xbf16>
    tpu.vector_store %arg7[%c0_6, %c0_7], %8 {strides = array<i32>} : memref<128x128xbf16, #tpu.memory_space<vmem>>, vector<128x128xbf16>,
    %c0_8 = arith.constant 0 : index
    %c0_9 = arith.constant 0 : index
    %10 = vector.load %arg4[%c0_8, %c0_9] : memref<64x256xbf16, #tpu.memory_space<vmem>>, vector<64x256xbf16>
    %c0_10 = arith.constant 0 : index
    %c0_11 = arith.constant 0 : index
    %11 = vector.load %arg5[%c0_10, %c0_11] : memref<256x128xbf16, #tpu.memory_space<vmem>>, vector<256x128xbf16>
    %cst_12 = arith.constant dense<0.000000e+00> : vector<64x128xf32>
    %12 = tpu.matmul %10, %11, %cst_12 {dimension_numbers = #tpu.dot_dimension_numbers<[1], [0], [0], [1], [0, 0, 1, 1], [], []>} : vector<64x256xbf16>, vector<256x128xbf16>, vector<64x128xf32> -> vector<64x128xf32>
    %c0_13 = arith.constant 0 : index
    %c0_14 = arith.constant 0 : index
    %13 = vector.load %arg6[%c0_13, %c0_14] : memref<1x128xf32, #tpu.memory_space<vmem>>, vector<1x128xf32>
    %14 = vector.broadcast %13 : vector<1x128xf32> to vector<64x128xf32>
    %15 = arith.addf %12, %14 : vector<64x128xf32>
    %cst_15 = arith.constant 0.000000e+00 : f32
    %16 = vector.broadcast %cst_15 : f32 to vector<64x128xf32>
    %17 = arith.maximumf %15, %16 : vector<64x128xf32>
    %18 = arith.truncf %17 : vector<64x128xf32> to vector<64x128xbf16>
    %c0_16 = arith.constant 0 : index
    %c0_17 = arith.constant 0 : index
    %19 = vector.load %arg8[%c0_16, %c0_17] : memref<64x128xbf16, #tpu.memory_space<vmem>>, vector<64x128xbf16>
    tpu.vector_store %arg8[%c0_16, %c0_17], %18 {strides = array<i32>} : memref<64x128xbf16, #tpu.memory_space<vmem>>, vector<64x128xbf16>,
    return
  }
  func.func @transform_0(%arg0: i32) -> (i32, i32) {
    %c0_i32 = arith.constant 0 : i32
    %c0_i32_0 = arith.constant 0 : i32
    return %arg0, %c0_i32 : i32, i32
  }
  func.func @transform_1(%arg0: i32) -> (i32, i32) {
    %c0_i32 = arith.constant 0 : i32
    %c0_i32_0 = arith.constant 0 : i32
    %c0_i32_1 = arith.constant 0 : i32
    return %c0_i32, %c0_i32_0 : i32, i32
  }
  func.func @transform_2(%arg0: i32) -> (i32, i32) {
    %c0_i32 = arith.constant 0 : i32
    %c0_i32_0 = arith.constant 0 : i32
    %c0_i32_1 = arith.constant 0 : i32
    return %c0_i32, %c0_i32_0 : i32, i32
  }
  func.func @transform_3(%arg0: i32) -> (i32, i32) {
    %c0_i32 = arith.constant 0 : i32
    %c0_i32_0 = arith.constant 0 : i32
    return %arg0, %c0_i32 : i32, i32
  }
  func.func @transform_4(%arg0: i32) -> (i32, i32) {
    %c0_i32 = arith.constant 0 : i32
    %c0_i32_0 = arith.constant 0 : i32
    %c0_i32_1 = arith.constant 0 : i32
    return %c0_i32, %c0_i32_0 : i32, i32
  }
  func.func @transform_5(%arg0: i32) -> (i32, i32) {
    %c0_i32 = arith.constant 0 : i32
    %c0_i32_0 = arith.constant 0 : i32
    %c0_i32_1 = arith.constant 0 : i32
    return %c0_i32, %c0_i32_0 : i32, i32
  }
  func.func @transform_6(%arg0: i32) -> (i32, i32) {
    %c0_i32 = arith.constant 0 : i32
    %c0_i32_0 = arith.constant 0 : i32
    return %arg0, %c0_i32 : i32, i32
  }
  func.func @transform_7(%arg0: i32) -> (i32, i32) {
    %c0_i32 = arith.constant 0 : i32
    %c0_i32_0 = arith.constant 0 : i32
    return %arg0, %c0_i32 : i32, i32
  }
}

module attributes {stable_mosaic.version = 11 : i64} {
  func.func @_fc_chain_kernel(%arg0: i32, %arg1: memref<16x1024xbf16, #tpu.memory_space<vmem>>, %arg2: memref<16x256xbf16, #tpu.memory_space<vmem>>, %arg3: memref<1024x512xbf16, #tpu.memory_space<vmem>>, %arg4: memref<256x512xbf16, #tpu.memory_space<vmem>>, %arg5: memref<1x512xf32, #tpu.memory_space<vmem>>, %arg6: memref<512x256xbf16, #tpu.memory_space<vmem>>, %arg7: memref<1x256xf32, #tpu.memory_space<vmem>>, %arg8: memref<256x128xbf16, #tpu.memory_space<vmem>>, %arg9: memref<1x128xf32, #tpu.memory_space<vmem>>, %arg10: memref<16x128xf32, #tpu.memory_space<vmem>>) attributes {dimension_semantics = [#tpu.dimension_semantics<arbitrary>], iteration_bounds = array<i64: 1>, scalar_prefetch = 0 : i64, scratch_operands = 0 : i64, tpu.core_type = #tpu.core_type<tc>, window_params = [{pipeline_mode = #tpu.pipeline_mode<synchronous>, transform_indices = @transform_0, window_bounds = array<i64: 16, 1024>}, {pipeline_mode = #tpu.pipeline_mode<synchronous>, transform_indices = @transform_1, window_bounds = array<i64: 16, 256>}, {pipeline_mode = #tpu.pipeline_mode<synchronous>, transform_indices = @transform_2, window_bounds = array<i64: 1024, 512>}, {pipeline_mode = #tpu.pipeline_mode<synchronous>, transform_indices = @transform_3, window_bounds = array<i64: 256, 512>}, {pipeline_mode = #tpu.pipeline_mode<synchronous>, transform_indices = @transform_4, window_bounds = array<i64: 1, 512>}, {pipeline_mode = #tpu.pipeline_mode<synchronous>, transform_indices = @transform_5, window_bounds = array<i64: 512, 256>}, {pipeline_mode = #tpu.pipeline_mode<synchronous>, transform_indices = @transform_6, window_bounds = array<i64: 1, 256>}, {pipeline_mode = #tpu.pipeline_mode<synchronous>, transform_indices = @transform_7, window_bounds = array<i64: 256, 128>}, {pipeline_mode = #tpu.pipeline_mode<synchronous>, transform_indices = @transform_8, window_bounds = array<i64: 1, 128>}, {pipeline_mode = #tpu.pipeline_mode<synchronous>, transform_indices = @transform_9, window_bounds = array<i64: 16, 128>}]} {
    %c0 = arith.constant 0 : index
    %c0_0 = arith.constant 0 : index
    %0 = vector.load %arg1[%c0, %c0_0] : memref<16x1024xbf16, #tpu.memory_space<vmem>>, vector<16x1024xbf16>
    %c0_1 = arith.constant 0 : index
    %c0_2 = arith.constant 0 : index
    %1 = vector.load %arg3[%c0_1, %c0_2] : memref<1024x512xbf16, #tpu.memory_space<vmem>>, vector<1024x512xbf16>
    %cst = arith.constant dense<0.000000e+00> : vector<16x512xf32>
    %2 = tpu.matmul %0, %1, %cst {dimension_numbers = #tpu.dot_dimension_numbers<[1], [0], [0], [1], [0, 0, 1, 1], [], []>} : vector<16x1024xbf16>, vector<1024x512xbf16>, vector<16x512xf32> -> vector<16x512xf32>
    %c0_3 = arith.constant 0 : index
    %c0_4 = arith.constant 0 : index
    %3 = vector.load %arg2[%c0_3, %c0_4] : memref<16x256xbf16, #tpu.memory_space<vmem>>, vector<16x256xbf16>
    %c0_5 = arith.constant 0 : index
    %c0_6 = arith.constant 0 : index
    %4 = vector.load %arg4[%c0_5, %c0_6] : memref<256x512xbf16, #tpu.memory_space<vmem>>, vector<256x512xbf16>
    %cst_7 = arith.constant dense<0.000000e+00> : vector<16x512xf32>
    %5 = tpu.matmul %3, %4, %cst_7 {dimension_numbers = #tpu.dot_dimension_numbers<[1], [0], [0], [1], [0, 0, 1, 1], [], []>} : vector<16x256xbf16>, vector<256x512xbf16>, vector<16x512xf32> -> vector<16x512xf32>
    %6 = arith.addf %2, %5 : vector<16x512xf32>
    %c0_8 = arith.constant 0 : index
    %c0_9 = arith.constant 0 : index
    %7 = vector.load %arg5[%c0_8, %c0_9] : memref<1x512xf32, #tpu.memory_space<vmem>>, vector<1x512xf32>
    %8 = vector.broadcast %7 : vector<1x512xf32> to vector<16x512xf32>
    %9 = arith.addf %6, %8 : vector<16x512xf32>
    %cst_10 = arith.constant 0.000000e+00 : f32
    %10 = vector.broadcast %cst_10 : f32 to vector<16x512xf32>
    %11 = arith.maximumf %9, %10 : vector<16x512xf32>
    %12 = arith.truncf %11 : vector<16x512xf32> to vector<16x512xbf16>
    %c0_11 = arith.constant 0 : index
    %c0_12 = arith.constant 0 : index
    %13 = vector.load %arg6[%c0_11, %c0_12] : memref<512x256xbf16, #tpu.memory_space<vmem>>, vector<512x256xbf16>
    %cst_13 = arith.constant dense<0.000000e+00> : vector<16x256xf32>
    %14 = tpu.matmul %12, %13, %cst_13 {dimension_numbers = #tpu.dot_dimension_numbers<[1], [0], [0], [1], [0, 0, 1, 1], [], []>} : vector<16x512xbf16>, vector<512x256xbf16>, vector<16x256xf32> -> vector<16x256xf32>
    %c0_14 = arith.constant 0 : index
    %c0_15 = arith.constant 0 : index
    %15 = vector.load %arg7[%c0_14, %c0_15] : memref<1x256xf32, #tpu.memory_space<vmem>>, vector<1x256xf32>
    %16 = vector.broadcast %15 : vector<1x256xf32> to vector<16x256xf32>
    %17 = arith.addf %14, %16 : vector<16x256xf32>
    %cst_16 = arith.constant 0.000000e+00 : f32
    %18 = vector.broadcast %cst_16 : f32 to vector<16x256xf32>
    %19 = arith.maximumf %17, %18 : vector<16x256xf32>
    %20 = arith.truncf %19 : vector<16x256xf32> to vector<16x256xbf16>
    %c0_17 = arith.constant 0 : index
    %c0_18 = arith.constant 0 : index
    %21 = vector.load %arg8[%c0_17, %c0_18] : memref<256x128xbf16, #tpu.memory_space<vmem>>, vector<256x128xbf16>
    %cst_19 = arith.constant dense<0.000000e+00> : vector<16x128xf32>
    %22 = tpu.matmul %20, %21, %cst_19 {dimension_numbers = #tpu.dot_dimension_numbers<[1], [0], [0], [1], [0, 0, 1, 1], [], []>} : vector<16x256xbf16>, vector<256x128xbf16>, vector<16x128xf32> -> vector<16x128xf32>
    %c0_20 = arith.constant 0 : index
    %c0_21 = arith.constant 0 : index
    %23 = vector.load %arg9[%c0_20, %c0_21] : memref<1x128xf32, #tpu.memory_space<vmem>>, vector<1x128xf32>
    %24 = vector.broadcast %23 : vector<1x128xf32> to vector<16x128xf32>
    %25 = arith.addf %22, %24 : vector<16x128xf32>
    %c0_22 = arith.constant 0 : index
    %c0_23 = arith.constant 0 : index
    %26 = vector.load %arg10[%c0_22, %c0_23] : memref<16x128xf32, #tpu.memory_space<vmem>>, vector<16x128xf32>
    tpu.vector_store %arg10[%c0_22, %c0_23], %25 {strides = array<i32>} : memref<16x128xf32, #tpu.memory_space<vmem>>, vector<16x128xf32>,
    return
  }
  func.func @transform_0(%arg0: i32) -> (i32, i32) {
    %c0_i32 = arith.constant 0 : i32
    %c0_i32_0 = arith.constant 0 : i32
    %c0_i32_1 = arith.constant 0 : i32
    return %c0_i32, %c0_i32_0 : i32, i32
  }
  func.func @transform_1(%arg0: i32) -> (i32, i32) {
    %c0_i32 = arith.constant 0 : i32
    %c0_i32_0 = arith.constant 0 : i32
    %c0_i32_1 = arith.constant 0 : i32
    return %c0_i32, %c0_i32_0 : i32, i32
  }
  func.func @transform_2(%arg0: i32) -> (i32, i32) {
    %c0_i32 = arith.constant 0 : i32
    %c0_i32_0 = arith.constant 0 : i32
    %c0_i32_1 = arith.constant 0 : i32
    return %c0_i32, %c0_i32_0 : i32, i32
  }
  func.func @transform_3(%arg0: i32) -> (i32, i32) {
    %c0_i32 = arith.constant 0 : i32
    %c0_i32_0 = arith.constant 0 : i32
    %c0_i32_1 = arith.constant 0 : i32
    return %c0_i32, %c0_i32_0 : i32, i32
  }
  func.func @transform_4(%arg0: i32) -> (i32, i32) {
    %c0_i32 = arith.constant 0 : i32
    %c0_i32_0 = arith.constant 0 : i32
    %c0_i32_1 = arith.constant 0 : i32
    return %c0_i32, %c0_i32_0 : i32, i32
  }
  func.func @transform_5(%arg0: i32) -> (i32, i32) {
    %c0_i32 = arith.constant 0 : i32
    %c0_i32_0 = arith.constant 0 : i32
    %c0_i32_1 = arith.constant 0 : i32
    return %c0_i32, %c0_i32_0 : i32, i32
  }
  func.func @transform_6(%arg0: i32) -> (i32, i32) {
    %c0_i32 = arith.constant 0 : i32
    %c0_i32_0 = arith.constant 0 : i32
    %c0_i32_1 = arith.constant 0 : i32
    return %c0_i32, %c0_i32_0 : i32, i32
  }
  func.func @transform_7(%arg0: i32) -> (i32, i32) {
    %c0_i32 = arith.constant 0 : i32
    %c0_i32_0 = arith.constant 0 : i32
    %c0_i32_1 = arith.constant 0 : i32
    return %c0_i32, %c0_i32_0 : i32, i32
  }
  func.func @transform_8(%arg0: i32) -> (i32, i32) {
    %c0_i32 = arith.constant 0 : i32
    %c0_i32_0 = arith.constant 0 : i32
    %c0_i32_1 = arith.constant 0 : i32
    return %c0_i32, %c0_i32_0 : i32, i32
  }
  func.func @transform_9(%arg0: i32) -> (i32, i32) {
    %c0_i32 = arith.constant 0 : i32
    %c0_i32_0 = arith.constant 0 : i32
    %c0_i32_1 = arith.constant 0 : i32
    return %c0_i32, %c0_i32_0 : i32, i32
  }
}

</mosaic_0001>

<llo_original>
// kernel: forward.4
$region0: #{forward.4}
  #allocation0 [shape = 'u32[]', space=smem, size = 0x4, offset = 0x4, fixed_abs, tag = 'smem constant byte address 0x4 - core index']
  #allocation1 [shape = 'u32[144,128]{1,0:T(1,128)}', space=vmem, size = 0x12000, scoped, tag = 'internal scratch']
  %s0 = inlined_call_operand.vmem [shape: bf16[2048,128], index: 0, kind: input, shape index: {}]
  %s1 = inlined_call_operand.vmem [shape: bf16[128,128], index: 1, kind: input, shape index: {}]
  %s2 = inlined_call_operand.vmem [shape: f32[1,128], index: 2, kind: input, shape index: {}]
  %s3 = inlined_call_operand.vmem [shape: bf16[512,128], index: 3, kind: input, shape index: {}]
  %s4 = inlined_call_operand.vmem [shape: bf16[128,128], index: 4, kind: input, shape index: {}]
  %s5 = inlined_call_operand.vmem [shape: f32[1,128], index: 5, kind: input, shape index: {}]
  %s6 = inlined_call_operand.vmem [shape: bf16[2048,128], index: 6, kind: output, shape index: {0}]
  %s7 = inlined_call_operand.vmem [shape: bf16[512,128], index: 7, kind: output, shape index: {1}]
  %8 = xla_tuple %s6, %s7
  %s9 = sld [smem:[#allocation0]]
  $region42: #{forward.4} parent=0
    _
  %s11 = ssub.s32 1, %s9
  %s12 = scalar_select 0, %s11, %s9
  // Predicated region
  $region2: #{forward.4} parent=0 // pred_check
    _
  $region3: #{forward.4} parent=0 // pred_check_branch
    %14 = sbr.rel (0) target = $region5
  $region4: #{forward.4} parent=0 // pred_region
    _
  $region5: #{forward.4} parent=0 // pred_fallthru
    _
  // Predicated region
  $region6: #{forward.4} parent=0 // pred_check
    _
  $region7: #{forward.4} parent=0 // pred_check_branch
    %16 = sbr.rel (0) target = $region9
  $region8: #{forward.4} parent=0 // pred_region
    _
  $region9: #{forward.4} parent=0 // pred_fallthru
    _
  // Predicated region
  $region10: #{forward.4} parent=0 // pred_check
    _
  $region11: #{forward.4} parent=0 // pred_check_branch
    %18 = sbr.rel (0) target = $region13
  $region12: #{forward.4} parent=0 // pred_region
    _
  $region13: #{forward.4} parent=0 // pred_fallthru
    _
  // Predicated region
  $region14: #{forward.4} parent=0 // pred_check
    _
  $region15: #{forward.4} parent=0 // pred_check_branch
    %20 = sbr.rel (0) target = $region17
  $region16: #{forward.4} parent=0 // pred_region
    _
  $region17: #{forward.4} parent=0 // pred_fallthru
    _
  // Predicated region
  $region18: #{forward.4} parent=0 // pred_check
    _
  $region19: #{forward.4} parent=0 // pred_check_branch
    %22 = sbr.rel (0) target = $region21
  $region20: #{forward.4} parent=0 // pred_region
    _
  $region21: #{forward.4} parent=0 // pred_fallthru
    _
  // Predicated region
  $region22: #{forward.4} parent=0 // pred_check
    _
  $region23: #{forward.4} parent=0 // pred_check_branch
    %24 = sbr.rel (0) target = $region25
  $region24: #{forward.4} parent=0 // pred_region
    _
  $region25: #{forward.4} parent=0 // pred_fallthru
    _
  %v26 = vld [vmem:[%s0] sm:$0xf]
  %v27 = vld [vmem:[%s0 + $0x4] sm:$0xf]
  %v28 = vld [vmem:[%s0 + $0x8] sm:$0xf]
  %v29 = vld [vmem:[%s0 + $0xc] sm:$0xf]
  %v30 = vld [vmem:[%s0 + $0x10] sm:$0xf]
  %v31 = vld [vmem:[%s0 + $0x14] sm:$0xf]
  %v32 = vld [vmem:[%s0 + $0x18] sm:$0xf]
  %v33 = vld [vmem:[%s0 + $0x1c] sm:$0xf]
  %v34 = vld [vmem:[%s0 + $0x20] sm:$0xf]
  %v35 = vld [vmem:[%s0 + $0x24] sm:$0xf]
  %v36 = vld [vmem:[%s0 + $0x28] sm:$0xf]
  %v37 = vld [vmem:[%s0 + $0x2c] sm:$0xf]
  %v38 = vld [vmem:[%s0 + $0x30] sm:$0xf]
  %v39 = vld [vmem:[%s0 + $0x34] sm:$0xf]
  %v40 = vld [vmem:[%s0 + $0x38] sm:$0xf]
  %v41 = vld [vmem:[%s0 + $0x3c] sm:$0xf]
  %v42 = vld [vmem:[%s0 + $0x40] sm:$0xf]
  %v43 = vld [vmem:[%s0 + $0x44] sm:$0xf]
  %v44 = vld [vmem:[%s0 + $0x48] sm:$0xf]
  %v45 = vld [vmem:[%s0 + $0x4c] sm:$0xf]
  %v46 = vld [vmem:[%s0 + $0x50] sm:$0xf]
  %v47 = vld [vmem:[%s0 + $0x54] sm:$0xf]
  %v48 = vld [vmem:[%s0 + $0x58] sm:$0xf]
  %v49 = vld [vmem:[%s0 + $0x5c] sm:$0xf]
  %v50 = vld [vmem:[%s0 + $0x60] sm:$0xf]
  %v51 = vld [vmem:[%s0 + $0x64] sm:$0xf]
  %v52 = vld [vmem:[%s0 + $0x68] sm:$0xf]
  %v53 = vld [vmem:[%s0 + $0x6c] sm:$0xf]
  %v54 = vld [vmem:[%s0 + $0x70] sm:$0xf]
  %v55 = vld [vmem:[%s0 + $0x74] sm:$0xf]
  %v56 = vld [vmem:[%s0 + $0x78] sm:$0xf]
  %v57 = vld [vmem:[%s0 + $0x7c] sm:$0xf]
  %v58 = vld [vmem:[%s0 + $0x80] sm:$0xf]
  %v59 = vld [vmem:[%s0 + $0x84] sm:$0xf]
  %v60 = vld [vmem:[%s0 + $0x88] sm:$0xf]
  %v61 = vld [vmem:[%s0 + $0x8c] sm:$0xf]
  %v62 = vld [vmem:[%s0 + $0x90] sm:$0xf]
  %v63 = vld [vmem:[%s0 + $0x94] sm:$0xf]
  %v64 = vld [vmem:[%s0 + $0x98] sm:$0xf]
  %v65 = vld [vmem:[%s0 + $0x9c] sm:$0xf]
  %v66 = vld [vmem:[%s0 + $0xa0] sm:$0xf]
  %v67 = vld [vmem:[%s0 + $0xa4] sm:$0xf]
  %v68 = vld [vmem:[%s0 + $0xa8] sm:$0xf]
  %v69 = vld [vmem:[%s0 + $0xac] sm:$0xf]
  %v70 = vld [vmem:[%s0 + $0xb0] sm:$0xf]
  %v71 = vld [vmem:[%s0 + $0xb4] sm:$0xf]
  %v72 = vld [vmem:[%s0 + $0xb8] sm:$0xf]
  %v73 = vld [vmem:[%s0 + $0xbc] sm:$0xf]
  %v74 = vld [vmem:[%s0 + $0xc0] sm:$0xf]
  %v75 = vld [vmem:[%s0 + $0xc4] sm:$0xf]
  %v76 = vld [vmem:[%s0 + $0xc8] sm:$0xf]
  %v77 = vld [vmem:[%s0 + $0xcc] sm:$0xf]
  %v78 = vld [vmem:[%s0 + $0xd0] sm:$0xf]
  %v79 = vld [vmem:[%s0 + $0xd4] sm:$0xf]
  %v80 = vld [vmem:[%s0 + $0xd8] sm:$0xf]
  %v81 = vld [vmem:[%s0 + $0xdc] sm:$0xf]
  %v82 = vld [vmem:[%s0 + $0xe0] sm:$0xf]
  %v83 = vld [vmem:[%s0 + $0xe4] sm:$0xf]
  %v84 = vld [vmem:[%s0 + $0xe8] sm:$0xf]
  %v85 = vld [vmem:[%s0 + $0xec] sm:$0xf]
  %v86 = vld [vmem:[%s0 + $0xf0] sm:$0xf]
  %v87 = vld [vmem:[%s0 + $0xf4] sm:$0xf]
  %v88 = vld [vmem:[%s0 + $0xf8] sm:$0xf]
  %v89 = vld [vmem:[%s0 + $0xfc] sm:$0xf]
  %v90 = vld [vmem:[%s0 + $0x100] sm:$0xf]
  %v91 = vld [vmem:[%s0 + $0x104] sm:$0xf]
  %v92 = vld [vmem:[%s0 + $0x108] sm:$0xf]
  %v93 = vld [vmem:[%s0 + $0x10c] sm:$0xf]
  %v94 = vld [vmem:[%s0 + $0x110] sm:$0xf]
  %v95 = vld [vmem:[%s0 + $0x114] sm:$0xf]
  %v96 = vld [vmem:[%s0 + $0x118] sm:$0xf]
  %v97 = vld [vmem:[%s0 + $0x11c] sm:$0xf]
  %v98 = vld [vmem:[%s0 + $0x120] sm:$0xf]
  %v99 = vld [vmem:[%s0 + $0x124] sm:$0xf]
  %v100 = vld [vmem:[%s0 + $0x128] sm:$0xf]
  %v101 = vld [vmem:[%s0 + $0x12c] sm:$0xf]
  %v102 = vld [vmem:[%s0 + $0x130] sm:$0xf]
  %v103 = vld [vmem:[%s0 + $0x134] sm:$0xf]
  %v104 = vld [vmem:[%s0 + $0x138] sm:$0xf]
  %v105 = vld [vmem:[%s0 + $0x13c] sm:$0xf]
  %v106 = vld [vmem:[%s0 + $0x140] sm:$0xf]
  %v107 = vld [vmem:[%s0 + $0x144] sm:$0xf]
  %v108 = vld [vmem:[%s0 + $0x148] sm:$0xf]
  %v109 = vld [vmem:[%s0 + $0x14c] sm:$0xf]
  %v110 = vld [vmem:[%s0 + $0x150] sm:$0xf]
  %v111 = vld [vmem:[%s0 + $0x154] sm:$0xf]
  %v112 = vld [vmem:[%s0 + $0x158] sm:$0xf]
  %v113 = vld [vmem:[%s0 + $0x15c] sm:$0xf]
  %v114 = vld [vmem:[%s0 + $0x160] sm:$0xf]
  %v115 = vld [vmem:[%s0 + $0x164] sm:$0xf]
  %v116 = vld [vmem:[%s0 + $0x168] sm:$0xf]
  %v117 = vld [vmem:[%s0 + $0x16c] sm:$0xf]
  %v118 = vld [vmem:[%s0 + $0x170] sm:$0xf]
  %v119 = vld [vmem:[%s0 + $0x174] sm:$0xf]
  %v120 = vld [vmem:[%s0 + $0x178] sm:$0xf]
  %v121 = vld [vmem:[%s0 + $0x17c] sm:$0xf]
  %v122 = vld [vmem:[%s0 + $0x180] sm:$0xf]
  %v123 = vld [vmem:[%s0 + $0x184] sm:$0xf]
  %v124 = vld [vmem:[%s0 + $0x188] sm:$0xf]
  %v125 = vld [vmem:[%s0 + $0x18c] sm:$0xf]
  %v126 = vld [vmem:[%s0 + $0x190] sm:$0xf]
  %v127 = vld [vmem:[%s0 + $0x194] sm:$0xf]
  %v128 = vld [vmem:[%s0 + $0x198] sm:$0xf]
  %v129 = vld [vmem:[%s0 + $0x19c] sm:$0xf]
  %v130 = vld [vmem:[%s0 + $0x1a0] sm:$0xf]
  %v131 = vld [vmem:[%s0 + $0x1a4] sm:$0xf]
  %v132 = vld [vmem:[%s0 + $0x1a8] sm:$0xf]
  %v133 = vld [vmem:[%s0 + $0x1ac] sm:$0xf]
  %v134 = vld [vmem:[%s0 + $0x1b0] sm:$0xf]
  %v135 = vld [vmem:[%s0 + $0x1b4] sm:$0xf]
  %v136 = vld [vmem:[%s0 + $0x1b8] sm:$0xf]
  %v137 = vld [vmem:[%s0 + $0x1bc] sm:$0xf]
  %v138 = vld [vmem:[%s0 + $0x1c0] sm:$0xf]
  %v139 = vld [vmem:[%s0 + $0x1c4] sm:$0xf]
  %v140 = vld [vmem:[%s0 + $0x1c8] sm:$0xf]
  %v141 = vld [vmem:[%s0 + $0x1cc] sm:$0xf]
  %v142 = vld [vmem:[%s0 + $0x1d0] sm:$0xf]
  %v143 = vld [vmem:[%s0 + $0x1d4] sm:$0xf]
  %v144 = vld [vmem:[%s0 + $0x1d8] sm:$0xf]
  %v145 = vld [vmem:[%s0 + $0x1dc] sm:$0xf]
  %v146 = vld [vmem:[%s0 + $0x1e0] sm:$0xf]
  %v147 = vld [vmem:[%s0 + $0x1e4] sm:$0xf]
  %v148 = vld [vmem:[%s0 + $0x1e8] sm:$0xf]
  %v149 = vld [vmem:[%s0 + $0x1ec] sm:$0xf]
  %v150 = vld [vmem:[%s0 + $0x1f0] sm:$0xf]
  %v151 = vld [vmem:[%s0 + $0x1f4] sm:$0xf]
  %v152 = vld [vmem:[%s0 + $0x1f8] sm:$0xf]
  %v153 = vld [vmem:[%s0 + $0x1fc] sm:$0xf]
  %v154 = vld [vmem:[%s0 + $0x200] sm:$0xf]
  %v155 = vld [vmem:[%s0 + $0x204] sm:$0xf]
  %v156 = vld [vmem:[%s0 + $0x208] sm:$0xf]
  %v157 = vld [vmem:[%s0 + $0x20c] sm:$0xf]
  %v158 = vld [vmem:[%s0 + $0x210] sm:$0xf]
  %v159 = vld [vmem:[%s0 + $0x214] sm:$0xf]
  %v160 = vld [vmem:[%s0 + $0x218] sm:$0xf]
  %v161 = vld [vmem:[%s0 + $0x21c] sm:$0xf]
  %v162 = vld [vmem:[%s0 + $0x220] sm:$0xf]
  %v163 = vld [vmem:[%s0 + $0x224] sm:$0xf]
  %v164 = vld [vmem:[%s0 + $0x228] sm:$0xf]
  %v165 = vld [vmem:[%s0 + $0x22c] sm:$0xf]
  %v166 = vld [vmem:[%s0 + $0x230] sm:$0xf]
  %v167 = vld [vmem:[%s0 + $0x234] sm:$0xf]
  %v168 = vld [vmem:[%s0 + $0x238] sm:$0xf]
  %v169 = vld [vmem:[%s0 + $0x23c] sm:$0xf]
  %v170 = vld [vmem:[%s0 + $0x240] sm:$0xf]
  %v171 = vld [vmem:[%s0 + $0x244] sm:$0xf]
  %v172 = vld [vmem:[%s0 + $0x248] sm:$0xf]
  %v173 = vld [vmem:[%s0 + $0x24c] sm:$0xf]
  %v174 = vld [vmem:[%s0 + $0x250] sm:$0xf]
  %v175 = vld [vmem:[%s0 + $0x254] sm:$0xf]
  %v176 = vld [vmem:[%s0 + $0x258] sm:$0xf]
  %v177 = vld [vmem:[%s0 + $0x25c] sm:$0xf]
  %v178 = vld [vmem:[%s0 + $0x260] sm:$0xf]
  %v179 = vld [vmem:[%s0 + $0x264] sm:$0xf]
  %v180 = vld [vmem:[%s0 + $0x268] sm:$0xf]
  %v181 = vld [vmem:[%s0 + $0x26c] sm:$0xf]
  %v182 = vld [vmem:[%s0 + $0x270] sm:$0xf]
  %v183 = vld [vmem:[%s0 + $0x274] sm:$0xf]
  %v184 = vld [vmem:[%s0 + $0x278] sm:$0xf]
  %v185 = vld [vmem:[%s0 + $0x27c] sm:$0xf]
  %v186 = vld [vmem:[%s0 + $0x280] sm:$0xf]
  %v187 = vld [vmem:[%s0 + $0x284] sm:$0xf]
  %v188 = vld [vmem:[%s0 + $0x288] sm:$0xf]
  %v189 = vld [vmem:[%s0 + $0x28c] sm:$0xf]
  %v190 = vld [vmem:[%s0 + $0x290] sm:$0xf]
  %v191 = vld [vmem:[%s0 + $0x294] sm:$0xf]
  %v192 = vld [vmem:[%s0 + $0x298] sm:$0xf]
  %v193 = vld [vmem:[%s0 + $0x29c] sm:$0xf]
  %v194 = vld [vmem:[%s0 + $0x2a0] sm:$0xf]
  %v195 = vld [vmem:[%s0 + $0x2a4] sm:$0xf]
  %v196 = vld [vmem:[%s0 + $0x2a8] sm:$0xf]
  %v197 = vld [vmem:[%s0 + $0x2ac] sm:$0xf]
  %v198 = vld [vmem:[%s0 + $0x2b0] sm:$0xf]
  %v199 = vld [vmem:[%s0 + $0x2b4] sm:$0xf]
  %v200 = vld [vmem:[%s0 + $0x2b8] sm:$0xf]
  %v201 = vld [vmem:[%s0 + $0x2bc] sm:$0xf]
  %v202 = vld [vmem:[%s0 + $0x2c0] sm:$0xf]
  %v203 = vld [vmem:[%s0 + $0x2c4] sm:$0xf]
  %v204 = vld [vmem:[%s0 + $0x2c8] sm:$0xf]
  %v205 = vld [vmem:[%s0 + $0x2cc] sm:$0xf]
  %v206 = vld [vmem:[%s0 + $0x2d0] sm:$0xf]
  %v207 = vld [vmem:[%s0 + $0x2d4] sm:$0xf]
  %v208 = vld [vmem:[%s0 + $0x2d8] sm:$0xf]
  %v209 = vld [vmem:[%s0 + $0x2dc] sm:$0xf]
  %v210 = vld [vmem:[%s0 + $0x2e0] sm:$0xf]
  %v211 = vld [vmem:[%s0 + $0x2e4] sm:$0xf]
  %v212 = vld [vmem:[%s0 + $0x2e8] sm:$0xf]
  %v213 = vld [vmem:[%s0 + $0x2ec] sm:$0xf]
  %v214 = vld [vmem:[%s0 + $0x2f0] sm:$0xf]
  %v215 = vld [vmem:[%s0 + $0x2f4] sm:$0xf]
  %v216 = vld [vmem:[%s0 + $0x2f8] sm:$0xf]
  %v217 = vld [vmem:[%s0 + $0x2fc] sm:$0xf]
  %v218 = vld [vmem:[%s0 + $0x300] sm:$0xf]
  %v219 = vld [vmem:[%s0 + $0x304] sm:$0xf]
  %v220 = vld [vmem:[%s0 + $0x308] sm:$0xf]
  %v221 = vld [vmem:[%s0 + $0x30c] sm:$0xf]
  %v222 = vld [vmem:[%s0 + $0x310] sm:$0xf]
  %v223 = vld [vmem:[%s0 + $0x314] sm:$0xf]
  %v224 = vld [vmem:[%s0 + $0x318] sm:$0xf]
  %v225 = vld [vmem:[%s0 + $0x31c] sm:$0xf]
  %v226 = vld [vmem:[%s0 + $0x320] sm:$0xf]
  %v227 = vld [vmem:[%s0 + $0x324] sm:$0xf]
  %v228 = vld [vmem:[%s0 + $0x328] sm:$0xf]
  %v229 = vld [vmem:[%s0 + $0x32c] sm:$0xf]
  %v230 = vld [vmem:[%s0 + $0x330] sm:$0xf]
  %v231 = vld [vmem:[%s0 + $0x334] sm:$0xf]
  %v232 = vld [vmem:[%s0 + $0x338] sm:$0xf]
  %v233 = vld [vmem:[%s0 + $0x33c] sm:$0xf]
  %v234 = vld [vmem:[%s0 + $0x340] sm:$0xf]
  %v235 = vld [vmem:[%s0 + $0x344] sm:$0xf]
  %v236 = vld [vmem:[%s0 + $0x348] sm:$0xf]
  %v237 = vld [vmem:[%s0 + $0x34c] sm:$0xf]
  %v238 = vld [vmem:[%s0 + $0x350] sm:$0xf]
  %v239 = vld [vmem:[%s0 + $0x354] sm:$0xf]
  %v240 = vld [vmem:[%s0 + $0x358] sm:$0xf]
  %v241 = vld [vmem:[%s0 + $0x35c] sm:$0xf]
  %v242 = vld [vmem:[%s0 + $0x360] sm:$0xf]
  %v243 = vld [vmem:[%s0 + $0x364] sm:$0xf]
  %v244 = vld [vmem:[%s0 + $0x368] sm:$0xf]
  %v245 = vld [vmem:[%s0 + $0x36c] sm:$0xf]
  %v246 = vld [vmem:[%s0 + $0x370] sm:$0xf]
  %v247 = vld [vmem:[%s0 + $0x374] sm:$0xf]
  %v248 = vld [vmem:[%s0 + $0x378] sm:$0xf]
  %v249 = vld [vmem:[%s0 + $0x37c] sm:$0xf]
  %v250 = vld [vmem:[%s0 + $0x380] sm:$0xf]
  %v251 = vld [vmem:[%s0 + $0x384] sm:$0xf]
  %v252 = vld [vmem:[%s0 + $0x388] sm:$0xf]
  %v253 = vld [vmem:[%s0 + $0x38c] sm:$0xf]
  %v254 = vld [vmem:[%s0 + $0x390] sm:$0xf]
  %v255 = vld [vmem:[%s0 + $0x394] sm:$0xf]
  %v256 = vld [vmem:[%s0 + $0x398] sm:$0xf]
  %v257 = vld [vmem:[%s0 + $0x39c] sm:$0xf]
  %v258 = vld [vmem:[%s0 + $0x3a0] sm:$0xf]
  %v259 = vld [vmem:[%s0 + $0x3a4] sm:$0xf]
  %v260 = vld [vmem:[%s0 + $0x3a8] sm:$0xf]
  %v261 = vld [vmem:[%s0 + $0x3ac] sm:$0xf]
  %v262 = vld [vmem:[%s0 + $0x3b0] sm:$0xf]
  %v263 = vld [vmem:[%s0 + $0x3b4] sm:$0xf]
  %v264 = vld [vmem:[%s0 + $0x3b8] sm:$0xf]
  %v265 = vld [vmem:[%s0 + $0x3bc] sm:$0xf]
  %v266 = vld [vmem:[%s0 + $0x3c0] sm:$0xf]
  %v267 = vld [vmem:[%s0 + $0x3c4] sm:$0xf]
  %v268 = vld [vmem:[%s0 + $0x3c8] sm:$0xf]
  %v269 = vld [vmem:[%s0 + $0x3cc] sm:$0xf]
  %v270 = vld [vmem:[%s0 + $0x3d0] sm:$0xf]
  %v271 = vld [vmem:[%s0 + $0x3d4] sm:$0xf]
  %v272 = vld [vmem:[%s0 + $0x3d8] sm:$0xf]
  %v273 = vld [vmem:[%s0 + $0x3dc] sm:$0xf]
  %v274 = vld [vmem:[%s0 + $0x3e0] sm:$0xf]
  %v275 = vld [vmem:[%s0 + $0x3e4] sm:$0xf]
  %v276 = vld [vmem:[%s0 + $0x3e8] sm:$0xf]
  %v277 = vld [vmem:[%s0 + $0x3ec] sm:$0xf]
  %v278 = vld [vmem:[%s0 + $0x3f0] sm:$0xf]
  %v279 = vld [vmem:[%s0 + $0x3f4] sm:$0xf]
  %v280 = vld [vmem:[%s0 + $0x3f8] sm:$0xf]
  %v281 = vld [vmem:[%s0 + $0x3fc] sm:$0xf]
  %v282 = vld [vmem:[%s1] sm:$0xf]
  %v283 = vld [vmem:[%s1 + $0x4] sm:$0xf]
  %v284 = vld [vmem:[%s1 + $0x8] sm:$0xf]
  %v285 = vld [vmem:[%s1 + $0xc] sm:$0xf]
  %v286 = vld [vmem:[%s1 + $0x10] sm:$0xf]
  %v287 = vld [vmem:[%s1 + $0x14] sm:$0xf]
  %v288 = vld [vmem:[%s1 + $0x18] sm:$0xf]
  %v289 = vld [vmem:[%s1 + $0x1c] sm:$0xf]
  %v290 = vld [vmem:[%s1 + $0x20] sm:$0xf]
  %v291 = vld [vmem:[%s1 + $0x24] sm:$0xf]
  %v292 = vld [vmem:[%s1 + $0x28] sm:$0xf]
  %v293 = vld [vmem:[%s1 + $0x2c] sm:$0xf]
  %v294 = vld [vmem:[%s1 + $0x30] sm:$0xf]
  %v295 = vld [vmem:[%s1 + $0x34] sm:$0xf]
  %v296 = vld [vmem:[%s1 + $0x38] sm:$0xf]
  %v297 = vld [vmem:[%s1 + $0x3c] sm:$0xf]
  %v298 = vld [vmem:[%s2] sm:$0x1]
  %v300 = vlaneseq
  %v301 = vshrl.u32 %v300, 7
  %v302 = vsub.s32 0, %v301
  %v303 = vrot.slane %v298, %v302
  %v561 = vunpack.c.l.b16 %v26
  %v562 = vunpack.c.l.b16 %v27
  %v563 = vunpack.c.l.b16 %v28
  %v564 = vunpack.c.l.b16 %v29
  %v565 = vunpack.c.l.b16 %v30
  %v566 = vunpack.c.l.b16 %v31
  %v567 = vunpack.c.l.b16 %v32
  %v568 = vunpack.c.l.b16 %v33
  %v569 = vunpack.c.l.b16 %v34
  %v570 = vunpack.c.l.b16 %v35
  %v571 = vunpack.c.l.b16 %v36
  %v572 = vunpack.c.l.b16 %v37
  %v573 = vunpack.c.l.b16 %v38
  %v574 = vunpack.c.l.b16 %v39
  %v575 = vunpack.c.l.b16 %v40
  %v576 = vunpack.c.l.b16 %v41
  %v577 = vunpack.c.l.b16 %v42
  %v578 = vunpack.c.l.b16 %v43
  %v579 = vunpack.c.l.b16 %v44
  %v580 = vunpack.c.l.b16 %v45
  %v581 = vunpack.c.l.b16 %v46
  %v582 = vunpack.c.l.b16 %v47
  %v583 = vunpack.c.l.b16 %v48
  %v584 = vunpack.c.l.b16 %v49
  %v585 = vunpack.c.l.b16 %v50
  %v586 = vunpack.c.l.b16 %v51
  %v587 = vunpack.c.l.b16 %v52
  %v588 = vunpack.c.l.b16 %v53
  %v589 = vunpack.c.l.b16 %v54
  %v590 = vunpack.c.l.b16 %v55
  %v591 = vunpack.c.l.b16 %v56
  %v592 = vunpack.c.l.b16 %v57
  %v593 = vunpack.c.l.b16 %v58
  %v594 = vunpack.c.l.b16 %v59
  %v595 = vunpack.c.l.b16 %v60
  %v596 = vunpack.c.l.b16 %v61
  %v597 = vunpack.c.l.b16 %v62
  %v598 = vunpack.c.l.b16 %v63
  %v599 = vunpack.c.l.b16 %v64
  %v600 = vunpack.c.l.b16 %v65
  %v601 = vunpack.c.l.b16 %v66
  %v602 = vunpack.c.l.b16 %v67
  %v603 = vunpack.c.l.b16 %v68
  %v604 = vunpack.c.l.b16 %v69
  %v605 = vunpack.c.l.b16 %v70
  %v606 = vunpack.c.l.b16 %v71
  %v607 = vunpack.c.l.b16 %v72
  %v608 = vunpack.c.l.b16 %v73
  %v609 = vunpack.c.l.b16 %v74
  %v610 = vunpack.c.l.b16 %v75
  %v611 = vunpack.c.l.b16 %v76
  %v612 = vunpack.c.l.b16 %v77
  %v613 = vunpack.c.l.b16 %v78
  %v614 = vunpack.c.l.b16 %v79
  %v615 = vunpack.c.l.b16 %v80
  %v616 = vunpack.c.l.b16 %v81
  %v617 = vunpack.c.l.b16 %v82
  %v618 = vunpack.c.l.b16 %v83
  %v619 = vunpack.c.l.b16 %v84
  %v620 = vunpack.c.l.b16 %v85
  %v621 = vunpack.c.l.b16 %v86
  %v622 = vunpack.c.l.b16 %v87
  %v623 = vunpack.c.l.b16 %v88
  %v624 = vunpack.c.l.b16 %v89
  %v625 = vunpack.c.l.b16 %v90
  %v626 = vunpack.c.l.b16 %v91
  %v627 = vunpack.c.l.b16 %v92
  %v628 = vunpack.c.l.b16 %v93
  %v629 = vunpack.c.l.b16 %v94
  %v630 = vunpack.c.l.b16 %v95
  %v631 = vunpack.c.l.b16 %v96
  %v632 = vunpack.c.l.b16 %v97
  %v633 = vunpack.c.l.b16 %v98
  %v634 = vunpack.c.l.b16 %v99
  %v635 = vunpack.c.l.b16 %v100
  %v636 = vunpack.c.l.b16 %v101
  %v637 = vunpack.c.l.b16 %v102
  %v638 = vunpack.c.l.b16 %v103
  %v639 = vunpack.c.l.b16 %v104
  %v640 = vunpack.c.l.b16 %v105
  %v641 = vunpack.c.l.b16 %v106
  %v642 = vunpack.c.l.b16 %v107
  %v643 = vunpack.c.l.b16 %v108
  %v644 = vunpack.c.l.b16 %v109
  %v645 = vunpack.c.l.b16 %v110
  %v646 = vunpack.c.l.b16 %v111
  %v647 = vunpack.c.l.b16 %v112
  %v648 = vunpack.c.l.b16 %v113
  %v649 = vunpack.c.l.b16 %v114
  %v650 = vunpack.c.l.b16 %v115
  %v651 = vunpack.c.l.b16 %v116
  %v652 = vunpack.c.l.b16 %v117
  %v653 = vunpack.c.l.b16 %v118
  %v654 = vunpack.c.l.b16 %v119
  %v655 = vunpack.c.l.b16 %v120
  %v656 = vunpack.c.l.b16 %v121
  %v657 = vunpack.c.l.b16 %v122
  %v658 = vunpack.c.l.b16 %v123
  %v659 = vunpack.c.l.b16 %v124
  %v660 = vunpack.c.l.b16 %v125
  %v661 = vunpack.c.l.b16 %v126
  %v662 = vunpack.c.l.b16 %v127
  %v663 = vunpack.c.l.b16 %v128
  %v664 = vunpack.c.l.b16 %v129
  %v665 = vunpack.c.l.b16 %v130
  %v666 = vunpack.c.l.b16 %v131
  %v667 = vunpack.c.l.b16 %v132
  %v668 = vunpack.c.l.b16 %v133
  %v669 = vunpack.c.l.b16 %v134
  %v670 = vunpack.c.l.b16 %v135
  %v671 = vunpack.c.l.b16 %v136
  %v672 = vunpack.c.l.b16 %v137
  %v673 = vunpack.c.l.b16 %v138
  %v674 = vunpack.c.l.b16 %v139
  %v675 = vunpack.c.l.b16 %v140
  %v676 = vunpack.c.l.b16 %v141
  %v677 = vunpack.c.l.b16 %v142
  %v678 = vunpack.c.l.b16 %v143
  %v679 = vunpack.c.l.b16 %v144
  %v680 = vunpack.c.l.b16 %v145
  %v681 = vunpack.c.l.b16 %v146
  %v682 = vunpack.c.l.b16 %v147
  %v683 = vunpack.c.l.b16 %v148
  %v684 = vunpack.c.l.b16 %v149
  %v685 = vunpack.c.l.b16 %v150
  %v686 = vunpack.c.l.b16 %v151
  %v687 = vunpack.c.l.b16 %v152
  %v688 = vunpack.c.l.b16 %v153
  %v689 = vunpack.c.l.b16 %v154
  %v690 = vunpack.c.l.b16 %v155
  %v691 = vunpack.c.l.b16 %v156
  %v692 = vunpack.c.l.b16 %v157
  %v693 = vunpack.c.l.b16 %v158
  %v694 = vunpack.c.l.b16 %v159
  %v695 = vunpack.c.l.b16 %v160
  %v696 = vunpack.c.l.b16 %v161
  %v697 = vunpack.c.l.b16 %v162
  %v698 = vunpack.c.l.b16 %v163
  %v699 = vunpack.c.l.b16 %v164
  %v700 = vunpack.c.l.b16 %v165
  %v701 = vunpack.c.l.b16 %v166
  %v702 = vunpack.c.l.b16 %v167
  %v703 = vunpack.c.l.b16 %v168
  %v704 = vunpack.c.l.b16 %v169
  %v705 = vunpack.c.l.b16 %v170
  %v706 = vunpack.c.l.b16 %v171
  %v707 = vunpack.c.l.b16 %v172
  %v708 = vunpack.c.l.b16 %v173
  %v709 = vunpack.c.l.b16 %v174
  %v710 = vunpack.c.l.b16 %v175
  %v711 = vunpack.c.l.b16 %v176
  %v712 = vunpack.c.l.b16 %v177
  %v713 = vunpack.c.l.b16 %v178
  %v714 = vunpack.c.l.b16 %v179
  %v715 = vunpack.c.l.b16 %v180
  %v716 = vunpack.c.l.b16 %v181
  %v717 = vunpack.c.l.b16 %v182
  %v718 = vunpack.c.l.b16 %v183
  %v719 = vunpack.c.l.b16 %v184
  %v720 = vunpack.c.l.b16 %v185
  %v721 = vunpack.c.l.b16 %v186
  %v722 = vunpack.c.l.b16 %v187
  %v723 = vunpack.c.l.b16 %v188
  %v724 = vunpack.c.l.b16 %v189
  %v725 = vunpack.c.l.b16 %v190
  %v726 = vunpack.c.l.b16 %v191
  %v727 = vunpack.c.l.b16 %v192
  %v728 = vunpack.c.l.b16 %v193
  %v729 = vunpack.c.l.b16 %v194
  %v730 = vunpack.c.l.b16 %v195
  %v731 = vunpack.c.l.b16 %v196
  %v732 = vunpack.c.l.b16 %v197
  %v733 = vunpack.c.l.b16 %v198
  %v734 = vunpack.c.l.b16 %v199
  %v735 = vunpack.c.l.b16 %v200
  %v736 = vunpack.c.l.b16 %v201
  %v737 = vunpack.c.l.b16 %v202
  %v738 = vunpack.c.l.b16 %v203
  %v739 = vunpack.c.l.b16 %v204
  %v740 = vunpack.c.l.b16 %v205
  %v741 = vunpack.c.l.b16 %v206
  %v742 = vunpack.c.l.b16 %v207
  %v743 = vunpack.c.l.b16 %v208
  %v744 = vunpack.c.l.b16 %v209
  %v745 = vunpack.c.l.b16 %v210
  %v746 = vunpack.c.l.b16 %v211
  %v747 = vunpack.c.l.b16 %v212
  %v748 = vunpack.c.l.b16 %v213
  %v749 = vunpack.c.l.b16 %v214
  %v750 = vunpack.c.l.b16 %v215
  %v751 = vunpack.c.l.b16 %v216
  %v752 = vunpack.c.l.b16 %v217
  %v753 = vunpack.c.l.b16 %v218
  %v754 = vunpack.c.l.b16 %v219
  %v755 = vunpack.c.l.b16 %v220
  %v756 = vunpack.c.l.b16 %v221
  %v757 = vunpack.c.l.b16 %v222
  %v758 = vunpack.c.l.b16 %v223
  %v759 = vunpack.c.l.b16 %v224
  %v760 = vunpack.c.l.b16 %v225
  %v761 = vunpack.c.l.b16 %v226
  %v762 = vunpack.c.l.b16 %v227
  %v763 = vunpack.c.l.b16 %v228
  %v764 = vunpack.c.l.b16 %v229
  %v765 = vunpack.c.l.b16 %v230
  %v766 = vunpack.c.l.b16 %v231
  %v767 = vunpack.c.l.b16 %v232
  %v768 = vunpack.c.l.b16 %v233
  %v769 = vunpack.c.l.b16 %v234
  %v770 = vunpack.c.l.b16 %v235
  %v771 = vunpack.c.l.b16 %v236
  %v772 = vunpack.c.l.b16 %v237
  %v773 = vunpack.c.l.b16 %v238
  %v774 = vunpack.c.l.b16 %v239
  %v775 = vunpack.c.l.b16 %v240
  %v776 = vunpack.c.l.b16 %v241
  %v777 = vunpack.c.l.b16 %v242
  %v778 = vunpack.c.l.b16 %v243
  %v779 = vunpack.c.l.b16 %v244
  %v780 = vunpack.c.l.b16 %v245
  %v781 = vunpack.c.l.b16 %v246
  %v782 = vunpack.c.l.b16 %v247
  %v783 = vunpack.c.l.b16 %v248
  %v784 = vunpack.c.l.b16 %v249
  %v785 = vunpack.c.l.b16 %v250
  %v786 = vunpack.c.l.b16 %v251
  %v787 = vunpack.c.l.b16 %v252
  %v788 = vunpack.c.l.b16 %v253
  %v789 = vunpack.c.l.b16 %v254
  %v790 = vunpack.c.l.b16 %v255
  %v791 = vunpack.c.l.b16 %v256
  %v792 = vunpack.c.l.b16 %v257
  %v793 = vunpack.c.l.b16 %v258
  %v794 = vunpack.c.l.b16 %v259
  %v795 = vunpack.c.l.b16 %v260
  %v796 = vunpack.c.l.b16 %v261
  %v797 = vunpack.c.l.b16 %v262
  %v798 = vunpack.c.l.b16 %v263
  %v799 = vunpack.c.l.b16 %v264
  %v800 = vunpack.c.l.b16 %v265
  %v801 = vunpack.c.l.b16 %v266
  %v802 = vunpack.c.l.b16 %v267
  %v803 = vunpack.c.l.b16 %v268
  %v804 = vunpack.c.l.b16 %v269
  %v805 = vunpack.c.l.b16 %v270
  %v806 = vunpack.c.l.b16 %v271
  %v807 = vunpack.c.l.b16 %v272
  %v808 = vunpack.c.l.b16 %v273
  %v809 = vunpack.c.l.b16 %v274
  %v810 = vunpack.c.l.b16 %v275
  %v811 = vunpack.c.l.b16 %v276
  %v812 = vunpack.c.l.b16 %v277
  %v813 = vunpack.c.l.b16 %v278
  %v814 = vunpack.c.l.b16 %v279
  %v815 = vunpack.c.l.b16 %v280
  %v816 = vunpack.c.l.b16 %v281
  %v817 = vpack.c.b16 %v562, %v561
  %v818 = vpack.c.b16 %v564, %v563
  %v819 = vpack.c.b16 %v566, %v565
  %v820 = vpack.c.b16 %v568, %v567
  %v821 = vpack.c.b16 %v570, %v569
  %v822 = vpack.c.b16 %v572, %v571
  %v823 = vpack.c.b16 %v574, %v573
  %v824 = vpack.c.b16 %v576, %v575
  %v825 = vpack.c.b16 %v578, %v577
  %v826 = vpack.c.b16 %v580, %v579
  %v827 = vpack.c.b16 %v582, %v581
  %v828 = vpack.c.b16 %v584, %v583
  %v829 = vpack.c.b16 %v586, %v585
  %v830 = vpack.c.b16 %v588, %v587
  %v831 = vpack.c.b16 %v590, %v589
  %v832 = vpack.c.b16 %v592, %v591
  %v833 = vpack.c.b16 %v594, %v593
  %v834 = vpack.c.b16 %v596, %v595
  %v835 = vpack.c.b16 %v598, %v597
  %v836 = vpack.c.b16 %v600, %v599
  %v837 = vpack.c.b16 %v602, %v601
  %v838 = vpack.c.b16 %v604, %v603
  %v839 = vpack.c.b16 %v606, %v605
  %v840 = vpack.c.b16 %v608, %v607
  %v841 = vpack.c.b16 %v610, %v609
  %v842 = vpack.c.b16 %v612, %v611
  %v843 = vpack.c.b16 %v614, %v613
  %v844 = vpack.c.b16 %v616, %v615
  %v845 = vpack.c.b16 %v618, %v617
  %v846 = vpack.c.b16 %v620, %v619
  %v847 = vpack.c.b16 %v622, %v621
  %v848 = vpack.c.b16 %v624, %v623
  %v849 = vpack.c.b16 %v626, %v625
  %v850 = vpack.c.b16 %v628, %v627
  %v851 = vpack.c.b16 %v630, %v629
  %v852 = vpack.c.b16 %v632, %v631
  %v853 = vpack.c.b16 %v634, %v633
  %v854 = vpack.c.b16 %v636, %v635
  %v855 = vpack.c.b16 %v638, %v637
  %v856 = vpack.c.b16 %v640, %v639
  %v857 = vpack.c.b16 %v642, %v641
  %v858 = vpack.c.b16 %v644, %v643
  %v859 = vpack.c.b16 %v646, %v645
  %v860 = vpack.c.b16 %v648, %v647
  %v861 = vpack.c.b16 %v650, %v649
  %v862 = vpack.c.b16 %v652, %v651
  %v863 = vpack.c.b16 %v654, %v653
  %v864 = vpack.c.b16 %v656, %v655
  %v865 = vpack.c.b16 %v658, %v657
  %v866 = vpack.c.b16 %v660, %v659
  %v867 = vpack.c.b16 %v662, %v661
  %v868 = vpack.c.b16 %v664, %v663
  %v869 = vpack.c.b16 %v666, %v665
  %v870 = vpack.c.b16 %v668, %v667
  %v871 = vpack.c.b16 %v670, %v669
  %v872 = vpack.c.b16 %v672, %v671
  %v873 = vpack.c.b16 %v674, %v673
  %v874 = vpack.c.b16 %v676, %v675
  %v875 = vpack.c.b16 %v678, %v677
  %v876 = vpack.c.b16 %v680, %v679
  %v877 = vpack.c.b16 %v682, %v681
  %v878 = vpack.c.b16 %v684, %v683
  %v879 = vpack.c.b16 %v686, %v685
  %v880 = vpack.c.b16 %v688, %v687
  %v881 = vpack.c.b16 %v690, %v689
  %v882 = vpack.c.b16 %v692, %v691
  %v883 = vpack.c.b16 %v694, %v693
  %v884 = vpack.c.b16 %v696, %v695
  %v885 = vpack.c.b16 %v698, %v697
  %v886 = vpack.c.b16 %v700, %v699
  %v887 = vpack.c.b16 %v702, %v701
  %v888 = vpack.c.b16 %v704, %v703
  %v889 = vpack.c.b16 %v706, %v705
  %v890 = vpack.c.b16 %v708, %v707
  %v891 = vpack.c.b16 %v710, %v709
  %v892 = vpack.c.b16 %v712, %v711
  %v893 = vpack.c.b16 %v714, %v713
  %v894 = vpack.c.b16 %v716, %v715
  %v895 = vpack.c.b16 %v718, %v717
  %v896 = vpack.c.b16 %v720, %v719
  %v897 = vpack.c.b16 %v722, %v721
  %v898 = vpack.c.b16 %v724, %v723
  %v899 = vpack.c.b16 %v726, %v725
  %v900 = vpack.c.b16 %v728, %v727
  %v901 = vpack.c.b16 %v730, %v729
  %v902 = vpack.c.b16 %v732, %v731
  %v903 = vpack.c.b16 %v734, %v733
  %v904 = vpack.c.b16 %v736, %v735
  %v905 = vpack.c.b16 %v738, %v737
  %v906 = vpack.c.b16 %v740, %v739
  %v907 = vpack.c.b16 %v742, %v741
  %v908 = vpack.c.b16 %v744, %v743
  %v909 = vpack.c.b16 %v746, %v745
  %v910 = vpack.c.b16 %v748, %v747
  %v911 = vpack.c.b16 %v750, %v749
  %v912 = vpack.c.b16 %v752, %v751
  %v913 = vpack.c.b16 %v754, %v753
  %v914 = vpack.c.b16 %v756, %v755
  %v915 = vpack.c.b16 %v758, %v757
  %v916 = vpack.c.b16 %v760, %v759
  %v917 = vpack.c.b16 %v762, %v761
  %v918 = vpack.c.b16 %v764, %v763
  %v919 = vpack.c.b16 %v766, %v765
  %v920 = vpack.c.b16 %v768, %v767
  %v921 = vpack.c.b16 %v770, %v769
  %v922 = vpack.c.b16 %v772, %v771
  %v923 = vpack.c.b16 %v774, %v773
  %v924 = vpack.c.b16 %v776, %v775
  %v925 = vpack.c.b16 %v778, %v777
  %v926 = vpack.c.b16 %v780, %v779
  %v927 = vpack.c.b16 %v782, %v781
  %v928 = vpack.c.b16 %v784, %v783
  %v929 = vpack.c.b16 %v786, %v785
  %v930 = vpack.c.b16 %v788, %v787
  %v931 = vpack.c.b16 %v790, %v789
  %v932 = vpack.c.b16 %v792, %v791
  %v933 = vpack.c.b16 %v794, %v793
  %v934 = vpack.c.b16 %v796, %v795
  %v935 = vpack.c.b16 %v798, %v797
  %v936 = vpack.c.b16 %v800, %v799
  %v937 = vpack.c.b16 %v802, %v801
  %v938 = vpack.c.b16 %v804, %v803
  %v939 = vpack.c.b16 %v806, %v805
  %v940 = vpack.c.b16 %v808, %v807
  %v941 = vpack.c.b16 %v810, %v809
  %v942 = vpack.c.b16 %v812, %v811
  %v943 = vpack.c.b16 %v814, %v813
  %v944 = vpack.c.b16 %v816, %v815
  %v1089 = vunpack.c.l.b16 %v282
  %v1090 = vunpack.c.l.b16 %v283
  %v1091 = vunpack.c.l.b16 %v284
  %v1092 = vunpack.c.l.b16 %v285
  %v1093 = vunpack.c.l.b16 %v286
  %v1094 = vunpack.c.l.b16 %v287
  %v1095 = vunpack.c.l.b16 %v288
  %v1096 = vunpack.c.l.b16 %v289
  %v1097 = vunpack.c.l.b16 %v290
  %v1098 = vunpack.c.l.b16 %v291
  %v1099 = vunpack.c.l.b16 %v292
  %v1100 = vunpack.c.l.b16 %v293
  %v1101 = vunpack.c.l.b16 %v294
  %v1102 = vunpack.c.l.b16 %v295
  %v1103 = vunpack.c.l.b16 %v296
  %v1104 = vunpack.c.l.b16 %v297
  %v1105 = vpack.c.b16 %v1090, %v1089
  %v1106 = vpack.c.b16 %v1092, %v1091
  %v1107 = vpack.c.b16 %v1094, %v1093
  %v1108 = vpack.c.b16 %v1096, %v1095
  %v1109 = vpack.c.b16 %v1098, %v1097
  %v1110 = vpack.c.b16 %v1100, %v1099
  %v1111 = vpack.c.b16 %v1102, %v1101
  %v1112 = vpack.c.b16 %v1104, %v1103
  %1121 = vmatprep.subr.bf16.mxu0 0
  %1122 = vmatpush1.bf16.msra.mxu0 %v1105
  %1123 = vmatprep.subr.bf16.mxu0 0
  %1124 = vmatpush1.bf16.msra.mxu0 %v1106
  %1125 = vmatprep.subr.bf16.mxu0 0
  %1126 = vmatpush1.bf16.msra.mxu0 %v1107
  %1127 = vmatprep.subr.bf16.mxu0 0
  %1128 = vmatpush1.bf16.msra.mxu0 %v1108
  %1129 = vmatprep.subr.bf16.mxu0 0
  %1130 = vmatpush1.bf16.msra.mxu0 %v1109
  %1131 = vmatprep.subr.bf16.mxu0 0
  %1132 = vmatpush1.bf16.msra.mxu0 %v1110
  %1133 = vmatprep.subr.bf16.mxu0 0
  %1134 = vmatpush1.bf16.msra.mxu0 %v1111
  %1135 = vmatprep.subr.bf16.mxu0 0
  %1136 = vmatpush1.bf16.msra.mxu0 %v1112
  %1137 = vmatprep.subr.bf16.mxu0 0
  %1138 = vmatpush1.bf16.msra.mxu0 0
  %1139 = vmatprep.subr.bf16.mxu0 0
  %1140 = vmatpush1.bf16.msra.mxu0 0
  %1141 = vmatprep.subr.bf16.mxu0 0
  %1142 = vmatpush1.bf16.msra.mxu0 0
  %1143 = vmatprep.subr.bf16.mxu0 0
  %1144 = vmatpush1.bf16.msra.mxu0 0
  %1145 = vmatprep.subr.bf16.mxu0 0
  %1146 = vmatpush1.bf16.msra.mxu0 0
  %1147 = vmatprep.subr.bf16.mxu0 0
  %1148 = vmatpush1.bf16.msra.mxu0 0
  %1149 = vmatprep.subr.bf16.mxu0 0
  %1150 = vmatpush1.bf16.msra.mxu0 0
  %1151 = vmatprep.subr.bf16.mxu0 0
  %1152 = vmatpush1.bf16.msra.mxu0 0
  %1153 = vmatprep.mubr.bf16.mxu0 0
  %1154 = vmatmul.mubr.bf16.gmra.mrb[0].mxu0 %v817
  %v1155 = vpop.f32.mrb[0].mxu0
  %v1156 = vadd.f32 %v303, %v1155
  %v1157 = vpop.f32.mrb[0].mxu0
  %v1158 = vpop.f32.mrb[0].mxu0
  %v1159 = vadd.f32 %v303, %v1158
  %v1160 = vpop.f32.mrb[0].mxu0
  %1161 = vmatprep.mubr.bf16.mxu0 0
  %1162 = vmatmul.mubr.bf16.gmra.mrb[0].mxu0 %v818
  %v1163 = vpop.f32.mrb[0].mxu0
  %v1164 = vadd.f32 %v303, %v1163
  %v1165 = vpop.f32.mrb[0].mxu0
  %v1166 = vpop.f32.mrb[0].mxu0
  %v1167 = vadd.f32 %v303, %v1166
  %v1168 = vpop.f32.mrb[0].mxu0
  %1169 = vmatprep.mubr.bf16.mxu0 0
  %1170 = vmatmul.mubr.bf16.gmra.mrb[0].mxu0 %v819
  %v1171 = vpop.f32.mrb[0].mxu0
  %v1172 = vadd.f32 %v303, %v1171
  %v1173 = vpop.f32.mrb[0].mxu0
  %v1174 = vpop.f32.mrb[0].mxu0
  %v1175 = vadd.f32 %v303, %v1174
  %v1176 = vpop.f32.mrb[0].mxu0
  %1177 = vmatprep.mubr.bf16.mxu0 0
  %1178 = vmatmul.mubr.bf16.gmra.mrb[0].mxu0 %v820
  %v1179 = vpop.f32.mrb[0].mxu0
  %v1180 = vadd.f32 %v303, %v1179
  %v1181 = vpop.f32.mrb[0].mxu0
  %v1182 = vpop.f32.mrb[0].mxu0
  %v1183 = vadd.f32 %v303, %v1182
  %v1184 = vpop.f32.mrb[0].mxu0
  %1185 = vmatprep.mubr.bf16.mxu0 0
  %1186 = vmatmul.mubr.bf16.gmra.mrb[0].mxu0 %v821
  %v1187 = vpop.f32.mrb[0].mxu0
  %v1188 = vadd.f32 %v303, %v1187
  %v1189 = vpop.f32.mrb[0].mxu0
  %v1190 = vpop.f32.mrb[0].mxu0
  %v1191 = vadd.f32 %v303, %v1190
  %v1192 = vpop.f32.mrb[0].mxu0
  %1193 = vmatprep.mubr.bf16.mxu0 0
  %1194 = vmatmul.mubr.bf16.gmra.mrb[0].mxu0 %v822
  %v1195 = vpop.f32.mrb[0].mxu0
  %v1196 = vadd.f32 %v303, %v1195
  %v1197 = vpop.f32.mrb[0].mxu0
  %v1198 = vpop.f32.mrb[0].mxu0
  %v1199 = vadd.f32 %v303, %v1198
  %v1200 = vpop.f32.mrb[0].mxu0
  %1201 = vmatprep.mubr.bf16.mxu0 0
  %1202 = vmatmul.mubr.bf16.gmra.mrb[0].mxu0 %v823
  %v1203 = vpop.f32.mrb[0].mxu0
  %v1204 = vadd.f32 %v303, %v1203
  %v1205 = vpop.f32.mrb[0].mxu0
  %v1206 = vpop.f32.mrb[0].mxu0
  %v1207 = vadd.f32 %v303, %v1206
  %v1208 = vpop.f32.mrb[0].mxu0
  %1209 = vmatprep.mubr.bf16.mxu0 0
  %1210 = vmatmul.mubr.bf16.gmra.mrb[0].mxu0 %v824
  %v1211 = vpop.f32.mrb[0].mxu0
  %v1212 = vadd.f32 %v303, %v1211
  %v1213 = vpop.f32.mrb[0].mxu0
  %v1214 = vpop.f32.mrb[0].mxu0
  %v1215 = vadd.f32 %v303, %v1214
  %v1216 = vpop.f32.mrb[0].mxu0
  %1217 = vmatprep.mubr.bf16.mxu0 0
  %1218 = vmatmul.mubr.bf16.gmra.mrb[0].mxu0 %v825
  %v1219 = vpop.f32.mrb[0].mxu0
  %v1220 = vadd.f32 %v303, %v1219
  %v1221 = vpop.f32.mrb[0].mxu0
  %v1222 = vpop.f32.mrb[0].mxu0
  %v1223 = vadd.f32 %v303, %v1222
  %v1224 = vpop.f32.mrb[0].mxu0
  %1225 = vmatprep.mubr.bf16.mxu0 0
  %1226 = vmatmul.mubr.bf16.gmra.mrb[0].mxu0 %v826
  %v1227 = vpop.f32.mrb[0].mxu0
  %v1228 = vadd.f32 %v303, %v1227
  %v1229 = vpop.f32.mrb[0].mxu0
  %v1230 = vpop.f32.mrb[0].mxu0
  %v1231 = vadd.f32 %v303, %v1230
  %v1232 = vpop.f32.mrb[0].mxu0
  %1233 = vmatprep.mubr.bf16.mxu0 0
  %1234 = vmatmul.mubr.bf16.gmra.mrb[0].mxu0 %v827
  %v1235 = vpop.f32.mrb[0].mxu0
  %v1236 = vadd.f32 %v303, %v1235
  %v1237 = vpop.f32.mrb[0].mxu0
  %v1238 = vpop.f32.mrb[0].mxu0
  %v1239 = vadd.f32 %v303, %v1238
  %v1240 = vpop.f32.mrb[0].mxu0
  %1241 = vmatprep.mubr.bf16.mxu0 0
  %1242 = vmatmul.mubr.bf16.gmra.mrb[0].mxu0 %v828
  %v1243 = vpop.f32.mrb[0].mxu0
  %v1244 = vadd.f32 %v303, %v1243
  %v1245 = vpop.f32.mrb[0].mxu0
  %v1246 = vpop.f32.mrb[0].mxu0
  %v1247 = vadd.f32 %v303, %v1246
  %v1248 = vpop.f32.mrb[0].mxu0
  %1249 = vmatprep.mubr.bf16.mxu0 0
  %1250 = vmatmul.mubr.bf16.gmra.mrb[0].mxu0 %v829
  %v1251 = vpop.f32.mrb[0].mxu0
  %v1252 = vadd.f32 %v303, %v1251
  %v1253 = vpop.f32.mrb[0].mxu0
  %v1254 = vpop.f32.mrb[0].mxu0
  %v1255 = vadd.f32 %v303, %v1254
  %v1256 = vpop.f32.mrb[0].mxu0
  %1257 = vmatprep.mubr.bf16.mxu0 0
  %1258 = vmatmul.mubr.bf16.gmra.mrb[0].mxu0 %v830
  %v1259 = vpop.f32.mrb[0].mxu0
  %v1260 = vadd.f32 %v303, %v1259
  %v1261 = vpop.f32.mrb[0].mxu0
  %v1262 = vpop.f32.mrb[0].mxu0
  %v1263 = vadd.f32 %v303, %v1262
  %v1264 = vpop.f32.mrb[0].mxu0
  %1265 = vmatprep.mubr.bf16.mxu0 0
  %1266 = vmatmul.mubr.bf16.gmra.mrb[0].mxu0 %v831
  %v1267 = vpop.f32.mrb[0].mxu0
  %v1268 = vadd.f32 %v303, %v1267
  %v1269 = vpop.f32.mrb[0].mxu0
  %v1270 = vpop.f32.mrb[0].mxu0
  %v1271 = vadd.f32 %v303, %v1270
  %v1272 = vpop.f32.mrb[0].mxu0
  %1273 = vmatprep.mubr.bf16.mxu0 0
  %1274 = vmatmul.mubr.bf16.gmra.mrb[0].mxu0 %v832
  %v1275 = vpop.f32.mrb[0].mxu0
  %v1276 = vadd.f32 %v303, %v1275
  %v1277 = vpop.f32.mrb[0].mxu0
  %v1278 = vpop.f32.mrb[0].mxu0
  %v1279 = vadd.f32 %v303, %v1278
  %v1280 = vpop.f32.mrb[0].mxu0
  %1281 = vmatprep.mubr.bf16.mxu0 0
  %1282 = vmatmul.mubr.bf16.gmra.mrb[0].mxu0 %v833
  %v1283 = vpop.f32.mrb[0].mxu0
  %v1284 = vadd.f32 %v303, %v1283
  %v1285 = vpop.f32.mrb[0].mxu0
  %v1286 = vpop.f32.mrb[0].mxu0
  %v1287 = vadd.f32 %v303, %v1286
  %v1288 = vpop.f32.mrb[0].mxu0
  %1289 = vmatprep.mubr.bf16.mxu0 0
  %1290 = vmatmul.mubr.bf16.gmra.mrb[0].mxu0 %v834
  %v1291 = vpop.f32.mrb[0].mxu0
  %v1292 = vadd.f32 %v303, %v1291
  %v1293 = vpop.f32.mrb[0].mxu0
  %v1294 = vpop.f32.mrb[0].mxu0
  %v1295 = vadd.f32 %v303, %v1294
  %v1296 = vpop.f32.mrb[0].mxu0
  %1297 = vmatprep.mubr.bf16.mxu0 0
  %1298 = vmatmul.mubr.bf16.gmra.mrb[0].mxu0 %v835
  %v1299 = vpop.f32.mrb[0].mxu0
  %v1300 = vadd.f32 %v303, %v1299
  %v1301 = vpop.f32.mrb[0].mxu0
  %v1302 = vpop.f32.mrb[0].mxu0
  %v1303 = vadd.f32 %v303, %v1302
  %v1304 = vpop.f32.mrb[0].mxu0
  %1305 = vmatprep.mubr.bf16.mxu0 0
  %1306 = vmatmul.mubr.bf16.gmra.mrb[0].mxu0 %v836
  %v1307 = vpop.f32.mrb[0].mxu0
  %v1308 = vadd.f32 %v303, %v1307
  %v1309 = vpop.f32.mrb[0].mxu0
  %v1310 = vpop.f32.mrb[0].mxu0
  %v1311 = vadd.f32 %v303, %v1310
  %v1312 = vpop.f32.mrb[0].mxu0
  %1313 = vmatprep.mubr.bf16.mxu0 0
  %1314 = vmatmul.mubr.bf16.gmra.mrb[0].mxu0 %v837
  %v1315 = vpop.f32.mrb[0].mxu0
  %v1316 = vadd.f32 %v303, %v1315
  %v1317 = vpop.f32.mrb[0].mxu0
  %v1318 = vpop.f32.mrb[0].mxu0
  %v1319 = vadd.f32 %v303, %v1318
  %v1320 = vpop.f32.mrb[0].mxu0
  %1321 = vmatprep.mubr.bf16.mxu0 0
  %1322 = vmatmul.mubr.bf16.gmra.mrb[0].mxu0 %v838
  %v1323 = vpop.f32.mrb[0].mxu0
  %v1324 = vadd.f32 %v303, %v1323
  %v1325 = vpop.f32.mrb[0].mxu0
  %v1326 = vpop.f32.mrb[0].mxu0
  %v1327 = vadd.f32 %v303, %v1326
  %v1328 = vpop.f32.mrb[0].mxu0
  %1329 = vmatprep.mubr.bf16.mxu0 0
  %1330 = vmatmul.mubr.bf16.gmra.mrb[0].mxu0 %v839
  %v1331 = vpop.f32.mrb[0].mxu0
  %v1332 = vadd.f32 %v303, %v1331
  %v1333 = vpop.f32.mrb[0].mxu0
  %v1334 = vpop.f32.mrb[0].mxu0
  %v1335 = vadd.f32 %v303, %v1334
  %v1336 = vpop.f32.mrb[0].mxu0
  %1337 = vmatprep.mubr.bf16.mxu0 0
  %1338 = vmatmul.mubr.bf16.gmra.mrb[0].mxu0 %v840
  %v1339 = vpop.f32.mrb[0].mxu0
  %v1340 = vadd.f32 %v303, %v1339
  %v1341 = vpop.f32.mrb[0].mxu0
  %v1342 = vpop.f32.mrb[0].mxu0
  %v1343 = vadd.f32 %v303, %v1342
  %v1344 = vpop.f32.mrb[0].mxu0
  %1345 = vmatprep.mubr.bf16.mxu0 0
  %1346 = vmatmul.mubr.bf16.gmra.mrb[0].mxu0 %v841
  %v1347 = vpop.f32.mrb[0].mxu0
  %v1348 = vadd.f32 %v303, %v1347
  %v1349 = vpop.f32.mrb[0].mxu0
  %v1350 = vpop.f32.mrb[0].mxu0
  %v1351 = vadd.f32 %v303, %v1350
  %v1352 = vpop.f32.mrb[0].mxu0
  %1353 = vmatprep.mubr.bf16.mxu0 0
  %1354 = vmatmul.mubr.bf16.gmra.mrb[0].mxu0 %v842
  %v1355 = vpop.f32.mrb[0].mxu0
  %v1356 = vadd.f32 %v303, %v1355
  %v1357 = vpop.f32.mrb[0].mxu0
  %v1358 = vpop.f32.mrb[0].mxu0
  %v1359 = vadd.f32 %v303, %v1358
  %v1360 = vpop.f32.mrb[0].mxu0
  %1361 = vmatprep.mubr.bf16.mxu0 0
  %1362 = vmatmul.mubr.bf16.gmra.mrb[0].mxu0 %v843
  %v1363 = vpop.f32.mrb[0].mxu0
  %v1364 = vadd.f32 %v303, %v1363
  %v1365 = vpop.f32.mrb[0].mxu0
  %v1366 = vpop.f32.mrb[0].mxu0
  %v1367 = vadd.f32 %v303, %v1366
  %v1368 = vpop.f32.mrb[0].mxu0
  %1369 = vmatprep.mubr.bf16.mxu0 0
  %1370 = vmatmul.mubr.bf16.gmra.mrb[0].mxu0 %v844
  %v1371 = vpop.f32.mrb[0].mxu0
  %v1372 = vadd.f32 %v303, %v1371
  %v1373 = vpop.f32.mrb[0].mxu0
  %v1374 = vpop.f32.mrb[0].mxu0
  %v1375 = vadd.f32 %v303, %v1374
  %v1376 = vpop.f32.mrb[0].mxu0
  %1377 = vmatprep.mubr.bf16.mxu0 0
  %1378 = vmatmul.mubr.bf16.gmra.mrb[0].mxu0 %v845
  %v1379 = vpop.f32.mrb[0].mxu0
  %v1380 = vadd.f32 %v303, %v1379
  %v1381 = vpop.f32.mrb[0].mxu0
  %v1382 = vpop.f32.mrb[0].mxu0
  %v1383 = vadd.f32 %v303, %v1382
  %v1384 = vpop.f32.mrb[0].mxu0
  %1385 = vmatprep.mubr.bf16.mxu0 0
  %1386 = vmatmul.mubr.bf16.gmra.mrb[0].mxu0 %v846
  %v1387 = vpop.f32.mrb[0].mxu0
  %v1388 = vadd.f32 %v303, %v1387
  %v1389 = vpop.f32.mrb[0].mxu0
  %v1390 = vpop.f32.mrb[0].mxu0
  %v1391 = vadd.f32 %v303, %v1390
  %v1392 = vpop.f32.mrb[0].mxu0
  %1393 = vmatprep.mubr.bf16.mxu0 0
  %1394 = vmatmul.mubr.bf16.gmra.mrb[0].mxu0 %v847
  %v1395 = vpop.f32.mrb[0].mxu0
  %v1396 = vadd.f32 %v303, %v1395
  %v1397 = vpop.f32.mrb[0].mxu0
  %v1398 = vpop.f32.mrb[0].mxu0
  %v1399 = vadd.f32 %v303, %v1398
  %v1400 = vpop.f32.mrb[0].mxu0
  %1401 = vmatprep.mubr.bf16.mxu0 0
  %1402 = vmatmul.mubr.bf16.gmra.mrb[0].mxu0 %v848
  %v1403 = vpop.f32.mrb[0].mxu0
  %v1404 = vadd.f32 %v303, %v1403
  %v1405 = vpop.f32.mrb[0].mxu0
  %v1406 = vpop.f32.mrb[0].mxu0
  %v1407 = vadd.f32 %v303, %v1406
  %v1408 = vpop.f32.mrb[0].mxu0
  %1409 = vmatprep.mubr.bf16.mxu0 0
  %1410 = vmatmul.mubr.bf16.gmra.mrb[0].mxu0 %v849
  %v1411 = vpop.f32.mrb[0].mxu0
  %v1412 = vadd.f32 %v303, %v1411
  %v1413 = vpop.f32.mrb[0].mxu0
  %v1414 = vpop.f32.mrb[0].mxu0
  %v1415 = vadd.f32 %v303, %v1414
  %v1416 = vpop.f32.mrb[0].mxu0
  %1417 = vmatprep.mubr.bf16.mxu0 0
  %1418 = vmatmul.mubr.bf16.gmra.mrb[0].mxu0 %v850
  %v1419 = vpop.f32.mrb[0].mxu0
  %v1420 = vadd.f32 %v303, %v1419
  %v1421 = vpop.f32.mrb[0].mxu0
  %v1422 = vpop.f32.mrb[0].mxu0
  %v1423 = vadd.f32 %v303, %v1422
  %v1424 = vpop.f32.mrb[0].mxu0
  %1425 = vmatprep.mubr.bf16.mxu0 0
  %1426 = vmatmul.mubr.bf16.gmra.mrb[0].mxu0 %v851
  %v1427 = vpop.f32.mrb[0].mxu0
  %v1428 = vadd.f32 %v303, %v1427
  %v1429 = vpop.f32.mrb[0].mxu0
  %v1430 = vpop.f32.mrb[0].mxu0
  %v1431 = vadd.f32 %v303, %v1430
  %v1432 = vpop.f32.mrb[0].mxu0
  %1433 = vmatprep.mubr.bf16.mxu0 0
  %1434 = vmatmul.mubr.bf16.gmra.mrb[0].mxu0 %v852
  %v1435 = vpop.f32.mrb[0].mxu0
  %v1436 = vadd.f32 %v303, %v1435
  %v1437 = vpop.f32.mrb[0].mxu0
  %v1438 = vpop.f32.mrb[0].mxu0
  %v1439 = vadd.f32 %v303, %v1438
  %v1440 = vpop.f32.mrb[0].mxu0
  %1441 = vmatprep.mubr.bf16.mxu0 0
  %1442 = vmatmul.mubr.bf16.gmra.mrb[0].mxu0 %v853
  %v1443 = vpop.f32.mrb[0].mxu0
  %v1444 = vadd.f32 %v303, %v1443
  %v1445 = vpop.f32.mrb[0].mxu0
  %v1446 = vpop.f32.mrb[0].mxu0
  %v1447 = vadd.f32 %v303, %v1446
  %v1448 = vpop.f32.mrb[0].mxu0
  %1449 = vmatprep.mubr.bf16.mxu0 0
  %1450 = vmatmul.mubr.bf16.gmra.mrb[0].mxu0 %v854
  %v1451 = vpop.f32.mrb[0].mxu0
  %v1452 = vadd.f32 %v303, %v1451
  %v1453 = vpop.f32.mrb[0].mxu0
  %v1454 = vpop.f32.mrb[0].mxu0
  %v1455 = vadd.f32 %v303, %v1454
  %v1456 = vpop.f32.mrb[0].mxu0
  %1457 = vmatprep.mubr.bf16.mxu0 0
  %1458 = vmatmul.mubr.bf16.gmra.mrb[0].mxu0 %v855
  %v1459 = vpop.f32.mrb[0].mxu0
  %v1460 = vadd.f32 %v303, %v1459
  %v1461 = vpop.f32.mrb[0].mxu0
  %v1462 = vpop.f32.mrb[0].mxu0
  %v1463 = vadd.f32 %v303, %v1462
  %v1464 = vpop.f32.mrb[0].mxu0
  %1465 = vmatprep.mubr.bf16.mxu0 0
  %1466 = vmatmul.mubr.bf16.gmra.mrb[0].mxu0 %v856
  %v1467 = vpop.f32.mrb[0].mxu0
  %v1468 = vadd.f32 %v303, %v1467
  %v1469 = vpop.f32.mrb[0].mxu0
  %v1470 = vpop.f32.mrb[0].mxu0
  %v1471 = vadd.f32 %v303, %v1470
  %v1472 = vpop.f32.mrb[0].mxu0
  %1473 = vmatprep.mubr.bf16.mxu0 0
  %1474 = vmatmul.mubr.bf16.gmra.mrb[0].mxu0 %v857
  %v1475 = vpop.f32.mrb[0].mxu0
  %v1476 = vadd.f32 %v303, %v1475
  %v1477 = vpop.f32.mrb[0].mxu0
  %v1478 = vpop.f32.mrb[0].mxu0
  %v1479 = vadd.f32 %v303, %v1478
  %v1480 = vpop.f32.mrb[0].mxu0
  %1481 = vmatprep.mubr.bf16.mxu0 0
  %1482 = vmatmul.mubr.bf16.gmra.mrb[0].mxu0 %v858
  %v1483 = vpop.f32.mrb[0].mxu0
  %v1484 = vadd.f32 %v303, %v1483
  %v1485 = vpop.f32.mrb[0].mxu0
  %v1486 = vpop.f32.mrb[0].mxu0
  %v1487 = vadd.f32 %v303, %v1486
  %v1488 = vpop.f32.mrb[0].mxu0
  %1489 = vmatprep.mubr.bf16.mxu0 0
  %1490 = vmatmul.mubr.bf16.gmra.mrb[0].mxu0 %v859
  %v1491 = vpop.f32.mrb[0].mxu0
  %v1492 = vadd.f32 %v303, %v1491
  %v1493 = vpop.f32.mrb[0].mxu0
  %v1494 = vpop.f32.mrb[0].mxu0
  %v1495 = vadd.f32 %v303, %v1494
  %v1496 = vpop.f32.mrb[0].mxu0
  %1497 = vmatprep.mubr.bf16.mxu0 0
  %1498 = vmatmul.mubr.bf16.gmra.mrb[0].mxu0 %v860
  %v1499 = vpop.f32.mrb[0].mxu0
  %v1500 = vadd.f32 %v303, %v1499
  %v1501 = vpop.f32.mrb[0].mxu0
  %v1502 = vpop.f32.mrb[0].mxu0
  %v1503 = vadd.f32 %v303, %v1502
  %v1504 = vpop.f32.mrb[0].mxu0
  %1505 = vmatprep.mubr.bf16.mxu0 0
  %1506 = vmatmul.mubr.bf16.gmra.mrb[0].mxu0 %v861
  %v1507 = vpop.f32.mrb[0].mxu0
  %v1508 = vadd.f32 %v303, %v1507
  %v1509 = vpop.f32.mrb[0].mxu0
  %v1510 = vpop.f32.mrb[0].mxu0
  %v1511 = vadd.f32 %v303, %v1510
  %v1512 = vpop.f32.mrb[0].mxu0
  %1513 = vmatprep.mubr.bf16.mxu0 0
  %1514 = vmatmul.mubr.bf16.gmra.mrb[0].mxu0 %v862
  %v1515 = vpop.f32.mrb[0].mxu0
  %v1516 = vadd.f32 %v303, %v1515
  %v1517 = vpop.f32.mrb[0].mxu0
  %v1518 = vpop.f32.mrb[0].mxu0
  %v1519 = vadd.f32 %v303, %v1518
  %v1520 = vpop.f32.mrb[0].mxu0
  %1521 = vmatprep.mubr.bf16.mxu0 0
  %1522 = vmatmul.mubr.bf16.gmra.mrb[0].mxu0 %v863
  %v1523 = vpop.f32.mrb[0].mxu0
  %v1524 = vadd.f32 %v303, %v1523
  %v1525 = vpop.f32.mrb[0].mxu0
  %v1526 = vpop.f32.mrb[0].mxu0
  %v1527 = vadd.f32 %v303, %v1526
  %v1528 = vpop.f32.mrb[0].mxu0
  %1529 = vmatprep.mubr.bf16.mxu0 0
  %1530 = vmatmul.mubr.bf16.gmra.mrb[0].mxu0 %v864
  %v1531 = vpop.f32.mrb[0].mxu0
  %v1532 = vadd.f32 %v303, %v1531
  %v1533 = vpop.f32.mrb[0].mxu0
  %v1534 = vpop.f32.mrb[0].mxu0
  %v1535 = vadd.f32 %v303, %v1534
  %v1536 = vpop.f32.mrb[0].mxu0
  %1537 = vmatprep.mubr.bf16.mxu0 0
  %1538 = vmatmul.mubr.bf16.gmra.mrb[0].mxu0 %v865
  %v1539 = vpop.f32.mrb[0].mxu0
  %v1540 = vadd.f32 %v303, %v1539
  %v1541 = vpop.f32.mrb[0].mxu0
  %v1542 = vpop.f32.mrb[0].mxu0
  %v1543 = vadd.f32 %v303, %v1542
  %v1544 = vpop.f32.mrb[0].mxu0
  %1545 = vmatprep.mubr.bf16.mxu0 0
  %1546 = vmatmul.mubr.bf16.gmra.mrb[0].mxu0 %v866
  %v1547 = vpop.f32.mrb[0].mxu0
  %v1548 = vadd.f32 %v303, %v1547
  %v1549 = vpop.f32.mrb[0].mxu0
  %v1550 = vpop.f32.mrb[0].mxu0
  %v1551 = vadd.f32 %v303, %v1550
  %v1552 = vpop.f32.mrb[0].mxu0
  %1553 = vmatprep.mubr.bf16.mxu0 0
  %1554 = vmatmul.mubr.bf16.gmra.mrb[0].mxu0 %v867
  %v1555 = vpop.f32.mrb[0].mxu0
  %v1556 = vadd.f32 %v303, %v1555
  %v1557 = vpop.f32.mrb[0].mxu0
  %v1558 = vpop.f32.mrb[0].mxu0
  %v1559 = vadd.f32 %v303, %v1558
  %v1560 = vpop.f32.mrb[0].mxu0
  %1561 = vmatprep.mubr.bf16.mxu0 0
  %1562 = vmatmul.mubr.bf16.gmra.mrb[0].mxu0 %v868
  %v1563 = vpop.f32.mrb[0].mxu0
  %v1564 = vadd.f32 %v303, %v1563
  %v1565 = vpop.f32.mrb[0].mxu0
  %v1566 = vpop.f32.mrb[0].mxu0
  %v1567 = vadd.f32 %v303, %v1566
  %v1568 = vpop.f32.mrb[0].mxu0
  %1569 = vmatprep.mubr.bf16.mxu0 0
  %1570 = vmatmul.mubr.bf16.gmra.mrb[0].mxu0 %v869
  %v1571 = vpop.f32.mrb[0].mxu0
  %v1572 = vadd.f32 %v303, %v1571
  %v1573 = vpop.f32.mrb[0].mxu0
  %v1574 = vpop.f32.mrb[0].mxu0
  %v1575 = vadd.f32 %v303, %v1574
  %v1576 = vpop.f32.mrb[0].mxu0
  %1577 = vmatprep.mubr.bf16.mxu0 0
  %1578 = vmatmul.mubr.bf16.gmra.mrb[0].mxu0 %v870
  %v1579 = vpop.f32.mrb[0].mxu0
  %v1580 = vadd.f32 %v303, %v1579
  %v1581 = vpop.f32.mrb[0].mxu0
  %v1582 = vpop.f32.mrb[0].mxu0
  %v1583 = vadd.f32 %v303, %v1582
  %v1584 = vpop.f32.mrb[0].mxu0
  %1585 = vmatprep.mubr.bf16.mxu0 0
  %1586 = vmatmul.mubr.bf16.gmra.mrb[0].mxu0 %v871
  %v1587 = vpop.f32.mrb[0].mxu0
  %v1588 = vadd.f32 %v303, %v1587
  %v1589 = vpop.f32.mrb[0].mxu0
  %v1590 = vpop.f32.mrb[0].mxu0
  %v1591 = vadd.f32 %v303, %v1590
  %v1592 = vpop.f32.mrb[0].mxu0
  %1593 = vmatprep.mubr.bf16.mxu0 0
  %1594 = vmatmul.mubr.bf16.gmra.mrb[0].mxu0 %v872
  %v1595 = vpop.f32.mrb[0].mxu0
  %v1596 = vadd.f32 %v303, %v1595
  %v1597 = vpop.f32.mrb[0].mxu0
  %v1598 = vpop.f32.mrb[0].mxu0
  %v1599 = vadd.f32 %v303, %v1598
  %v1600 = vpop.f32.mrb[0].mxu0
  %1601 = vmatprep.mubr.bf16.mxu0 0
  %1602 = vmatmul.mubr.bf16.gmra.mrb[0].mxu0 %v873
  %v1603 = vpop.f32.mrb[0].mxu0
  %v1604 = vadd.f32 %v303, %v1603
  %v1605 = vpop.f32.mrb[0].mxu0
  %v1606 = vpop.f32.mrb[0].mxu0
  %v1607 = vadd.f32 %v303, %v1606
  %v1608 = vpop.f32.mrb[0].mxu0
  %1609 = vmatprep.mubr.bf16.mxu0 0
  %1610 = vmatmul.mubr.bf16.gmra.mrb[0].mxu0 %v874
  %v1611 = vpop.f32.mrb[0].mxu0
  %v1612 = vadd.f32 %v303, %v1611
  %v1613 = vpop.f32.mrb[0].mxu0
  %v1614 = vpop.f32.mrb[0].mxu0
  %v1615 = vadd.f32 %v303, %v1614
  %v1616 = vpop.f32.mrb[0].mxu0
  %1617 = vmatprep.mubr.bf16.mxu0 0
  %1618 = vmatmul.mubr.bf16.gmra.mrb[0].mxu0 %v875
  %v1619 = vpop.f32.mrb[0].mxu0
  %v1620 = vadd.f32 %v303, %v1619
  %v1621 = vpop.f32.mrb[0].mxu0
  %v1622 = vpop.f32.mrb[0].mxu0
  %v1623 = vadd.f32 %v303, %v1622
  %v1624 = vpop.f32.mrb[0].mxu0
  %1625 = vmatprep.mubr.bf16.mxu0 0
  %1626 = vmatmul.mubr.bf16.gmra.mrb[0].mxu0 %v876
  %v1627 = vpop.f32.mrb[0].mxu0
  %v1628 = vadd.f32 %v303, %v1627
  %v1629 = vpop.f32.mrb[0].mxu0
  %v1630 = vpop.f32.mrb[0].mxu0
  %v1631 = vadd.f32 %v303, %v1630
  %v1632 = vpop.f32.mrb[0].mxu0
  %1633 = vmatprep.mubr.bf16.mxu0 0
  %1634 = vmatmul.mubr.bf16.gmra.mrb[0].mxu0 %v877
  %v1635 = vpop.f32.mrb[0].mxu0
  %v1636 = vadd.f32 %v303, %v1635
  %v1637 = vpop.f32.mrb[0].mxu0
  %v1638 = vpop.f32.mrb[0].mxu0
  %v1639 = vadd.f32 %v303, %v1638
  %v1640 = vpop.f32.mrb[0].mxu0
  %1641 = vmatprep.mubr.bf16.mxu0 0
  %1642 = vmatmul.mubr.bf16.gmra.mrb[0].mxu0 %v878
  %v1643 = vpop.f32.mrb[0].mxu0
  %v1644 = vadd.f32 %v303, %v1643
  %v1645 = vpop.f32.mrb[0].mxu0
  %v1646 = vpop.f32.mrb[0].mxu0
  %v1647 = vadd.f32 %v303, %v1646
  %v1648 = vpop.f32.mrb[0].mxu0
  %1649 = vmatprep.mubr.bf16.mxu0 0
  %1650 = vmatmul.mubr.bf16.gmra.mrb[0].mxu0 %v879
  %v1651 = vpop.f32.mrb[0].mxu0
  %v1652 = vadd.f32 %v303, %v1651
  %v1653 = vpop.f32.mrb[0].mxu0
  %v1654 = vpop.f32.mrb[0].mxu0
  %v1655 = vadd.f32 %v303, %v1654
  %v1656 = vpop.f32.mrb[0].mxu0
  %1657 = vmatprep.mubr.bf16.mxu0 0
  %1658 = vmatmul.mubr.bf16.gmra.mrb[0].mxu0 %v880
  %v1659 = vpop.f32.mrb[0].mxu0
  %v1660 = vadd.f32 %v303, %v1659
  %v1661 = vpop.f32.mrb[0].mxu0
  %v1662 = vpop.f32.mrb[0].mxu0
  %v1663 = vadd.f32 %v303, %v1662
  %v1664 = vpop.f32.mrb[0].mxu0
  %1665 = vmatprep.mubr.bf16.mxu0 0
  %1666 = vmatmul.mubr.bf16.gmra.mrb[0].mxu0 %v881
  %v1667 = vpop.f32.mrb[0].mxu0
  %v1668 = vadd.f32 %v303, %v1667
  %v1669 = vpop.f32.mrb[0].mxu0
  %v1670 = vpop.f32.mrb[0].mxu0
  %v1671 = vadd.f32 %v303, %v1670
  %v1672 = vpop.f32.mrb[0].mxu0
  %1673 = vmatprep.mubr.bf16.mxu0 0
  %1674 = vmatmul.mubr.bf16.gmra.mrb[0].mxu0 %v882
  %v1675 = vpop.f32.mrb[0].mxu0
  %v1676 = vadd.f32 %v303, %v1675
  %v1677 = vpop.f32.mrb[0].mxu0
  %v1678 = vpop.f32.mrb[0].mxu0
  %v1679 = vadd.f32 %v303, %v1678
  %v1680 = vpop.f32.mrb[0].mxu0
  %1681 = vmatprep.mubr.bf16.mxu0 0
  %1682 = vmatmul.mubr.bf16.gmra.mrb[0].mxu0 %v883
  %v1683 = vpop.f32.mrb[0].mxu0
  %v1684 = vadd.f32 %v303, %v1683
  %v1685 = vpop.f32.mrb[0].mxu0
  %v1686 = vpop.f32.mrb[0].mxu0
  %v1687 = vadd.f32 %v303, %v1686
  %v1688 = vpop.f32.mrb[0].mxu0
  %1689 = vmatprep.mubr.bf16.mxu0 0
  %1690 = vmatmul.mubr.bf16.gmra.mrb[0].mxu0 %v884
  %v1691 = vpop.f32.mrb[0].mxu0
  %v1692 = vadd.f32 %v303, %v1691
  %v1693 = vpop.f32.mrb[0].mxu0
  %v1694 = vpop.f32.mrb[0].mxu0
  %v1695 = vadd.f32 %v303, %v1694
  %v1696 = vpop.f32.mrb[0].mxu0
  %1697 = vmatprep.mubr.bf16.mxu0 0
  %1698 = vmatmul.mubr.bf16.gmra.mrb[0].mxu0 %v885
  %v1699 = vpop.f32.mrb[0].mxu0
  %v1700 = vadd.f32 %v303, %v1699
  %v1701 = vpop.f32.mrb[0].mxu0
  %v1702 = vpop.f32.mrb[0].mxu0
  %v1703 = vadd.f32 %v303, %v1702
  %v1704 = vpop.f32.mrb[0].mxu0
  %1705 = vmatprep.mubr.bf16.mxu0 0
  %1706 = vmatmul.mubr.bf16.gmra.mrb[0].mxu0 %v886
  %v1707 = vpop.f32.mrb[0].mxu0
  %v1708 = vadd.f32 %v303, %v1707
  %v1709 = vpop.f32.mrb[0].mxu0
  %v1710 = vpop.f32.mrb[0].mxu0
  %v1711 = vadd.f32 %v303, %v1710
  %v1712 = vpop.f32.mrb[0].mxu0
  %1713 = vmatprep.mubr.bf16.mxu0 0
  %1714 = vmatmul.mubr.bf16.gmra.mrb[0].mxu0 %v887
  %v1715 = vpop.f32.mrb[0].mxu0
  %v1716 = vadd.f32 %v303, %v1715
  %v1717 = vpop.f32.mrb[0].mxu0
  %v1718 = vpop.f32.mrb[0].mxu0
  %v1719 = vadd.f32 %v303, %v1718
  %v1720 = vpop.f32.mrb[0].mxu0
  %1721 = vmatprep.mubr.bf16.mxu0 0
  %1722 = vmatmul.mubr.bf16.gmra.mrb[0].mxu0 %v888
  %v1723 = vpop.f32.mrb[0].mxu0
  %v1724 = vadd.f32 %v303, %v1723
  %v1725 = vpop.f32.mrb[0].mxu0
  %v1726 = vpop.f32.mrb[0].mxu0
  %v1727 = vadd.f32 %v303, %v1726
  %v1728 = vpop.f32.mrb[0].mxu0
  %1729 = vmatprep.mubr.bf16.mxu0 0
  %1730 = vmatmul.mubr.bf16.gmra.mrb[0].mxu0 %v889
  %v1731 = vpop.f32.mrb[0].mxu0
  %v1732 = vadd.f32 %v303, %v1731
  %v1733 = vpop.f32.mrb[0].mxu0
  %v1734 = vpop.f32.mrb[0].mxu0
  %v1735 = vadd.f32 %v303, %v1734
  %v1736 = vpop.f32.mrb[0].mxu0
  %1737 = vmatprep.mubr.bf16.mxu0 0
  %1738 = vmatmul.mubr.bf16.gmra.mrb[0].mxu0 %v890
  %v1739 = vpop.f32.mrb[0].mxu0
  %v1740 = vadd.f32 %v303, %v1739
  %v1741 = vpop.f32.mrb[0].mxu0
  %v1742 = vpop.f32.mrb[0].mxu0
  %v1743 = vadd.f32 %v303, %v1742
  %v1744 = vpop.f32.mrb[0].mxu0
  %1745 = vmatprep.mubr.bf16.mxu0 0
  %1746 = vmatmul.mubr.bf16.gmra.mrb[0].mxu0 %v891
  %v1747 = vpop.f32.mrb[0].mxu0
  %v1748 = vadd.f32 %v303, %v1747
  %v1749 = vpop.f32.mrb[0].mxu0
  %v1750 = vpop.f32.mrb[0].mxu0
  %v1751 = vadd.f32 %v303, %v1750
  %v1752 = vpop.f32.mrb[0].mxu0
  %1753 = vmatprep.mubr.bf16.mxu0 0
  %1754 = vmatmul.mubr.bf16.gmra.mrb[0].mxu0 %v892
  %v1755 = vpop.f32.mrb[0].mxu0
  %v1756 = vadd.f32 %v303, %v1755
  %v1757 = vpop.f32.mrb[0].mxu0
  %v1758 = vpop.f32.mrb[0].mxu0
  %v1759 = vadd.f32 %v303, %v1758
  %v1760 = vpop.f32.mrb[0].mxu0
  %1761 = vmatprep.mubr.bf16.mxu0 0
  %1762 = vmatmul.mubr.bf16.gmra.mrb[0].mxu0 %v893
  %v1763 = vpop.f32.mrb[0].mxu0
  %v1764 = vadd.f32 %v303, %v1763
  %v1765 = vpop.f32.mrb[0].mxu0
  %v1766 = vpop.f32.mrb[0].mxu0
  %v1767 = vadd.f32 %v303, %v1766
  %v1768 = vpop.f32.mrb[0].mxu0
  %1769 = vmatprep.mubr.bf16.mxu0 0
  %1770 = vmatmul.mubr.bf16.gmra.mrb[0].mxu0 %v894
  %v1771 = vpop.f32.mrb[0].mxu0
  %v1772 = vadd.f32 %v303, %v1771
  %v1773 = vpop.f32.mrb[0].mxu0
  %v1774 = vpop.f32.mrb[0].mxu0
  %v1775 = vadd.f32 %v303, %v1774
  %v1776 = vpop.f32.mrb[0].mxu0
  %1777 = vmatprep.mubr.bf16.mxu0 0
  %1778 = vmatmul.mubr.bf16.gmra.mrb[0].mxu0 %v895
  %v1779 = vpop.f32.mrb[0].mxu0
  %v1780 = vadd.f32 %v303, %v1779
  %v1781 = vpop.f32.mrb[0].mxu0
  %v1782 = vpop.f32.mrb[0].mxu0
  %v1783 = vadd.f32 %v303, %v1782
  %v1784 = vpop.f32.mrb[0].mxu0
  %1785 = vmatprep.mubr.bf16.mxu0 0
  %1786 = vmatmul.mubr.bf16.gmra.mrb[0].mxu0 %v896
  %v1787 = vpop.f32.mrb[0].mxu0
  %v1788 = vadd.f32 %v303, %v1787
  %v1789 = vpop.f32.mrb[0].mxu0
  %v1790 = vpop.f32.mrb[0].mxu0
  %v1791 = vadd.f32 %v303, %v1790
  %v1792 = vpop.f32.mrb[0].mxu0
  %1793 = vmatprep.mubr.bf16.mxu0 0
  %1794 = vmatmul.mubr.bf16.gmra.mrb[0].mxu0 %v897
  %v1795 = vpop.f32.mrb[0].mxu0
  %v1796 = vadd.f32 %v303, %v1795
  %v1797 = vpop.f32.mrb[0].mxu0
  %v1798 = vpop.f32.mrb[0].mxu0
  %v1799 = vadd.f32 %v303, %v1798
  %v1800 = vpop.f32.mrb[0].mxu0
  %1801 = vmatprep.mubr.bf16.mxu0 0
  %1802 = vmatmul.mubr.bf16.gmra.mrb[0].mxu0 %v898
  %v1803 = vpop.f32.mrb[0].mxu0
  %v1804 = vadd.f32 %v303, %v1803
  %v1805 = vpop.f32.mrb[0].mxu0
  %v1806 = vpop.f32.mrb[0].mxu0
  %v1807 = vadd.f32 %v303, %v1806
  %v1808 = vpop.f32.mrb[0].mxu0
  %1809 = vmatprep.mubr.bf16.mxu0 0
  %1810 = vmatmul.mubr.bf16.gmra.mrb[0].mxu0 %v899
  %v1811 = vpop.f32.mrb[0].mxu0
  %v1812 = vadd.f32 %v303, %v1811
  %v1813 = vpop.f32.mrb[0].mxu0
  %v1814 = vpop.f32.mrb[0].mxu0
  %v1815 = vadd.f32 %v303, %v1814
  %v1816 = vpop.f32.mrb[0].mxu0
  %1817 = vmatprep.mubr.bf16.mxu0 0
  %1818 = vmatmul.mubr.bf16.gmra.mrb[0].mxu0 %v900
  %v1819 = vpop.f32.mrb[0].mxu0
  %v1820 = vadd.f32 %v303, %v1819
  %v1821 = vpop.f32.mrb[0].mxu0
  %v1822 = vpop.f32.mrb[0].mxu0
  %v1823 = vadd.f32 %v303, %v1822
  %v1824 = vpop.f32.mrb[0].mxu0
  %1825 = vmatprep.mubr.bf16.mxu0 0
  %1826 = vmatmul.mubr.bf16.gmra.mrb[0].mxu0 %v901
  %v1827 = vpop.f32.mrb[0].mxu0
  %v1828 = vadd.f32 %v303, %v1827
  %v1829 = vpop.f32.mrb[0].mxu0
  %v1830 = vpop.f32.mrb[0].mxu0
  %v1831 = vadd.f32 %v303, %v1830
  %v1832 = vpop.f32.mrb[0].mxu0
  %1833 = vmatprep.mubr.bf16.mxu0 0
  %1834 = vmatmul.mubr.bf16.gmra.mrb[0].mxu0 %v902
  %v1835 = vpop.f32.mrb[0].mxu0
  %v1836 = vadd.f32 %v303, %v1835
  %v1837 = vpop.f32.mrb[0].mxu0
  %v1838 = vpop.f32.mrb[0].mxu0
  %v1839 = vadd.f32 %v303, %v1838
  %v1840 = vpop.f32.mrb[0].mxu0
  %1841 = vmatprep.mubr.bf16.mxu0 0
  %1842 = vmatmul.mubr.bf16.gmra.mrb[0].mxu0 %v903
  %v1843 = vpop.f32.mrb[0].mxu0
  %v1844 = vadd.f32 %v303, %v1843
  %v1845 = vpop.f32.mrb[0].mxu0
  %v1846 = vpop.f32.mrb[0].mxu0
  %v1847 = vadd.f32 %v303, %v1846
  %v1848 = vpop.f32.mrb[0].mxu0
  %1849 = vmatprep.mubr.bf16.mxu0 0
  %1850 = vmatmul.mubr.bf16.gmra.mrb[0].mxu0 %v904
  %v1851 = vpop.f32.mrb[0].mxu0
  %v1852 = vadd.f32 %v303, %v1851
  %v1853 = vpop.f32.mrb[0].mxu0
  %v1854 = vpop.f32.mrb[0].mxu0
  %v1855 = vadd.f32 %v303, %v1854
  %v1856 = vpop.f32.mrb[0].mxu0
  %1857 = vmatprep.mubr.bf16.mxu0 0
  %1858 = vmatmul.mubr.bf16.gmra.mrb[0].mxu0 %v905
  %v1859 = vpop.f32.mrb[0].mxu0
  %v1860 = vadd.f32 %v303, %v1859
  %v1861 = vpop.f32.mrb[0].mxu0
  %v1862 = vpop.f32.mrb[0].mxu0
  %v1863 = vadd.f32 %v303, %v1862
  %v1864 = vpop.f32.mrb[0].mxu0
  %1865 = vmatprep.mubr.bf16.mxu0 0
  %1866 = vmatmul.mubr.bf16.gmra.mrb[0].mxu0 %v906
  %v1867 = vpop.f32.mrb[0].mxu0
  %v1868 = vadd.f32 %v303, %v1867
  %v1869 = vpop.f32.mrb[0].mxu0
  %v1870 = vpop.f32.mrb[0].mxu0
  %v1871 = vadd.f32 %v303, %v1870
  %v1872 = vpop.f32.mrb[0].mxu0
  %1873 = vmatprep.mubr.bf16.mxu0 0
  %1874 = vmatmul.mubr.bf16.gmra.mrb[0].mxu0 %v907
  %v1875 = vpop.f32.mrb[0].mxu0
  %v1876 = vadd.f32 %v303, %v1875
  %v1877 = vpop.f32.mrb[0].mxu0
  %v1878 = vpop.f32.mrb[0].mxu0
  %v1879 = vadd.f32 %v303, %v1878
  %v1880 = vpop.f32.mrb[0].mxu0
  %1881 = vmatprep.mubr.bf16.mxu0 0
  %1882 = vmatmul.mubr.bf16.gmra.mrb[0].mxu0 %v908
  %v1883 = vpop.f32.mrb[0].mxu0
  %v1884 = vadd.f32 %v303, %v1883
  %v1885 = vpop.f32.mrb[0].mxu0
  %v1886 = vpop.f32.mrb[0].mxu0
  %v1887 = vadd.f32 %v303, %v1886
  %v1888 = vpop.f32.mrb[0].mxu0
  %1889 = vmatprep.mubr.bf16.mxu0 0
  %1890 = vmatmul.mubr.bf16.gmra.mrb[0].mxu0 %v909
  %v1891 = vpop.f32.mrb[0].mxu0
  %v1892 = vadd.f32 %v303, %v1891
  %v1893 = vpop.f32.mrb[0].mxu0
  %v1894 = vpop.f32.mrb[0].mxu0
  %v1895 = vadd.f32 %v303, %v1894
  %v1896 = vpop.f32.mrb[0].mxu0
  %1897 = vmatprep.mubr.bf16.mxu0 0
  %1898 = vmatmul.mubr.bf16.gmra.mrb[0].mxu0 %v910
  %v1899 = vpop.f32.mrb[0].mxu0
  %v1900 = vadd.f32 %v303, %v1899
  %v1901 = vpop.f32.mrb[0].mxu0
  %v1902 = vpop.f32.mrb[0].mxu0
  %v1903 = vadd.f32 %v303, %v1902
  %v1904 = vpop.f32.mrb[0].mxu0
  %1905 = vmatprep.mubr.bf16.mxu0 0
  %1906 = vmatmul.mubr.bf16.gmra.mrb[0].mxu0 %v911
  %v1907 = vpop.f32.mrb[0].mxu0
  %v1908 = vadd.f32 %v303, %v1907
  %v1909 = vpop.f32.mrb[0].mxu0
  %v1910 = vpop.f32.mrb[0].mxu0
  %v1911 = vadd.f32 %v303, %v1910
  %v1912 = vpop.f32.mrb[0].mxu0
  %1913 = vmatprep.mubr.bf16.mxu0 0
  %1914 = vmatmul.mubr.bf16.gmra.mrb[0].mxu0 %v912
  %v1915 = vpop.f32.mrb[0].mxu0
  %v1916 = vadd.f32 %v303, %v1915
  %v1917 = vpop.f32.mrb[0].mxu0
  %v1918 = vpop.f32.mrb[0].mxu0
  %v1919 = vadd.f32 %v303, %v1918
  %v1920 = vpop.f32.mrb[0].mxu0
  %1921 = vmatprep.mubr.bf16.mxu0 0
  %1922 = vmatmul.mubr.bf16.gmra.mrb[0].mxu0 %v913
  %v1923 = vpop.f32.mrb[0].mxu0
  %v1924 = vadd.f32 %v303, %v1923
  %v1925 = vpop.f32.mrb[0].mxu0
  %v1926 = vpop.f32.mrb[0].mxu0
  %v1927 = vadd.f32 %v303, %v1926
  %v1928 = vpop.f32.mrb[0].mxu0
  %1929 = vmatprep.mubr.bf16.mxu0 0
  %1930 = vmatmul.mubr.bf16.gmra.mrb[0].mxu0 %v914
  %v1931 = vpop.f32.mrb[0].mxu0
  %v1932 = vadd.f32 %v303, %v1931
  %v1933 = vpop.f32.mrb[0].mxu0
  %v1934 = vpop.f32.mrb[0].mxu0
  %v1935 = vadd.f32 %v303, %v1934
  %v1936 = vpop.f32.mrb[0].mxu0
  %1937 = vmatprep.mubr.bf16.mxu0 0
  %1938 = vmatmul.mubr.bf16.gmra.mrb[0].mxu0 %v915
  %v1939 = vpop.f32.mrb[0].mxu0
  %v1940 = vadd.f32 %v303, %v1939
  %v1941 = vpop.f32.mrb[0].mxu0
  %v1942 = vpop.f32.mrb[0].mxu0
  %v1943 = vadd.f32 %v303, %v1942
  %v1944 = vpop.f32.mrb[0].mxu0
  %1945 = vmatprep.mubr.bf16.mxu0 0
  %1946 = vmatmul.mubr.bf16.gmra.mrb[0].mxu0 %v916
  %v1947 = vpop.f32.mrb[0].mxu0
  %v1948 = vadd.f32 %v303, %v1947
  %v1949 = vpop.f32.mrb[0].mxu0
  %v1950 = vpop.f32.mrb[0].mxu0
  %v1951 = vadd.f32 %v303, %v1950
  %v1952 = vpop.f32.mrb[0].mxu0
  %1953 = vmatprep.mubr.bf16.mxu0 0
  %1954 = vmatmul.mubr.bf16.gmra.mrb[0].mxu0 %v917
  %v1955 = vpop.f32.mrb[0].mxu0
  %v1956 = vadd.f32 %v303, %v1955
  %v1957 = vpop.f32.mrb[0].mxu0
  %v1958 = vpop.f32.mrb[0].mxu0
  %v1959 = vadd.f32 %v303, %v1958
  %v1960 = vpop.f32.mrb[0].mxu0
  %1961 = vmatprep.mubr.bf16.mxu0 0
  %1962 = vmatmul.mubr.bf16.gmra.mrb[0].mxu0 %v918
  %v1963 = vpop.f32.mrb[0].mxu0
  %v1964 = vadd.f32 %v303, %v1963
  %v1965 = vpop.f32.mrb[0].mxu0
  %v1966 = vpop.f32.mrb[0].mxu0
  %v1967 = vadd.f32 %v303, %v1966
  %v1968 = vpop.f32.mrb[0].mxu0
  %1969 = vmatprep.mubr.bf16.mxu0 0
  %1970 = vmatmul.mubr.bf16.gmra.mrb[0].mxu0 %v919
  %v1971 = vpop.f32.mrb[0].mxu0
  %v1972 = vadd.f32 %v303, %v1971
  %v1973 = vpop.f32.mrb[0].mxu0
  %v1974 = vpop.f32.mrb[0].mxu0
  %v1975 = vadd.f32 %v303, %v1974
  %v1976 = vpop.f32.mrb[0].mxu0
  %1977 = vmatprep.mubr.bf16.mxu0 0
  %1978 = vmatmul.mubr.bf16.gmra.mrb[0].mxu0 %v920
  %v1979 = vpop.f32.mrb[0].mxu0
  %v1980 = vadd.f32 %v303, %v1979
  %v1981 = vpop.f32.mrb[0].mxu0
  %v1982 = vpop.f32.mrb[0].mxu0
  %v1983 = vadd.f32 %v303, %v1982
  %v1984 = vpop.f32.mrb[0].mxu0
  %1985 = vmatprep.mubr.bf16.mxu0 0
  %1986 = vmatmul.mubr.bf16.gmra.mrb[0].mxu0 %v921
  %v1987 = vpop.f32.mrb[0].mxu0
  %v1988 = vadd.f32 %v303, %v1987
  %v1989 = vpop.f32.mrb[0].mxu0
  %v1990 = vpop.f32.mrb[0].mxu0
  %v1991 = vadd.f32 %v303, %v1990
  %v1992 = vpop.f32.mrb[0].mxu0
  %1993 = vmatprep.mubr.bf16.mxu0 0
  %1994 = vmatmul.mubr.bf16.gmra.mrb[0].mxu0 %v922
  %v1995 = vpop.f32.mrb[0].mxu0
  %v1996 = vadd.f32 %v303, %v1995
  %v1997 = vpop.f32.mrb[0].mxu0
  %v1998 = vpop.f32.mrb[0].mxu0
  %v1999 = vadd.f32 %v303, %v1998
  %v2000 = vpop.f32.mrb[0].mxu0
  %2001 = vmatprep.mubr.bf16.mxu0 0
  %2002 = vmatmul.mubr.bf16.gmra.mrb[0].mxu0 %v923
  %v2003 = vpop.f32.mrb[0].mxu0
  %v2004 = vadd.f32 %v303, %v2003
  %v2005 = vpop.f32.mrb[0].mxu0
  %v2006 = vpop.f32.mrb[0].mxu0
  %v2007 = vadd.f32 %v303, %v2006
  %v2008 = vpop.f32.mrb[0].mxu0
  %2009 = vmatprep.mubr.bf16.mxu0 0
  %2010 = vmatmul.mubr.bf16.gmra.mrb[0].mxu0 %v924
  %v2011 = vpop.f32.mrb[0].mxu0
  %v2012 = vadd.f32 %v303, %v2011
  %v2013 = vpop.f32.mrb[0].mxu0
  %v2014 = vpop.f32.mrb[0].mxu0
  %v2015 = vadd.f32 %v303, %v2014
  %v2016 = vpop.f32.mrb[0].mxu0
  %2017 = vmatprep.mubr.bf16.mxu0 0
  %2018 = vmatmul.mubr.bf16.gmra.mrb[0].mxu0 %v925
  %v2019 = vpop.f32.mrb[0].mxu0
  %v2020 = vadd.f32 %v303, %v2019
  %v2021 = vpop.f32.mrb[0].mxu0
  %v2022 = vpop.f32.mrb[0].mxu0
  %v2023 = vadd.f32 %v303, %v2022
  %v2024 = vpop.f32.mrb[0].mxu0
  %2025 = vmatprep.mubr.bf16.mxu0 0
  %2026 = vmatmul.mubr.bf16.gmra.mrb[0].mxu0 %v926
  %v2027 = vpop.f32.mrb[0].mxu0
  %v2028 = vadd.f32 %v303, %v2027
  %v2029 = vpop.f32.mrb[0].mxu0
  %v2030 = vpop.f32.mrb[0].mxu0
  %v2031 = vadd.f32 %v303, %v2030
  %v2032 = vpop.f32.mrb[0].mxu0
  %2033 = vmatprep.mubr.bf16.mxu0 0
  %2034 = vmatmul.mubr.bf16.gmra.mrb[0].mxu0 %v927
  %v2035 = vpop.f32.mrb[0].mxu0
  %v2036 = vadd.f32 %v303, %v2035
  %v2037 = vpop.f32.mrb[0].mxu0
  %v2038 = vpop.f32.mrb[0].mxu0
  %v2039 = vadd.f32 %v303, %v2038
  %v2040 = vpop.f32.mrb[0].mxu0
  %2041 = vmatprep.mubr.bf16.mxu0 0
  %2042 = vmatmul.mubr.bf16.gmra.mrb[0].mxu0 %v928
  %v2043 = vpop.f32.mrb[0].mxu0
  %v2044 = vadd.f32 %v303, %v2043
  %v2045 = vpop.f32.mrb[0].mxu0
  %v2046 = vpop.f32.mrb[0].mxu0
  %v2047 = vadd.f32 %v303, %v2046
  %v2048 = vpop.f32.mrb[0].mxu0
  %2049 = vmatprep.mubr.bf16.mxu0 0
  %2050 = vmatmul.mubr.bf16.gmra.mrb[0].mxu0 %v929
  %v2051 = vpop.f32.mrb[0].mxu0
  %v2052 = vadd.f32 %v303, %v2051
  %v2053 = vpop.f32.mrb[0].mxu0
  %v2054 = vpop.f32.mrb[0].mxu0
  %v2055 = vadd.f32 %v303, %v2054
  %v2056 = vpop.f32.mrb[0].mxu0
  %2057 = vmatprep.mubr.bf16.mxu0 0
  %2058 = vmatmul.mubr.bf16.gmra.mrb[0].mxu0 %v930
  %v2059 = vpop.f32.mrb[0].mxu0
  %v2060 = vadd.f32 %v303, %v2059
  %v2061 = vpop.f32.mrb[0].mxu0
  %v2062 = vpop.f32.mrb[0].mxu0
  %v2063 = vadd.f32 %v303, %v2062
  %v2064 = vpop.f32.mrb[0].mxu0
  %2065 = vmatprep.mubr.bf16.mxu0 0
  %2066 = vmatmul.mubr.bf16.gmra.mrb[0].mxu0 %v931
  %v2067 = vpop.f32.mrb[0].mxu0
  %v2068 = vadd.f32 %v303, %v2067
  %v2069 = vpop.f32.mrb[0].mxu0
  %v2070 = vpop.f32.mrb[0].mxu0
  %v2071 = vadd.f32 %v303, %v2070
  %v2072 = vpop.f32.mrb[0].mxu0
  %2073 = vmatprep.mubr.bf16.mxu0 0
  %2074 = vmatmul.mubr.bf16.gmra.mrb[0].mxu0 %v932
  %v2075 = vpop.f32.mrb[0].mxu0
  %v2076 = vadd.f32 %v303, %v2075
  %v2077 = vpop.f32.mrb[0].mxu0
  %v2078 = vpop.f32.mrb[0].mxu0
  %v2079 = vadd.f32 %v303, %v2078
  %v2080 = vpop.f32.mrb[0].mxu0
  %2081 = vmatprep.mubr.bf16.mxu0 0
  %2082 = vmatmul.mubr.bf16.gmra.mrb[0].mxu0 %v933
  %v2083 = vpop.f32.mrb[0].mxu0
  %v2084 = vadd.f32 %v303, %v2083
  %v2085 = vpop.f32.mrb[0].mxu0
  %v2086 = vpop.f32.mrb[0].mxu0
  %v2087 = vadd.f32 %v303, %v2086
  %v2088 = vpop.f32.mrb[0].mxu0
  %2089 = vmatprep.mubr.bf16.mxu0 0
  %2090 = vmatmul.mubr.bf16.gmra.mrb[0].mxu0 %v934
  %v2091 = vpop.f32.mrb[0].mxu0
  %v2092 = vadd.f32 %v303, %v2091
  %v2093 = vpop.f32.mrb[0].mxu0
  %v2094 = vpop.f32.mrb[0].mxu0
  %v2095 = vadd.f32 %v303, %v2094
  %v2096 = vpop.f32.mrb[0].mxu0
  %2097 = vmatprep.mubr.bf16.mxu0 0
  %2098 = vmatmul.mubr.bf16.gmra.mrb[0].mxu0 %v935
  %v2099 = vpop.f32.mrb[0].mxu0
  %v2100 = vadd.f32 %v303, %v2099
  %v2101 = vpop.f32.mrb[0].mxu0
  %v2102 = vpop.f32.mrb[0].mxu0
  %v2103 = vadd.f32 %v303, %v2102
  %v2104 = vpop.f32.mrb[0].mxu0
  %2105 = vmatprep.mubr.bf16.mxu0 0
  %2106 = vmatmul.mubr.bf16.gmra.mrb[0].mxu0 %v936
  %v2107 = vpop.f32.mrb[0].mxu0
  %v2108 = vadd.f32 %v303, %v2107
  %v2109 = vpop.f32.mrb[0].mxu0
  %v2110 = vpop.f32.mrb[0].mxu0
  %v2111 = vadd.f32 %v303, %v2110
  %v2112 = vpop.f32.mrb[0].mxu0
  %2113 = vmatprep.mubr.bf16.mxu0 0
  %2114 = vmatmul.mubr.bf16.gmra.mrb[0].mxu0 %v937
  %v2115 = vpop.f32.mrb[0].mxu0
  %v2116 = vadd.f32 %v303, %v2115
  %v2117 = vpop.f32.mrb[0].mxu0
  %v2118 = vpop.f32.mrb[0].mxu0
  %v2119 = vadd.f32 %v303, %v2118
  %v2120 = vpop.f32.mrb[0].mxu0
  %2121 = vmatprep.mubr.bf16.mxu0 0
  %2122 = vmatmul.mubr.bf16.gmra.mrb[0].mxu0 %v938
  %v2123 = vpop.f32.mrb[0].mxu0
  %v2124 = vadd.f32 %v303, %v2123
  %v2125 = vpop.f32.mrb[0].mxu0
  %v2126 = vpop.f32.mrb[0].mxu0
  %v2127 = vadd.f32 %v303, %v2126
  %v2128 = vpop.f32.mrb[0].mxu0
  %2129 = vmatprep.mubr.bf16.mxu0 0
  %2130 = vmatmul.mubr.bf16.gmra.mrb[0].mxu0 %v939
  %v2131 = vpop.f32.mrb[0].mxu0
  %v2132 = vadd.f32 %v303, %v2131
  %v2133 = vpop.f32.mrb[0].mxu0
  %v2134 = vpop.f32.mrb[0].mxu0
  %v2135 = vadd.f32 %v303, %v2134
  %v2136 = vpop.f32.mrb[0].mxu0
  %2137 = vmatprep.mubr.bf16.mxu0 0
  %2138 = vmatmul.mubr.bf16.gmra.mrb[0].mxu0 %v940
  %v2139 = vpop.f32.mrb[0].mxu0
  %v2140 = vadd.f32 %v303, %v2139
  %v2141 = vpop.f32.mrb[0].mxu0
  %v2142 = vpop.f32.mrb[0].mxu0
  %v2143 = vadd.f32 %v303, %v2142
  %v2144 = vpop.f32.mrb[0].mxu0
  %2145 = vmatprep.mubr.bf16.mxu0 0
  %2146 = vmatmul.mubr.bf16.gmra.mrb[0].mxu0 %v941
  %v2147 = vpop.f32.mrb[0].mxu0
  %v2148 = vadd.f32 %v303, %v2147
  %v2149 = vpop.f32.mrb[0].mxu0
  %v2150 = vpop.f32.mrb[0].mxu0
  %v2151 = vadd.f32 %v303, %v2150
  %v2152 = vpop.f32.mrb[0].mxu0
  %2153 = vmatprep.mubr.bf16.mxu0 0
  %2154 = vmatmul.mubr.bf16.gmra.mrb[0].mxu0 %v942
  %v2155 = vpop.f32.mrb[0].mxu0
  %v2156 = vadd.f32 %v303, %v2155
  %v2157 = vpop.f32.mrb[0].mxu0
  %v2158 = vpop.f32.mrb[0].mxu0
  %v2159 = vadd.f32 %v303, %v2158
  %v2160 = vpop.f32.mrb[0].mxu0
  %2161 = vmatprep.mubr.bf16.mxu0 0
  %2162 = vmatmul.mubr.bf16.gmra.mrb[0].mxu0 %v943
  %v2163 = vpop.f32.mrb[0].mxu0
  %v2164 = vadd.f32 %v303, %v2163
  %v2165 = vpop.f32.mrb[0].mxu0
  %v2166 = vpop.f32.mrb[0].mxu0
  %v2167 = vadd.f32 %v303, %v2166
  %v2168 = vpop.f32.mrb[0].mxu0
  %2169 = vmatprep.mubr.bf16.mxu0 0
  %2170 = vmatmul.mubr.bf16.gmra.mrb[0].mxu0 %v944
  %v2171 = vpop.f32.mrb[0].mxu0
  %v2172 = vadd.f32 %v303, %v2171
  %v2173 = vpop.f32.mrb[0].mxu0
  %v2174 = vpop.f32.mrb[0].mxu0
  %v2175 = vadd.f32 %v303, %v2174
  %v2176 = vpop.f32.mrb[0].mxu0
  %2177 = vdwg.mxu0
  %v2178 = vmax.f32 %v1156, 0.0
  %v2179 = vmax.f32 %v1159, 0.0
  %v2180 = vmax.f32 %v1164, 0.0
  %v2181 = vmax.f32 %v1167, 0.0
  %v2182 = vmax.f32 %v1172, 0.0
  %v2183 = vmax.f32 %v1175, 0.0
  %v2184 = vmax.f32 %v1180, 0.0
  %v2185 = vmax.f32 %v1183, 0.0
  %v2186 = vmax.f32 %v1188, 0.0
  %v2187 = vmax.f32 %v1191, 0.0
  %v2188 = vmax.f32 %v1196, 0.0
  %v2189 = vmax.f32 %v1199, 0.0
  %v2190 = vmax.f32 %v1204, 0.0
  %v2191 = vmax.f32 %v1207, 0.0
  %v2192 = vmax.f32 %v1212, 0.0
  %v2193 = vmax.f32 %v1215, 0.0
  %v2194 = vmax.f32 %v1220, 0.0
  %v2195 = vmax.f32 %v1223, 0.0
  %v2196 = vmax.f32 %v1228, 0.0
  %v2197 = vmax.f32 %v1231, 0.0
  %v2198 = vmax.f32 %v1236, 0.0
  %v2199 = vmax.f32 %v1239, 0.0
  %v2200 = vmax.f32 %v1244, 0.0
  %v2201 = vmax.f32 %v1247, 0.0
  %v2202 = vmax.f32 %v1252, 0.0
  %v2203 = vmax.f32 %v1255, 0.0
  %v2204 = vmax.f32 %v1260, 0.0
  %v2205 = vmax.f32 %v1263, 0.0
  %v2206 = vmax.f32 %v1268, 0.0
  %v2207 = vmax.f32 %v1271, 0.0
  %v2208 = vmax.f32 %v1276, 0.0
  %v2209 = vmax.f32 %v1279, 0.0
  %v2210 = vmax.f32 %v1284, 0.0
  %v2211 = vmax.f32 %v1287, 0.0
  %v2212 = vmax.f32 %v1292, 0.0
  %v2213 = vmax.f32 %v1295, 0.0
  %v2214 = vmax.f32 %v1300, 0.0
  %v2215 = vmax.f32 %v1303, 0.0
  %v2216 = vmax.f32 %v1308, 0.0
  %v2217 = vmax.f32 %v1311, 0.0
  %v2218 = vmax.f32 %v1316, 0.0
  %v2219 = vmax.f32 %v1319, 0.0
  %v2220 = vmax.f32 %v1324, 0.0
  %v2221 = vmax.f32 %v1327, 0.0
  %v2222 = vmax.f32 %v1332, 0.0
  %v2223 = vmax.f32 %v1335, 0.0
  %v2224 = vmax.f32 %v1340, 0.0
  %v2225 = vmax.f32 %v1343, 0.0
  %v2226 = vmax.f32 %v1348, 0.0
  %v2227 = vmax.f32 %v1351, 0.0
  %v2228 = vmax.f32 %v1356, 0.0
  %v2229 = vmax.f32 %v1359, 0.0
  %v2230 = vmax.f32 %v1364, 0.0
  %v2231 = vmax.f32 %v1367, 0.0
  %v2232 = vmax.f32 %v1372, 0.0
  %v2233 = vmax.f32 %v1375, 0.0
  %v2234 = vmax.f32 %v1380, 0.0
  %v2235 = vmax.f32 %v1383, 0.0
  %v2236 = vmax.f32 %v1388, 0.0
  %v2237 = vmax.f32 %v1391, 0.0
  %v2238 = vmax.f32 %v1396, 0.0
  %v2239 = vmax.f32 %v1399, 0.0
  %v2240 = vmax.f32 %v1404, 0.0
  %v2241 = vmax.f32 %v1407, 0.0
  %v2242 = vmax.f32 %v1412, 0.0
  %v2243 = vmax.f32 %v1415, 0.0
  %v2244 = vmax.f32 %v1420, 0.0
  %v2245 = vmax.f32 %v1423, 0.0
  %v2246 = vmax.f32 %v1428, 0.0
  %v2247 = vmax.f32 %v1431, 0.0
  %v2248 = vmax.f32 %v1436, 0.0
  %v2249 = vmax.f32 %v1439, 0.0
  %v2250 = vmax.f32 %v1444, 0.0
  %v2251 = vmax.f32 %v1447, 0.0
  %v2252 = vmax.f32 %v1452, 0.0
  %v2253 = vmax.f32 %v1455, 0.0
  %v2254 = vmax.f32 %v1460, 0.0
  %v2255 = vmax.f32 %v1463, 0.0
  %v2256 = vmax.f32 %v1468, 0.0
  %v2257 = vmax.f32 %v1471, 0.0
  %v2258 = vmax.f32 %v1476, 0.0
  %v2259 = vmax.f32 %v1479, 0.0
  %v2260 = vmax.f32 %v1484, 0.0
  %v2261 = vmax.f32 %v1487, 0.0
  %v2262 = vmax.f32 %v1492, 0.0
  %v2263 = vmax.f32 %v1495, 0.0
  %v2264 = vmax.f32 %v1500, 0.0
  %v2265 = vmax.f32 %v1503, 0.0
  %v2266 = vmax.f32 %v1508, 0.0
  %v2267 = vmax.f32 %v1511, 0.0
  %v2268 = vmax.f32 %v1516, 0.0
  %v2269 = vmax.f32 %v1519, 0.0
  %v2270 = vmax.f32 %v1524, 0.0
  %v2271 = vmax.f32 %v1527, 0.0
  %v2272 = vmax.f32 %v1532, 0.0
  %v2273 = vmax.f32 %v1535, 0.0
  %v2274 = vmax.f32 %v1540, 0.0
  %v2275 = vmax.f32 %v1543, 0.0
  %v2276 = vmax.f32 %v1548, 0.0
  %v2277 = vmax.f32 %v1551, 0.0
  %v2278 = vmax.f32 %v1556, 0.0
  %v2279 = vmax.f32 %v1559, 0.0
  %v2280 = vmax.f32 %v1564, 0.0
  %v2281 = vmax.f32 %v1567, 0.0
  %v2282 = vmax.f32 %v1572, 0.0
  %v2283 = vmax.f32 %v1575, 0.0
  %v2284 = vmax.f32 %v1580, 0.0
  %v2285 = vmax.f32 %v1583, 0.0
  %v2286 = vmax.f32 %v1588, 0.0
  %v2287 = vmax.f32 %v1591, 0.0
  %v2288 = vmax.f32 %v1596, 0.0
  %v2289 = vmax.f32 %v1599, 0.0
  %v2290 = vmax.f32 %v1604, 0.0
  %v2291 = vmax.f32 %v1607, 0.0
  %v2292 = vmax.f32 %v1612, 0.0
  %v2293 = vmax.f32 %v1615, 0.0
  %v2294 = vmax.f32 %v1620, 0.0
  %v2295 = vmax.f32 %v1623, 0.0
  %v2296 = vmax.f32 %v1628, 0.0
  %v2297 = vmax.f32 %v1631, 0.0
  %v2298 = vmax.f32 %v1636, 0.0
  %v2299 = vmax.f32 %v1639, 0.0
  %v2300 = vmax.f32 %v1644, 0.0
  %v2301 = vmax.f32 %v1647, 0.0
  %v2302 = vmax.f32 %v1652, 0.0
  %v2303 = vmax.f32 %v1655, 0.0
  %v2304 = vmax.f32 %v1660, 0.0
  %v2305 = vmax.f32 %v1663, 0.0
  %v2306 = vmax.f32 %v1668, 0.0
  %v2307 = vmax.f32 %v1671, 0.0
  %v2308 = vmax.f32 %v1676, 0.0
  %v2309 = vmax.f32 %v1679, 0.0
  %v2310 = vmax.f32 %v1684, 0.0
  %v2311 = vmax.f32 %v1687, 0.0
  %v2312 = vmax.f32 %v1692, 0.0
  %v2313 = vmax.f32 %v1695, 0.0
  %v2314 = vmax.f32 %v1700, 0.0
  %v2315 = vmax.f32 %v1703, 0.0
  %v2316 = vmax.f32 %v1708, 0.0
  %v2317 = vmax.f32 %v1711, 0.0
  %v2318 = vmax.f32 %v1716, 0.0
  %v2319 = vmax.f32 %v1719, 0.0
  %v2320 = vmax.f32 %v1724, 0.0
  %v2321 = vmax.f32 %v1727, 0.0
  %v2322 = vmax.f32 %v1732, 0.0
  %v2323 = vmax.f32 %v1735, 0.0
  %v2324 = vmax.f32 %v1740, 0.0
  %v2325 = vmax.f32 %v1743, 0.0
  %v2326 = vmax.f32 %v1748, 0.0
  %v2327 = vmax.f32 %v1751, 0.0
  %v2328 = vmax.f32 %v1756, 0.0
  %v2329 = vmax.f32 %v1759, 0.0
  %v2330 = vmax.f32 %v1764, 0.0
  %v2331 = vmax.f32 %v1767, 0.0
  %v2332 = vmax.f32 %v1772, 0.0
  %v2333 = vmax.f32 %v1775, 0.0
  %v2334 = vmax.f32 %v1780, 0.0
  %v2335 = vmax.f32 %v1783, 0.0
  %v2336 = vmax.f32 %v1788, 0.0
  %v2337 = vmax.f32 %v1791, 0.0
  %v2338 = vmax.f32 %v1796, 0.0
  %v2339 = vmax.f32 %v1799, 0.0
  %v2340 = vmax.f32 %v1804, 0.0
  %v2341 = vmax.f32 %v1807, 0.0
  %v2342 = vmax.f32 %v1812, 0.0
  %v2343 = vmax.f32 %v1815, 0.0
  %v2344 = vmax.f32 %v1820, 0.0
  %v2345 = vmax.f32 %v1823, 0.0
  %v2346 = vmax.f32 %v1828, 0.0
  %v2347 = vmax.f32 %v1831, 0.0
  %v2348 = vmax.f32 %v1836, 0.0
  %v2349 = vmax.f32 %v1839, 0.0
  %v2350 = vmax.f32 %v1844, 0.0
  %v2351 = vmax.f32 %v1847, 0.0
  %v2352 = vmax.f32 %v1852, 0.0
  %v2353 = vmax.f32 %v1855, 0.0
  %v2354 = vmax.f32 %v1860, 0.0
  %v2355 = vmax.f32 %v1863, 0.0
  %v2356 = vmax.f32 %v1868, 0.0
  %v2357 = vmax.f32 %v1871, 0.0
  %v2358 = vmax.f32 %v1876, 0.0
  %v2359 = vmax.f32 %v1879, 0.0
  %v2360 = vmax.f32 %v1884, 0.0
  %v2361 = vmax.f32 %v1887, 0.0
  %v2362 = vmax.f32 %v1892, 0.0
  %v2363 = vmax.f32 %v1895, 0.0
  %v2364 = vmax.f32 %v1900, 0.0
  %v2365 = vmax.f32 %v1903, 0.0
  %v2366 = vmax.f32 %v1908, 0.0
  %v2367 = vmax.f32 %v1911, 0.0
  %v2368 = vmax.f32 %v1916, 0.0
  %v2369 = vmax.f32 %v1919, 0.0
  %v2370 = vmax.f32 %v1924, 0.0
  %v2371 = vmax.f32 %v1927, 0.0
  %v2372 = vmax.f32 %v1932, 0.0
  %v2373 = vmax.f32 %v1935, 0.0
  %v2374 = vmax.f32 %v1940, 0.0
  %v2375 = vmax.f32 %v1943, 0.0
  %v2376 = vmax.f32 %v1948, 0.0
  %v2377 = vmax.f32 %v1951, 0.0
  %v2378 = vmax.f32 %v1956, 0.0
  %v2379 = vmax.f32 %v1959, 0.0
  %v2380 = vmax.f32 %v1964, 0.0
  %v2381 = vmax.f32 %v1967, 0.0
  %v2382 = vmax.f32 %v1972, 0.0
  %v2383 = vmax.f32 %v1975, 0.0
  %v2384 = vmax.f32 %v1980, 0.0
  %v2385 = vmax.f32 %v1983, 0.0
  %v2386 = vmax.f32 %v1988, 0.0
  %v2387 = vmax.f32 %v1991, 0.0
  %v2388 = vmax.f32 %v1996, 0.0
  %v2389 = vmax.f32 %v1999, 0.0
  %v2390 = vmax.f32 %v2004, 0.0
  %v2391 = vmax.f32 %v2007, 0.0
  %v2392 = vmax.f32 %v2012, 0.0
  %v2393 = vmax.f32 %v2015, 0.0
  %v2394 = vmax.f32 %v2020, 0.0
  %v2395 = vmax.f32 %v2023, 0.0
  %v2396 = vmax.f32 %v2028, 0.0
  %v2397 = vmax.f32 %v2031, 0.0
  %v2398 = vmax.f32 %v2036, 0.0
  %v2399 = vmax.f32 %v2039, 0.0
  %v2400 = vmax.f32 %v2044, 0.0
  %v2401 = vmax.f32 %v2047, 0.0
  %v2402 = vmax.f32 %v2052, 0.0
  %v2403 = vmax.f32 %v2055, 0.0
  %v2404 = vmax.f32 %v2060, 0.0
  %v2405 = vmax.f32 %v2063, 0.0
  %v2406 = vmax.f32 %v2068, 0.0
  %v2407 = vmax.f32 %v2071, 0.0
  %v2408 = vmax.f32 %v2076, 0.0
  %v2409 = vmax.f32 %v2079, 0.0
  %v2410 = vmax.f32 %v2084, 0.0
  %v2411 = vmax.f32 %v2087, 0.0
  %v2412 = vmax.f32 %v2092, 0.0
  %v2413 = vmax.f32 %v2095, 0.0
  %v2414 = vmax.f32 %v2100, 0.0
  %v2415 = vmax.f32 %v2103, 0.0
  %v2416 = vmax.f32 %v2108, 0.0
  %v2417 = vmax.f32 %v2111, 0.0
  %v2418 = vmax.f32 %v2116, 0.0
  %v2419 = vmax.f32 %v2119, 0.0
  %v2420 = vmax.f32 %v2124, 0.0
  %v2421 = vmax.f32 %v2127, 0.0
  %v2422 = vmax.f32 %v2132, 0.0
  %v2423 = vmax.f32 %v2135, 0.0
  %v2424 = vmax.f32 %v2140, 0.0
  %v2425 = vmax.f32 %v2143, 0.0
  %v2426 = vmax.f32 %v2148, 0.0
  %v2427 = vmax.f32 %v2151, 0.0
  %v2428 = vmax.f32 %v2156, 0.0
  %v2429 = vmax.f32 %v2159, 0.0
  %v2430 = vmax.f32 %v2164, 0.0
  %v2431 = vmax.f32 %v2167, 0.0
  %v2432 = vmax.f32 %v2172, 0.0
  %v2433 = vmax.f32 %v2175, 0.0
  %v2434 = vpack.c.bf16 %v2179, %v2178
  %v2435 = vpack.c.bf16 %v2181, %v2180
  %v2436 = vpack.c.bf16 %v2183, %v2182
  %v2437 = vpack.c.bf16 %v2185, %v2184
  %v2438 = vpack.c.bf16 %v2187, %v2186
  %v2439 = vpack.c.bf16 %v2189, %v2188
  %v2440 = vpack.c.bf16 %v2191, %v2190
  %v2441 = vpack.c.bf16 %v2193, %v2192
  %v2442 = vpack.c.bf16 %v2195, %v2194
  %v2443 = vpack.c.bf16 %v2197, %v2196
  %v2444 = vpack.c.bf16 %v2199, %v2198
  %v2445 = vpack.c.bf16 %v2201, %v2200
  %v2446 = vpack.c.bf16 %v2203, %v2202
  %v2447 = vpack.c.bf16 %v2205, %v2204
  %v2448 = vpack.c.bf16 %v2207, %v2206
  %v2449 = vpack.c.bf16 %v2209, %v2208
  %v2450 = vpack.c.bf16 %v2211, %v2210
  %v2451 = vpack.c.bf16 %v2213, %v2212
  %v2452 = vpack.c.bf16 %v2215, %v2214
  %v2453 = vpack.c.bf16 %v2217, %v2216
  %v2454 = vpack.c.bf16 %v2219, %v2218
  %v2455 = vpack.c.bf16 %v2221, %v2220
  %v2456 = vpack.c.bf16 %v2223, %v2222
  %v2457 = vpack.c.bf16 %v2225, %v2224
  %v2458 = vpack.c.bf16 %v2227, %v2226
  %v2459 = vpack.c.bf16 %v2229, %v2228
  %v2460 = vpack.c.bf16 %v2231, %v2230
  %v2461 = vpack.c.bf16 %v2233, %v2232
  %v2462 = vpack.c.bf16 %v2235, %v2234
  %v2463 = vpack.c.bf16 %v2237, %v2236
  %v2464 = vpack.c.bf16 %v2239, %v2238
  %v2465 = vpack.c.bf16 %v2241, %v2240
  %v2466 = vpack.c.bf16 %v2243, %v2242
  %v2467 = vpack.c.bf16 %v2245, %v2244
  %v2468 = vpack.c.bf16 %v2247, %v2246
  %v2469 = vpack.c.bf16 %v2249, %v2248
  %v2470 = vpack.c.bf16 %v2251, %v2250
  %v2471 = vpack.c.bf16 %v2253, %v2252
  %v2472 = vpack.c.bf16 %v2255, %v2254
  %v2473 = vpack.c.bf16 %v2257, %v2256
  %v2474 = vpack.c.bf16 %v2259, %v2258
  %v2475 = vpack.c.bf16 %v2261, %v2260
  %v2476 = vpack.c.bf16 %v2263, %v2262
  %v2477 = vpack.c.bf16 %v2265, %v2264
  %v2478 = vpack.c.bf16 %v2267, %v2266
  %v2479 = vpack.c.bf16 %v2269, %v2268
  %v2480 = vpack.c.bf16 %v2271, %v2270
  %v2481 = vpack.c.bf16 %v2273, %v2272
  %v2482 = vpack.c.bf16 %v2275, %v2274
  %v2483 = vpack.c.bf16 %v2277, %v2276
  %v2484 = vpack.c.bf16 %v2279, %v2278
  %v2485 = vpack.c.bf16 %v2281, %v2280
  %v2486 = vpack.c.bf16 %v2283, %v2282
  %v2487 = vpack.c.bf16 %v2285, %v2284
  %v2488 = vpack.c.bf16 %v2287, %v2286
  %v2489 = vpack.c.bf16 %v2289, %v2288
  %v2490 = vpack.c.bf16 %v2291, %v2290
  %v2491 = vpack.c.bf16 %v2293, %v2292
  %v2492 = vpack.c.bf16 %v2295, %v2294
  %v2493 = vpack.c.bf16 %v2297, %v2296
  %v2494 = vpack.c.bf16 %v2299, %v2298
  %v2495 = vpack.c.bf16 %v2301, %v2300
  %v2496 = vpack.c.bf16 %v2303, %v2302
  %v2497 = vpack.c.bf16 %v2305, %v2304
  %v2498 = vpack.c.bf16 %v2307, %v2306
  %v2499 = vpack.c.bf16 %v2309, %v2308
  %v2500 = vpack.c.bf16 %v2311, %v2310
  %v2501 = vpack.c.bf16 %v2313, %v2312
  %v2502 = vpack.c.bf16 %v2315, %v2314
  %v2503 = vpack.c.bf16 %v2317, %v2316
  %v2504 = vpack.c.bf16 %v2319, %v2318
  %v2505 = vpack.c.bf16 %v2321, %v2320
  %v2506 = vpack.c.bf16 %v2323, %v2322
  %v2507 = vpack.c.bf16 %v2325, %v2324
  %v2508 = vpack.c.bf16 %v2327, %v2326
  %v2509 = vpack.c.bf16 %v2329, %v2328
  %v2510 = vpack.c.bf16 %v2331, %v2330
  %v2511 = vpack.c.bf16 %v2333, %v2332
  %v2512 = vpack.c.bf16 %v2335, %v2334
  %v2513 = vpack.c.bf16 %v2337, %v2336
  %v2514 = vpack.c.bf16 %v2339, %v2338
  %v2515 = vpack.c.bf16 %v2341, %v2340
  %v2516 = vpack.c.bf16 %v2343, %v2342
  %v2517 = vpack.c.bf16 %v2345, %v2344
  %v2518 = vpack.c.bf16 %v2347, %v2346
  %v2519 = vpack.c.bf16 %v2349, %v2348
  %v2520 = vpack.c.bf16 %v2351, %v2350
  %v2521 = vpack.c.bf16 %v2353, %v2352
  %v2522 = vpack.c.bf16 %v2355, %v2354
  %v2523 = vpack.c.bf16 %v2357, %v2356
  %v2524 = vpack.c.bf16 %v2359, %v2358
  %v2525 = vpack.c.bf16 %v2361, %v2360
  %v2526 = vpack.c.bf16 %v2363, %v2362
  %v2527 = vpack.c.bf16 %v2365, %v2364
  %v2528 = vpack.c.bf16 %v2367, %v2366
  %v2529 = vpack.c.bf16 %v2369, %v2368
  %v2530 = vpack.c.bf16 %v2371, %v2370
  %v2531 = vpack.c.bf16 %v2373, %v2372
  %v2532 = vpack.c.bf16 %v2375, %v2374
  %v2533 = vpack.c.bf16 %v2377, %v2376
  %v2534 = vpack.c.bf16 %v2379, %v2378
  %v2535 = vpack.c.bf16 %v2381, %v2380
  %v2536 = vpack.c.bf16 %v2383, %v2382
  %v2537 = vpack.c.bf16 %v2385, %v2384
  %v2538 = vpack.c.bf16 %v2387, %v2386
  %v2539 = vpack.c.bf16 %v2389, %v2388
  %v2540 = vpack.c.bf16 %v2391, %v2390
  %v2541 = vpack.c.bf16 %v2393, %v2392
  %v2542 = vpack.c.bf16 %v2395, %v2394
  %v2543 = vpack.c.bf16 %v2397, %v2396
  %v2544 = vpack.c.bf16 %v2399, %v2398
  %v2545 = vpack.c.bf16 %v2401, %v2400
  %v2546 = vpack.c.bf16 %v2403, %v2402
  %v2547 = vpack.c.bf16 %v2405, %v2404
  %v2548 = vpack.c.bf16 %v2407, %v2406
  %v2549 = vpack.c.bf16 %v2409, %v2408
  %v2550 = vpack.c.bf16 %v2411, %v2410
  %v2551 = vpack.c.bf16 %v2413, %v2412
  %v2552 = vpack.c.bf16 %v2415, %v2414
  %v2553 = vpack.c.bf16 %v2417, %v2416
  %v2554 = vpack.c.bf16 %v2419, %v2418
  %v2555 = vpack.c.bf16 %v2421, %v2420
  %v2556 = vpack.c.bf16 %v2423, %v2422
  %v2557 = vpack.c.bf16 %v2425, %v2424
  %v2558 = vpack.c.bf16 %v2427, %v2426
  %v2559 = vpack.c.bf16 %v2429, %v2428
  %v2560 = vpack.c.bf16 %v2431, %v2430
  %v2561 = vpack.c.bf16 %v2433, %v2432
  %v2690 = vunpack.c.l.b16 %v2434
  %v2691 = vunpack.c.h.b16 %v2434
  %v2692 = vunpack.c.l.b16 %v2435
  %v2693 = vunpack.c.h.b16 %v2435
  %v2694 = vunpack.c.l.b16 %v2436
  %v2695 = vunpack.c.h.b16 %v2436
  %v2696 = vunpack.c.l.b16 %v2437
  %v2697 = vunpack.c.h.b16 %v2437
  %v2698 = vunpack.c.l.b16 %v2438
  %v2699 = vunpack.c.h.b16 %v2438
  %v2700 = vunpack.c.l.b16 %v2439
  %v2701 = vunpack.c.h.b16 %v2439
  %v2702 = vunpack.c.l.b16 %v2440
  %v2703 = vunpack.c.h.b16 %v2440
  %v2704 = vunpack.c.l.b16 %v2441
  %v2705 = vunpack.c.h.b16 %v2441
  %v2706 = vunpack.c.l.b16 %v2442
  %v2707 = vunpack.c.h.b16 %v2442
  %v2708 = vunpack.c.l.b16 %v2443
  %v2709 = vunpack.c.h.b16 %v2443
  %v2710 = vunpack.c.l.b16 %v2444
  %v2711 = vunpack.c.h.b16 %v2444
  %v2712 = vunpack.c.l.b16 %v2445
  %v2713 = vunpack.c.h.b16 %v2445
  %v2714 = vunpack.c.l.b16 %v2446
  %v2715 = vunpack.c.h.b16 %v2446
  %v2716 = vunpack.c.l.b16 %v2447
  %v2717 = vunpack.c.h.b16 %v2447
  %v2718 = vunpack.c.l.b16 %v2448
  %v2719 = vunpack.c.h.b16 %v2448
  %v2720 = vunpack.c.l.b16 %v2449
  %v2721 = vunpack.c.h.b16 %v2449
  %v2722 = vunpack.c.l.b16 %v2450
  %v2723 = vunpack.c.h.b16 %v2450
  %v2724 = vunpack.c.l.b16 %v2451
  %v2725 = vunpack.c.h.b16 %v2451
  %v2726 = vunpack.c.l.b16 %v2452
  %v2727 = vunpack.c.h.b16 %v2452
  %v2728 = vunpack.c.l.b16 %v2453
  %v2729 = vunpack.c.h.b16 %v2453
  %v2730 = vunpack.c.l.b16 %v2454
  %v2731 = vunpack.c.h.b16 %v2454
  %v2732 = vunpack.c.l.b16 %v2455
  %v2733 = vunpack.c.h.b16 %v2455
  %v2734 = vunpack.c.l.b16 %v2456
  %v2735 = vunpack.c.h.b16 %v2456
  %v2736 = vunpack.c.l.b16 %v2457
  %v2737 = vunpack.c.h.b16 %v2457
  %v2738 = vunpack.c.l.b16 %v2458
  %v2739 = vunpack.c.h.b16 %v2458
  %v2740 = vunpack.c.l.b16 %v2459
  %v2741 = vunpack.c.h.b16 %v2459
  %v2742 = vunpack.c.l.b16 %v2460
  %v2743 = vunpack.c.h.b16 %v2460
  %v2744 = vunpack.c.l.b16 %v2461
  %v2745 = vunpack.c.h.b16 %v2461
  %v2746 = vunpack.c.l.b16 %v2462
  %v2747 = vunpack.c.h.b16 %v2462
  %v2748 = vunpack.c.l.b16 %v2463
  %v2749 = vunpack.c.h.b16 %v2463
  %v2750 = vunpack.c.l.b16 %v2464
  %v2751 = vunpack.c.h.b16 %v2464
  %v2752 = vunpack.c.l.b16 %v2465
  %v2753 = vunpack.c.h.b16 %v2465
  %v2754 = vunpack.c.l.b16 %v2466
  %v2755 = vunpack.c.h.b16 %v2466
  %v2756 = vunpack.c.l.b16 %v2467
  %v2757 = vunpack.c.h.b16 %v2467
  %v2758 = vunpack.c.l.b16 %v2468
  %v2759 = vunpack.c.h.b16 %v2468
  %v2760 = vunpack.c.l.b16 %v2469
  %v2761 = vunpack.c.h.b16 %v2469
  %v2762 = vunpack.c.l.b16 %v2470
  %v2763 = vunpack.c.h.b16 %v2470
  %v2764 = vunpack.c.l.b16 %v2471
  %v2765 = vunpack.c.h.b16 %v2471
  %v2766 = vunpack.c.l.b16 %v2472
  %v2767 = vunpack.c.h.b16 %v2472
  %v2768 = vunpack.c.l.b16 %v2473
  %v2769 = vunpack.c.h.b16 %v2473
  %v2770 = vunpack.c.l.b16 %v2474
  %v2771 = vunpack.c.h.b16 %v2474
  %v2772 = vunpack.c.l.b16 %v2475
  %v2773 = vunpack.c.h.b16 %v2475
  %v2774 = vunpack.c.l.b16 %v2476
  %v2775 = vunpack.c.h.b16 %v2476
  %v2776 = vunpack.c.l.b16 %v2477
  %v2777 = vunpack.c.h.b16 %v2477
  %v2778 = vunpack.c.l.b16 %v2478
  %v2779 = vunpack.c.h.b16 %v2478
  %v2780 = vunpack.c.l.b16 %v2479
  %v2781 = vunpack.c.h.b16 %v2479
  %v2782 = vunpack.c.l.b16 %v2480
  %v2783 = vunpack.c.h.b16 %v2480
  %v2784 = vunpack.c.l.b16 %v2481
  %v2785 = vunpack.c.h.b16 %v2481
  %v2786 = vunpack.c.l.b16 %v2482
  %v2787 = vunpack.c.h.b16 %v2482
  %v2788 = vunpack.c.l.b16 %v2483
  %v2789 = vunpack.c.h.b16 %v2483
  %v2790 = vunpack.c.l.b16 %v2484
  %v2791 = vunpack.c.h.b16 %v2484
  %v2792 = vunpack.c.l.b16 %v2485
  %v2793 = vunpack.c.h.b16 %v2485
  %v2794 = vunpack.c.l.b16 %v2486
  %v2795 = vunpack.c.h.b16 %v2486
  %v2796 = vunpack.c.l.b16 %v2487
  %v2797 = vunpack.c.h.b16 %v2487
  %v2798 = vunpack.c.l.b16 %v2488
  %v2799 = vunpack.c.h.b16 %v2488
  %v2800 = vunpack.c.l.b16 %v2489
  %v2801 = vunpack.c.h.b16 %v2489
  %v2802 = vunpack.c.l.b16 %v2490
  %v2803 = vunpack.c.h.b16 %v2490
  %v2804 = vunpack.c.l.b16 %v2491
  %v2805 = vunpack.c.h.b16 %v2491
  %v2806 = vunpack.c.l.b16 %v2492
  %v2807 = vunpack.c.h.b16 %v2492
  %v2808 = vunpack.c.l.b16 %v2493
  %v2809 = vunpack.c.h.b16 %v2493
  %v2810 = vunpack.c.l.b16 %v2494
  %v2811 = vunpack.c.h.b16 %v2494
  %v2812 = vunpack.c.l.b16 %v2495
  %v2813 = vunpack.c.h.b16 %v2495
  %v2814 = vunpack.c.l.b16 %v2496
  %v2815 = vunpack.c.h.b16 %v2496
  %v2816 = vunpack.c.l.b16 %v2497
  %v2817 = vunpack.c.h.b16 %v2497
  %v2818 = vunpack.c.l.b16 %v2498
  %v2819 = vunpack.c.h.b16 %v2498
  %v2820 = vunpack.c.l.b16 %v2499
  %v2821 = vunpack.c.h.b16 %v2499
  %v2822 = vunpack.c.l.b16 %v2500
  %v2823 = vunpack.c.h.b16 %v2500
  %v2824 = vunpack.c.l.b16 %v2501
  %v2825 = vunpack.c.h.b16 %v2501
  %v2826 = vunpack.c.l.b16 %v2502
  %v2827 = vunpack.c.h.b16 %v2502
  %v2828 = vunpack.c.l.b16 %v2503
  %v2829 = vunpack.c.h.b16 %v2503
  %v2830 = vunpack.c.l.b16 %v2504
  %v2831 = vunpack.c.h.b16 %v2504
  %v2832 = vunpack.c.l.b16 %v2505
  %v2833 = vunpack.c.h.b16 %v2505
  %v2834 = vunpack.c.l.b16 %v2506
  %v2835 = vunpack.c.h.b16 %v2506
  %v2836 = vunpack.c.l.b16 %v2507
  %v2837 = vunpack.c.h.b16 %v2507
  %v2838 = vunpack.c.l.b16 %v2508
  %v2839 = vunpack.c.h.b16 %v2508
  %v2840 = vunpack.c.l.b16 %v2509
  %v2841 = vunpack.c.h.b16 %v2509
  %v2842 = vunpack.c.l.b16 %v2510
  %v2843 = vunpack.c.h.b16 %v2510
  %v2844 = vunpack.c.l.b16 %v2511
  %v2845 = vunpack.c.h.b16 %v2511
  %v2846 = vunpack.c.l.b16 %v2512
  %v2847 = vunpack.c.h.b16 %v2512
  %v2848 = vunpack.c.l.b16 %v2513
  %v2849 = vunpack.c.h.b16 %v2513
  %v2850 = vunpack.c.l.b16 %v2514
  %v2851 = vunpack.c.h.b16 %v2514
  %v2852 = vunpack.c.l.b16 %v2515
  %v2853 = vunpack.c.h.b16 %v2515
  %v2854 = vunpack.c.l.b16 %v2516
  %v2855 = vunpack.c.h.b16 %v2516
  %v2856 = vunpack.c.l.b16 %v2517
  %v2857 = vunpack.c.h.b16 %v2517
  %v2858 = vunpack.c.l.b16 %v2518
  %v2859 = vunpack.c.h.b16 %v2518
  %v2860 = vunpack.c.l.b16 %v2519
  %v2861 = vunpack.c.h.b16 %v2519
  %v2862 = vunpack.c.l.b16 %v2520
  %v2863 = vunpack.c.h.b16 %v2520
  %v2864 = vunpack.c.l.b16 %v2521
  %v2865 = vunpack.c.h.b16 %v2521
  %v2866 = vunpack.c.l.b16 %v2522
  %v2867 = vunpack.c.h.b16 %v2522
  %v2868 = vunpack.c.l.b16 %v2523
  %v2869 = vunpack.c.h.b16 %v2523
  %v2870 = vunpack.c.l.b16 %v2524
  %v2871 = vunpack.c.h.b16 %v2524
  %v2872 = vunpack.c.l.b16 %v2525
  %v2873 = vunpack.c.h.b16 %v2525
  %v2874 = vunpack.c.l.b16 %v2526
  %v2875 = vunpack.c.h.b16 %v2526
  %v2876 = vunpack.c.l.b16 %v2527
  %v2877 = vunpack.c.h.b16 %v2527
  %v2878 = vunpack.c.l.b16 %v2528
  %v2879 = vunpack.c.h.b16 %v2528
  %v2880 = vunpack.c.l.b16 %v2529
  %v2881 = vunpack.c.h.b16 %v2529
  %v2882 = vunpack.c.l.b16 %v2530
  %v2883 = vunpack.c.h.b16 %v2530
  %v2884 = vunpack.c.l.b16 %v2531
  %v2885 = vunpack.c.h.b16 %v2531
  %v2886 = vunpack.c.l.b16 %v2532
  %v2887 = vunpack.c.h.b16 %v2532
  %v2888 = vunpack.c.l.b16 %v2533
  %v2889 = vunpack.c.h.b16 %v2533
  %v2890 = vunpack.c.l.b16 %v2534
  %v2891 = vunpack.c.h.b16 %v2534
  %v2892 = vunpack.c.l.b16 %v2535
  %v2893 = vunpack.c.h.b16 %v2535
  %v2894 = vunpack.c.l.b16 %v2536
  %v2895 = vunpack.c.h.b16 %v2536
  %v2896 = vunpack.c.l.b16 %v2537
  %v2897 = vunpack.c.h.b16 %v2537
  %v2898 = vunpack.c.l.b16 %v2538
  %v2899 = vunpack.c.h.b16 %v2538
  %v2900 = vunpack.c.l.b16 %v2539
  %v2901 = vunpack.c.h.b16 %v2539
  %v2902 = vunpack.c.l.b16 %v2540
  %v2903 = vunpack.c.h.b16 %v2540
  %v2904 = vunpack.c.l.b16 %v2541
  %v2905 = vunpack.c.h.b16 %v2541
  %v2906 = vunpack.c.l.b16 %v2542
  %v2907 = vunpack.c.h.b16 %v2542
  %v2908 = vunpack.c.l.b16 %v2543
  %v2909 = vunpack.c.h.b16 %v2543
  %v2910 = vunpack.c.l.b16 %v2544
  %v2911 = vunpack.c.h.b16 %v2544
  %v2912 = vunpack.c.l.b16 %v2545
  %v2913 = vunpack.c.h.b16 %v2545
  %v2914 = vunpack.c.l.b16 %v2546
  %v2915 = vunpack.c.h.b16 %v2546
  %v2916 = vunpack.c.l.b16 %v2547
  %v2917 = vunpack.c.h.b16 %v2547
  %v2918 = vunpack.c.l.b16 %v2548
  %v2919 = vunpack.c.h.b16 %v2548
  %v2920 = vunpack.c.l.b16 %v2549
  %v2921 = vunpack.c.h.b16 %v2549
  %v2922 = vunpack.c.l.b16 %v2550
  %v2923 = vunpack.c.h.b16 %v2550
  %v2924 = vunpack.c.l.b16 %v2551
  %v2925 = vunpack.c.h.b16 %v2551
  %v2926 = vunpack.c.l.b16 %v2552
  %v2927 = vunpack.c.h.b16 %v2552
  %v2928 = vunpack.c.l.b16 %v2553
  %v2929 = vunpack.c.h.b16 %v2553
  %v2930 = vunpack.c.l.b16 %v2554
  %v2931 = vunpack.c.h.b16 %v2554
  %v2932 = vunpack.c.l.b16 %v2555
  %v2933 = vunpack.c.h.b16 %v2555
  %v2934 = vunpack.c.l.b16 %v2556
  %v2935 = vunpack.c.h.b16 %v2556
  %v2936 = vunpack.c.l.b16 %v2557
  %v2937 = vunpack.c.h.b16 %v2557
  %v2938 = vunpack.c.l.b16 %v2558
  %v2939 = vunpack.c.h.b16 %v2558
  %v2940 = vunpack.c.l.b16 %v2559
  %v2941 = vunpack.c.h.b16 %v2559
  %v2942 = vunpack.c.l.b16 %v2560
  %v2943 = vunpack.c.h.b16 %v2560
  %v2944 = vunpack.c.l.b16 %v2561
  %v2945 = vunpack.c.h.b16 %v2561
  %v2946 = vpack.c.b16 %v2690, %v2690
  %v2947 = vpack.c.b16 %v2691, %v2691
  %v2948 = vpack.c.b16 %v2692, %v2692
  %v2949 = vpack.c.b16 %v2693, %v2693
  %v2950 = vpack.c.b16 %v2694, %v2694
  %v2951 = vpack.c.b16 %v2695, %v2695
  %v2952 = vpack.c.b16 %v2696, %v2696
  %v2953 = vpack.c.b16 %v2697, %v2697
  %v2954 = vpack.c.b16 %v2698, %v2698
  %v2955 = vpack.c.b16 %v2699, %v2699
  %v2956 = vpack.c.b16 %v2700, %v2700
  %v2957 = vpack.c.b16 %v2701, %v2701
  %v2958 = vpack.c.b16 %v2702, %v2702
  %v2959 = vpack.c.b16 %v2703, %v2703
  %v2960 = vpack.c.b16 %v2704, %v2704
  %v2961 = vpack.c.b16 %v2705, %v2705
  %v2962 = vpack.c.b16 %v2706, %v2706
  %v2963 = vpack.c.b16 %v2707, %v2707
  %v2964 = vpack.c.b16 %v2708, %v2708
  %v2965 = vpack.c.b16 %v2709, %v2709
  %v2966 = vpack.c.b16 %v2710, %v2710
  %v2967 = vpack.c.b16 %v2711, %v2711
  %v2968 = vpack.c.b16 %v2712, %v2712
  %v2969 = vpack.c.b16 %v2713, %v2713
  %v2970 = vpack.c.b16 %v2714, %v2714
  %v2971 = vpack.c.b16 %v2715, %v2715
  %v2972 = vpack.c.b16 %v2716, %v2716
  %v2973 = vpack.c.b16 %v2717, %v2717
  %v2974 = vpack.c.b16 %v2718, %v2718
  %v2975 = vpack.c.b16 %v2719, %v2719
  %v2976 = vpack.c.b16 %v2720, %v2720
  %v2977 = vpack.c.b16 %v2721, %v2721
  %v2978 = vpack.c.b16 %v2722, %v2722
  %v2979 = vpack.c.b16 %v2723, %v2723
  %v2980 = vpack.c.b16 %v2724, %v2724
  %v2981 = vpack.c.b16 %v2725, %v2725
  %v2982 = vpack.c.b16 %v2726, %v2726
  %v2983 = vpack.c.b16 %v2727, %v2727
  %v2984 = vpack.c.b16 %v2728, %v2728
  %v2985 = vpack.c.b16 %v2729, %v2729
  %v2986 = vpack.c.b16 %v2730, %v2730
  %v2987 = vpack.c.b16 %v2731, %v2731
  %v2988 = vpack.c.b16 %v2732, %v2732
  %v2989 = vpack.c.b16 %v2733, %v2733
  %v2990 = vpack.c.b16 %v2734, %v2734
  %v2991 = vpack.c.b16 %v2735, %v2735
  %v2992 = vpack.c.b16 %v2736, %v2736
  %v2993 = vpack.c.b16 %v2737, %v2737
  %v2994 = vpack.c.b16 %v2738, %v2738
  %v2995 = vpack.c.b16 %v2739, %v2739
  %v2996 = vpack.c.b16 %v2740, %v2740
  %v2997 = vpack.c.b16 %v2741, %v2741
  %v2998 = vpack.c.b16 %v2742, %v2742
  %v2999 = vpack.c.b16 %v2743, %v2743
  %v3000 = vpack.c.b16 %v2744, %v2744
  %v3001 = vpack.c.b16 %v2745, %v2745
  %v3002 = vpack.c.b16 %v2746, %v2746
  %v3003 = vpack.c.b16 %v2747, %v2747
  %v3004 = vpack.c.b16 %v2748, %v2748
  %v3005 = vpack.c.b16 %v2749, %v2749
  %v3006 = vpack.c.b16 %v2750, %v2750
  %v3007 = vpack.c.b16 %v2751, %v2751
  %v3008 = vpack.c.b16 %v2752, %v2752
  %v3009 = vpack.c.b16 %v2753, %v2753
  %v3010 = vpack.c.b16 %v2754, %v2754
  %v3011 = vpack.c.b16 %v2755, %v2755
  %v3012 = vpack.c.b16 %v2756, %v2756
  %v3013 = vpack.c.b16 %v2757, %v2757
  %v3014 = vpack.c.b16 %v2758, %v2758
  %v3015 = vpack.c.b16 %v2759, %v2759
  %v3016 = vpack.c.b16 %v2760, %v2760
  %v3017 = vpack.c.b16 %v2761, %v2761
  %v3018 = vpack.c.b16 %v2762, %v2762
  %v3019 = vpack.c.b16 %v2763, %v2763
  %v3020 = vpack.c.b16 %v2764, %v2764
  %v3021 = vpack.c.b16 %v2765, %v2765
  %v3022 = vpack.c.b16 %v2766, %v2766
  %v3023 = vpack.c.b16 %v2767, %v2767
  %v3024 = vpack.c.b16 %v2768, %v2768
  %v3025 = vpack.c.b16 %v2769, %v2769
  %v3026 = vpack.c.b16 %v2770, %v2770
  %v3027 = vpack.c.b16 %v2771, %v2771
  %v3028 = vpack.c.b16 %v2772, %v2772
  %v3029 = vpack.c.b16 %v2773, %v2773
  %v3030 = vpack.c.b16 %v2774, %v2774
  %v3031 = vpack.c.b16 %v2775, %v2775
  %v3032 = vpack.c.b16 %v2776, %v2776
  %v3033 = vpack.c.b16 %v2777, %v2777
  %v3034 = vpack.c.b16 %v2778, %v2778
  %v3035 = vpack.c.b16 %v2779, %v2779
  %v3036 = vpack.c.b16 %v2780, %v2780
  %v3037 = vpack.c.b16 %v2781, %v2781
  %v3038 = vpack.c.b16 %v2782, %v2782
  %v3039 = vpack.c.b16 %v2783, %v2783
  %v3040 = vpack.c.b16 %v2784, %v2784
  %v3041 = vpack.c.b16 %v2785, %v2785
  %v3042 = vpack.c.b16 %v2786, %v2786
  %v3043 = vpack.c.b16 %v2787, %v2787
  %v3044 = vpack.c.b16 %v2788, %v2788
  %v3045 = vpack.c.b16 %v2789, %v2789
  %v3046 = vpack.c.b16 %v2790, %v2790
  %v3047 = vpack.c.b16 %v2791, %v2791
  %v3048 = vpack.c.b16 %v2792, %v2792
  %v3049 = vpack.c.b16 %v2793, %v2793
  %v3050 = vpack.c.b16 %v2794, %v2794
  %v3051 = vpack.c.b16 %v2795, %v2795
  %v3052 = vpack.c.b16 %v2796, %v2796
  %v3053 = vpack.c.b16 %v2797, %v2797
  %v3054 = vpack.c.b16 %v2798, %v2798
  %v3055 = vpack.c.b16 %v2799, %v2799
  %v3056 = vpack.c.b16 %v2800, %v2800
  %v3057 = vpack.c.b16 %v2801, %v2801
  %v3058 = vpack.c.b16 %v2802, %v2802
  %v3059 = vpack.c.b16 %v2803, %v2803
  %v3060 = vpack.c.b16 %v2804, %v2804
  %v3061 = vpack.c.b16 %v2805, %v2805
  %v3062 = vpack.c.b16 %v2806, %v2806
  %v3063 = vpack.c.b16 %v2807, %v2807
  %v3064 = vpack.c.b16 %v2808, %v2808
  %v3065 = vpack.c.b16 %v2809, %v2809
  %v3066 = vpack.c.b16 %v2810, %v2810
  %v3067 = vpack.c.b16 %v2811, %v2811
  %v3068 = vpack.c.b16 %v2812, %v2812
  %v3069 = vpack.c.b16 %v2813, %v2813
  %v3070 = vpack.c.b16 %v2814, %v2814
  %v3071 = vpack.c.b16 %v2815, %v2815
  %v3072 = vpack.c.b16 %v2816, %v2816
  %v3073 = vpack.c.b16 %v2817, %v2817
  %v3074 = vpack.c.b16 %v2818, %v2818
  %v3075 = vpack.c.b16 %v2819, %v2819
  %v3076 = vpack.c.b16 %v2820, %v2820
  %v3077 = vpack.c.b16 %v2821, %v2821
  %v3078 = vpack.c.b16 %v2822, %v2822
  %v3079 = vpack.c.b16 %v2823, %v2823
  %v3080 = vpack.c.b16 %v2824, %v2824
  %v3081 = vpack.c.b16 %v2825, %v2825
  %v3082 = vpack.c.b16 %v2826, %v2826
  %v3083 = vpack.c.b16 %v2827, %v2827
  %v3084 = vpack.c.b16 %v2828, %v2828
  %v3085 = vpack.c.b16 %v2829, %v2829
  %v3086 = vpack.c.b16 %v2830, %v2830
  %v3087 = vpack.c.b16 %v2831, %v2831
  %v3088 = vpack.c.b16 %v2832, %v2832
  %v3089 = vpack.c.b16 %v2833, %v2833
  %v3090 = vpack.c.b16 %v2834, %v2834
  %v3091 = vpack.c.b16 %v2835, %v2835
  %v3092 = vpack.c.b16 %v2836, %v2836
  %v3093 = vpack.c.b16 %v2837, %v2837
  %v3094 = vpack.c.b16 %v2838, %v2838
  %v3095 = vpack.c.b16 %v2839, %v2839
  %v3096 = vpack.c.b16 %v2840, %v2840
  %v3097 = vpack.c.b16 %v2841, %v2841
  %v3098 = vpack.c.b16 %v2842, %v2842
  %v3099 = vpack.c.b16 %v2843, %v2843
  %v3100 = vpack.c.b16 %v2844, %v2844
  %v3101 = vpack.c.b16 %v2845, %v2845
  %v3102 = vpack.c.b16 %v2846, %v2846
  %v3103 = vpack.c.b16 %v2847, %v2847
  %v3104 = vpack.c.b16 %v2848, %v2848
  %v3105 = vpack.c.b16 %v2849, %v2849
  %v3106 = vpack.c.b16 %v2850, %v2850
  %v3107 = vpack.c.b16 %v2851, %v2851
  %v3108 = vpack.c.b16 %v2852, %v2852
  %v3109 = vpack.c.b16 %v2853, %v2853
  %v3110 = vpack.c.b16 %v2854, %v2854
  %v3111 = vpack.c.b16 %v2855, %v2855
  %v3112 = vpack.c.b16 %v2856, %v2856
  %v3113 = vpack.c.b16 %v2857, %v2857
  %v3114 = vpack.c.b16 %v2858, %v2858
  %v3115 = vpack.c.b16 %v2859, %v2859
  %v3116 = vpack.c.b16 %v2860, %v2860
  %v3117 = vpack.c.b16 %v2861, %v2861
  %v3118 = vpack.c.b16 %v2862, %v2862
  %v3119 = vpack.c.b16 %v2863, %v2863
  %v3120 = vpack.c.b16 %v2864, %v2864
  %v3121 = vpack.c.b16 %v2865, %v2865
  %v3122 = vpack.c.b16 %v2866, %v2866
  %v3123 = vpack.c.b16 %v2867, %v2867
  %v3124 = vpack.c.b16 %v2868, %v2868
  %v3125 = vpack.c.b16 %v2869, %v2869
  %v3126 = vpack.c.b16 %v2870, %v2870
  %v3127 = vpack.c.b16 %v2871, %v2871
  %v3128 = vpack.c.b16 %v2872, %v2872
  %v3129 = vpack.c.b16 %v2873, %v2873
  %v3130 = vpack.c.b16 %v2874, %v2874
  %v3131 = vpack.c.b16 %v2875, %v2875
  %v3132 = vpack.c.b16 %v2876, %v2876
  %v3133 = vpack.c.b16 %v2877, %v2877
  %v3134 = vpack.c.b16 %v2878, %v2878
  %v3135 = vpack.c.b16 %v2879, %v2879
  %v3136 = vpack.c.b16 %v2880, %v2880
  %v3137 = vpack.c.b16 %v2881, %v2881
  %v3138 = vpack.c.b16 %v2882, %v2882
  %v3139 = vpack.c.b16 %v2883, %v2883
  %v3140 = vpack.c.b16 %v2884, %v2884
  %v3141 = vpack.c.b16 %v2885, %v2885
  %v3142 = vpack.c.b16 %v2886, %v2886
  %v3143 = vpack.c.b16 %v2887, %v2887
  %v3144 = vpack.c.b16 %v2888, %v2888
  %v3145 = vpack.c.b16 %v2889, %v2889
  %v3146 = vpack.c.b16 %v2890, %v2890
  %v3147 = vpack.c.b16 %v2891, %v2891
  %v3148 = vpack.c.b16 %v2892, %v2892
  %v3149 = vpack.c.b16 %v2893, %v2893
  %v3150 = vpack.c.b16 %v2894, %v2894
  %v3151 = vpack.c.b16 %v2895, %v2895
  %v3152 = vpack.c.b16 %v2896, %v2896
  %v3153 = vpack.c.b16 %v2897, %v2897
  %v3154 = vpack.c.b16 %v2898, %v2898
  %v3155 = vpack.c.b16 %v2899, %v2899
  %v3156 = vpack.c.b16 %v2900, %v2900
  %v3157 = vpack.c.b16 %v2901, %v2901
  %v3158 = vpack.c.b16 %v2902, %v2902
  %v3159 = vpack.c.b16 %v2903, %v2903
  %v3160 = vpack.c.b16 %v2904, %v2904
  %v3161 = vpack.c.b16 %v2905, %v2905
  %v3162 = vpack.c.b16 %v2906, %v2906
  %v3163 = vpack.c.b16 %v2907, %v2907
  %v3164 = vpack.c.b16 %v2908, %v2908
  %v3165 = vpack.c.b16 %v2909, %v2909
  %v3166 = vpack.c.b16 %v2910, %v2910
  %v3167 = vpack.c.b16 %v2911, %v2911
  %v3168 = vpack.c.b16 %v2912, %v2912
  %v3169 = vpack.c.b16 %v2913, %v2913
  %v3170 = vpack.c.b16 %v2914, %v2914
  %v3171 = vpack.c.b16 %v2915, %v2915
  %v3172 = vpack.c.b16 %v2916, %v2916
  %v3173 = vpack.c.b16 %v2917, %v2917
  %v3174 = vpack.c.b16 %v2918, %v2918
  %v3175 = vpack.c.b16 %v2919, %v2919
  %v3176 = vpack.c.b16 %v2920, %v2920
  %v3177 = vpack.c.b16 %v2921, %v2921
  %v3178 = vpack.c.b16 %v2922, %v2922
  %v3179 = vpack.c.b16 %v2923, %v2923
  %v3180 = vpack.c.b16 %v2924, %v2924
  %v3181 = vpack.c.b16 %v2925, %v2925
  %v3182 = vpack.c.b16 %v2926, %v2926
  %v3183 = vpack.c.b16 %v2927, %v2927
  %v3184 = vpack.c.b16 %v2928, %v2928
  %v3185 = vpack.c.b16 %v2929, %v2929
  %v3186 = vpack.c.b16 %v2930, %v2930
  %v3187 = vpack.c.b16 %v2931, %v2931
  %v3188 = vpack.c.b16 %v2932, %v2932
  %v3189 = vpack.c.b16 %v2933, %v2933
  %v3190 = vpack.c.b16 %v2934, %v2934
  %v3191 = vpack.c.b16 %v2935, %v2935
  %v3192 = vpack.c.b16 %v2936, %v2936
  %v3193 = vpack.c.b16 %v2937, %v2937
  %v3194 = vpack.c.b16 %v2938, %v2938
  %v3195 = vpack.c.b16 %v2939, %v2939
  %v3196 = vpack.c.b16 %v2940, %v2940
  %v3197 = vpack.c.b16 %v2941, %v2941
  %v3198 = vpack.c.b16 %v2942, %v2942
  %v3199 = vpack.c.b16 %v2943, %v2943
  %v3200 = vpack.c.b16 %v2944, %v2944
  %v3201 = vpack.c.b16 %v2945, %v2945
  %3458 = vst [vmem:[%s6] sm:$0xf] %v2946
  %3459 = vst [vmem:[%s6 + $0x4] sm:$0xf] %v2947
  %3460 = vst [vmem:[%s6 + $0x8] sm:$0xf] %v2948
  %3461 = vst [vmem:[%s6 + $0xc] sm:$0xf] %v2949
  %3462 = vst [vmem:[%s6 + $0x10] sm:$0xf] %v2950
  %3463 = vst [vmem:[%s6 + $0x14] sm:$0xf] %v2951
  %3464 = vst [vmem:[%s6 + $0x18] sm:$0xf] %v2952
  %3465 = vst [vmem:[%s6 + $0x1c] sm:$0xf] %v2953
  %3466 = vst [vmem:[%s6 + $0x20] sm:$0xf] %v2954
  %3467 = vst [vmem:[%s6 + $0x24] sm:$0xf] %v2955
  %3468 = vst [vmem:[%s6 + $0x28] sm:$0xf] %v2956
  %3469 = vst [vmem:[%s6 + $0x2c] sm:$0xf] %v2957
  %3470 = vst [vmem:[%s6 + $0x30] sm:$0xf] %v2958
  %3471 = vst [vmem:[%s6 + $0x34] sm:$0xf] %v2959
  %3472 = vst [vmem:[%s6 + $0x38] sm:$0xf] %v2960
  %3473 = vst [vmem:[%s6 + $0x3c] sm:$0xf] %v2961
  %3474 = vst [vmem:[%s6 + $0x40] sm:$0xf] %v2962
  %3475 = vst [vmem:[%s6 + $0x44] sm:$0xf] %v2963
  %3476 = vst [vmem:[%s6 + $0x48] sm:$0xf] %v2964
  %3477 = vst [vmem:[%s6 + $0x4c] sm:$0xf] %v2965
  %3478 = vst [vmem:[%s6 + $0x50] sm:$0xf] %v2966
  %3479 = vst [vmem:[%s6 + $0x54] sm:$0xf] %v2967
  %3480 = vst [vmem:[%s6 + $0x58] sm:$0xf] %v2968
  %3481 = vst [vmem:[%s6 + $0x5c] sm:$0xf] %v2969
  %3482 = vst [vmem:[%s6 + $0x60] sm:$0xf] %v2970
  %3483 = vst [vmem:[%s6 + $0x64] sm:$0xf] %v2971
  %3484 = vst [vmem:[%s6 + $0x68] sm:$0xf] %v2972
  %3485 = vst [vmem:[%s6 + $0x6c] sm:$0xf] %v2973
  %3486 = vst [vmem:[%s6 + $0x70] sm:$0xf] %v2974
  %3487 = vst [vmem:[%s6 + $0x74] sm:$0xf] %v2975
  %3488 = vst [vmem:[%s6 + $0x78] sm:$0xf] %v2976
  %3489 = vst [vmem:[%s6 + $0x7c] sm:$0xf] %v2977
  %3490 = vst [vmem:[%s6 + $0x80] sm:$0xf] %v2978
  %3491 = vst [vmem:[%s6 + $0x84] sm:$0xf] %v2979
  %3492 = vst [vmem:[%s6 + $0x88] sm:$0xf] %v2980
  %3493 = vst [vmem:[%s6 + $0x8c] sm:$0xf] %v2981
  %3494 = vst [vmem:[%s6 + $0x90] sm:$0xf] %v2982
  %3495 = vst [vmem:[%s6 + $0x94] sm:$0xf] %v2983
  %3496 = vst [vmem:[%s6 + $0x98] sm:$0xf] %v2984
  %3497 = vst [vmem:[%s6 + $0x9c] sm:$0xf] %v2985
  %3498 = vst [vmem:[%s6 + $0xa0] sm:$0xf] %v2986
  %3499 = vst [vmem:[%s6 + $0xa4] sm:$0xf] %v2987
  %3500 = vst [vmem:[%s6 + $0xa8] sm:$0xf] %v2988
  %3501 = vst [vmem:[%s6 + $0xac] sm:$0xf] %v2989
  %3502 = vst [vmem:[%s6 + $0xb0] sm:$0xf] %v2990
  %3503 = vst [vmem:[%s6 + $0xb4] sm:$0xf] %v2991
  %3504 = vst [vmem:[%s6 + $0xb8] sm:$0xf] %v2992
  %3505 = vst [vmem:[%s6 + $0xbc] sm:$0xf] %v2993
  %3506 = vst [vmem:[%s6 + $0xc0] sm:$0xf] %v2994
  %3507 = vst [vmem:[%s6 + $0xc4] sm:$0xf] %v2995
  %3508 = vst [vmem:[%s6 + $0xc8] sm:$0xf] %v2996
  %3509 = vst [vmem:[%s6 + $0xcc] sm:$0xf] %v2997
  %3510 = vst [vmem:[%s6 + $0xd0] sm:$0xf] %v2998
  %3511 = vst [vmem:[%s6 + $0xd4] sm:$0xf] %v2999
  %3512 = vst [vmem:[%s6 + $0xd8] sm:$0xf] %v3000
  %3513 = vst [vmem:[%s6 + $0xdc] sm:$0xf] %v3001
  %3514 = vst [vmem:[%s6 + $0xe0] sm:$0xf] %v3002
  %3515 = vst [vmem:[%s6 + $0xe4] sm:$0xf] %v3003
  %3516 = vst [vmem:[%s6 + $0xe8] sm:$0xf] %v3004
  %3517 = vst [vmem:[%s6 + $0xec] sm:$0xf] %v3005
  %3518 = vst [vmem:[%s6 + $0xf0] sm:$0xf] %v3006
  %3519 = vst [vmem:[%s6 + $0xf4] sm:$0xf] %v3007
  %3520 = vst [vmem:[%s6 + $0xf8] sm:$0xf] %v3008
  %3521 = vst [vmem:[%s6 + $0xfc] sm:$0xf] %v3009
  %3522 = vst [vmem:[%s6 + $0x100] sm:$0xf] %v3010
  %3523 = vst [vmem:[%s6 + $0x104] sm:$0xf] %v3011
  %3524 = vst [vmem:[%s6 + $0x108] sm:$0xf] %v3012
  %3525 = vst [vmem:[%s6 + $0x10c] sm:$0xf] %v3013
  %3526 = vst [vmem:[%s6 + $0x110] sm:$0xf] %v3014
  %3527 = vst [vmem:[%s6 + $0x114] sm:$0xf] %v3015
  %3528 = vst [vmem:[%s6 + $0x118] sm:$0xf] %v3016
  %3529 = vst [vmem:[%s6 + $0x11c] sm:$0xf] %v3017
  %3530 = vst [vmem:[%s6 + $0x120] sm:$0xf] %v3018
  %3531 = vst [vmem:[%s6 + $0x124] sm:$0xf] %v3019
  %3532 = vst [vmem:[%s6 + $0x128] sm:$0xf] %v3020
  %3533 = vst [vmem:[%s6 + $0x12c] sm:$0xf] %v3021
  %3534 = vst [vmem:[%s6 + $0x130] sm:$0xf] %v3022
  %3535 = vst [vmem:[%s6 + $0x134] sm:$0xf] %v3023
  %3536 = vst [vmem:[%s6 + $0x138] sm:$0xf] %v3024
  %3537 = vst [vmem:[%s6 + $0x13c] sm:$0xf] %v3025
  %3538 = vst [vmem:[%s6 + $0x140] sm:$0xf] %v3026
  %3539 = vst [vmem:[%s6 + $0x144] sm:$0xf] %v3027
  %3540 = vst [vmem:[%s6 + $0x148] sm:$0xf] %v3028
  %3541 = vst [vmem:[%s6 + $0x14c] sm:$0xf] %v3029
  %3542 = vst [vmem:[%s6 + $0x150] sm:$0xf] %v3030
  %3543 = vst [vmem:[%s6 + $0x154] sm:$0xf] %v3031
  %3544 = vst [vmem:[%s6 + $0x158] sm:$0xf] %v3032
  %3545 = vst [vmem:[%s6 + $0x15c] sm:$0xf] %v3033
  %3546 = vst [vmem:[%s6 + $0x160] sm:$0xf] %v3034
  %3547 = vst [vmem:[%s6 + $0x164] sm:$0xf] %v3035
  %3548 = vst [vmem:[%s6 + $0x168] sm:$0xf] %v3036
  %3549 = vst [vmem:[%s6 + $0x16c] sm:$0xf] %v3037
  %3550 = vst [vmem:[%s6 + $0x170] sm:$0xf] %v3038
  %3551 = vst [vmem:[%s6 + $0x174] sm:$0xf] %v3039
  %3552 = vst [vmem:[%s6 + $0x178] sm:$0xf] %v3040
  %3553 = vst [vmem:[%s6 + $0x17c] sm:$0xf] %v3041
  %3554 = vst [vmem:[%s6 + $0x180] sm:$0xf] %v3042
  %3555 = vst [vmem:[%s6 + $0x184] sm:$0xf] %v3043
  %3556 = vst [vmem:[%s6 + $0x188] sm:$0xf] %v3044
  %3557 = vst [vmem:[%s6 + $0x18c] sm:$0xf] %v3045
  %3558 = vst [vmem:[%s6 + $0x190] sm:$0xf] %v3046
  %3559 = vst [vmem:[%s6 + $0x194] sm:$0xf] %v3047
  %3560 = vst [vmem:[%s6 + $0x198] sm:$0xf] %v3048
  %3561 = vst [vmem:[%s6 + $0x19c] sm:$0xf] %v3049
  %3562 = vst [vmem:[%s6 + $0x1a0] sm:$0xf] %v3050
  %3563 = vst [vmem:[%s6 + $0x1a4] sm:$0xf] %v3051
  %3564 = vst [vmem:[%s6 + $0x1a8] sm:$0xf] %v3052
  %3565 = vst [vmem:[%s6 + $0x1ac] sm:$0xf] %v3053
  %3566 = vst [vmem:[%s6 + $0x1b0] sm:$0xf] %v3054
  %3567 = vst [vmem:[%s6 + $0x1b4] sm:$0xf] %v3055
  %3568 = vst [vmem:[%s6 + $0x1b8] sm:$0xf] %v3056
  %3569 = vst [vmem:[%s6 + $0x1bc] sm:$0xf] %v3057
  %3570 = vst [vmem:[%s6 + $0x1c0] sm:$0xf] %v3058
  %3571 = vst [vmem:[%s6 + $0x1c4] sm:$0xf] %v3059
  %3572 = vst [vmem:[%s6 + $0x1c8] sm:$0xf] %v3060
  %3573 = vst [vmem:[%s6 + $0x1cc] sm:$0xf] %v3061
  %3574 = vst [vmem:[%s6 + $0x1d0] sm:$0xf] %v3062
  %3575 = vst [vmem:[%s6 + $0x1d4] sm:$0xf] %v3063
  %3576 = vst [vmem:[%s6 + $0x1d8] sm:$0xf] %v3064
  %3577 = vst [vmem:[%s6 + $0x1dc] sm:$0xf] %v3065
  %3578 = vst [vmem:[%s6 + $0x1e0] sm:$0xf] %v3066
  %3579 = vst [vmem:[%s6 + $0x1e4] sm:$0xf] %v3067
  %3580 = vst [vmem:[%s6 + $0x1e8] sm:$0xf] %v3068
  %3581 = vst [vmem:[%s6 + $0x1ec] sm:$0xf] %v3069
  %3582 = vst [vmem:[%s6 + $0x1f0] sm:$0xf] %v3070
  %3583 = vst [vmem:[%s6 + $0x1f4] sm:$0xf] %v3071
  %3584 = vst [vmem:[%s6 + $0x1f8] sm:$0xf] %v3072
  %3585 = vst [vmem:[%s6 + $0x1fc] sm:$0xf] %v3073
  %3586 = vst [vmem:[%s6 + $0x200] sm:$0xf] %v3074
  %3587 = vst [vmem:[%s6 + $0x204] sm:$0xf] %v3075
  %3588 = vst [vmem:[%s6 + $0x208] sm:$0xf] %v3076
  %3589 = vst [vmem:[%s6 + $0x20c] sm:$0xf] %v3077
  %3590 = vst [vmem:[%s6 + $0x210] sm:$0xf] %v3078
  %3591 = vst [vmem:[%s6 + $0x214] sm:$0xf] %v3079
  %3592 = vst [vmem:[%s6 + $0x218] sm:$0xf] %v3080
  %3593 = vst [vmem:[%s6 + $0x21c] sm:$0xf] %v3081
  %3594 = vst [vmem:[%s6 + $0x220] sm:$0xf] %v3082
  %3595 = vst [vmem:[%s6 + $0x224] sm:$0xf] %v3083
  %3596 = vst [vmem:[%s6 + $0x228] sm:$0xf] %v3084
  %3597 = vst [vmem:[%s6 + $0x22c] sm:$0xf] %v3085
  %3598 = vst [vmem:[%s6 + $0x230] sm:$0xf] %v3086
  %3599 = vst [vmem:[%s6 + $0x234] sm:$0xf] %v3087
  %3600 = vst [vmem:[%s6 + $0x238] sm:$0xf] %v3088
  %3601 = vst [vmem:[%s6 + $0x23c] sm:$0xf] %v3089
  %3602 = vst [vmem:[%s6 + $0x240] sm:$0xf] %v3090
  %3603 = vst [vmem:[%s6 + $0x244] sm:$0xf] %v3091
  %3604 = vst [vmem:[%s6 + $0x248] sm:$0xf] %v3092
  %3605 = vst [vmem:[%s6 + $0x24c] sm:$0xf] %v3093
  %3606 = vst [vmem:[%s6 + $0x250] sm:$0xf] %v3094
  %3607 = vst [vmem:[%s6 + $0x254] sm:$0xf] %v3095
  %3608 = vst [vmem:[%s6 + $0x258] sm:$0xf] %v3096
  %3609 = vst [vmem:[%s6 + $0x25c] sm:$0xf] %v3097
  %3610 = vst [vmem:[%s6 + $0x260] sm:$0xf] %v3098
  %3611 = vst [vmem:[%s6 + $0x264] sm:$0xf] %v3099
  %3612 = vst [vmem:[%s6 + $0x268] sm:$0xf] %v3100
  %3613 = vst [vmem:[%s6 + $0x26c] sm:$0xf] %v3101
  %3614 = vst [vmem:[%s6 + $0x270] sm:$0xf] %v3102
  %3615 = vst [vmem:[%s6 + $0x274] sm:$0xf] %v3103
  %3616 = vst [vmem:[%s6 + $0x278] sm:$0xf] %v3104
  %3617 = vst [vmem:[%s6 + $0x27c] sm:$0xf] %v3105
  %3618 = vst [vmem:[%s6 + $0x280] sm:$0xf] %v3106
  %3619 = vst [vmem:[%s6 + $0x284] sm:$0xf] %v3107
  %3620 = vst [vmem:[%s6 + $0x288] sm:$0xf] %v3108
  %3621 = vst [vmem:[%s6 + $0x28c] sm:$0xf] %v3109
  %3622 = vst [vmem:[%s6 + $0x290] sm:$0xf] %v3110
  %3623 = vst [vmem:[%s6 + $0x294] sm:$0xf] %v3111
  %3624 = vst [vmem:[%s6 + $0x298] sm:$0xf] %v3112
  %3625 = vst [vmem:[%s6 + $0x29c] sm:$0xf] %v3113
  %3626 = vst [vmem:[%s6 + $0x2a0] sm:$0xf] %v3114
  %3627 = vst [vmem:[%s6 + $0x2a4] sm:$0xf] %v3115
  %3628 = vst [vmem:[%s6 + $0x2a8] sm:$0xf] %v3116
  %3629 = vst [vmem:[%s6 + $0x2ac] sm:$0xf] %v3117
  %3630 = vst [vmem:[%s6 + $0x2b0] sm:$0xf] %v3118
  %3631 = vst [vmem:[%s6 + $0x2b4] sm:$0xf] %v3119
  %3632 = vst [vmem:[%s6 + $0x2b8] sm:$0xf] %v3120
  %3633 = vst [vmem:[%s6 + $0x2bc] sm:$0xf] %v3121
  %3634 = vst [vmem:[%s6 + $0x2c0] sm:$0xf] %v3122
  %3635 = vst [vmem:[%s6 + $0x2c4] sm:$0xf] %v3123
  %3636 = vst [vmem:[%s6 + $0x2c8] sm:$0xf] %v3124
  %3637 = vst [vmem:[%s6 + $0x2cc] sm:$0xf] %v3125
  %3638 = vst [vmem:[%s6 + $0x2d0] sm:$0xf] %v3126
  %3639 = vst [vmem:[%s6 + $0x2d4] sm:$0xf] %v3127
  %3640 = vst [vmem:[%s6 + $0x2d8] sm:$0xf] %v3128
  %3641 = vst [vmem:[%s6 + $0x2dc] sm:$0xf] %v3129
  %3642 = vst [vmem:[%s6 + $0x2e0] sm:$0xf] %v3130
  %3643 = vst [vmem:[%s6 + $0x2e4] sm:$0xf] %v3131
  %3644 = vst [vmem:[%s6 + $0x2e8] sm:$0xf] %v3132
  %3645 = vst [vmem:[%s6 + $0x2ec] sm:$0xf] %v3133
  %3646 = vst [vmem:[%s6 + $0x2f0] sm:$0xf] %v3134
  %3647 = vst [vmem:[%s6 + $0x2f4] sm:$0xf] %v3135
  %3648 = vst [vmem:[%s6 + $0x2f8] sm:$0xf] %v3136
  %3649 = vst [vmem:[%s6 + $0x2fc] sm:$0xf] %v3137
  %3650 = vst [vmem:[%s6 + $0x300] sm:$0xf] %v3138
  %3651 = vst [vmem:[%s6 + $0x304] sm:$0xf] %v3139
  %3652 = vst [vmem:[%s6 + $0x308] sm:$0xf] %v3140
  %3653 = vst [vmem:[%s6 + $0x30c] sm:$0xf] %v3141
  %3654 = vst [vmem:[%s6 + $0x310] sm:$0xf] %v3142
  %3655 = vst [vmem:[%s6 + $0x314] sm:$0xf] %v3143
  %3656 = vst [vmem:[%s6 + $0x318] sm:$0xf] %v3144
  %3657 = vst [vmem:[%s6 + $0x31c] sm:$0xf] %v3145
  %3658 = vst [vmem:[%s6 + $0x320] sm:$0xf] %v3146
  %3659 = vst [vmem:[%s6 + $0x324] sm:$0xf] %v3147
  %3660 = vst [vmem:[%s6 + $0x328] sm:$0xf] %v3148
  %3661 = vst [vmem:[%s6 + $0x32c] sm:$0xf] %v3149
  %3662 = vst [vmem:[%s6 + $0x330] sm:$0xf] %v3150
  %3663 = vst [vmem:[%s6 + $0x334] sm:$0xf] %v3151
  %3664 = vst [vmem:[%s6 + $0x338] sm:$0xf] %v3152
  %3665 = vst [vmem:[%s6 + $0x33c] sm:$0xf] %v3153
  %3666 = vst [vmem:[%s6 + $0x340] sm:$0xf] %v3154
  %3667 = vst [vmem:[%s6 + $0x344] sm:$0xf] %v3155
  %3668 = vst [vmem:[%s6 + $0x348] sm:$0xf] %v3156
  %3669 = vst [vmem:[%s6 + $0x34c] sm:$0xf] %v3157
  %3670 = vst [vmem:[%s6 + $0x350] sm:$0xf] %v3158
  %3671 = vst [vmem:[%s6 + $0x354] sm:$0xf] %v3159
  %3672 = vst [vmem:[%s6 + $0x358] sm:$0xf] %v3160
  %3673 = vst [vmem:[%s6 + $0x35c] sm:$0xf] %v3161
  %3674 = vst [vmem:[%s6 + $0x360] sm:$0xf] %v3162
  %3675 = vst [vmem:[%s6 + $0x364] sm:$0xf] %v3163
  %3676 = vst [vmem:[%s6 + $0x368] sm:$0xf] %v3164
  %3677 = vst [vmem:[%s6 + $0x36c] sm:$0xf] %v3165
  %3678 = vst [vmem:[%s6 + $0x370] sm:$0xf] %v3166
  %3679 = vst [vmem:[%s6 + $0x374] sm:$0xf] %v3167
  %3680 = vst [vmem:[%s6 + $0x378] sm:$0xf] %v3168
  %3681 = vst [vmem:[%s6 + $0x37c] sm:$0xf] %v3169
  %3682 = vst [vmem:[%s6 + $0x380] sm:$0xf] %v3170
  %3683 = vst [vmem:[%s6 + $0x384] sm:$0xf] %v3171
  %3684 = vst [vmem:[%s6 + $0x388] sm:$0xf] %v3172
  %3685 = vst [vmem:[%s6 + $0x38c] sm:$0xf] %v3173
  %3686 = vst [vmem:[%s6 + $0x390] sm:$0xf] %v3174
  %3687 = vst [vmem:[%s6 + $0x394] sm:$0xf] %v3175
  %3688 = vst [vmem:[%s6 + $0x398] sm:$0xf] %v3176
  %3689 = vst [vmem:[%s6 + $0x39c] sm:$0xf] %v3177
  %3690 = vst [vmem:[%s6 + $0x3a0] sm:$0xf] %v3178
  %3691 = vst [vmem:[%s6 + $0x3a4] sm:$0xf] %v3179
  %3692 = vst [vmem:[%s6 + $0x3a8] sm:$0xf] %v3180
  %3693 = vst [vmem:[%s6 + $0x3ac] sm:$0xf] %v3181
  %3694 = vst [vmem:[%s6 + $0x3b0] sm:$0xf] %v3182
  %3695 = vst [vmem:[%s6 + $0x3b4] sm:$0xf] %v3183
  %3696 = vst [vmem:[%s6 + $0x3b8] sm:$0xf] %v3184
  %3697 = vst [vmem:[%s6 + $0x3bc] sm:$0xf] %v3185
  %3698 = vst [vmem:[%s6 + $0x3c0] sm:$0xf] %v3186
  %3699 = vst [vmem:[%s6 + $0x3c4] sm:$0xf] %v3187
  %3700 = vst [vmem:[%s6 + $0x3c8] sm:$0xf] %v3188
  %3701 = vst [vmem:[%s6 + $0x3cc] sm:$0xf] %v3189
  %3702 = vst [vmem:[%s6 + $0x3d0] sm:$0xf] %v3190
  %3703 = vst [vmem:[%s6 + $0x3d4] sm:$0xf] %v3191
  %3704 = vst [vmem:[%s6 + $0x3d8] sm:$0xf] %v3192
  %3705 = vst [vmem:[%s6 + $0x3dc] sm:$0xf] %v3193
  %3706 = vst [vmem:[%s6 + $0x3e0] sm:$0xf] %v3194
  %3707 = vst [vmem:[%s6 + $0x3e4] sm:$0xf] %v3195
  %3708 = vst [vmem:[%s6 + $0x3e8] sm:$0xf] %v3196
  %3709 = vst [vmem:[%s6 + $0x3ec] sm:$0xf] %v3197
  %3710 = vst [vmem:[%s6 + $0x3f0] sm:$0xf] %v3198
  %3711 = vst [vmem:[%s6 + $0x3f4] sm:$0xf] %v3199
  %3712 = vst [vmem:[%s6 + $0x3f8] sm:$0xf] %v3200
  %3713 = vst [vmem:[%s6 + $0x3fc] sm:$0xf] %v3201
  %v3714 = vld [vmem:[%s3] sm:$0xf]
  %v3715 = vld [vmem:[%s3 + $0x4] sm:$0xf]
  %v3716 = vld [vmem:[%s3 + $0x8] sm:$0xf]
  %v3717 = vld [vmem:[%s3 + $0xc] sm:$0xf]
  %v3718 = vld [vmem:[%s3 + $0x10] sm:$0xf]
  %v3719 = vld [vmem:[%s3 + $0x14] sm:$0xf]
  %v3720 = vld [vmem:[%s3 + $0x18] sm:$0xf]
  %v3721 = vld [vmem:[%s3 + $0x1c] sm:$0xf]
  %v3722 = vld [vmem:[%s3 + $0x20] sm:$0xf]
  %v3723 = vld [vmem:[%s3 + $0x24] sm:$0xf]
  %v3724 = vld [vmem:[%s3 + $0x28] sm:$0xf]
  %v3725 = vld [vmem:[%s3 + $0x2c] sm:$0xf]
  %v3726 = vld [vmem:[%s3 + $0x30] sm:$0xf]
  %v3727 = vld [vmem:[%s3 + $0x34] sm:$0xf]
  %v3728 = vld [vmem:[%s3 + $0x38] sm:$0xf]
  %v3729 = vld [vmem:[%s3 + $0x3c] sm:$0xf]
  %v3730 = vld [vmem:[%s3 + $0x40] sm:$0xf]
  %v3731 = vld [vmem:[%s3 + $0x44] sm:$0xf]
  %v3732 = vld [vmem:[%s3 + $0x48] sm:$0xf]
  %v3733 = vld [vmem:[%s3 + $0x4c] sm:$0xf]
  %v3734 = vld [vmem:[%s3 + $0x50] sm:$0xf]
  %v3735 = vld [vmem:[%s3 + $0x54] sm:$0xf]
  %v3736 = vld [vmem:[%s3 + $0x58] sm:$0xf]
  %v3737 = vld [vmem:[%s3 + $0x5c] sm:$0xf]
  %v3738 = vld [vmem:[%s3 + $0x60] sm:$0xf]
  %v3739 = vld [vmem:[%s3 + $0x64] sm:$0xf]
  %v3740 = vld [vmem:[%s3 + $0x68] sm:$0xf]
  %v3741 = vld [vmem:[%s3 + $0x6c] sm:$0xf]
  %v3742 = vld [vmem:[%s3 + $0x70] sm:$0xf]
  %v3743 = vld [vmem:[%s3 + $0x74] sm:$0xf]
  %v3744 = vld [vmem:[%s3 + $0x78] sm:$0xf]
  %v3745 = vld [vmem:[%s3 + $0x7c] sm:$0xf]
  %v3746 = vld [vmem:[%s3 + $0x80] sm:$0xf]
  %v3747 = vld [vmem:[%s3 + $0x84] sm:$0xf]
  %v3748 = vld [vmem:[%s3 + $0x88] sm:$0xf]
  %v3749 = vld [vmem:[%s3 + $0x8c] sm:$0xf]
  %v3750 = vld [vmem:[%s3 + $0x90] sm:$0xf]
  %v3751 = vld [vmem:[%s3 + $0x94] sm:$0xf]
  %v3752 = vld [vmem:[%s3 + $0x98] sm:$0xf]
  %v3753 = vld [vmem:[%s3 + $0x9c] sm:$0xf]
  %v3754 = vld [vmem:[%s3 + $0xa0] sm:$0xf]
  %v3755 = vld [vmem:[%s3 + $0xa4] sm:$0xf]
  %v3756 = vld [vmem:[%s3 + $0xa8] sm:$0xf]
  %v3757 = vld [vmem:[%s3 + $0xac] sm:$0xf]
  %v3758 = vld [vmem:[%s3 + $0xb0] sm:$0xf]
  %v3759 = vld [vmem:[%s3 + $0xb4] sm:$0xf]
  %v3760 = vld [vmem:[%s3 + $0xb8] sm:$0xf]
  %v3761 = vld [vmem:[%s3 + $0xbc] sm:$0xf]
  %v3762 = vld [vmem:[%s3 + $0xc0] sm:$0xf]
  %v3763 = vld [vmem:[%s3 + $0xc4] sm:$0xf]
  %v3764 = vld [vmem:[%s3 + $0xc8] sm:$0xf]
  %v3765 = vld [vmem:[%s3 + $0xcc] sm:$0xf]
  %v3766 = vld [vmem:[%s3 + $0xd0] sm:$0xf]
  %v3767 = vld [vmem:[%s3 + $0xd4] sm:$0xf]
  %v3768 = vld [vmem:[%s3 + $0xd8] sm:$0xf]
  %v3769 = vld [vmem:[%s3 + $0xdc] sm:$0xf]
  %v3770 = vld [vmem:[%s3 + $0xe0] sm:$0xf]
  %v3771 = vld [vmem:[%s3 + $0xe4] sm:$0xf]
  %v3772 = vld [vmem:[%s3 + $0xe8] sm:$0xf]
  %v3773 = vld [vmem:[%s3 + $0xec] sm:$0xf]
  %v3774 = vld [vmem:[%s3 + $0xf0] sm:$0xf]
  %v3775 = vld [vmem:[%s3 + $0xf4] sm:$0xf]
  %v3776 = vld [vmem:[%s3 + $0xf8] sm:$0xf]
  %v3777 = vld [vmem:[%s3 + $0xfc] sm:$0xf]
  %v3778 = vld [vmem:[%s4] sm:$0xf]
  %v3779 = vld [vmem:[%s4 + $0x4] sm:$0xf]
  %v3780 = vld [vmem:[%s4 + $0x8] sm:$0xf]
  %v3781 = vld [vmem:[%s4 + $0xc] sm:$0xf]
  %v3782 = vld [vmem:[%s4 + $0x10] sm:$0xf]
  %v3783 = vld [vmem:[%s4 + $0x14] sm:$0xf]
  %v3784 = vld [vmem:[%s4 + $0x18] sm:$0xf]
  %v3785 = vld [vmem:[%s4 + $0x1c] sm:$0xf]
  %v3786 = vld [vmem:[%s4 + $0x20] sm:$0xf]
  %v3787 = vld [vmem:[%s4 + $0x24] sm:$0xf]
  %v3788 = vld [vmem:[%s4 + $0x28] sm:$0xf]
  %v3789 = vld [vmem:[%s4 + $0x2c] sm:$0xf]
  %v3790 = vld [vmem:[%s4 + $0x30] sm:$0xf]
  %v3791 = vld [vmem:[%s4 + $0x34] sm:$0xf]
  %v3792 = vld [vmem:[%s4 + $0x38] sm:$0xf]
  %v3793 = vld [vmem:[%s4 + $0x3c] sm:$0xf]
  %v3794 = vld [vmem:[%s5] sm:$0x1]
  %v3796 = vlaneseq
  %v3797 = vshrl.u32 %v3796, 7
  %v3798 = vsub.s32 0, %v3797
  %v3799 = vrot.slane %v3794, %v3798
  %v3865 = vunpack.c.l.b16 %v3714
  %v3866 = vunpack.c.l.b16 %v3715
  %v3867 = vunpack.c.l.b16 %v3716
  %v3868 = vunpack.c.l.b16 %v3717
  %v3869 = vunpack.c.l.b16 %v3718
  %v3870 = vunpack.c.l.b16 %v3719
  %v3871 = vunpack.c.l.b16 %v3720
  %v3872 = vunpack.c.l.b16 %v3721
  %v3873 = vunpack.c.l.b16 %v3722
  %v3874 = vunpack.c.l.b16 %v3723
  %v3875 = vunpack.c.l.b16 %v3724
  %v3876 = vunpack.c.l.b16 %v3725
  %v3877 = vunpack.c.l.b16 %v3726
  %v3878 = vunpack.c.l.b16 %v3727
  %v3879 = vunpack.c.l.b16 %v3728
  %v3880 = vunpack.c.l.b16 %v3729
  %v3881 = vunpack.c.l.b16 %v3730
  %v3882 = vunpack.c.l.b16 %v3731
  %v3883 = vunpack.c.l.b16 %v3732
  %v3884 = vunpack.c.l.b16 %v3733
  %v3885 = vunpack.c.l.b16 %v3734
  %v3886 = vunpack.c.l.b16 %v3735
  %v3887 = vunpack.c.l.b16 %v3736
  %v3888 = vunpack.c.l.b16 %v3737
  %v3889 = vunpack.c.l.b16 %v3738
  %v3890 = vunpack.c.l.b16 %v3739
  %v3891 = vunpack.c.l.b16 %v3740
  %v3892 = vunpack.c.l.b16 %v3741
  %v3893 = vunpack.c.l.b16 %v3742
  %v3894 = vunpack.c.l.b16 %v3743
  %v3895 = vunpack.c.l.b16 %v3744
  %v3896 = vunpack.c.l.b16 %v3745
  %v3897 = vunpack.c.l.b16 %v3746
  %v3898 = vunpack.c.l.b16 %v3747
  %v3899 = vunpack.c.l.b16 %v3748
  %v3900 = vunpack.c.l.b16 %v3749
  %v3901 = vunpack.c.l.b16 %v3750
  %v3902 = vunpack.c.l.b16 %v3751
  %v3903 = vunpack.c.l.b16 %v3752
  %v3904 = vunpack.c.l.b16 %v3753
  %v3905 = vunpack.c.l.b16 %v3754
  %v3906 = vunpack.c.l.b16 %v3755
  %v3907 = vunpack.c.l.b16 %v3756
  %v3908 = vunpack.c.l.b16 %v3757
  %v3909 = vunpack.c.l.b16 %v3758
  %v3910 = vunpack.c.l.b16 %v3759
  %v3911 = vunpack.c.l.b16 %v3760
  %v3912 = vunpack.c.l.b16 %v3761
  %v3913 = vunpack.c.l.b16 %v3762
  %v3914 = vunpack.c.l.b16 %v3763
  %v3915 = vunpack.c.l.b16 %v3764
  %v3916 = vunpack.c.l.b16 %v3765
  %v3917 = vunpack.c.l.b16 %v3766
  %v3918 = vunpack.c.l.b16 %v3767
  %v3919 = vunpack.c.l.b16 %v3768
  %v3920 = vunpack.c.l.b16 %v3769
  %v3921 = vunpack.c.l.b16 %v3770
  %v3922 = vunpack.c.l.b16 %v3771
  %v3923 = vunpack.c.l.b16 %v3772
  %v3924 = vunpack.c.l.b16 %v3773
  %v3925 = vunpack.c.l.b16 %v3774
  %v3926 = vunpack.c.l.b16 %v3775
  %v3927 = vunpack.c.l.b16 %v3776
  %v3928 = vunpack.c.l.b16 %v3777
  %v3929 = vpack.c.b16 %v3866, %v3865
  %v3930 = vpack.c.b16 %v3868, %v3867
  %v3931 = vpack.c.b16 %v3870, %v3869
  %v3932 = vpack.c.b16 %v3872, %v3871
  %v3933 = vpack.c.b16 %v3874, %v3873
  %v3934 = vpack.c.b16 %v3876, %v3875
  %v3935 = vpack.c.b16 %v3878, %v3877
  %v3936 = vpack.c.b16 %v3880, %v3879
  %v3937 = vpack.c.b16 %v3882, %v3881
  %v3938 = vpack.c.b16 %v3884, %v3883
  %v3939 = vpack.c.b16 %v3886, %v3885
  %v3940 = vpack.c.b16 %v3888, %v3887
  %v3941 = vpack.c.b16 %v3890, %v3889
  %v3942 = vpack.c.b16 %v3892, %v3891
  %v3943 = vpack.c.b16 %v3894, %v3893
  %v3944 = vpack.c.b16 %v3896, %v3895
  %v3945 = vpack.c.b16 %v3898, %v3897
  %v3946 = vpack.c.b16 %v3900, %v3899
  %v3947 = vpack.c.b16 %v3902, %v3901
  %v3948 = vpack.c.b16 %v3904, %v3903
  %v3949 = vpack.c.b16 %v3906, %v3905
  %v3950 = vpack.c.b16 %v3908, %v3907
  %v3951 = vpack.c.b16 %v3910, %v3909
  %v3952 = vpack.c.b16 %v3912, %v3911
  %v3953 = vpack.c.b16 %v3914, %v3913
  %v3954 = vpack.c.b16 %v3916, %v3915
  %v3955 = vpack.c.b16 %v3918, %v3917
  %v3956 = vpack.c.b16 %v3920, %v3919
  %v3957 = vpack.c.b16 %v3922, %v3921
  %v3958 = vpack.c.b16 %v3924, %v3923
  %v3959 = vpack.c.b16 %v3926, %v3925
  %v3960 = vpack.c.b16 %v3928, %v3927
  %v4009 = vunpack.c.l.b16 %v3778
  %v4010 = vunpack.c.l.b16 %v3779
  %v4011 = vunpack.c.l.b16 %v3780
  %v4012 = vunpack.c.l.b16 %v3781
  %v4013 = vunpack.c.l.b16 %v3782
  %v4014 = vunpack.c.l.b16 %v3783
  %v4015 = vunpack.c.l.b16 %v3784
  %v4016 = vunpack.c.l.b16 %v3785
  %v4017 = vunpack.c.l.b16 %v3786
  %v4018 = vunpack.c.l.b16 %v3787
  %v4019 = vunpack.c.l.b16 %v3788
  %v4020 = vunpack.c.l.b16 %v3789
  %v4021 = vunpack.c.l.b16 %v3790
  %v4022 = vunpack.c.l.b16 %v3791
  %v4023 = vunpack.c.l.b16 %v3792
  %v4024 = vunpack.c.l.b16 %v3793
  %v4025 = vpack.c.b16 %v4010, %v4009
  %v4026 = vpack.c.b16 %v4012, %v4011
  %v4027 = vpack.c.b16 %v4014, %v4013
  %v4028 = vpack.c.b16 %v4016, %v4015
  %v4029 = vpack.c.b16 %v4018, %v4017
  %v4030 = vpack.c.b16 %v4020, %v4019
  %v4031 = vpack.c.b16 %v4022, %v4021
  %v4032 = vpack.c.b16 %v4024, %v4023
  %4041 = vmatprep.subr.bf16.mxu0 0
  %4042 = vmatpush1.bf16.msra.mxu0 %v4025
  %4043 = vmatprep.subr.bf16.mxu0 0
  %4044 = vmatpush1.bf16.msra.mxu0 %v4026
  %4045 = vmatprep.subr.bf16.mxu0 0
  %4046 = vmatpush1.bf16.msra.mxu0 %v4027
  %4047 = vmatprep.subr.bf16.mxu0 0
  %4048 = vmatpush1.bf16.msra.mxu0 %v4028
  %4049 = vmatprep.subr.bf16.mxu0 0
  %4050 = vmatpush1.bf16.msra.mxu0 %v4029
  %4051 = vmatprep.subr.bf16.mxu0 0
  %4052 = vmatpush1.bf16.msra.mxu0 %v4030
  %4053 = vmatprep.subr.bf16.mxu0 0
  %4054 = vmatpush1.bf16.msra.mxu0 %v4031
  %4055 = vmatprep.subr.bf16.mxu0 0
  %4056 = vmatpush1.bf16.msra.mxu0 %v4032
  %4057 = vmatprep.subr.bf16.mxu0 0
  %4058 = vmatpush1.bf16.msra.mxu0 0
  %4059 = vmatprep.subr.bf16.mxu0 0
  %4060 = vmatpush1.bf16.msra.mxu0 0
  %4061 = vmatprep.subr.bf16.mxu0 0
  %4062 = vmatpush1.bf16.msra.mxu0 0
  %4063 = vmatprep.subr.bf16.mxu0 0
  %4064 = vmatpush1.bf16.msra.mxu0 0
  %4065 = vmatprep.subr.bf16.mxu0 0
  %4066 = vmatpush1.bf16.msra.mxu0 0
  %4067 = vmatprep.subr.bf16.mxu0 0
  %4068 = vmatpush1.bf16.msra.mxu0 0
  %4069 = vmatprep.subr.bf16.mxu0 0
  %4070 = vmatpush1.bf16.msra.mxu0 0
  %4071 = vmatprep.subr.bf16.mxu0 0
  %4072 = vmatpush1.bf16.msra.mxu0 0
  %4073 = vmatprep.mubr.bf16.mxu0 0
  %4074 = vmatmul.mubr.bf16.gmra.mrb[0].mxu0 %v3929
  %v4075 = vpop.f32.mrb[0].mxu0
  %v4076 = vadd.f32 %v3799, %v4075
  %v4077 = vpop.f32.mrb[0].mxu0
  %v4078 = vpop.f32.mrb[0].mxu0
  %v4079 = vadd.f32 %v3799, %v4078
  %v4080 = vpop.f32.mrb[0].mxu0
  %4081 = vmatprep.mubr.bf16.mxu0 0
  %4082 = vmatmul.mubr.bf16.gmra.mrb[0].mxu0 %v3930
  %v4083 = vpop.f32.mrb[0].mxu0
  %v4084 = vadd.f32 %v3799, %v4083
  %v4085 = vpop.f32.mrb[0].mxu0
  %v4086 = vpop.f32.mrb[0].mxu0
  %v4087 = vadd.f32 %v3799, %v4086
  %v4088 = vpop.f32.mrb[0].mxu0
  %4089 = vmatprep.mubr.bf16.mxu0 0
  %4090 = vmatmul.mubr.bf16.gmra.mrb[0].mxu0 %v3931
  %v4091 = vpop.f32.mrb[0].mxu0
  %v4092 = vadd.f32 %v3799, %v4091
  %v4093 = vpop.f32.mrb[0].mxu0
  %v4094 = vpop.f32.mrb[0].mxu0
  %v4095 = vadd.f32 %v3799, %v4094
  %v4096 = vpop.f32.mrb[0].mxu0
  %4097 = vmatprep.mubr.bf16.mxu0 0
  %4098 = vmatmul.mubr.bf16.gmra.mrb[0].mxu0 %v3932
  %v4099 = vpop.f32.mrb[0].mxu0
  %v4100 = vadd.f32 %v3799, %v4099
  %v4101 = vpop.f32.mrb[0].mxu0
  %v4102 = vpop.f32.mrb[0].mxu0
  %v4103 = vadd.f32 %v3799, %v4102
  %v4104 = vpop.f32.mrb[0].mxu0
  %4105 = vmatprep.mubr.bf16.mxu0 0
  %4106 = vmatmul.mubr.bf16.gmra.mrb[0].mxu0 %v3933
  %v4107 = vpop.f32.mrb[0].mxu0
  %v4108 = vadd.f32 %v3799, %v4107
  %v4109 = vpop.f32.mrb[0].mxu0
  %v4110 = vpop.f32.mrb[0].mxu0
  %v4111 = vadd.f32 %v3799, %v4110
  %v4112 = vpop.f32.mrb[0].mxu0
  %4113 = vmatprep.mubr.bf16.mxu0 0
  %4114 = vmatmul.mubr.bf16.gmra.mrb[0].mxu0 %v3934
  %v4115 = vpop.f32.mrb[0].mxu0
  %v4116 = vadd.f32 %v3799, %v4115
  %v4117 = vpop.f32.mrb[0].mxu0
  %v4118 = vpop.f32.mrb[0].mxu0
  %v4119 = vadd.f32 %v3799, %v4118
  %v4120 = vpop.f32.mrb[0].mxu0
  %4121 = vmatprep.mubr.bf16.mxu0 0
  %4122 = vmatmul.mubr.bf16.gmra.mrb[0].mxu0 %v3935
  %v4123 = vpop.f32.mrb[0].mxu0
  %v4124 = vadd.f32 %v3799, %v4123
  %v4125 = vpop.f32.mrb[0].mxu0
  %v4126 = vpop.f32.mrb[0].mxu0
  %v4127 = vadd.f32 %v3799, %v4126
  %v4128 = vpop.f32.mrb[0].mxu0
  %4129 = vmatprep.mubr.bf16.mxu0 0
  %4130 = vmatmul.mubr.bf16.gmra.mrb[0].mxu0 %v3936
  %v4131 = vpop.f32.mrb[0].mxu0
  %v4132 = vadd.f32 %v3799, %v4131
  %v4133 = vpop.f32.mrb[0].mxu0
  %v4134 = vpop.f32.mrb[0].mxu0
  %v4135 = vadd.f32 %v3799, %v4134
  %v4136 = vpop.f32.mrb[0].mxu0
  %4137 = vmatprep.mubr.bf16.mxu0 0
  %4138 = vmatmul.mubr.bf16.gmra.mrb[0].mxu0 %v3937
  %v4139 = vpop.f32.mrb[0].mxu0
  %v4140 = vadd.f32 %v3799, %v4139
  %v4141 = vpop.f32.mrb[0].mxu0
  %v4142 = vpop.f32.mrb[0].mxu0
  %v4143 = vadd.f32 %v3799, %v4142
  %v4144 = vpop.f32.mrb[0].mxu0
  %4145 = vmatprep.mubr.bf16.mxu0 0
  %4146 = vmatmul.mubr.bf16.gmra.mrb[0].mxu0 %v3938
  %v4147 = vpop.f32.mrb[0].mxu0
  %v4148 = vadd.f32 %v3799, %v4147
  %v4149 = vpop.f32.mrb[0].mxu0
  %v4150 = vpop.f32.mrb[0].mxu0
  %v4151 = vadd.f32 %v3799, %v4150
  %v4152 = vpop.f32.mrb[0].mxu0
  %4153 = vmatprep.mubr.bf16.mxu0 0
  %4154 = vmatmul.mubr.bf16.gmra.mrb[0].mxu0 %v3939
  %v4155 = vpop.f32.mrb[0].mxu0
  %v4156 = vadd.f32 %v3799, %v4155
  %v4157 = vpop.f32.mrb[0].mxu0
  %v4158 = vpop.f32.mrb[0].mxu0
  %v4159 = vadd.f32 %v3799, %v4158
  %v4160 = vpop.f32.mrb[0].mxu0
  %4161 = vmatprep.mubr.bf16.mxu0 0
  %4162 = vmatmul.mubr.bf16.gmra.mrb[0].mxu0 %v3940
  %v4163 = vpop.f32.mrb[0].mxu0
  %v4164 = vadd.f32 %v3799, %v4163
  %v4165 = vpop.f32.mrb[0].mxu0
  %v4166 = vpop.f32.mrb[0].mxu0
  %v4167 = vadd.f32 %v3799, %v4166
  %v4168 = vpop.f32.mrb[0].mxu0
  %4169 = vmatprep.mubr.bf16.mxu0 0
  %4170 = vmatmul.mubr.bf16.gmra.mrb[0].mxu0 %v3941
  %v4171 = vpop.f32.mrb[0].mxu0
  %v4172 = vadd.f32 %v3799, %v4171
  %v4173 = vpop.f32.mrb[0].mxu0
  %v4174 = vpop.f32.mrb[0].mxu0
  %v4175 = vadd.f32 %v3799, %v4174
  %v4176 = vpop.f32.mrb[0].mxu0
  %4177 = vmatprep.mubr.bf16.mxu0 0
  %4178 = vmatmul.mubr.bf16.gmra.mrb[0].mxu0 %v3942
  %v4179 = vpop.f32.mrb[0].mxu0
  %v4180 = vadd.f32 %v3799, %v4179
  %v4181 = vpop.f32.mrb[0].mxu0
  %v4182 = vpop.f32.mrb[0].mxu0
  %v4183 = vadd.f32 %v3799, %v4182
  %v4184 = vpop.f32.mrb[0].mxu0
  %4185 = vmatprep.mubr.bf16.mxu0 0
  %4186 = vmatmul.mubr.bf16.gmra.mrb[0].mxu0 %v3943
  %v4187 = vpop.f32.mrb[0].mxu0
  %v4188 = vadd.f32 %v3799, %v4187
  %v4189 = vpop.f32.mrb[0].mxu0
  %v4190 = vpop.f32.mrb[0].mxu0
  %v4191 = vadd.f32 %v3799, %v4190
  %v4192 = vpop.f32.mrb[0].mxu0
  %4193 = vmatprep.mubr.bf16.mxu0 0
  %4194 = vmatmul.mubr.bf16.gmra.mrb[0].mxu0 %v3944
  %v4195 = vpop.f32.mrb[0].mxu0
  %v4196 = vadd.f32 %v3799, %v4195
  %v4197 = vpop.f32.mrb[0].mxu0
  %v4198 = vpop.f32.mrb[0].mxu0
  %v4199 = vadd.f32 %v3799, %v4198
  %v4200 = vpop.f32.mrb[0].mxu0
  %4201 = vmatprep.mubr.bf16.mxu0 0
  %4202 = vmatmul.mubr.bf16.gmra.mrb[0].mxu0 %v3945
  %v4203 = vpop.f32.mrb[0].mxu0
  %v4204 = vadd.f32 %v3799, %v4203
  %v4205 = vpop.f32.mrb[0].mxu0
  %v4206 = vpop.f32.mrb[0].mxu0
  %v4207 = vadd.f32 %v3799, %v4206
  %v4208 = vpop.f32.mrb[0].mxu0
  %4209 = vmatprep.mubr.bf16.mxu0 0
  %4210 = vmatmul.mubr.bf16.gmra.mrb[0].mxu0 %v3946
  %v4211 = vpop.f32.mrb[0].mxu0
  %v4212 = vadd.f32 %v3799, %v4211
  %v4213 = vpop.f32.mrb[0].mxu0
  %v4214 = vpop.f32.mrb[0].mxu0
  %v4215 = vadd.f32 %v3799, %v4214
  %v4216 = vpop.f32.mrb[0].mxu0
  %4217 = vmatprep.mubr.bf16.mxu0 0
  %4218 = vmatmul.mubr.bf16.gmra.mrb[0].mxu0 %v3947
  %v4219 = vpop.f32.mrb[0].mxu0
  %v4220 = vadd.f32 %v3799, %v4219
  %v4221 = vpop.f32.mrb[0].mxu0
  %v4222 = vpop.f32.mrb[0].mxu0
  %v4223 = vadd.f32 %v3799, %v4222
  %v4224 = vpop.f32.mrb[0].mxu0
  %4225 = vmatprep.mubr.bf16.mxu0 0
  %4226 = vmatmul.mubr.bf16.gmra.mrb[0].mxu0 %v3948
  %v4227 = vpop.f32.mrb[0].mxu0
  %v4228 = vadd.f32 %v3799, %v4227
  %v4229 = vpop.f32.mrb[0].mxu0
  %v4230 = vpop.f32.mrb[0].mxu0
  %v4231 = vadd.f32 %v3799, %v4230
  %v4232 = vpop.f32.mrb[0].mxu0
  %4233 = vmatprep.mubr.bf16.mxu0 0
  %4234 = vmatmul.mubr.bf16.gmra.mrb[0].mxu0 %v3949
  %v4235 = vpop.f32.mrb[0].mxu0
  %v4236 = vadd.f32 %v3799, %v4235
  %v4237 = vpop.f32.mrb[0].mxu0
  %v4238 = vpop.f32.mrb[0].mxu0
  %v4239 = vadd.f32 %v3799, %v4238
  %v4240 = vpop.f32.mrb[0].mxu0
  %4241 = vmatprep.mubr.bf16.mxu0 0
  %4242 = vmatmul.mubr.bf16.gmra.mrb[0].mxu0 %v3950
  %v4243 = vpop.f32.mrb[0].mxu0
  %v4244 = vadd.f32 %v3799, %v4243
  %v4245 = vpop.f32.mrb[0].mxu0
  %v4246 = vpop.f32.mrb[0].mxu0
  %v4247 = vadd.f32 %v3799, %v4246
  %v4248 = vpop.f32.mrb[0].mxu0
  %4249 = vmatprep.mubr.bf16.mxu0 0
  %4250 = vmatmul.mubr.bf16.gmra.mrb[0].mxu0 %v3951
  %v4251 = vpop.f32.mrb[0].mxu0
  %v4252 = vadd.f32 %v3799, %v4251
  %v4253 = vpop.f32.mrb[0].mxu0
  %v4254 = vpop.f32.mrb[0].mxu0
  %v4255 = vadd.f32 %v3799, %v4254
  %v4256 = vpop.f32.mrb[0].mxu0
  %4257 = vmatprep.mubr.bf16.mxu0 0
  %4258 = vmatmul.mubr.bf16.gmra.mrb[0].mxu0 %v3952
  %v4259 = vpop.f32.mrb[0].mxu0
  %v4260 = vadd.f32 %v3799, %v4259
  %v4261 = vpop.f32.mrb[0].mxu0
  %v4262 = vpop.f32.mrb[0].mxu0
  %v4263 = vadd.f32 %v3799, %v4262
  %v4264 = vpop.f32.mrb[0].mxu0
  %4265 = vmatprep.mubr.bf16.mxu0 0
  %4266 = vmatmul.mubr.bf16.gmra.mrb[0].mxu0 %v3953
  %v4267 = vpop.f32.mrb[0].mxu0
  %v4268 = vadd.f32 %v3799, %v4267
  %v4269 = vpop.f32.mrb[0].mxu0
  %v4270 = vpop.f32.mrb[0].mxu0
  %v4271 = vadd.f32 %v3799, %v4270
  %v4272 = vpop.f32.mrb[0].mxu0
  %4273 = vmatprep.mubr.bf16.mxu0 0
  %4274 = vmatmul.mubr.bf16.gmra.mrb[0].mxu0 %v3954
  %v4275 = vpop.f32.mrb[0].mxu0
  %v4276 = vadd.f32 %v3799, %v4275
  %v4277 = vpop.f32.mrb[0].mxu0
  %v4278 = vpop.f32.mrb[0].mxu0
  %v4279 = vadd.f32 %v3799, %v4278
  %v4280 = vpop.f32.mrb[0].mxu0
  %4281 = vmatprep.mubr.bf16.mxu0 0
  %4282 = vmatmul.mubr.bf16.gmra.mrb[0].mxu0 %v3955
  %v4283 = vpop.f32.mrb[0].mxu0
  %v4284 = vadd.f32 %v3799, %v4283
  %v4285 = vpop.f32.mrb[0].mxu0
  %v4286 = vpop.f32.mrb[0].mxu0
  %v4287 = vadd.f32 %v3799, %v4286
  %v4288 = vpop.f32.mrb[0].mxu0
  %4289 = vmatprep.mubr.bf16.mxu0 0
  %4290 = vmatmul.mubr.bf16.gmra.mrb[0].mxu0 %v3956
  %v4291 = vpop.f32.mrb[0].mxu0
  %v4292 = vadd.f32 %v3799, %v4291
  %v4293 = vpop.f32.mrb[0].mxu0
  %v4294 = vpop.f32.mrb[0].mxu0
  %v4295 = vadd.f32 %v3799, %v4294
  %v4296 = vpop.f32.mrb[0].mxu0
  %4297 = vmatprep.mubr.bf16.mxu0 0
  %4298 = vmatmul.mubr.bf16.gmra.mrb[0].mxu0 %v3957
  %v4299 = vpop.f32.mrb[0].mxu0
  %v4300 = vadd.f32 %v3799, %v4299
  %v4301 = vpop.f32.mrb[0].mxu0
  %v4302 = vpop.f32.mrb[0].mxu0
  %v4303 = vadd.f32 %v3799, %v4302
  %v4304 = vpop.f32.mrb[0].mxu0
  %4305 = vmatprep.mubr.bf16.mxu0 0
  %4306 = vmatmul.mubr.bf16.gmra.mrb[0].mxu0 %v3958
  %v4307 = vpop.f32.mrb[0].mxu0
  %v4308 = vadd.f32 %v3799, %v4307
  %v4309 = vpop.f32.mrb[0].mxu0
  %v4310 = vpop.f32.mrb[0].mxu0
  %v4311 = vadd.f32 %v3799, %v4310
  %v4312 = vpop.f32.mrb[0].mxu0
  %4313 = vmatprep.mubr.bf16.mxu0 0
  %4314 = vmatmul.mubr.bf16.gmra.mrb[0].mxu0 %v3959
  %v4315 = vpop.f32.mrb[0].mxu0
  %v4316 = vadd.f32 %v3799, %v4315
  %v4317 = vpop.f32.mrb[0].mxu0
  %v4318 = vpop.f32.mrb[0].mxu0
  %v4319 = vadd.f32 %v3799, %v4318
  %v4320 = vpop.f32.mrb[0].mxu0
  %4321 = vmatprep.mubr.bf16.mxu0 0
  %4322 = vmatmul.mubr.bf16.gmra.mrb[0].mxu0 %v3960
  %v4323 = vpop.f32.mrb[0].mxu0
  %v4324 = vadd.f32 %v3799, %v4323
  %v4325 = vpop.f32.mrb[0].mxu0
  %v4326 = vpop.f32.mrb[0].mxu0
  %v4327 = vadd.f32 %v3799, %v4326
  %v4328 = vpop.f32.mrb[0].mxu0
  %4329 = vdwg.mxu0
  %v4330 = vmax.f32 %v4076, 0.0
  %v4331 = vmax.f32 %v4079, 0.0
  %v4332 = vmax.f32 %v4084, 0.0
  %v4333 = vmax.f32 %v4087, 0.0
  %v4334 = vmax.f32 %v4092, 0.0
  %v4335 = vmax.f32 %v4095, 0.0
  %v4336 = vmax.f32 %v4100, 0.0
  %v4337 = vmax.f32 %v4103, 0.0
  %v4338 = vmax.f32 %v4108, 0.0
  %v4339 = vmax.f32 %v4111, 0.0
  %v4340 = vmax.f32 %v4116, 0.0
  %v4341 = vmax.f32 %v4119, 0.0
  %v4342 = vmax.f32 %v4124, 0.0
  %v4343 = vmax.f32 %v4127, 0.0
  %v4344 = vmax.f32 %v4132, 0.0
  %v4345 = vmax.f32 %v4135, 0.0
  %v4346 = vmax.f32 %v4140, 0.0
  %v4347 = vmax.f32 %v4143, 0.0
  %v4348 = vmax.f32 %v4148, 0.0
  %v4349 = vmax.f32 %v4151, 0.0
  %v4350 = vmax.f32 %v4156, 0.0
  %v4351 = vmax.f32 %v4159, 0.0
  %v4352 = vmax.f32 %v4164, 0.0
  %v4353 = vmax.f32 %v4167, 0.0
  %v4354 = vmax.f32 %v4172, 0.0
  %v4355 = vmax.f32 %v4175, 0.0
  %v4356 = vmax.f32 %v4180, 0.0
  %v4357 = vmax.f32 %v4183, 0.0
  %v4358 = vmax.f32 %v4188, 0.0
  %v4359 = vmax.f32 %v4191, 0.0
  %v4360 = vmax.f32 %v4196, 0.0
  %v4361 = vmax.f32 %v4199, 0.0
  %v4362 = vmax.f32 %v4204, 0.0
  %v4363 = vmax.f32 %v4207, 0.0
  %v4364 = vmax.f32 %v4212, 0.0
  %v4365 = vmax.f32 %v4215, 0.0
  %v4366 = vmax.f32 %v4220, 0.0
  %v4367 = vmax.f32 %v4223, 0.0
  %v4368 = vmax.f32 %v4228, 0.0
  %v4369 = vmax.f32 %v4231, 0.0
  %v4370 = vmax.f32 %v4236, 0.0
  %v4371 = vmax.f32 %v4239, 0.0
  %v4372 = vmax.f32 %v4244, 0.0
  %v4373 = vmax.f32 %v4247, 0.0
  %v4374 = vmax.f32 %v4252, 0.0
  %v4375 = vmax.f32 %v4255, 0.0
  %v4376 = vmax.f32 %v4260, 0.0
  %v4377 = vmax.f32 %v4263, 0.0
  %v4378 = vmax.f32 %v4268, 0.0
  %v4379 = vmax.f32 %v4271, 0.0
  %v4380 = vmax.f32 %v4276, 0.0
  %v4381 = vmax.f32 %v4279, 0.0
  %v4382 = vmax.f32 %v4284, 0.0
  %v4383 = vmax.f32 %v4287, 0.0
  %v4384 = vmax.f32 %v4292, 0.0
  %v4385 = vmax.f32 %v4295, 0.0
  %v4386 = vmax.f32 %v4300, 0.0
  %v4387 = vmax.f32 %v4303, 0.0
  %v4388 = vmax.f32 %v4308, 0.0
  %v4389 = vmax.f32 %v4311, 0.0
  %v4390 = vmax.f32 %v4316, 0.0
  %v4391 = vmax.f32 %v4319, 0.0
  %v4392 = vmax.f32 %v4324, 0.0
  %v4393 = vmax.f32 %v4327, 0.0
  %v4394 = vpack.c.bf16 %v4331, %v4330
  %v4395 = vpack.c.bf16 %v4333, %v4332
  %v4396 = vpack.c.bf16 %v4335, %v4334
  %v4397 = vpack.c.bf16 %v4337, %v4336
  %v4398 = vpack.c.bf16 %v4339, %v4338
  %v4399 = vpack.c.bf16 %v4341, %v4340
  %v4400 = vpack.c.bf16 %v4343, %v4342
  %v4401 = vpack.c.bf16 %v4345, %v4344
  %v4402 = vpack.c.bf16 %v4347, %v4346
  %v4403 = vpack.c.bf16 %v4349, %v4348
  %v4404 = vpack.c.bf16 %v4351, %v4350
  %v4405 = vpack.c.bf16 %v4353, %v4352
  %v4406 = vpack.c.bf16 %v4355, %v4354
  %v4407 = vpack.c.bf16 %v4357, %v4356
  %v4408 = vpack.c.bf16 %v4359, %v4358
  %v4409 = vpack.c.bf16 %v4361, %v4360
  %v4410 = vpack.c.bf16 %v4363, %v4362
  %v4411 = vpack.c.bf16 %v4365, %v4364
  %v4412 = vpack.c.bf16 %v4367, %v4366
  %v4413 = vpack.c.bf16 %v4369, %v4368
  %v4414 = vpack.c.bf16 %v4371, %v4370
  %v4415 = vpack.c.bf16 %v4373, %v4372
  %v4416 = vpack.c.bf16 %v4375, %v4374
  %v4417 = vpack.c.bf16 %v4377, %v4376
  %v4418 = vpack.c.bf16 %v4379, %v4378
  %v4419 = vpack.c.bf16 %v4381, %v4380
  %v4420 = vpack.c.bf16 %v4383, %v4382
  %v4421 = vpack.c.bf16 %v4385, %v4384
  %v4422 = vpack.c.bf16 %v4387, %v4386
  %v4423 = vpack.c.bf16 %v4389, %v4388
  %v4424 = vpack.c.bf16 %v4391, %v4390
  %v4425 = vpack.c.bf16 %v4393, %v4392
  %v4458 = vunpack.c.l.b16 %v4394
  %v4459 = vunpack.c.h.b16 %v4394
  %v4460 = vunpack.c.l.b16 %v4395
  %v4461 = vunpack.c.h.b16 %v4395
  %v4462 = vunpack.c.l.b16 %v4396
  %v4463 = vunpack.c.h.b16 %v4396
  %v4464 = vunpack.c.l.b16 %v4397
  %v4465 = vunpack.c.h.b16 %v4397
  %v4466 = vunpack.c.l.b16 %v4398
  %v4467 = vunpack.c.h.b16 %v4398
  %v4468 = vunpack.c.l.b16 %v4399
  %v4469 = vunpack.c.h.b16 %v4399
  %v4470 = vunpack.c.l.b16 %v4400
  %v4471 = vunpack.c.h.b16 %v4400
  %v4472 = vunpack.c.l.b16 %v4401
  %v4473 = vunpack.c.h.b16 %v4401
  %v4474 = vunpack.c.l.b16 %v4402
  %v4475 = vunpack.c.h.b16 %v4402
  %v4476 = vunpack.c.l.b16 %v4403
  %v4477 = vunpack.c.h.b16 %v4403
  %v4478 = vunpack.c.l.b16 %v4404
  %v4479 = vunpack.c.h.b16 %v4404
  %v4480 = vunpack.c.l.b16 %v4405
  %v4481 = vunpack.c.h.b16 %v4405
  %v4482 = vunpack.c.l.b16 %v4406
  %v4483 = vunpack.c.h.b16 %v4406
  %v4484 = vunpack.c.l.b16 %v4407
  %v4485 = vunpack.c.h.b16 %v4407
  %v4486 = vunpack.c.l.b16 %v4408
  %v4487 = vunpack.c.h.b16 %v4408
  %v4488 = vunpack.c.l.b16 %v4409
  %v4489 = vunpack.c.h.b16 %v4409
  %v4490 = vunpack.c.l.b16 %v4410
  %v4491 = vunpack.c.h.b16 %v4410
  %v4492 = vunpack.c.l.b16 %v4411
  %v4493 = vunpack.c.h.b16 %v4411
  %v4494 = vunpack.c.l.b16 %v4412
  %v4495 = vunpack.c.h.b16 %v4412
  %v4496 = vunpack.c.l.b16 %v4413
  %v4497 = vunpack.c.h.b16 %v4413
  %v4498 = vunpack.c.l.b16 %v4414
  %v4499 = vunpack.c.h.b16 %v4414
  %v4500 = vunpack.c.l.b16 %v4415
  %v4501 = vunpack.c.h.b16 %v4415
  %v4502 = vunpack.c.l.b16 %v4416
  %v4503 = vunpack.c.h.b16 %v4416
  %v4504 = vunpack.c.l.b16 %v4417
  %v4505 = vunpack.c.h.b16 %v4417
  %v4506 = vunpack.c.l.b16 %v4418
  %v4507 = vunpack.c.h.b16 %v4418
  %v4508 = vunpack.c.l.b16 %v4419
  %v4509 = vunpack.c.h.b16 %v4419
  %v4510 = vunpack.c.l.b16 %v4420
  %v4511 = vunpack.c.h.b16 %v4420
  %v4512 = vunpack.c.l.b16 %v4421
  %v4513 = vunpack.c.h.b16 %v4421
  %v4514 = vunpack.c.l.b16 %v4422
  %v4515 = vunpack.c.h.b16 %v4422
  %v4516 = vunpack.c.l.b16 %v4423
  %v4517 = vunpack.c.h.b16 %v4423
  %v4518 = vunpack.c.l.b16 %v4424
  %v4519 = vunpack.c.h.b16 %v4424
  %v4520 = vunpack.c.l.b16 %v4425
  %v4521 = vunpack.c.h.b16 %v4425
  %v4522 = vpack.c.b16 %v4458, %v4458
  %v4523 = vpack.c.b16 %v4459, %v4459
  %v4524 = vpack.c.b16 %v4460, %v4460
  %v4525 = vpack.c.b16 %v4461, %v4461
  %v4526 = vpack.c.b16 %v4462, %v4462
  %v4527 = vpack.c.b16 %v4463, %v4463
  %v4528 = vpack.c.b16 %v4464, %v4464
  %v4529 = vpack.c.b16 %v4465, %v4465
  %v4530 = vpack.c.b16 %v4466, %v4466
  %v4531 = vpack.c.b16 %v4467, %v4467
  %v4532 = vpack.c.b16 %v4468, %v4468
  %v4533 = vpack.c.b16 %v4469, %v4469
  %v4534 = vpack.c.b16 %v4470, %v4470
  %v4535 = vpack.c.b16 %v4471, %v4471
  %v4536 = vpack.c.b16 %v4472, %v4472
  %v4537 = vpack.c.b16 %v4473, %v4473
  %v4538 = vpack.c.b16 %v4474, %v4474
  %v4539 = vpack.c.b16 %v4475, %v4475
  %v4540 = vpack.c.b16 %v4476, %v4476
  %v4541 = vpack.c.b16 %v4477, %v4477
  %v4542 = vpack.c.b16 %v4478, %v4478
  %v4543 = vpack.c.b16 %v4479, %v4479
  %v4544 = vpack.c.b16 %v4480, %v4480
  %v4545 = vpack.c.b16 %v4481, %v4481
  %v4546 = vpack.c.b16 %v4482, %v4482
  %v4547 = vpack.c.b16 %v4483, %v4483
  %v4548 = vpack.c.b16 %v4484, %v4484
  %v4549 = vpack.c.b16 %v4485, %v4485
  %v4550 = vpack.c.b16 %v4486, %v4486
  %v4551 = vpack.c.b16 %v4487, %v4487
  %v4552 = vpack.c.b16 %v4488, %v4488
  %v4553 = vpack.c.b16 %v4489, %v4489
  %v4554 = vpack.c.b16 %v4490, %v4490
  %v4555 = vpack.c.b16 %v4491, %v4491
  %v4556 = vpack.c.b16 %v4492, %v4492
  %v4557 = vpack.c.b16 %v4493, %v4493
  %v4558 = vpack.c.b16 %v4494, %v4494
  %v4559 = vpack.c.b16 %v4495, %v4495
  %v4560 = vpack.c.b16 %v4496, %v4496
  %v4561 = vpack.c.b16 %v4497, %v4497
  %v4562 = vpack.c.b16 %v4498, %v4498
  %v4563 = vpack.c.b16 %v4499, %v4499
  %v4564 = vpack.c.b16 %v4500, %v4500
  %v4565 = vpack.c.b16 %v4501, %v4501
  %v4566 = vpack.c.b16 %v4502, %v4502
  %v4567 = vpack.c.b16 %v4503, %v4503
  %v4568 = vpack.c.b16 %v4504, %v4504
  %v4569 = vpack.c.b16 %v4505, %v4505
  %v4570 = vpack.c.b16 %v4506, %v4506
  %v4571 = vpack.c.b16 %v4507, %v4507
  %v4572 = vpack.c.b16 %v4508, %v4508
  %v4573 = vpack.c.b16 %v4509, %v4509
  %v4574 = vpack.c.b16 %v4510, %v4510
  %v4575 = vpack.c.b16 %v4511, %v4511
  %v4576 = vpack.c.b16 %v4512, %v4512
  %v4577 = vpack.c.b16 %v4513, %v4513
  %v4578 = vpack.c.b16 %v4514, %v4514
  %v4579 = vpack.c.b16 %v4515, %v4515
  %v4580 = vpack.c.b16 %v4516, %v4516
  %v4581 = vpack.c.b16 %v4517, %v4517
  %v4582 = vpack.c.b16 %v4518, %v4518
  %v4583 = vpack.c.b16 %v4519, %v4519
  %v4584 = vpack.c.b16 %v4520, %v4520
  %v4585 = vpack.c.b16 %v4521, %v4521
  %4650 = vst [vmem:[%s7] sm:$0xf] %v4522
  %4651 = vst [vmem:[%s7 + $0x4] sm:$0xf] %v4523
  %4652 = vst [vmem:[%s7 + $0x8] sm:$0xf] %v4524
  %4653 = vst [vmem:[%s7 + $0xc] sm:$0xf] %v4525
  %4654 = vst [vmem:[%s7 + $0x10] sm:$0xf] %v4526
  %4655 = vst [vmem:[%s7 + $0x14] sm:$0xf] %v4527
  %4656 = vst [vmem:[%s7 + $0x18] sm:$0xf] %v4528
  %4657 = vst [vmem:[%s7 + $0x1c] sm:$0xf] %v4529
  %4658 = vst [vmem:[%s7 + $0x20] sm:$0xf] %v4530
  %4659 = vst [vmem:[%s7 + $0x24] sm:$0xf] %v4531
  %4660 = vst [vmem:[%s7 + $0x28] sm:$0xf] %v4532
  %4661 = vst [vmem:[%s7 + $0x2c] sm:$0xf] %v4533
  %4662 = vst [vmem:[%s7 + $0x30] sm:$0xf] %v4534
  %4663 = vst [vmem:[%s7 + $0x34] sm:$0xf] %v4535
  %4664 = vst [vmem:[%s7 + $0x38] sm:$0xf] %v4536
  %4665 = vst [vmem:[%s7 + $0x3c] sm:$0xf] %v4537
  %4666 = vst [vmem:[%s7 + $0x40] sm:$0xf] %v4538
  %4667 = vst [vmem:[%s7 + $0x44] sm:$0xf] %v4539
  %4668 = vst [vmem:[%s7 + $0x48] sm:$0xf] %v4540
  %4669 = vst [vmem:[%s7 + $0x4c] sm:$0xf] %v4541
  %4670 = vst [vmem:[%s7 + $0x50] sm:$0xf] %v4542
  %4671 = vst [vmem:[%s7 + $0x54] sm:$0xf] %v4543
  %4672 = vst [vmem:[%s7 + $0x58] sm:$0xf] %v4544
  %4673 = vst [vmem:[%s7 + $0x5c] sm:$0xf] %v4545
  %4674 = vst [vmem:[%s7 + $0x60] sm:$0xf] %v4546
  %4675 = vst [vmem:[%s7 + $0x64] sm:$0xf] %v4547
  %4676 = vst [vmem:[%s7 + $0x68] sm:$0xf] %v4548
  %4677 = vst [vmem:[%s7 + $0x6c] sm:$0xf] %v4549
  %4678 = vst [vmem:[%s7 + $0x70] sm:$0xf] %v4550
  %4679 = vst [vmem:[%s7 + $0x74] sm:$0xf] %v4551
  %4680 = vst [vmem:[%s7 + $0x78] sm:$0xf] %v4552
  %4681 = vst [vmem:[%s7 + $0x7c] sm:$0xf] %v4553
  %4682 = vst [vmem:[%s7 + $0x80] sm:$0xf] %v4554
  %4683 = vst [vmem:[%s7 + $0x84] sm:$0xf] %v4555
  %4684 = vst [vmem:[%s7 + $0x88] sm:$0xf] %v4556
  %4685 = vst [vmem:[%s7 + $0x8c] sm:$0xf] %v4557
  %4686 = vst [vmem:[%s7 + $0x90] sm:$0xf] %v4558
  %4687 = vst [vmem:[%s7 + $0x94] sm:$0xf] %v4559
  %4688 = vst [vmem:[%s7 + $0x98] sm:$0xf] %v4560
  %4689 = vst [vmem:[%s7 + $0x9c] sm:$0xf] %v4561
  %4690 = vst [vmem:[%s7 + $0xa0] sm:$0xf] %v4562
  %4691 = vst [vmem:[%s7 + $0xa4] sm:$0xf] %v4563
  %4692 = vst [vmem:[%s7 + $0xa8] sm:$0xf] %v4564
  %4693 = vst [vmem:[%s7 + $0xac] sm:$0xf] %v4565
  %4694 = vst [vmem:[%s7 + $0xb0] sm:$0xf] %v4566
  %4695 = vst [vmem:[%s7 + $0xb4] sm:$0xf] %v4567
  %4696 = vst [vmem:[%s7 + $0xb8] sm:$0xf] %v4568
  %4697 = vst [vmem:[%s7 + $0xbc] sm:$0xf] %v4569
  %4698 = vst [vmem:[%s7 + $0xc0] sm:$0xf] %v4570
  %4699 = vst [vmem:[%s7 + $0xc4] sm:$0xf] %v4571
  %4700 = vst [vmem:[%s7 + $0xc8] sm:$0xf] %v4572
  %4701 = vst [vmem:[%s7 + $0xcc] sm:$0xf] %v4573
  %4702 = vst [vmem:[%s7 + $0xd0] sm:$0xf] %v4574
  %4703 = vst [vmem:[%s7 + $0xd4] sm:$0xf] %v4575
  %4704 = vst [vmem:[%s7 + $0xd8] sm:$0xf] %v4576
  %4705 = vst [vmem:[%s7 + $0xdc] sm:$0xf] %v4577
  %4706 = vst [vmem:[%s7 + $0xe0] sm:$0xf] %v4578
  %4707 = vst [vmem:[%s7 + $0xe4] sm:$0xf] %v4579
  %4708 = vst [vmem:[%s7 + $0xe8] sm:$0xf] %v4580
  %4709 = vst [vmem:[%s7 + $0xec] sm:$0xf] %v4581
  %4710 = vst [vmem:[%s7 + $0xf0] sm:$0xf] %v4582
  %4711 = vst [vmem:[%s7 + $0xf4] sm:$0xf] %v4583
  %4712 = vst [vmem:[%s7 + $0xf8] sm:$0xf] %v4584
  %4713 = vst [vmem:[%s7 + $0xfc] sm:$0xf] %v4585
  // Predicated region
  $region26: #{forward.4} parent=0 // pred_check
    _
  $region27: #{forward.4} parent=0 // pred_check_branch
    %4715 = sbr.rel (0) target = $region29
  $region28: #{forward.4} parent=0 // pred_region
    _
  $region29: #{forward.4} parent=0 // pred_fallthru
    _
  // Predicated region
  $region30: #{forward.4} parent=0 // pred_check
    _
  $region31: #{forward.4} parent=0 // pred_check_branch
    %4717 = sbr.rel (0) target = $region33
  $region32: #{forward.4} parent=0 // pred_region
    _
  $region33: #{forward.4} parent=0 // pred_fallthru
    _
  // Predicated region
  $region34: #{forward.4} parent=0 // pred_check
    _
  $region35: #{forward.4} parent=0 // pred_check_branch
    %4719 = sbr.rel (0) target = $region37
  $region36: #{forward.4} parent=0 // pred_region
    _
  $region37: #{forward.4} parent=0 // pred_fallthru
    _
  // Predicated region
  $region38: #{forward.4} parent=0 // pred_check
    _
  $region39: #{forward.4} parent=0 // pred_check_branch
    %4721 = sbr.rel (0) target = $region41
  $region40: #{forward.4} parent=0 // pred_region
    _
  $region41: #{forward.4} parent=0 // pred_fallthru
    _

// kernel: forward.5
$region0: #{forward.5}
  #allocation0 [shape = 'u32[]', space=smem, size = 0x4, offset = 0x4, fixed_abs, tag = 'smem constant byte address 0x4 - core index']
  #allocation1 [shape = 'u32[144,128]{1,0:T(1,128)}', space=vmem, size = 0x12000, scoped, tag = 'internal scratch']
  %s0 = inlined_call_operand.vmem [shape: bf16[512,384], index: 0, kind: input, shape index: {}]
  %s1 = inlined_call_operand.vmem [shape: bf16[384,128], index: 1, kind: input, shape index: {}]
  %s2 = inlined_call_operand.vmem [shape: f32[1,128], index: 2, kind: input, shape index: {}]
  %s3 = inlined_call_operand.vmem [shape: bf16[128,256], index: 3, kind: input, shape index: {}]
  %s4 = inlined_call_operand.vmem [shape: bf16[256,128], index: 4, kind: input, shape index: {}]
  %s5 = inlined_call_operand.vmem [shape: f32[1,128], index: 5, kind: input, shape index: {}]
  %s6 = inlined_call_operand.vmem [shape: bf16[512,128], index: 6, kind: output, shape index: {0}]
  %s7 = inlined_call_operand.vmem [shape: bf16[128,128], index: 7, kind: output, shape index: {1}]
  %8 = xla_tuple %s6, %s7
  %s9 = sld [smem:[#allocation0]]
  $region42: #{forward.5} parent=0
    _
  %s11 = ssub.s32 1, %s9
  %s12 = scalar_select 0, %s11, %s9
  // Predicated region
  $region2: #{forward.5} parent=0 // pred_check
    _
  $region3: #{forward.5} parent=0 // pred_check_branch
    %14 = sbr.rel (0) target = $region5
  $region4: #{forward.5} parent=0 // pred_region
    _
  $region5: #{forward.5} parent=0 // pred_fallthru
    _
  // Predicated region
  $region6: #{forward.5} parent=0 // pred_check
    _
  $region7: #{forward.5} parent=0 // pred_check_branch
    %16 = sbr.rel (0) target = $region9
  $region8: #{forward.5} parent=0 // pred_region
    _
  $region9: #{forward.5} parent=0 // pred_fallthru
    _
  // Predicated region
  $region10: #{forward.5} parent=0 // pred_check
    _
  $region11: #{forward.5} parent=0 // pred_check_branch
    %18 = sbr.rel (0) target = $region13
  $region12: #{forward.5} parent=0 // pred_region
    _
  $region13: #{forward.5} parent=0 // pred_fallthru
    _
  // Predicated region
  $region14: #{forward.5} parent=0 // pred_check
    _
  $region15: #{forward.5} parent=0 // pred_check_branch
    %20 = sbr.rel (0) target = $region17
  $region16: #{forward.5} parent=0 // pred_region
    _
  $region17: #{forward.5} parent=0 // pred_fallthru
    _
  // Predicated region
  $region18: #{forward.5} parent=0 // pred_check
    _
  $region19: #{forward.5} parent=0 // pred_check_branch
    %22 = sbr.rel (0) target = $region21
  $region20: #{forward.5} parent=0 // pred_region
    _
  $region21: #{forward.5} parent=0 // pred_fallthru
    _
  // Predicated region
  $region22: #{forward.5} parent=0 // pred_check
    _
  $region23: #{forward.5} parent=0 // pred_check_branch
    %24 = sbr.rel (0) target = $region25
  $region24: #{forward.5} parent=0 // pred_region
    _
  $region25: #{forward.5} parent=0 // pred_fallthru
    _
  %v26 = vld [vmem:[%s0] sm:$0xff]
  %v27 = vld [vmem:[%s0 + $0x8] sm:$0xf]
  %v28 = vld [vmem:[%s0 + $0xc] sm:$0xff]
  %v29 = vld [vmem:[%s0 + $0x14] sm:$0xf]
  %v30 = vld [vmem:[%s0 + $0x18] sm:$0xff]
  %v31 = vld [vmem:[%s0 + $0x20] sm:$0xf]
  %v32 = vld [vmem:[%s0 + $0x24] sm:$0xff]
  %v33 = vld [vmem:[%s0 + $0x2c] sm:$0xf]
  %v34 = vld [vmem:[%s0 + $0x30] sm:$0xff]
  %v35 = vld [vmem:[%s0 + $0x38] sm:$0xf]
  %v36 = vld [vmem:[%s0 + $0x3c] sm:$0xff]
  %v37 = vld [vmem:[%s0 + $0x44] sm:$0xf]
  %v38 = vld [vmem:[%s0 + $0x48] sm:$0xff]
  %v39 = vld [vmem:[%s0 + $0x50] sm:$0xf]
  %v40 = vld [vmem:[%s0 + $0x54] sm:$0xff]
  %v41 = vld [vmem:[%s0 + $0x5c] sm:$0xf]
  %v42 = vld [vmem:[%s0 + $0x60] sm:$0xff]
  %v43 = vld [vmem:[%s0 + $0x68] sm:$0xf]
  %v44 = vld [vmem:[%s0 + $0x6c] sm:$0xff]
  %v45 = vld [vmem:[%s0 + $0x74] sm:$0xf]
  %v46 = vld [vmem:[%s0 + $0x78] sm:$0xff]
  %v47 = vld [vmem:[%s0 + $0x80] sm:$0xf]
  %v48 = vld [vmem:[%s0 + $0x84] sm:$0xff]
  %v49 = vld [vmem:[%s0 + $0x8c] sm:$0xf]
  %v50 = vld [vmem:[%s0 + $0x90] sm:$0xff]
  %v51 = vld [vmem:[%s0 + $0x98] sm:$0xf]
  %v52 = vld [vmem:[%s0 + $0x9c] sm:$0xff]
  %v53 = vld [vmem:[%s0 + $0xa4] sm:$0xf]
  %v54 = vld [vmem:[%s0 + $0xa8] sm:$0xff]
  %v55 = vld [vmem:[%s0 + $0xb0] sm:$0xf]
  %v56 = vld [vmem:[%s0 + $0xb4] sm:$0xff]
  %v57 = vld [vmem:[%s0 + $0xbc] sm:$0xf]
  %v58 = vld [vmem:[%s0 + $0xc0] sm:$0xff]
  %v59 = vld [vmem:[%s0 + $0xc8] sm:$0xf]
  %v60 = vld [vmem:[%s0 + $0xcc] sm:$0xff]
  %v61 = vld [vmem:[%s0 + $0xd4] sm:$0xf]
  %v62 = vld [vmem:[%s0 + $0xd8] sm:$0xff]
  %v63 = vld [vmem:[%s0 + $0xe0] sm:$0xf]
  %v64 = vld [vmem:[%s0 + $0xe4] sm:$0xff]
  %v65 = vld [vmem:[%s0 + $0xec] sm:$0xf]
  %v66 = vld [vmem:[%s0 + $0xf0] sm:$0xff]
  %v67 = vld [vmem:[%s0 + $0xf8] sm:$0xf]
  %v68 = vld [vmem:[%s0 + $0xfc] sm:$0xff]
  %v69 = vld [vmem:[%s0 + $0x104] sm:$0xf]
  %v70 = vld [vmem:[%s0 + $0x108] sm:$0xff]
  %v71 = vld [vmem:[%s0 + $0x110] sm:$0xf]
  %v72 = vld [vmem:[%s0 + $0x114] sm:$0xff]
  %v73 = vld [vmem:[%s0 + $0x11c] sm:$0xf]
  %v74 = vld [vmem:[%s0 + $0x120] sm:$0xff]
  %v75 = vld [vmem:[%s0 + $0x128] sm:$0xf]
  %v76 = vld [vmem:[%s0 + $0x12c] sm:$0xff]
  %v77 = vld [vmem:[%s0 + $0x134] sm:$0xf]
  %v78 = vld [vmem:[%s0 + $0x138] sm:$0xff]
  %v79 = vld [vmem:[%s0 + $0x140] sm:$0xf]
  %v80 = vld [vmem:[%s0 + $0x144] sm:$0xff]
  %v81 = vld [vmem:[%s0 + $0x14c] sm:$0xf]
  %v82 = vld [vmem:[%s0 + $0x150] sm:$0xff]
  %v83 = vld [vmem:[%s0 + $0x158] sm:$0xf]
  %v84 = vld [vmem:[%s0 + $0x15c] sm:$0xff]
  %v85 = vld [vmem:[%s0 + $0x164] sm:$0xf]
  %v86 = vld [vmem:[%s0 + $0x168] sm:$0xff]
  %v87 = vld [vmem:[%s0 + $0x170] sm:$0xf]
  %v88 = vld [vmem:[%s0 + $0x174] sm:$0xff]
  %v89 = vld [vmem:[%s0 + $0x17c] sm:$0xf]
  %v90 = vld [vmem:[%s0 + $0x180] sm:$0xff]
  %v91 = vld [vmem:[%s0 + $0x188] sm:$0xf]
  %v92 = vld [vmem:[%s0 + $0x18c] sm:$0xff]
  %v93 = vld [vmem:[%s0 + $0x194] sm:$0xf]
  %v94 = vld [vmem:[%s0 + $0x198] sm:$0xff]
  %v95 = vld [vmem:[%s0 + $0x1a0] sm:$0xf]
  %v96 = vld [vmem:[%s0 + $0x1a4] sm:$0xff]
  %v97 = vld [vmem:[%s0 + $0x1ac] sm:$0xf]
  %v98 = vld [vmem:[%s0 + $0x1b0] sm:$0xff]
  %v99 = vld [vmem:[%s0 + $0x1b8] sm:$0xf]
  %v100 = vld [vmem:[%s0 + $0x1bc] sm:$0xff]
  %v101 = vld [vmem:[%s0 + $0x1c4] sm:$0xf]
  %v102 = vld [vmem:[%s0 + $0x1c8] sm:$0xff]
  %v103 = vld [vmem:[%s0 + $0x1d0] sm:$0xf]
  %v104 = vld [vmem:[%s0 + $0x1d4] sm:$0xff]
  %v105 = vld [vmem:[%s0 + $0x1dc] sm:$0xf]
  %v106 = vld [vmem:[%s0 + $0x1e0] sm:$0xff]
  %v107 = vld [vmem:[%s0 + $0x1e8] sm:$0xf]
  %v108 = vld [vmem:[%s0 + $0x1ec] sm:$0xff]
  %v109 = vld [vmem:[%s0 + $0x1f4] sm:$0xf]
  %v110 = vld [vmem:[%s0 + $0x1f8] sm:$0xff]
  %v111 = vld [vmem:[%s0 + $0x200] sm:$0xf]
  %v112 = vld [vmem:[%s0 + $0x204] sm:$0xff]
  %v113 = vld [vmem:[%s0 + $0x20c] sm:$0xf]
  %v114 = vld [vmem:[%s0 + $0x210] sm:$0xff]
  %v115 = vld [vmem:[%s0 + $0x218] sm:$0xf]
  %v116 = vld [vmem:[%s0 + $0x21c] sm:$0xff]
  %v117 = vld [vmem:[%s0 + $0x224] sm:$0xf]
  %v118 = vld [vmem:[%s0 + $0x228] sm:$0xff]
  %v119 = vld [vmem:[%s0 + $0x230] sm:$0xf]
  %v120 = vld [vmem:[%s0 + $0x234] sm:$0xff]
  %v121 = vld [vmem:[%s0 + $0x23c] sm:$0xf]
  %v122 = vld [vmem:[%s0 + $0x240] sm:$0xff]
  %v123 = vld [vmem:[%s0 + $0x248] sm:$0xf]
  %v124 = vld [vmem:[%s0 + $0x24c] sm:$0xff]
  %v125 = vld [vmem:[%s0 + $0x254] sm:$0xf]
  %v126 = vld [vmem:[%s0 + $0x258] sm:$0xff]
  %v127 = vld [vmem:[%s0 + $0x260] sm:$0xf]
  %v128 = vld [vmem:[%s0 + $0x264] sm:$0xff]
  %v129 = vld [vmem:[%s0 + $0x26c] sm:$0xf]
  %v130 = vld [vmem:[%s0 + $0x270] sm:$0xff]
  %v131 = vld [vmem:[%s0 + $0x278] sm:$0xf]
  %v132 = vld [vmem:[%s0 + $0x27c] sm:$0xff]
  %v133 = vld [vmem:[%s0 + $0x284] sm:$0xf]
  %v134 = vld [vmem:[%s0 + $0x288] sm:$0xff]
  %v135 = vld [vmem:[%s0 + $0x290] sm:$0xf]
  %v136 = vld [vmem:[%s0 + $0x294] sm:$0xff]
  %v137 = vld [vmem:[%s0 + $0x29c] sm:$0xf]
  %v138 = vld [vmem:[%s0 + $0x2a0] sm:$0xff]
  %v139 = vld [vmem:[%s0 + $0x2a8] sm:$0xf]
  %v140 = vld [vmem:[%s0 + $0x2ac] sm:$0xff]
  %v141 = vld [vmem:[%s0 + $0x2b4] sm:$0xf]
  %v142 = vld [vmem:[%s0 + $0x2b8] sm:$0xff]
  %v143 = vld [vmem:[%s0 + $0x2c0] sm:$0xf]
  %v144 = vld [vmem:[%s0 + $0x2c4] sm:$0xff]
  %v145 = vld [vmem:[%s0 + $0x2cc] sm:$0xf]
  %v146 = vld [vmem:[%s0 + $0x2d0] sm:$0xff]
  %v147 = vld [vmem:[%s0 + $0x2d8] sm:$0xf]
  %v148 = vld [vmem:[%s0 + $0x2dc] sm:$0xff]
  %v149 = vld [vmem:[%s0 + $0x2e4] sm:$0xf]
  %v150 = vld [vmem:[%s0 + $0x2e8] sm:$0xff]
  %v151 = vld [vmem:[%s0 + $0x2f0] sm:$0xf]
  %v152 = vld [vmem:[%s0 + $0x2f4] sm:$0xff]
  %v153 = vld [vmem:[%s0 + $0x2fc] sm:$0xf]
  %v154 = vld [vmem:[%s1] sm:$0xf]
  %v155 = vld [vmem:[%s1 + $0x4] sm:$0xf]
  %v156 = vld [vmem:[%s1 + $0x8] sm:$0xf]
  %v157 = vld [vmem:[%s1 + $0xc] sm:$0xf]
  %v158 = vld [vmem:[%s1 + $0x10] sm:$0xf]
  %v159 = vld [vmem:[%s1 + $0x14] sm:$0xf]
  %v160 = vld [vmem:[%s1 + $0x18] sm:$0xf]
  %v161 = vld [vmem:[%s1 + $0x1c] sm:$0xf]
  %v162 = vld [vmem:[%s1 + $0x20] sm:$0xf]
  %v163 = vld [vmem:[%s1 + $0x24] sm:$0xf]
  %v164 = vld [vmem:[%s1 + $0x28] sm:$0xf]
  %v165 = vld [vmem:[%s1 + $0x2c] sm:$0xf]
  %v166 = vld [vmem:[%s1 + $0x30] sm:$0xf]
  %v167 = vld [vmem:[%s1 + $0x34] sm:$0xf]
  %v168 = vld [vmem:[%s1 + $0x38] sm:$0xf]
  %v169 = vld [vmem:[%s1 + $0x3c] sm:$0xf]
  %v170 = vld [vmem:[%s1 + $0x40] sm:$0xf]
  %v171 = vld [vmem:[%s1 + $0x44] sm:$0xf]
  %v172 = vld [vmem:[%s1 + $0x48] sm:$0xf]
  %v173 = vld [vmem:[%s1 + $0x4c] sm:$0xf]
  %v174 = vld [vmem:[%s1 + $0x50] sm:$0xf]
  %v175 = vld [vmem:[%s1 + $0x54] sm:$0xf]
  %v176 = vld [vmem:[%s1 + $0x58] sm:$0xf]
  %v177 = vld [vmem:[%s1 + $0x5c] sm:$0xf]
  %v178 = vld [vmem:[%s1 + $0x60] sm:$0xf]
  %v179 = vld [vmem:[%s1 + $0x64] sm:$0xf]
  %v180 = vld [vmem:[%s1 + $0x68] sm:$0xf]
  %v181 = vld [vmem:[%s1 + $0x6c] sm:$0xf]
  %v182 = vld [vmem:[%s1 + $0x70] sm:$0xf]
  %v183 = vld [vmem:[%s1 + $0x74] sm:$0xf]
  %v184 = vld [vmem:[%s1 + $0x78] sm:$0xf]
  %v185 = vld [vmem:[%s1 + $0x7c] sm:$0xf]
  %v186 = vld [vmem:[%s1 + $0x80] sm:$0xf]
  %v187 = vld [vmem:[%s1 + $0x84] sm:$0xf]
  %v188 = vld [vmem:[%s1 + $0x88] sm:$0xf]
  %v189 = vld [vmem:[%s1 + $0x8c] sm:$0xf]
  %v190 = vld [vmem:[%s1 + $0x90] sm:$0xf]
  %v191 = vld [vmem:[%s1 + $0x94] sm:$0xf]
  %v192 = vld [vmem:[%s1 + $0x98] sm:$0xf]
  %v193 = vld [vmem:[%s1 + $0x9c] sm:$0xf]
  %v194 = vld [vmem:[%s1 + $0xa0] sm:$0xf]
  %v195 = vld [vmem:[%s1 + $0xa4] sm:$0xf]
  %v196 = vld [vmem:[%s1 + $0xa8] sm:$0xf]
  %v197 = vld [vmem:[%s1 + $0xac] sm:$0xf]
  %v198 = vld [vmem:[%s1 + $0xb0] sm:$0xf]
  %v199 = vld [vmem:[%s1 + $0xb4] sm:$0xf]
  %v200 = vld [vmem:[%s1 + $0xb8] sm:$0xf]
  %v201 = vld [vmem:[%s1 + $0xbc] sm:$0xf]
  %v202 = vld [vmem:[%s2] sm:$0x1]
  %v204 = vlaneseq
  %v205 = vshrl.u32 %v204, 7
  %v206 = vsub.s32 0, %v205
  %v207 = vrot.slane %v202, %v206
  %v337 = vunpack.c.l.b16 %v26
  %v338 = vunpack.c.h.b16 %v26
  %v339 = vunpack.c.l.b16 %v27
  %v340 = vunpack.c.l.b16 %v28
  %v341 = vunpack.c.h.b16 %v28
  %v342 = vunpack.c.l.b16 %v29
  %v343 = vunpack.c.l.b16 %v30
  %v344 = vunpack.c.h.b16 %v30
  %v345 = vunpack.c.l.b16 %v31
  %v346 = vunpack.c.l.b16 %v32
  %v347 = vunpack.c.h.b16 %v32
  %v348 = vunpack.c.l.b16 %v33
  %v349 = vunpack.c.l.b16 %v34
  %v350 = vunpack.c.h.b16 %v34
  %v351 = vunpack.c.l.b16 %v35
  %v352 = vunpack.c.l.b16 %v36
  %v353 = vunpack.c.h.b16 %v36
  %v354 = vunpack.c.l.b16 %v37
  %v355 = vunpack.c.l.b16 %v38
  %v356 = vunpack.c.h.b16 %v38
  %v357 = vunpack.c.l.b16 %v39
  %v358 = vunpack.c.l.b16 %v40
  %v359 = vunpack.c.h.b16 %v40
  %v360 = vunpack.c.l.b16 %v41
  %v361 = vunpack.c.l.b16 %v42
  %v362 = vunpack.c.h.b16 %v42
  %v363 = vunpack.c.l.b16 %v43
  %v364 = vunpack.c.l.b16 %v44
  %v365 = vunpack.c.h.b16 %v44
  %v366 = vunpack.c.l.b16 %v45
  %v367 = vunpack.c.l.b16 %v46
  %v368 = vunpack.c.h.b16 %v46
  %v369 = vunpack.c.l.b16 %v47
  %v370 = vunpack.c.l.b16 %v48
  %v371 = vunpack.c.h.b16 %v48
  %v372 = vunpack.c.l.b16 %v49
  %v373 = vunpack.c.l.b16 %v50
  %v374 = vunpack.c.h.b16 %v50
  %v375 = vunpack.c.l.b16 %v51
  %v376 = vunpack.c.l.b16 %v52
  %v377 = vunpack.c.h.b16 %v52
  %v378 = vunpack.c.l.b16 %v53
  %v379 = vunpack.c.l.b16 %v54
  %v380 = vunpack.c.h.b16 %v54
  %v381 = vunpack.c.l.b16 %v55
  %v382 = vunpack.c.l.b16 %v56
  %v383 = vunpack.c.h.b16 %v56
  %v384 = vunpack.c.l.b16 %v57
  %v385 = vunpack.c.l.b16 %v58
  %v386 = vunpack.c.h.b16 %v58
  %v387 = vunpack.c.l.b16 %v59
  %v388 = vunpack.c.l.b16 %v60
  %v389 = vunpack.c.h.b16 %v60
  %v390 = vunpack.c.l.b16 %v61
  %v391 = vunpack.c.l.b16 %v62
  %v392 = vunpack.c.h.b16 %v62
  %v393 = vunpack.c.l.b16 %v63
  %v394 = vunpack.c.l.b16 %v64
  %v395 = vunpack.c.h.b16 %v64
  %v396 = vunpack.c.l.b16 %v65
  %v397 = vunpack.c.l.b16 %v66
  %v398 = vunpack.c.h.b16 %v66
  %v399 = vunpack.c.l.b16 %v67
  %v400 = vunpack.c.l.b16 %v68
  %v401 = vunpack.c.h.b16 %v68
  %v402 = vunpack.c.l.b16 %v69
  %v403 = vunpack.c.l.b16 %v70
  %v404 = vunpack.c.h.b16 %v70
  %v405 = vunpack.c.l.b16 %v71
  %v406 = vunpack.c.l.b16 %v72
  %v407 = vunpack.c.h.b16 %v72
  %v408 = vunpack.c.l.b16 %v73
  %v409 = vunpack.c.l.b16 %v74
  %v410 = vunpack.c.h.b16 %v74
  %v411 = vunpack.c.l.b16 %v75
  %v412 = vunpack.c.l.b16 %v76
  %v413 = vunpack.c.h.b16 %v76
  %v414 = vunpack.c.l.b16 %v77
  %v415 = vunpack.c.l.b16 %v78
  %v416 = vunpack.c.h.b16 %v78
  %v417 = vunpack.c.l.b16 %v79
  %v418 = vunpack.c.l.b16 %v80
  %v419 = vunpack.c.h.b16 %v80
  %v420 = vunpack.c.l.b16 %v81
  %v421 = vunpack.c.l.b16 %v82
  %v422 = vunpack.c.h.b16 %v82
  %v423 = vunpack.c.l.b16 %v83
  %v424 = vunpack.c.l.b16 %v84
  %v425 = vunpack.c.h.b16 %v84
  %v426 = vunpack.c.l.b16 %v85
  %v427 = vunpack.c.l.b16 %v86
  %v428 = vunpack.c.h.b16 %v86
  %v429 = vunpack.c.l.b16 %v87
  %v430 = vunpack.c.l.b16 %v88
  %v431 = vunpack.c.h.b16 %v88
  %v432 = vunpack.c.l.b16 %v89
  %v433 = vunpack.c.l.b16 %v90
  %v434 = vunpack.c.h.b16 %v90
  %v435 = vunpack.c.l.b16 %v91
  %v436 = vunpack.c.l.b16 %v92
  %v437 = vunpack.c.h.b16 %v92
  %v438 = vunpack.c.l.b16 %v93
  %v439 = vunpack.c.l.b16 %v94
  %v440 = vunpack.c.h.b16 %v94
  %v441 = vunpack.c.l.b16 %v95
  %v442 = vunpack.c.l.b16 %v96
  %v443 = vunpack.c.h.b16 %v96
  %v444 = vunpack.c.l.b16 %v97
  %v445 = vunpack.c.l.b16 %v98
  %v446 = vunpack.c.h.b16 %v98
  %v447 = vunpack.c.l.b16 %v99
  %v448 = vunpack.c.l.b16 %v100
  %v449 = vunpack.c.h.b16 %v100
  %v450 = vunpack.c.l.b16 %v101
  %v451 = vunpack.c.l.b16 %v102
  %v452 = vunpack.c.h.b16 %v102
  %v453 = vunpack.c.l.b16 %v103
  %v454 = vunpack.c.l.b16 %v104
  %v455 = vunpack.c.h.b16 %v104
  %v456 = vunpack.c.l.b16 %v105
  %v457 = vunpack.c.l.b16 %v106
  %v458 = vunpack.c.h.b16 %v106
  %v459 = vunpack.c.l.b16 %v107
  %v460 = vunpack.c.l.b16 %v108
  %v461 = vunpack.c.h.b16 %v108
  %v462 = vunpack.c.l.b16 %v109
  %v463 = vunpack.c.l.b16 %v110
  %v464 = vunpack.c.h.b16 %v110
  %v465 = vunpack.c.l.b16 %v111
  %v466 = vunpack.c.l.b16 %v112
  %v467 = vunpack.c.h.b16 %v112
  %v468 = vunpack.c.l.b16 %v113
  %v469 = vunpack.c.l.b16 %v114
  %v470 = vunpack.c.h.b16 %v114
  %v471 = vunpack.c.l.b16 %v115
  %v472 = vunpack.c.l.b16 %v116
  %v473 = vunpack.c.h.b16 %v116
  %v474 = vunpack.c.l.b16 %v117
  %v475 = vunpack.c.l.b16 %v118
  %v476 = vunpack.c.h.b16 %v118
  %v477 = vunpack.c.l.b16 %v119
  %v478 = vunpack.c.l.b16 %v120
  %v479 = vunpack.c.h.b16 %v120
  %v480 = vunpack.c.l.b16 %v121
  %v481 = vunpack.c.l.b16 %v122
  %v482 = vunpack.c.h.b16 %v122
  %v483 = vunpack.c.l.b16 %v123
  %v484 = vunpack.c.l.b16 %v124
  %v485 = vunpack.c.h.b16 %v124
  %v486 = vunpack.c.l.b16 %v125
  %v487 = vunpack.c.l.b16 %v126
  %v488 = vunpack.c.h.b16 %v126
  %v489 = vunpack.c.l.b16 %v127
  %v490 = vunpack.c.l.b16 %v128
  %v491 = vunpack.c.h.b16 %v128
  %v492 = vunpack.c.l.b16 %v129
  %v493 = vunpack.c.l.b16 %v130
  %v494 = vunpack.c.h.b16 %v130
  %v495 = vunpack.c.l.b16 %v131
  %v496 = vunpack.c.l.b16 %v132
  %v497 = vunpack.c.h.b16 %v132
  %v498 = vunpack.c.l.b16 %v133
  %v499 = vunpack.c.l.b16 %v134
  %v500 = vunpack.c.h.b16 %v134
  %v501 = vunpack.c.l.b16 %v135
  %v502 = vunpack.c.l.b16 %v136
  %v503 = vunpack.c.h.b16 %v136
  %v504 = vunpack.c.l.b16 %v137
  %v505 = vunpack.c.l.b16 %v138
  %v506 = vunpack.c.h.b16 %v138
  %v507 = vunpack.c.l.b16 %v139
  %v508 = vunpack.c.l.b16 %v140
  %v509 = vunpack.c.h.b16 %v140
  %v510 = vunpack.c.l.b16 %v141
  %v511 = vunpack.c.l.b16 %v142
  %v512 = vunpack.c.h.b16 %v142
  %v513 = vunpack.c.l.b16 %v143
  %v514 = vunpack.c.l.b16 %v144
  %v515 = vunpack.c.h.b16 %v144
  %v516 = vunpack.c.l.b16 %v145
  %v517 = vunpack.c.l.b16 %v146
  %v518 = vunpack.c.h.b16 %v146
  %v519 = vunpack.c.l.b16 %v147
  %v520 = vunpack.c.l.b16 %v148
  %v521 = vunpack.c.h.b16 %v148
  %v522 = vunpack.c.l.b16 %v149
  %v523 = vunpack.c.l.b16 %v150
  %v524 = vunpack.c.h.b16 %v150
  %v525 = vunpack.c.l.b16 %v151
  %v526 = vunpack.c.l.b16 %v152
  %v527 = vunpack.c.h.b16 %v152
  %v528 = vunpack.c.l.b16 %v153
  %v529 = vpack.c.b16 %v340, %v337
  %v530 = vpack.c.b16 %v341, %v338
  %v531 = vpack.c.b16 %v342, %v339
  %v532 = vpack.c.b16 %v346, %v343
  %v533 = vpack.c.b16 %v347, %v344
  %v534 = vpack.c.b16 %v348, %v345
  %v535 = vpack.c.b16 %v352, %v349
  %v536 = vpack.c.b16 %v353, %v350
  %v537 = vpack.c.b16 %v354, %v351
  %v538 = vpack.c.b16 %v358, %v355
  %v539 = vpack.c.b16 %v359, %v356
  %v540 = vpack.c.b16 %v360, %v357
  %v541 = vpack.c.b16 %v364, %v361
  %v542 = vpack.c.b16 %v365, %v362
  %v543 = vpack.c.b16 %v366, %v363
  %v544 = vpack.c.b16 %v370, %v367
  %v545 = vpack.c.b16 %v371, %v368
  %v546 = vpack.c.b16 %v372, %v369
  %v547 = vpack.c.b16 %v376, %v373
  %v548 = vpack.c.b16 %v377, %v374
  %v549 = vpack.c.b16 %v378, %v375
  %v550 = vpack.c.b16 %v382, %v379
  %v551 = vpack.c.b16 %v383, %v380
  %v552 = vpack.c.b16 %v384, %v381
  %v553 = vpack.c.b16 %v388, %v385
  %v554 = vpack.c.b16 %v389, %v386
  %v555 = vpack.c.b16 %v390, %v387
  %v556 = vpack.c.b16 %v394, %v391
  %v557 = vpack.c.b16 %v395, %v392
  %v558 = vpack.c.b16 %v396, %v393
  %v559 = vpack.c.b16 %v400, %v397
  %v560 = vpack.c.b16 %v401, %v398
  %v561 = vpack.c.b16 %v402, %v399
  %v562 = vpack.c.b16 %v406, %v403
  %v563 = vpack.c.b16 %v407, %v404
  %v564 = vpack.c.b16 %v408, %v405
  %v565 = vpack.c.b16 %v412, %v409
  %v566 = vpack.c.b16 %v413, %v410
  %v567 = vpack.c.b16 %v414, %v411
  %v568 = vpack.c.b16 %v418, %v415
  %v569 = vpack.c.b16 %v419, %v416
  %v570 = vpack.c.b16 %v420, %v417
  %v571 = vpack.c.b16 %v424, %v421
  %v572 = vpack.c.b16 %v425, %v422
  %v573 = vpack.c.b16 %v426, %v423
  %v574 = vpack.c.b16 %v430, %v427
  %v575 = vpack.c.b16 %v431, %v428
  %v576 = vpack.c.b16 %v432, %v429
  %v577 = vpack.c.b16 %v436, %v433
  %v578 = vpack.c.b16 %v437, %v434
  %v579 = vpack.c.b16 %v438, %v435
  %v580 = vpack.c.b16 %v442, %v439
  %v581 = vpack.c.b16 %v443, %v440
  %v582 = vpack.c.b16 %v444, %v441
  %v583 = vpack.c.b16 %v448, %v445
  %v584 = vpack.c.b16 %v449, %v446
  %v585 = vpack.c.b16 %v450, %v447
  %v586 = vpack.c.b16 %v454, %v451
  %v587 = vpack.c.b16 %v455, %v452
  %v588 = vpack.c.b16 %v456, %v453
  %v589 = vpack.c.b16 %v460, %v457
  %v590 = vpack.c.b16 %v461, %v458
  %v591 = vpack.c.b16 %v462, %v459
  %v592 = vpack.c.b16 %v466, %v463
  %v593 = vpack.c.b16 %v467, %v464
  %v594 = vpack.c.b16 %v468, %v465
  %v595 = vpack.c.b16 %v472, %v469
  %v596 = vpack.c.b16 %v473, %v470
  %v597 = vpack.c.b16 %v474, %v471
  %v598 = vpack.c.b16 %v478, %v475
  %v599 = vpack.c.b16 %v479, %v476
  %v600 = vpack.c.b16 %v480, %v477
  %v601 = vpack.c.b16 %v484, %v481
  %v602 = vpack.c.b16 %v485, %v482
  %v603 = vpack.c.b16 %v486, %v483
  %v604 = vpack.c.b16 %v490, %v487
  %v605 = vpack.c.b16 %v491, %v488
  %v606 = vpack.c.b16 %v492, %v489
  %v607 = vpack.c.b16 %v496, %v493
  %v608 = vpack.c.b16 %v497, %v494
  %v609 = vpack.c.b16 %v498, %v495
  %v610 = vpack.c.b16 %v502, %v499
  %v611 = vpack.c.b16 %v503, %v500
  %v612 = vpack.c.b16 %v504, %v501
  %v613 = vpack.c.b16 %v508, %v505
  %v614 = vpack.c.b16 %v509, %v506
  %v615 = vpack.c.b16 %v510, %v507
  %v616 = vpack.c.b16 %v514, %v511
  %v617 = vpack.c.b16 %v515, %v512
  %v618 = vpack.c.b16 %v516, %v513
  %v619 = vpack.c.b16 %v520, %v517
  %v620 = vpack.c.b16 %v521, %v518
  %v621 = vpack.c.b16 %v522, %v519
  %v622 = vpack.c.b16 %v526, %v523
  %v623 = vpack.c.b16 %v527, %v524
  %v624 = vpack.c.b16 %v528, %v525
  %v769 = vunpack.c.l.b16 %v154
  %v770 = vunpack.c.l.b16 %v155
  %v771 = vunpack.c.l.b16 %v156
  %v772 = vunpack.c.l.b16 %v157
  %v773 = vunpack.c.l.b16 %v158
  %v774 = vunpack.c.l.b16 %v159
  %v775 = vunpack.c.l.b16 %v160
  %v776 = vunpack.c.l.b16 %v161
  %v777 = vunpack.c.l.b16 %v162
  %v778 = vunpack.c.l.b16 %v163
  %v779 = vunpack.c.l.b16 %v164
  %v780 = vunpack.c.l.b16 %v165
  %v781 = vunpack.c.l.b16 %v166
  %v782 = vunpack.c.l.b16 %v167
  %v783 = vunpack.c.l.b16 %v168
  %v784 = vunpack.c.l.b16 %v169
  %v785 = vunpack.c.l.b16 %v170
  %v786 = vunpack.c.l.b16 %v171
  %v787 = vunpack.c.l.b16 %v172
  %v788 = vunpack.c.l.b16 %v173
  %v789 = vunpack.c.l.b16 %v174
  %v790 = vunpack.c.l.b16 %v175
  %v791 = vunpack.c.l.b16 %v176
  %v792 = vunpack.c.l.b16 %v177
  %v793 = vunpack.c.l.b16 %v178
  %v794 = vunpack.c.l.b16 %v179
  %v795 = vunpack.c.l.b16 %v180
  %v796 = vunpack.c.l.b16 %v181
  %v797 = vunpack.c.l.b16 %v182
  %v798 = vunpack.c.l.b16 %v183
  %v799 = vunpack.c.l.b16 %v184
  %v800 = vunpack.c.l.b16 %v185
  %v801 = vunpack.c.l.b16 %v186
  %v802 = vunpack.c.l.b16 %v187
  %v803 = vunpack.c.l.b16 %v188
  %v804 = vunpack.c.l.b16 %v189
  %v805 = vunpack.c.l.b16 %v190
  %v806 = vunpack.c.l.b16 %v191
  %v807 = vunpack.c.l.b16 %v192
  %v808 = vunpack.c.l.b16 %v193
  %v809 = vunpack.c.l.b16 %v194
  %v810 = vunpack.c.l.b16 %v195
  %v811 = vunpack.c.l.b16 %v196
  %v812 = vunpack.c.l.b16 %v197
  %v813 = vunpack.c.l.b16 %v198
  %v814 = vunpack.c.l.b16 %v199
  %v815 = vunpack.c.l.b16 %v200
  %v816 = vunpack.c.l.b16 %v201
  %v817 = vpack.c.b16 %v770, %v769
  %v818 = vpack.c.b16 %v772, %v771
  %v819 = vpack.c.b16 %v774, %v773
  %v820 = vpack.c.b16 %v776, %v775
  %v821 = vpack.c.b16 %v778, %v777
  %v822 = vpack.c.b16 %v780, %v779
  %v823 = vpack.c.b16 %v782, %v781
  %v824 = vpack.c.b16 %v784, %v783
  %v825 = vpack.c.b16 %v786, %v785
  %v826 = vpack.c.b16 %v788, %v787
  %v827 = vpack.c.b16 %v790, %v789
  %v828 = vpack.c.b16 %v792, %v791
  %v829 = vpack.c.b16 %v794, %v793
  %v830 = vpack.c.b16 %v796, %v795
  %v831 = vpack.c.b16 %v798, %v797
  %v832 = vpack.c.b16 %v800, %v799
  %v833 = vpack.c.b16 %v802, %v801
  %v834 = vpack.c.b16 %v804, %v803
  %v835 = vpack.c.b16 %v806, %v805
  %v836 = vpack.c.b16 %v808, %v807
  %v837 = vpack.c.b16 %v810, %v809
  %v838 = vpack.c.b16 %v812, %v811
  %v839 = vpack.c.b16 %v814, %v813
  %v840 = vpack.c.b16 %v816, %v815
  %865 = vmatprep.subr.bf16.mxu0 0
  %866 = vmatpush1.bf16.msra.mxu0 %v817
  %867 = vmatprep.subr.bf16.mxu0 0
  %868 = vmatpush1.bf16.msra.mxu0 %v818
  %869 = vmatprep.subr.bf16.mxu0 0
  %870 = vmatpush1.bf16.msra.mxu0 %v819
  %871 = vmatprep.subr.bf16.mxu0 0
  %872 = vmatpush1.bf16.msra.mxu0 %v820
  %873 = vmatprep.subr.bf16.mxu0 0
  %874 = vmatpush1.bf16.msra.mxu0 %v821
  %875 = vmatprep.subr.bf16.mxu0 0
  %876 = vmatpush1.bf16.msra.mxu0 %v822
  %877 = vmatprep.subr.bf16.mxu0 0
  %878 = vmatpush1.bf16.msra.mxu0 %v823
  %879 = vmatprep.subr.bf16.mxu0 0
  %880 = vmatpush1.bf16.msra.mxu0 %v824
  %881 = vmatprep.subr.bf16.mxu0 0
  %882 = vmatpush1.bf16.msra.mxu0 %v825
  %883 = vmatprep.subr.bf16.mxu0 0
  %884 = vmatpush1.bf16.msra.mxu0 %v826
  %885 = vmatprep.subr.bf16.mxu0 0
  %886 = vmatpush1.bf16.msra.mxu0 %v827
  %887 = vmatprep.subr.bf16.mxu0 0
  %888 = vmatpush1.bf16.msra.mxu0 %v828
  %889 = vmatprep.subr.bf16.mxu0 0
  %890 = vmatpush1.bf16.msra.mxu0 %v829
  %891 = vmatprep.subr.bf16.mxu0 0
  %892 = vmatpush1.bf16.msra.mxu0 %v830
  %893 = vmatprep.subr.bf16.mxu0 0
  %894 = vmatpush1.bf16.msra.mxu0 %v831
  %895 = vmatprep.subr.bf16.mxu0 0
  %896 = vmatpush1.bf16.msra.mxu0 %v832
  %897 = vmatprep.mubr.bf16.mxu0 %v530
  %898 = vmatmul.mubr.bf16.gmra.mrb[0].mxu0 %v529
  %v899 = vpop.f32.mrb[0].mxu0
  %v900 = vadd.f32 %v207, %v899
  %v901 = vpop.f32.mrb[0].mxu0
  %v902 = vpop.f32.mrb[0].mxu0
  %v903 = vadd.f32 %v207, %v902
  %v904 = vpop.f32.mrb[0].mxu0
  %905 = vmatprep.mubr.bf16.mxu0 %v533
  %906 = vmatmul.mubr.bf16.gmra.mrb[0].mxu0 %v532
  %v907 = vpop.f32.mrb[0].mxu0
  %v908 = vadd.f32 %v207, %v907
  %v909 = vpop.f32.mrb[0].mxu0
  %v910 = vpop.f32.mrb[0].mxu0
  %v911 = vadd.f32 %v207, %v910
  %v912 = vpop.f32.mrb[0].mxu0
  %913 = vmatprep.mubr.bf16.mxu0 %v536
  %914 = vmatmul.mubr.bf16.gmra.mrb[0].mxu0 %v535
  %v915 = vpop.f32.mrb[0].mxu0
  %v916 = vadd.f32 %v207, %v915
  %v917 = vpop.f32.mrb[0].mxu0
  %v918 = vpop.f32.mrb[0].mxu0
  %v919 = vadd.f32 %v207, %v918
  %v920 = vpop.f32.mrb[0].mxu0
  %921 = vmatprep.mubr.bf16.mxu0 %v539
  %922 = vmatmul.mubr.bf16.gmra.mrb[0].mxu0 %v538
  %v923 = vpop.f32.mrb[0].mxu0
  %v924 = vadd.f32 %v207, %v923
  %v925 = vpop.f32.mrb[0].mxu0
  %v926 = vpop.f32.mrb[0].mxu0
  %v927 = vadd.f32 %v207, %v926
  %v928 = vpop.f32.mrb[0].mxu0
  %929 = vmatprep.mubr.bf16.mxu0 %v542
  %930 = vmatmul.mubr.bf16.gmra.mrb[0].mxu0 %v541
  %v931 = vpop.f32.mrb[0].mxu0
  %v932 = vadd.f32 %v207, %v931
  %v933 = vpop.f32.mrb[0].mxu0
  %v934 = vpop.f32.mrb[0].mxu0
  %v935 = vadd.f32 %v207, %v934
  %v936 = vpop.f32.mrb[0].mxu0
  %937 = vmatprep.mubr.bf16.mxu0 %v545
  %938 = vmatmul.mubr.bf16.gmra.mrb[0].mxu0 %v544
  %v939 = vpop.f32.mrb[0].mxu0
  %v940 = vadd.f32 %v207, %v939
  %v941 = vpop.f32.mrb[0].mxu0
  %v942 = vpop.f32.mrb[0].mxu0
  %v943 = vadd.f32 %v207, %v942
  %v944 = vpop.f32.mrb[0].mxu0
  %945 = vmatprep.mubr.bf16.mxu0 %v548
  %946 = vmatmul.mubr.bf16.gmra.mrb[0].mxu0 %v547
  %v947 = vpop.f32.mrb[0].mxu0
  %v948 = vadd.f32 %v207, %v947
  %v949 = vpop.f32.mrb[0].mxu0
  %v950 = vpop.f32.mrb[0].mxu0
  %v951 = vadd.f32 %v207, %v950
  %v952 = vpop.f32.mrb[0].mxu0
  %953 = vmatprep.mubr.bf16.mxu0 %v551
  %954 = vmatmul.mubr.bf16.gmra.mrb[0].mxu0 %v550
  %v955 = vpop.f32.mrb[0].mxu0
  %v956 = vadd.f32 %v207, %v955
  %v957 = vpop.f32.mrb[0].mxu0
  %v958 = vpop.f32.mrb[0].mxu0
  %v959 = vadd.f32 %v207, %v958
  %v960 = vpop.f32.mrb[0].mxu0
  %961 = vmatprep.mubr.bf16.mxu0 %v554
  %962 = vmatmul.mubr.bf16.gmra.mrb[0].mxu0 %v553
  %v963 = vpop.f32.mrb[0].mxu0
  %v964 = vadd.f32 %v207, %v963
  %v965 = vpop.f32.mrb[0].mxu0
  %v966 = vpop.f32.mrb[0].mxu0
  %v967 = vadd.f32 %v207, %v966
  %v968 = vpop.f32.mrb[0].mxu0
  %969 = vmatprep.mubr.bf16.mxu0 %v557
  %970 = vmatmul.mubr.bf16.gmra.mrb[0].mxu0 %v556
  %v971 = vpop.f32.mrb[0].mxu0
  %v972 = vadd.f32 %v207, %v971
  %v973 = vpop.f32.mrb[0].mxu0
  %v974 = vpop.f32.mrb[0].mxu0
  %v975 = vadd.f32 %v207, %v974
  %v976 = vpop.f32.mrb[0].mxu0
  %977 = vmatprep.mubr.bf16.mxu0 %v560
  %978 = vmatmul.mubr.bf16.gmra.mrb[0].mxu0 %v559
  %v979 = vpop.f32.mrb[0].mxu0
  %v980 = vadd.f32 %v207, %v979
  %v981 = vpop.f32.mrb[0].mxu0
  %v982 = vpop.f32.mrb[0].mxu0
  %v983 = vadd.f32 %v207, %v982
  %v984 = vpop.f32.mrb[0].mxu0
  %985 = vmatprep.mubr.bf16.mxu0 %v563
  %986 = vmatmul.mubr.bf16.gmra.mrb[0].mxu0 %v562
  %v987 = vpop.f32.mrb[0].mxu0
  %v988 = vadd.f32 %v207, %v987
  %v989 = vpop.f32.mrb[0].mxu0
  %v990 = vpop.f32.mrb[0].mxu0
  %v991 = vadd.f32 %v207, %v990
  %v992 = vpop.f32.mrb[0].mxu0
  %993 = vmatprep.mubr.bf16.mxu0 %v566
  %994 = vmatmul.mubr.bf16.gmra.mrb[0].mxu0 %v565
  %v995 = vpop.f32.mrb[0].mxu0
  %v996 = vadd.f32 %v207, %v995
  %v997 = vpop.f32.mrb[0].mxu0
  %v998 = vpop.f32.mrb[0].mxu0
  %v999 = vadd.f32 %v207, %v998
  %v1000 = vpop.f32.mrb[0].mxu0
  %1001 = vmatprep.mubr.bf16.mxu0 %v569
  %1002 = vmatmul.mubr.bf16.gmra.mrb[0].mxu0 %v568
  %v1003 = vpop.f32.mrb[0].mxu0
  %v1004 = vadd.f32 %v207, %v1003
  %v1005 = vpop.f32.mrb[0].mxu0
  %v1006 = vpop.f32.mrb[0].mxu0
  %v1007 = vadd.f32 %v207, %v1006
  %v1008 = vpop.f32.mrb[0].mxu0
  %1009 = vmatprep.mubr.bf16.mxu0 %v572
  %1010 = vmatmul.mubr.bf16.gmra.mrb[0].mxu0 %v571
  %v1011 = vpop.f32.mrb[0].mxu0
  %v1012 = vadd.f32 %v207, %v1011
  %v1013 = vpop.f32.mrb[0].mxu0
  %v1014 = vpop.f32.mrb[0].mxu0
  %v1015 = vadd.f32 %v207, %v1014
  %v1016 = vpop.f32.mrb[0].mxu0
  %1017 = vmatprep.mubr.bf16.mxu0 %v575
  %1018 = vmatmul.mubr.bf16.gmra.mrb[0].mxu0 %v574
  %v1019 = vpop.f32.mrb[0].mxu0
  %v1020 = vadd.f32 %v207, %v1019
  %v1021 = vpop.f32.mrb[0].mxu0
  %v1022 = vpop.f32.mrb[0].mxu0
  %v1023 = vadd.f32 %v207, %v1022
  %v1024 = vpop.f32.mrb[0].mxu0
  %1025 = vmatprep.mubr.bf16.mxu0 %v578
  %1026 = vmatmul.mubr.bf16.gmra.mrb[0].mxu0 %v577
  %v1027 = vpop.f32.mrb[0].mxu0
  %v1028 = vadd.f32 %v207, %v1027
  %v1029 = vpop.f32.mrb[0].mxu0
  %v1030 = vpop.f32.mrb[0].mxu0
  %v1031 = vadd.f32 %v207, %v1030
  %v1032 = vpop.f32.mrb[0].mxu0
  %1033 = vmatprep.mubr.bf16.mxu0 %v581
  %1034 = vmatmul.mubr.bf16.gmra.mrb[0].mxu0 %v580
  %v1035 = vpop.f32.mrb[0].mxu0
  %v1036 = vadd.f32 %v207, %v1035
  %v1037 = vpop.f32.mrb[0].mxu0
  %v1038 = vpop.f32.mrb[0].mxu0
  %v1039 = vadd.f32 %v207, %v1038
  %v1040 = vpop.f32.mrb[0].mxu0
  %1041 = vmatprep.mubr.bf16.mxu0 %v584
  %1042 = vmatmul.mubr.bf16.gmra.mrb[0].mxu0 %v583
  %v1043 = vpop.f32.mrb[0].mxu0
  %v1044 = vadd.f32 %v207, %v1043
  %v1045 = vpop.f32.mrb[0].mxu0
  %v1046 = vpop.f32.mrb[0].mxu0
  %v1047 = vadd.f32 %v207, %v1046
  %v1048 = vpop.f32.mrb[0].mxu0
  %1049 = vmatprep.mubr.bf16.mxu0 %v587
  %1050 = vmatmul.mubr.bf16.gmra.mrb[0].mxu0 %v586
  %v1051 = vpop.f32.mrb[0].mxu0
  %v1052 = vadd.f32 %v207, %v1051
  %v1053 = vpop.f32.mrb[0].mxu0
  %v1054 = vpop.f32.mrb[0].mxu0
  %v1055 = vadd.f32 %v207, %v1054
  %v1056 = vpop.f32.mrb[0].mxu0
  %1057 = vmatprep.mubr.bf16.mxu0 %v590
  %1058 = vmatmul.mubr.bf16.gmra.mrb[0].mxu0 %v589
  %v1059 = vpop.f32.mrb[0].mxu0
  %v1060 = vadd.f32 %v207, %v1059
  %v1061 = vpop.f32.mrb[0].mxu0
  %v1062 = vpop.f32.mrb[0].mxu0
  %v1063 = vadd.f32 %v207, %v1062
  %v1064 = vpop.f32.mrb[0].mxu0
  %1065 = vmatprep.mubr.bf16.mxu0 %v593
  %1066 = vmatmul.mubr.bf16.gmra.mrb[0].mxu0 %v592
  %v1067 = vpop.f32.mrb[0].mxu0
  %v1068 = vadd.f32 %v207, %v1067
  %v1069 = vpop.f32.mrb[0].mxu0
  %v1070 = vpop.f32.mrb[0].mxu0
  %v1071 = vadd.f32 %v207, %v1070
  %v1072 = vpop.f32.mrb[0].mxu0
  %1073 = vmatprep.mubr.bf16.mxu0 %v596
  %1074 = vmatmul.mubr.bf16.gmra.mrb[0].mxu0 %v595
  %v1075 = vpop.f32.mrb[0].mxu0
  %v1076 = vadd.f32 %v207, %v1075
  %v1077 = vpop.f32.mrb[0].mxu0
  %v1078 = vpop.f32.mrb[0].mxu0
  %v1079 = vadd.f32 %v207, %v1078
  %v1080 = vpop.f32.mrb[0].mxu0
  %1081 = vmatprep.mubr.bf16.mxu0 %v599
  %1082 = vmatmul.mubr.bf16.gmra.mrb[0].mxu0 %v598
  %v1083 = vpop.f32.mrb[0].mxu0
  %v1084 = vadd.f32 %v207, %v1083
  %v1085 = vpop.f32.mrb[0].mxu0
  %v1086 = vpop.f32.mrb[0].mxu0
  %v1087 = vadd.f32 %v207, %v1086
  %v1088 = vpop.f32.mrb[0].mxu0
  %1089 = vmatprep.mubr.bf16.mxu0 %v602
  %1090 = vmatmul.mubr.bf16.gmra.mrb[0].mxu0 %v601
  %v1091 = vpop.f32.mrb[0].mxu0
  %v1092 = vadd.f32 %v207, %v1091
  %v1093 = vpop.f32.mrb[0].mxu0
  %v1094 = vpop.f32.mrb[0].mxu0
  %v1095 = vadd.f32 %v207, %v1094
  %v1096 = vpop.f32.mrb[0].mxu0
  %1097 = vmatprep.mubr.bf16.mxu0 %v605
  %1098 = vmatmul.mubr.bf16.gmra.mrb[0].mxu0 %v604
  %v1099 = vpop.f32.mrb[0].mxu0
  %v1100 = vadd.f32 %v207, %v1099
  %v1101 = vpop.f32.mrb[0].mxu0
  %v1102 = vpop.f32.mrb[0].mxu0
  %v1103 = vadd.f32 %v207, %v1102
  %v1104 = vpop.f32.mrb[0].mxu0
  %1105 = vmatprep.mubr.bf16.mxu0 %v608
  %1106 = vmatmul.mubr.bf16.gmra.mrb[0].mxu0 %v607
  %v1107 = vpop.f32.mrb[0].mxu0
  %v1108 = vadd.f32 %v207, %v1107
  %v1109 = vpop.f32.mrb[0].mxu0
  %v1110 = vpop.f32.mrb[0].mxu0
  %v1111 = vadd.f32 %v207, %v1110
  %v1112 = vpop.f32.mrb[0].mxu0
  %1113 = vmatprep.mubr.bf16.mxu0 %v611
  %1114 = vmatmul.mubr.bf16.gmra.mrb[0].mxu0 %v610
  %v1115 = vpop.f32.mrb[0].mxu0
  %v1116 = vadd.f32 %v207, %v1115
  %v1117 = vpop.f32.mrb[0].mxu0
  %v1118 = vpop.f32.mrb[0].mxu0
  %v1119 = vadd.f32 %v207, %v1118
  %v1120 = vpop.f32.mrb[0].mxu0
  %1121 = vmatprep.mubr.bf16.mxu0 %v614
  %1122 = vmatmul.mubr.bf16.gmra.mrb[0].mxu0 %v613
  %v1123 = vpop.f32.mrb[0].mxu0
  %v1124 = vadd.f32 %v207, %v1123
  %v1125 = vpop.f32.mrb[0].mxu0
  %v1126 = vpop.f32.mrb[0].mxu0
  %v1127 = vadd.f32 %v207, %v1126
  %v1128 = vpop.f32.mrb[0].mxu0
  %1129 = vmatprep.mubr.bf16.mxu0 %v617
  %1130 = vmatmul.mubr.bf16.gmra.mrb[0].mxu0 %v616
  %v1131 = vpop.f32.mrb[0].mxu0
  %v1132 = vadd.f32 %v207, %v1131
  %v1133 = vpop.f32.mrb[0].mxu0
  %v1134 = vpop.f32.mrb[0].mxu0
  %v1135 = vadd.f32 %v207, %v1134
  %v1136 = vpop.f32.mrb[0].mxu0
  %1137 = vmatprep.mubr.bf16.mxu0 %v620
  %1138 = vmatmul.mubr.bf16.gmra.mrb[0].mxu0 %v619
  %v1139 = vpop.f32.mrb[0].mxu0
  %v1140 = vadd.f32 %v207, %v1139
  %v1141 = vpop.f32.mrb[0].mxu0
  %v1142 = vpop.f32.mrb[0].mxu0
  %v1143 = vadd.f32 %v207, %v1142
  %v1144 = vpop.f32.mrb[0].mxu0
  %1145 = vmatprep.mubr.bf16.mxu0 %v623
  %1146 = vmatmul.mubr.bf16.gmra.mrb[0].mxu0 %v622
  %v1147 = vpop.f32.mrb[0].mxu0
  %v1148 = vadd.f32 %v207, %v1147
  %v1149 = vpop.f32.mrb[0].mxu0
  %v1150 = vpop.f32.mrb[0].mxu0
  %v1151 = vadd.f32 %v207, %v1150
  %v1152 = vpop.f32.mrb[0].mxu0
  %1153 = vdwg.mxu0
  %1154 = vmatprep.subr.bf16.mxu0 0
  %1155 = vmatpush1.bf16.msra.mxu0 %v833
  %1156 = vmatprep.subr.bf16.mxu0 0
  %1157 = vmatpush1.bf16.msra.mxu0 %v834
  %1158 = vmatprep.subr.bf16.mxu0 0
  %1159 = vmatpush1.bf16.msra.mxu0 %v835
  %1160 = vmatprep.subr.bf16.mxu0 0
  %1161 = vmatpush1.bf16.msra.mxu0 %v836
  %1162 = vmatprep.subr.bf16.mxu0 0
  %1163 = vmatpush1.bf16.msra.mxu0 %v837
  %1164 = vmatprep.subr.bf16.mxu0 0
  %1165 = vmatpush1.bf16.msra.mxu0 %v838
  %1166 = vmatprep.subr.bf16.mxu0 0
  %1167 = vmatpush1.bf16.msra.mxu0 %v839
  %1168 = vmatprep.subr.bf16.mxu0 0
  %1169 = vmatpush1.bf16.msra.mxu0 %v840
  %1170 = vmatprep.subr.bf16.mxu0 0
  %1171 = vmatpush1.bf16.msra.mxu0 0
  %1172 = vmatprep.subr.bf16.mxu0 0
  %1173 = vmatpush1.bf16.msra.mxu0 0
  %1174 = vmatprep.subr.bf16.mxu0 0
  %1175 = vmatpush1.bf16.msra.mxu0 0
  %1176 = vmatprep.subr.bf16.mxu0 0
  %1177 = vmatpush1.bf16.msra.mxu0 0
  %1178 = vmatprep.subr.bf16.mxu0 0
  %1179 = vmatpush1.bf16.msra.mxu0 0
  %1180 = vmatprep.subr.bf16.mxu0 0
  %1181 = vmatpush1.bf16.msra.mxu0 0
  %1182 = vmatprep.subr.bf16.mxu0 0
  %1183 = vmatpush1.bf16.msra.mxu0 0
  %1184 = vmatprep.subr.bf16.mxu0 0
  %1185 = vmatpush1.bf16.msra.mxu0 0
  %1186 = vmatprep.mubr.bf16.mxu0 0
  %1187 = vmatmul.mubr.bf16.gmra.mrb[0].mxu0 %v531
  %v1188 = vpop.f32.mrb[0].mxu0
  %v1189 = vadd.f32 %v900, %v1188
  %v1190 = vpop.f32.mrb[0].mxu0
  %v1191 = vpop.f32.mrb[0].mxu0
  %v1192 = vadd.f32 %v903, %v1191
  %v1193 = vpop.f32.mrb[0].mxu0
  %1194 = vmatprep.mubr.bf16.mxu0 0
  %1195 = vmatmul.mubr.bf16.gmra.mrb[0].mxu0 %v534
  %v1196 = vpop.f32.mrb[0].mxu0
  %v1197 = vadd.f32 %v908, %v1196
  %v1198 = vpop.f32.mrb[0].mxu0
  %v1199 = vpop.f32.mrb[0].mxu0
  %v1200 = vadd.f32 %v911, %v1199
  %v1201 = vpop.f32.mrb[0].mxu0
  %1202 = vmatprep.mubr.bf16.mxu0 0
  %1203 = vmatmul.mubr.bf16.gmra.mrb[0].mxu0 %v537
  %v1204 = vpop.f32.mrb[0].mxu0
  %v1205 = vadd.f32 %v916, %v1204
  %v1206 = vpop.f32.mrb[0].mxu0
  %v1207 = vpop.f32.mrb[0].mxu0
  %v1208 = vadd.f32 %v919, %v1207
  %v1209 = vpop.f32.mrb[0].mxu0
  %1210 = vmatprep.mubr.bf16.mxu0 0
  %1211 = vmatmul.mubr.bf16.gmra.mrb[0].mxu0 %v540
  %v1212 = vpop.f32.mrb[0].mxu0
  %v1213 = vadd.f32 %v924, %v1212
  %v1214 = vpop.f32.mrb[0].mxu0
  %v1215 = vpop.f32.mrb[0].mxu0
  %v1216 = vadd.f32 %v927, %v1215
  %v1217 = vpop.f32.mrb[0].mxu0
  %1218 = vmatprep.mubr.bf16.mxu0 0
  %1219 = vmatmul.mubr.bf16.gmra.mrb[0].mxu0 %v543
  %v1220 = vpop.f32.mrb[0].mxu0
  %v1221 = vadd.f32 %v932, %v1220
  %v1222 = vpop.f32.mrb[0].mxu0
  %v1223 = vpop.f32.mrb[0].mxu0
  %v1224 = vadd.f32 %v935, %v1223
  %v1225 = vpop.f32.mrb[0].mxu0
  %1226 = vmatprep.mubr.bf16.mxu0 0
  %1227 = vmatmul.mubr.bf16.gmra.mrb[0].mxu0 %v546
  %v1228 = vpop.f32.mrb[0].mxu0
  %v1229 = vadd.f32 %v940, %v1228
  %v1230 = vpop.f32.mrb[0].mxu0
  %v1231 = vpop.f32.mrb[0].mxu0
  %v1232 = vadd.f32 %v943, %v1231
  %v1233 = vpop.f32.mrb[0].mxu0
  %1234 = vmatprep.mubr.bf16.mxu0 0
  %1235 = vmatmul.mubr.bf16.gmra.mrb[0].mxu0 %v549
  %v1236 = vpop.f32.mrb[0].mxu0
  %v1237 = vadd.f32 %v948, %v1236
  %v1238 = vpop.f32.mrb[0].mxu0
  %v1239 = vpop.f32.mrb[0].mxu0
  %v1240 = vadd.f32 %v951, %v1239
  %v1241 = vpop.f32.mrb[0].mxu0
  %1242 = vmatprep.mubr.bf16.mxu0 0
  %1243 = vmatmul.mubr.bf16.gmra.mrb[0].mxu0 %v552
  %v1244 = vpop.f32.mrb[0].mxu0
  %v1245 = vadd.f32 %v956, %v1244
  %v1246 = vpop.f32.mrb[0].mxu0
  %v1247 = vpop.f32.mrb[0].mxu0
  %v1248 = vadd.f32 %v959, %v1247
  %v1249 = vpop.f32.mrb[0].mxu0
  %1250 = vmatprep.mubr.bf16.mxu0 0
  %1251 = vmatmul.mubr.bf16.gmra.mrb[0].mxu0 %v555
  %v1252 = vpop.f32.mrb[0].mxu0
  %v1253 = vadd.f32 %v964, %v1252
  %v1254 = vpop.f32.mrb[0].mxu0
  %v1255 = vpop.f32.mrb[0].mxu0
  %v1256 = vadd.f32 %v967, %v1255
  %v1257 = vpop.f32.mrb[0].mxu0
  %1258 = vmatprep.mubr.bf16.mxu0 0
  %1259 = vmatmul.mubr.bf16.gmra.mrb[0].mxu0 %v558
  %v1260 = vpop.f32.mrb[0].mxu0
  %v1261 = vadd.f32 %v972, %v1260
  %v1262 = vpop.f32.mrb[0].mxu0
  %v1263 = vpop.f32.mrb[0].mxu0
  %v1264 = vadd.f32 %v975, %v1263
  %v1265 = vpop.f32.mrb[0].mxu0
  %1266 = vmatprep.mubr.bf16.mxu0 0
  %1267 = vmatmul.mubr.bf16.gmra.mrb[0].mxu0 %v561
  %v1268 = vpop.f32.mrb[0].mxu0
  %v1269 = vadd.f32 %v980, %v1268
  %v1270 = vpop.f32.mrb[0].mxu0
  %v1271 = vpop.f32.mrb[0].mxu0
  %v1272 = vadd.f32 %v983, %v1271
  %v1273 = vpop.f32.mrb[0].mxu0
  %1274 = vmatprep.mubr.bf16.mxu0 0
  %1275 = vmatmul.mubr.bf16.gmra.mrb[0].mxu0 %v564
  %v1276 = vpop.f32.mrb[0].mxu0
  %v1277 = vadd.f32 %v988, %v1276
  %v1278 = vpop.f32.mrb[0].mxu0
  %v1279 = vpop.f32.mrb[0].mxu0
  %v1280 = vadd.f32 %v991, %v1279
  %v1281 = vpop.f32.mrb[0].mxu0
  %1282 = vmatprep.mubr.bf16.mxu0 0
  %1283 = vmatmul.mubr.bf16.gmra.mrb[0].mxu0 %v567
  %v1284 = vpop.f32.mrb[0].mxu0
  %v1285 = vadd.f32 %v996, %v1284
  %v1286 = vpop.f32.mrb[0].mxu0
  %v1287 = vpop.f32.mrb[0].mxu0
  %v1288 = vadd.f32 %v999, %v1287
  %v1289 = vpop.f32.mrb[0].mxu0
  %1290 = vmatprep.mubr.bf16.mxu0 0
  %1291 = vmatmul.mubr.bf16.gmra.mrb[0].mxu0 %v570
  %v1292 = vpop.f32.mrb[0].mxu0
  %v1293 = vadd.f32 %v1004, %v1292
  %v1294 = vpop.f32.mrb[0].mxu0
  %v1295 = vpop.f32.mrb[0].mxu0
  %v1296 = vadd.f32 %v1007, %v1295
  %v1297 = vpop.f32.mrb[0].mxu0
  %1298 = vmatprep.mubr.bf16.mxu0 0
  %1299 = vmatmul.mubr.bf16.gmra.mrb[0].mxu0 %v573
  %v1300 = vpop.f32.mrb[0].mxu0
  %v1301 = vadd.f32 %v1012, %v1300
  %v1302 = vpop.f32.mrb[0].mxu0
  %v1303 = vpop.f32.mrb[0].mxu0
  %v1304 = vadd.f32 %v1015, %v1303
  %v1305 = vpop.f32.mrb[0].mxu0
  %1306 = vmatprep.mubr.bf16.mxu0 0
  %1307 = vmatmul.mubr.bf16.gmra.mrb[0].mxu0 %v576
  %v1308 = vpop.f32.mrb[0].mxu0
  %v1309 = vadd.f32 %v1020, %v1308
  %v1310 = vpop.f32.mrb[0].mxu0
  %v1311 = vpop.f32.mrb[0].mxu0
  %v1312 = vadd.f32 %v1023, %v1311
  %v1313 = vpop.f32.mrb[0].mxu0
  %1314 = vmatprep.mubr.bf16.mxu0 0
  %1315 = vmatmul.mubr.bf16.gmra.mrb[0].mxu0 %v579
  %v1316 = vpop.f32.mrb[0].mxu0
  %v1317 = vadd.f32 %v1028, %v1316
  %v1318 = vpop.f32.mrb[0].mxu0
  %v1319 = vpop.f32.mrb[0].mxu0
  %v1320 = vadd.f32 %v1031, %v1319
  %v1321 = vpop.f32.mrb[0].mxu0
  %1322 = vmatprep.mubr.bf16.mxu0 0
  %1323 = vmatmul.mubr.bf16.gmra.mrb[0].mxu0 %v582
  %v1324 = vpop.f32.mrb[0].mxu0
  %v1325 = vadd.f32 %v1036, %v1324
  %v1326 = vpop.f32.mrb[0].mxu0
  %v1327 = vpop.f32.mrb[0].mxu0
  %v1328 = vadd.f32 %v1039, %v1327
  %v1329 = vpop.f32.mrb[0].mxu0
  %1330 = vmatprep.mubr.bf16.mxu0 0
  %1331 = vmatmul.mubr.bf16.gmra.mrb[0].mxu0 %v585
  %v1332 = vpop.f32.mrb[0].mxu0
  %v1333 = vadd.f32 %v1044, %v1332
  %v1334 = vpop.f32.mrb[0].mxu0
  %v1335 = vpop.f32.mrb[0].mxu0
  %v1336 = vadd.f32 %v1047, %v1335
  %v1337 = vpop.f32.mrb[0].mxu0
  %1338 = vmatprep.mubr.bf16.mxu0 0
  %1339 = vmatmul.mubr.bf16.gmra.mrb[0].mxu0 %v588
  %v1340 = vpop.f32.mrb[0].mxu0
  %v1341 = vadd.f32 %v1052, %v1340
  %v1342 = vpop.f32.mrb[0].mxu0
  %v1343 = vpop.f32.mrb[0].mxu0
  %v1344 = vadd.f32 %v1055, %v1343
  %v1345 = vpop.f32.mrb[0].mxu0
  %1346 = vmatprep.mubr.bf16.mxu0 0
  %1347 = vmatmul.mubr.bf16.gmra.mrb[0].mxu0 %v591
  %v1348 = vpop.f32.mrb[0].mxu0
  %v1349 = vadd.f32 %v1060, %v1348
  %v1350 = vpop.f32.mrb[0].mxu0
  %v1351 = vpop.f32.mrb[0].mxu0
  %v1352 = vadd.f32 %v1063, %v1351
  %v1353 = vpop.f32.mrb[0].mxu0
  %1354 = vmatprep.mubr.bf16.mxu0 0
  %1355 = vmatmul.mubr.bf16.gmra.mrb[0].mxu0 %v594
  %v1356 = vpop.f32.mrb[0].mxu0
  %v1357 = vadd.f32 %v1068, %v1356
  %v1358 = vpop.f32.mrb[0].mxu0
  %v1359 = vpop.f32.mrb[0].mxu0
  %v1360 = vadd.f32 %v1071, %v1359
  %v1361 = vpop.f32.mrb[0].mxu0
  %1362 = vmatprep.mubr.bf16.mxu0 0
  %1363 = vmatmul.mubr.bf16.gmra.mrb[0].mxu0 %v597
  %v1364 = vpop.f32.mrb[0].mxu0
  %v1365 = vadd.f32 %v1076, %v1364
  %v1366 = vpop.f32.mrb[0].mxu0
  %v1367 = vpop.f32.mrb[0].mxu0
  %v1368 = vadd.f32 %v1079, %v1367
  %v1369 = vpop.f32.mrb[0].mxu0
  %1370 = vmatprep.mubr.bf16.mxu0 0
  %1371 = vmatmul.mubr.bf16.gmra.mrb[0].mxu0 %v600
  %v1372 = vpop.f32.mrb[0].mxu0
  %v1373 = vadd.f32 %v1084, %v1372
  %v1374 = vpop.f32.mrb[0].mxu0
  %v1375 = vpop.f32.mrb[0].mxu0
  %v1376 = vadd.f32 %v1087, %v1375
  %v1377 = vpop.f32.mrb[0].mxu0
  %1378 = vmatprep.mubr.bf16.mxu0 0
  %1379 = vmatmul.mubr.bf16.gmra.mrb[0].mxu0 %v603
  %v1380 = vpop.f32.mrb[0].mxu0
  %v1381 = vadd.f32 %v1092, %v1380
  %v1382 = vpop.f32.mrb[0].mxu0
  %v1383 = vpop.f32.mrb[0].mxu0
  %v1384 = vadd.f32 %v1095, %v1383
  %v1385 = vpop.f32.mrb[0].mxu0
  %1386 = vmatprep.mubr.bf16.mxu0 0
  %1387 = vmatmul.mubr.bf16.gmra.mrb[0].mxu0 %v606
  %v1388 = vpop.f32.mrb[0].mxu0
  %v1389 = vadd.f32 %v1100, %v1388
  %v1390 = vpop.f32.mrb[0].mxu0
  %v1391 = vpop.f32.mrb[0].mxu0
  %v1392 = vadd.f32 %v1103, %v1391
  %v1393 = vpop.f32.mrb[0].mxu0
  %1394 = vmatprep.mubr.bf16.mxu0 0
  %1395 = vmatmul.mubr.bf16.gmra.mrb[0].mxu0 %v609
  %v1396 = vpop.f32.mrb[0].mxu0
  %v1397 = vadd.f32 %v1108, %v1396
  %v1398 = vpop.f32.mrb[0].mxu0
  %v1399 = vpop.f32.mrb[0].mxu0
  %v1400 = vadd.f32 %v1111, %v1399
  %v1401 = vpop.f32.mrb[0].mxu0
  %1402 = vmatprep.mubr.bf16.mxu0 0
  %1403 = vmatmul.mubr.bf16.gmra.mrb[0].mxu0 %v612
  %v1404 = vpop.f32.mrb[0].mxu0
  %v1405 = vadd.f32 %v1116, %v1404
  %v1406 = vpop.f32.mrb[0].mxu0
  %v1407 = vpop.f32.mrb[0].mxu0
  %v1408 = vadd.f32 %v1119, %v1407
  %v1409 = vpop.f32.mrb[0].mxu0
  %1410 = vmatprep.mubr.bf16.mxu0 0
  %1411 = vmatmul.mubr.bf16.gmra.mrb[0].mxu0 %v615
  %v1412 = vpop.f32.mrb[0].mxu0
  %v1413 = vadd.f32 %v1124, %v1412
  %v1414 = vpop.f32.mrb[0].mxu0
  %v1415 = vpop.f32.mrb[0].mxu0
  %v1416 = vadd.f32 %v1127, %v1415
  %v1417 = vpop.f32.mrb[0].mxu0
  %1418 = vmatprep.mubr.bf16.mxu0 0
  %1419 = vmatmul.mubr.bf16.gmra.mrb[0].mxu0 %v618
  %v1420 = vpop.f32.mrb[0].mxu0
  %v1421 = vadd.f32 %v1132, %v1420
  %v1422 = vpop.f32.mrb[0].mxu0
  %v1423 = vpop.f32.mrb[0].mxu0
  %v1424 = vadd.f32 %v1135, %v1423
  %v1425 = vpop.f32.mrb[0].mxu0
  %1426 = vmatprep.mubr.bf16.mxu0 0
  %1427 = vmatmul.mubr.bf16.gmra.mrb[0].mxu0 %v621
  %v1428 = vpop.f32.mrb[0].mxu0
  %v1429 = vadd.f32 %v1140, %v1428
  %v1430 = vpop.f32.mrb[0].mxu0
  %v1431 = vpop.f32.mrb[0].mxu0
  %v1432 = vadd.f32 %v1143, %v1431
  %v1433 = vpop.f32.mrb[0].mxu0
  %1434 = vmatprep.mubr.bf16.mxu0 0
  %1435 = vmatmul.mubr.bf16.gmra.mrb[0].mxu0 %v624
  %v1436 = vpop.f32.mrb[0].mxu0
  %v1437 = vadd.f32 %v1148, %v1436
  %v1438 = vpop.f32.mrb[0].mxu0
  %v1439 = vpop.f32.mrb[0].mxu0
  %v1440 = vadd.f32 %v1151, %v1439
  %v1441 = vpop.f32.mrb[0].mxu0
  %1442 = vdwg.mxu0
  %v1443 = vmax.f32 %v1189, 0.0
  %v1444 = vmax.f32 %v1192, 0.0
  %v1445 = vmax.f32 %v1197, 0.0
  %v1446 = vmax.f32 %v1200, 0.0
  %v1447 = vmax.f32 %v1205, 0.0
  %v1448 = vmax.f32 %v1208, 0.0
  %v1449 = vmax.f32 %v1213, 0.0
  %v1450 = vmax.f32 %v1216, 0.0
  %v1451 = vmax.f32 %v1221, 0.0
  %v1452 = vmax.f32 %v1224, 0.0
  %v1453 = vmax.f32 %v1229, 0.0
  %v1454 = vmax.f32 %v1232, 0.0
  %v1455 = vmax.f32 %v1237, 0.0
  %v1456 = vmax.f32 %v1240, 0.0
  %v1457 = vmax.f32 %v1245, 0.0
  %v1458 = vmax.f32 %v1248, 0.0
  %v1459 = vmax.f32 %v1253, 0.0
  %v1460 = vmax.f32 %v1256, 0.0
  %v1461 = vmax.f32 %v1261, 0.0
  %v1462 = vmax.f32 %v1264, 0.0
  %v1463 = vmax.f32 %v1269, 0.0
  %v1464 = vmax.f32 %v1272, 0.0
  %v1465 = vmax.f32 %v1277, 0.0
  %v1466 = vmax.f32 %v1280, 0.0
  %v1467 = vmax.f32 %v1285, 0.0
  %v1468 = vmax.f32 %v1288, 0.0
  %v1469 = vmax.f32 %v1293, 0.0
  %v1470 = vmax.f32 %v1296, 0.0
  %v1471 = vmax.f32 %v1301, 0.0
  %v1472 = vmax.f32 %v1304, 0.0
  %v1473 = vmax.f32 %v1309, 0.0
  %v1474 = vmax.f32 %v1312, 0.0
  %v1475 = vmax.f32 %v1317, 0.0
  %v1476 = vmax.f32 %v1320, 0.0
  %v1477 = vmax.f32 %v1325, 0.0
  %v1478 = vmax.f32 %v1328, 0.0
  %v1479 = vmax.f32 %v1333, 0.0
  %v1480 = vmax.f32 %v1336, 0.0
  %v1481 = vmax.f32 %v1341, 0.0
  %v1482 = vmax.f32 %v1344, 0.0
  %v1483 = vmax.f32 %v1349, 0.0
  %v1484 = vmax.f32 %v1352, 0.0
  %v1485 = vmax.f32 %v1357, 0.0
  %v1486 = vmax.f32 %v1360, 0.0
  %v1487 = vmax.f32 %v1365, 0.0
  %v1488 = vmax.f32 %v1368, 0.0
  %v1489 = vmax.f32 %v1373, 0.0
  %v1490 = vmax.f32 %v1376, 0.0
  %v1491 = vmax.f32 %v1381, 0.0
  %v1492 = vmax.f32 %v1384, 0.0
  %v1493 = vmax.f32 %v1389, 0.0
  %v1494 = vmax.f32 %v1392, 0.0
  %v1495 = vmax.f32 %v1397, 0.0
  %v1496 = vmax.f32 %v1400, 0.0
  %v1497 = vmax.f32 %v1405, 0.0
  %v1498 = vmax.f32 %v1408, 0.0
  %v1499 = vmax.f32 %v1413, 0.0
  %v1500 = vmax.f32 %v1416, 0.0
  %v1501 = vmax.f32 %v1421, 0.0
  %v1502 = vmax.f32 %v1424, 0.0
  %v1503 = vmax.f32 %v1429, 0.0
  %v1504 = vmax.f32 %v1432, 0.0
  %v1505 = vmax.f32 %v1437, 0.0
  %v1506 = vmax.f32 %v1440, 0.0
  %v1507 = vpack.c.bf16 %v1444, %v1443
  %v1508 = vpack.c.bf16 %v1446, %v1445
  %v1509 = vpack.c.bf16 %v1448, %v1447
  %v1510 = vpack.c.bf16 %v1450, %v1449
  %v1511 = vpack.c.bf16 %v1452, %v1451
  %v1512 = vpack.c.bf16 %v1454, %v1453
  %v1513 = vpack.c.bf16 %v1456, %v1455
  %v1514 = vpack.c.bf16 %v1458, %v1457
  %v1515 = vpack.c.bf16 %v1460, %v1459
  %v1516 = vpack.c.bf16 %v1462, %v1461
  %v1517 = vpack.c.bf16 %v1464, %v1463
  %v1518 = vpack.c.bf16 %v1466, %v1465
  %v1519 = vpack.c.bf16 %v1468, %v1467
  %v1520 = vpack.c.bf16 %v1470, %v1469
  %v1521 = vpack.c.bf16 %v1472, %v1471
  %v1522 = vpack.c.bf16 %v1474, %v1473
  %v1523 = vpack.c.bf16 %v1476, %v1475
  %v1524 = vpack.c.bf16 %v1478, %v1477
  %v1525 = vpack.c.bf16 %v1480, %v1479
  %v1526 = vpack.c.bf16 %v1482, %v1481
  %v1527 = vpack.c.bf16 %v1484, %v1483
  %v1528 = vpack.c.bf16 %v1486, %v1485
  %v1529 = vpack.c.bf16 %v1488, %v1487
  %v1530 = vpack.c.bf16 %v1490, %v1489
  %v1531 = vpack.c.bf16 %v1492, %v1491
  %v1532 = vpack.c.bf16 %v1494, %v1493
  %v1533 = vpack.c.bf16 %v1496, %v1495
  %v1534 = vpack.c.bf16 %v1498, %v1497
  %v1535 = vpack.c.bf16 %v1500, %v1499
  %v1536 = vpack.c.bf16 %v1502, %v1501
  %v1537 = vpack.c.bf16 %v1504, %v1503
  %v1538 = vpack.c.bf16 %v1506, %v1505
  %v1571 = vunpack.c.l.b16 %v1507
  %v1572 = vunpack.c.h.b16 %v1507
  %v1573 = vunpack.c.l.b16 %v1508
  %v1574 = vunpack.c.h.b16 %v1508
  %v1575 = vunpack.c.l.b16 %v1509
  %v1576 = vunpack.c.h.b16 %v1509
  %v1577 = vunpack.c.l.b16 %v1510
  %v1578 = vunpack.c.h.b16 %v1510
  %v1579 = vunpack.c.l.b16 %v1511
  %v1580 = vunpack.c.h.b16 %v1511
  %v1581 = vunpack.c.l.b16 %v1512
  %v1582 = vunpack.c.h.b16 %v1512
  %v1583 = vunpack.c.l.b16 %v1513
  %v1584 = vunpack.c.h.b16 %v1513
  %v1585 = vunpack.c.l.b16 %v1514
  %v1586 = vunpack.c.h.b16 %v1514
  %v1587 = vunpack.c.l.b16 %v1515
  %v1588 = vunpack.c.h.b16 %v1515
  %v1589 = vunpack.c.l.b16 %v1516
  %v1590 = vunpack.c.h.b16 %v1516
  %v1591 = vunpack.c.l.b16 %v1517
  %v1592 = vunpack.c.h.b16 %v1517
  %v1593 = vunpack.c.l.b16 %v1518
  %v1594 = vunpack.c.h.b16 %v1518
  %v1595 = vunpack.c.l.b16 %v1519
  %v1596 = vunpack.c.h.b16 %v1519
  %v1597 = vunpack.c.l.b16 %v1520
  %v1598 = vunpack.c.h.b16 %v1520
  %v1599 = vunpack.c.l.b16 %v1521
  %v1600 = vunpack.c.h.b16 %v1521
  %v1601 = vunpack.c.l.b16 %v1522
  %v1602 = vunpack.c.h.b16 %v1522
  %v1603 = vunpack.c.l.b16 %v1523
  %v1604 = vunpack.c.h.b16 %v1523
  %v1605 = vunpack.c.l.b16 %v1524
  %v1606 = vunpack.c.h.b16 %v1524
  %v1607 = vunpack.c.l.b16 %v1525
  %v1608 = vunpack.c.h.b16 %v1525
  %v1609 = vunpack.c.l.b16 %v1526
  %v1610 = vunpack.c.h.b16 %v1526
  %v1611 = vunpack.c.l.b16 %v1527
  %v1612 = vunpack.c.h.b16 %v1527
  %v1613 = vunpack.c.l.b16 %v1528
  %v1614 = vunpack.c.h.b16 %v1528
  %v1615 = vunpack.c.l.b16 %v1529
  %v1616 = vunpack.c.h.b16 %v1529
  %v1617 = vunpack.c.l.b16 %v1530
  %v1618 = vunpack.c.h.b16 %v1530
  %v1619 = vunpack.c.l.b16 %v1531
  %v1620 = vunpack.c.h.b16 %v1531
  %v1621 = vunpack.c.l.b16 %v1532
  %v1622 = vunpack.c.h.b16 %v1532
  %v1623 = vunpack.c.l.b16 %v1533
  %v1624 = vunpack.c.h.b16 %v1533
  %v1625 = vunpack.c.l.b16 %v1534
  %v1626 = vunpack.c.h.b16 %v1534
  %v1627 = vunpack.c.l.b16 %v1535
  %v1628 = vunpack.c.h.b16 %v1535
  %v1629 = vunpack.c.l.b16 %v1536
  %v1630 = vunpack.c.h.b16 %v1536
  %v1631 = vunpack.c.l.b16 %v1537
  %v1632 = vunpack.c.h.b16 %v1537
  %v1633 = vunpack.c.l.b16 %v1538
  %v1634 = vunpack.c.h.b16 %v1538
  %v1635 = vpack.c.b16 %v1571, %v1571
  %v1636 = vpack.c.b16 %v1572, %v1572
  %v1637 = vpack.c.b16 %v1573, %v1573
  %v1638 = vpack.c.b16 %v1574, %v1574
  %v1639 = vpack.c.b16 %v1575, %v1575
  %v1640 = vpack.c.b16 %v1576, %v1576
  %v1641 = vpack.c.b16 %v1577, %v1577
  %v1642 = vpack.c.b16 %v1578, %v1578
  %v1643 = vpack.c.b16 %v1579, %v1579
  %v1644 = vpack.c.b16 %v1580, %v1580
  %v1645 = vpack.c.b16 %v1581, %v1581
  %v1646 = vpack.c.b16 %v1582, %v1582
  %v1647 = vpack.c.b16 %v1583, %v1583
  %v1648 = vpack.c.b16 %v1584, %v1584
  %v1649 = vpack.c.b16 %v1585, %v1585
  %v1650 = vpack.c.b16 %v1586, %v1586
  %v1651 = vpack.c.b16 %v1587, %v1587
  %v1652 = vpack.c.b16 %v1588, %v1588
  %v1653 = vpack.c.b16 %v1589, %v1589
  %v1654 = vpack.c.b16 %v1590, %v1590
  %v1655 = vpack.c.b16 %v1591, %v1591
  %v1656 = vpack.c.b16 %v1592, %v1592
  %v1657 = vpack.c.b16 %v1593, %v1593
  %v1658 = vpack.c.b16 %v1594, %v1594
  %v1659 = vpack.c.b16 %v1595, %v1595
  %v1660 = vpack.c.b16 %v1596, %v1596
  %v1661 = vpack.c.b16 %v1597, %v1597
  %v1662 = vpack.c.b16 %v1598, %v1598
  %v1663 = vpack.c.b16 %v1599, %v1599
  %v1664 = vpack.c.b16 %v1600, %v1600
  %v1665 = vpack.c.b16 %v1601, %v1601
  %v1666 = vpack.c.b16 %v1602, %v1602
  %v1667 = vpack.c.b16 %v1603, %v1603
  %v1668 = vpack.c.b16 %v1604, %v1604
  %v1669 = vpack.c.b16 %v1605, %v1605
  %v1670 = vpack.c.b16 %v1606, %v1606
  %v1671 = vpack.c.b16 %v1607, %v1607
  %v1672 = vpack.c.b16 %v1608, %v1608
  %v1673 = vpack.c.b16 %v1609, %v1609
  %v1674 = vpack.c.b16 %v1610, %v1610
  %v1675 = vpack.c.b16 %v1611, %v1611
  %v1676 = vpack.c.b16 %v1612, %v1612
  %v1677 = vpack.c.b16 %v1613, %v1613
  %v1678 = vpack.c.b16 %v1614, %v1614
  %v1679 = vpack.c.b16 %v1615, %v1615
  %v1680 = vpack.c.b16 %v1616, %v1616
  %v1681 = vpack.c.b16 %v1617, %v1617
  %v1682 = vpack.c.b16 %v1618, %v1618
  %v1683 = vpack.c.b16 %v1619, %v1619
  %v1684 = vpack.c.b16 %v1620, %v1620
  %v1685 = vpack.c.b16 %v1621, %v1621
  %v1686 = vpack.c.b16 %v1622, %v1622
  %v1687 = vpack.c.b16 %v1623, %v1623
  %v1688 = vpack.c.b16 %v1624, %v1624
  %v1689 = vpack.c.b16 %v1625, %v1625
  %v1690 = vpack.c.b16 %v1626, %v1626
  %v1691 = vpack.c.b16 %v1627, %v1627
  %v1692 = vpack.c.b16 %v1628, %v1628
  %v1693 = vpack.c.b16 %v1629, %v1629
  %v1694 = vpack.c.b16 %v1630, %v1630
  %v1695 = vpack.c.b16 %v1631, %v1631
  %v1696 = vpack.c.b16 %v1632, %v1632
  %v1697 = vpack.c.b16 %v1633, %v1633
  %v1698 = vpack.c.b16 %v1634, %v1634
  %1763 = vst [vmem:[%s6] sm:$0xf] %v1635
  %1764 = vst [vmem:[%s6 + $0x4] sm:$0xf] %v1636
  %1765 = vst [vmem:[%s6 + $0x8] sm:$0xf] %v1637
  %1766 = vst [vmem:[%s6 + $0xc] sm:$0xf] %v1638
  %1767 = vst [vmem:[%s6 + $0x10] sm:$0xf] %v1639
  %1768 = vst [vmem:[%s6 + $0x14] sm:$0xf] %v1640
  %1769 = vst [vmem:[%s6 + $0x18] sm:$0xf] %v1641
  %1770 = vst [vmem:[%s6 + $0x1c] sm:$0xf] %v1642
  %1771 = vst [vmem:[%s6 + $0x20] sm:$0xf] %v1643
  %1772 = vst [vmem:[%s6 + $0x24] sm:$0xf] %v1644
  %1773 = vst [vmem:[%s6 + $0x28] sm:$0xf] %v1645
  %1774 = vst [vmem:[%s6 + $0x2c] sm:$0xf] %v1646
  %1775 = vst [vmem:[%s6 + $0x30] sm:$0xf] %v1647
  %1776 = vst [vmem:[%s6 + $0x34] sm:$0xf] %v1648
  %1777 = vst [vmem:[%s6 + $0x38] sm:$0xf] %v1649
  %1778 = vst [vmem:[%s6 + $0x3c] sm:$0xf] %v1650
  %1779 = vst [vmem:[%s6 + $0x40] sm:$0xf] %v1651
  %1780 = vst [vmem:[%s6 + $0x44] sm:$0xf] %v1652
  %1781 = vst [vmem:[%s6 + $0x48] sm:$0xf] %v1653
  %1782 = vst [vmem:[%s6 + $0x4c] sm:$0xf] %v1654
  %1783 = vst [vmem:[%s6 + $0x50] sm:$0xf] %v1655
  %1784 = vst [vmem:[%s6 + $0x54] sm:$0xf] %v1656
  %1785 = vst [vmem:[%s6 + $0x58] sm:$0xf] %v1657
  %1786 = vst [vmem:[%s6 + $0x5c] sm:$0xf] %v1658
  %1787 = vst [vmem:[%s6 + $0x60] sm:$0xf] %v1659
  %1788 = vst [vmem:[%s6 + $0x64] sm:$0xf] %v1660
  %1789 = vst [vmem:[%s6 + $0x68] sm:$0xf] %v1661
  %1790 = vst [vmem:[%s6 + $0x6c] sm:$0xf] %v1662
  %1791 = vst [vmem:[%s6 + $0x70] sm:$0xf] %v1663
  %1792 = vst [vmem:[%s6 + $0x74] sm:$0xf] %v1664
  %1793 = vst [vmem:[%s6 + $0x78] sm:$0xf] %v1665
  %1794 = vst [vmem:[%s6 + $0x7c] sm:$0xf] %v1666
  %1795 = vst [vmem:[%s6 + $0x80] sm:$0xf] %v1667
  %1796 = vst [vmem:[%s6 + $0x84] sm:$0xf] %v1668
  %1797 = vst [vmem:[%s6 + $0x88] sm:$0xf] %v1669
  %1798 = vst [vmem:[%s6 + $0x8c] sm:$0xf] %v1670
  %1799 = vst [vmem:[%s6 + $0x90] sm:$0xf] %v1671
  %1800 = vst [vmem:[%s6 + $0x94] sm:$0xf] %v1672
  %1801 = vst [vmem:[%s6 + $0x98] sm:$0xf] %v1673
  %1802 = vst [vmem:[%s6 + $0x9c] sm:$0xf] %v1674
  %1803 = vst [vmem:[%s6 + $0xa0] sm:$0xf] %v1675
  %1804 = vst [vmem:[%s6 + $0xa4] sm:$0xf] %v1676
  %1805 = vst [vmem:[%s6 + $0xa8] sm:$0xf] %v1677
  %1806 = vst [vmem:[%s6 + $0xac] sm:$0xf] %v1678
  %1807 = vst [vmem:[%s6 + $0xb0] sm:$0xf] %v1679
  %1808 = vst [vmem:[%s6 + $0xb4] sm:$0xf] %v1680
  %1809 = vst [vmem:[%s6 + $0xb8] sm:$0xf] %v1681
  %1810 = vst [vmem:[%s6 + $0xbc] sm:$0xf] %v1682
  %1811 = vst [vmem:[%s6 + $0xc0] sm:$0xf] %v1683
  %1812 = vst [vmem:[%s6 + $0xc4] sm:$0xf] %v1684
  %1813 = vst [vmem:[%s6 + $0xc8] sm:$0xf] %v1685
  %1814 = vst [vmem:[%s6 + $0xcc] sm:$0xf] %v1686
  %1815 = vst [vmem:[%s6 + $0xd0] sm:$0xf] %v1687
  %1816 = vst [vmem:[%s6 + $0xd4] sm:$0xf] %v1688
  %1817 = vst [vmem:[%s6 + $0xd8] sm:$0xf] %v1689
  %1818 = vst [vmem:[%s6 + $0xdc] sm:$0xf] %v1690
  %1819 = vst [vmem:[%s6 + $0xe0] sm:$0xf] %v1691
  %1820 = vst [vmem:[%s6 + $0xe4] sm:$0xf] %v1692
  %1821 = vst [vmem:[%s6 + $0xe8] sm:$0xf] %v1693
  %1822 = vst [vmem:[%s6 + $0xec] sm:$0xf] %v1694
  %1823 = vst [vmem:[%s6 + $0xf0] sm:$0xf] %v1695
  %1824 = vst [vmem:[%s6 + $0xf4] sm:$0xf] %v1696
  %1825 = vst [vmem:[%s6 + $0xf8] sm:$0xf] %v1697
  %1826 = vst [vmem:[%s6 + $0xfc] sm:$0xf] %v1698
  %v1827 = vld [vmem:[%s3] sm:$0xff]
  %v1828 = vld [vmem:[%s3 + $0x8] sm:$0xff]
  %v1829 = vld [vmem:[%s3 + $0x10] sm:$0xff]
  %v1830 = vld [vmem:[%s3 + $0x18] sm:$0xff]
  %v1831 = vld [vmem:[%s3 + $0x20] sm:$0xff]
  %v1832 = vld [vmem:[%s3 + $0x28] sm:$0xff]
  %v1833 = vld [vmem:[%s3 + $0x30] sm:$0xff]
  %v1834 = vld [vmem:[%s3 + $0x38] sm:$0xff]
  %v1835 = vld [vmem:[%s3 + $0x40] sm:$0xff]
  %v1836 = vld [vmem:[%s3 + $0x48] sm:$0xff]
  %v1837 = vld [vmem:[%s3 + $0x50] sm:$0xff]
  %v1838 = vld [vmem:[%s3 + $0x58] sm:$0xff]
  %v1839 = vld [vmem:[%s3 + $0x60] sm:$0xff]
  %v1840 = vld [vmem:[%s3 + $0x68] sm:$0xff]
  %v1841 = vld [vmem:[%s3 + $0x70] sm:$0xff]
  %v1842 = vld [vmem:[%s3 + $0x78] sm:$0xff]
  %v1843 = vld [vmem:[%s4] sm:$0xf]
  %v1844 = vld [vmem:[%s4 + $0x4] sm:$0xf]
  %v1845 = vld [vmem:[%s4 + $0x8] sm:$0xf]
  %v1846 = vld [vmem:[%s4 + $0xc] sm:$0xf]
  %v1847 = vld [vmem:[%s4 + $0x10] sm:$0xf]
  %v1848 = vld [vmem:[%s4 + $0x14] sm:$0xf]
  %v1849 = vld [vmem:[%s4 + $0x18] sm:$0xf]
  %v1850 = vld [vmem:[%s4 + $0x1c] sm:$0xf]
  %v1851 = vld [vmem:[%s4 + $0x20] sm:$0xf]
  %v1852 = vld [vmem:[%s4 + $0x24] sm:$0xf]
  %v1853 = vld [vmem:[%s4 + $0x28] sm:$0xf]
  %v1854 = vld [vmem:[%s4 + $0x2c] sm:$0xf]
  %v1855 = vld [vmem:[%s4 + $0x30] sm:$0xf]
  %v1856 = vld [vmem:[%s4 + $0x34] sm:$0xf]
  %v1857 = vld [vmem:[%s4 + $0x38] sm:$0xf]
  %v1858 = vld [vmem:[%s4 + $0x3c] sm:$0xf]
  %v1859 = vld [vmem:[%s4 + $0x40] sm:$0xf]
  %v1860 = vld [vmem:[%s4 + $0x44] sm:$0xf]
  %v1861 = vld [vmem:[%s4 + $0x48] sm:$0xf]
  %v1862 = vld [vmem:[%s4 + $0x4c] sm:$0xf]
  %v1863 = vld [vmem:[%s4 + $0x50] sm:$0xf]
  %v1864 = vld [vmem:[%s4 + $0x54] sm:$0xf]
  %v1865 = vld [vmem:[%s4 + $0x58] sm:$0xf]
  %v1866 = vld [vmem:[%s4 + $0x5c] sm:$0xf]
  %v1867 = vld [vmem:[%s4 + $0x60] sm:$0xf]
  %v1868 = vld [vmem:[%s4 + $0x64] sm:$0xf]
  %v1869 = vld [vmem:[%s4 + $0x68] sm:$0xf]
  %v1870 = vld [vmem:[%s4 + $0x6c] sm:$0xf]
  %v1871 = vld [vmem:[%s4 + $0x70] sm:$0xf]
  %v1872 = vld [vmem:[%s4 + $0x74] sm:$0xf]
  %v1873 = vld [vmem:[%s4 + $0x78] sm:$0xf]
  %v1874 = vld [vmem:[%s4 + $0x7c] sm:$0xf]
  %v1875 = vld [vmem:[%s5] sm:$0x1]
  %v1877 = vlaneseq
  %v1878 = vshrl.u32 %v1877, 7
  %v1879 = vsub.s32 0, %v1878
  %v1880 = vrot.slane %v1875, %v1879
  %v1898 = vunpack.c.l.b16 %v1827
  %v1899 = vunpack.c.h.b16 %v1827
  %v1900 = vunpack.c.l.b16 %v1828
  %v1901 = vunpack.c.h.b16 %v1828
  %v1902 = vunpack.c.l.b16 %v1829
  %v1903 = vunpack.c.h.b16 %v1829
  %v1904 = vunpack.c.l.b16 %v1830
  %v1905 = vunpack.c.h.b16 %v1830
  %v1906 = vunpack.c.l.b16 %v1831
  %v1907 = vunpack.c.h.b16 %v1831
  %v1908 = vunpack.c.l.b16 %v1832
  %v1909 = vunpack.c.h.b16 %v1832
  %v1910 = vunpack.c.l.b16 %v1833
  %v1911 = vunpack.c.h.b16 %v1833
  %v1912 = vunpack.c.l.b16 %v1834
  %v1913 = vunpack.c.h.b16 %v1834
  %v1914 = vunpack.c.l.b16 %v1835
  %v1915 = vunpack.c.h.b16 %v1835
  %v1916 = vunpack.c.l.b16 %v1836
  %v1917 = vunpack.c.h.b16 %v1836
  %v1918 = vunpack.c.l.b16 %v1837
  %v1919 = vunpack.c.h.b16 %v1837
  %v1920 = vunpack.c.l.b16 %v1838
  %v1921 = vunpack.c.h.b16 %v1838
  %v1922 = vunpack.c.l.b16 %v1839
  %v1923 = vunpack.c.h.b16 %v1839
  %v1924 = vunpack.c.l.b16 %v1840
  %v1925 = vunpack.c.h.b16 %v1840
  %v1926 = vunpack.c.l.b16 %v1841
  %v1927 = vunpack.c.h.b16 %v1841
  %v1928 = vunpack.c.l.b16 %v1842
  %v1929 = vunpack.c.h.b16 %v1842
  %v1930 = vpack.c.b16 %v1900, %v1898
  %v1931 = vpack.c.b16 %v1901, %v1899
  %v1932 = vpack.c.b16 %v1904, %v1902
  %v1933 = vpack.c.b16 %v1905, %v1903
  %v1934 = vpack.c.b16 %v1908, %v1906
  %v1935 = vpack.c.b16 %v1909, %v1907
  %v1936 = vpack.c.b16 %v1912, %v1910
  %v1937 = vpack.c.b16 %v1913, %v1911
  %v1938 = vpack.c.b16 %v1916, %v1914
  %v1939 = vpack.c.b16 %v1917, %v1915
  %v1940 = vpack.c.b16 %v1920, %v1918
  %v1941 = vpack.c.b16 %v1921, %v1919
  %v1942 = vpack.c.b16 %v1924, %v1922
  %v1943 = vpack.c.b16 %v1925, %v1923
  %v1944 = vpack.c.b16 %v1928, %v1926
  %v1945 = vpack.c.b16 %v1929, %v1927
  %v1994 = vunpack.c.l.b16 %v1843
  %v1995 = vunpack.c.l.b16 %v1844
  %v1996 = vunpack.c.l.b16 %v1845
  %v1997 = vunpack.c.l.b16 %v1846
  %v1998 = vunpack.c.l.b16 %v1847
  %v1999 = vunpack.c.l.b16 %v1848
  %v2000 = vunpack.c.l.b16 %v1849
  %v2001 = vunpack.c.l.b16 %v1850
  %v2002 = vunpack.c.l.b16 %v1851
  %v2003 = vunpack.c.l.b16 %v1852
  %v2004 = vunpack.c.l.b16 %v1853
  %v2005 = vunpack.c.l.b16 %v1854
  %v2006 = vunpack.c.l.b16 %v1855
  %v2007 = vunpack.c.l.b16 %v1856
  %v2008 = vunpack.c.l.b16 %v1857
  %v2009 = vunpack.c.l.b16 %v1858
  %v2010 = vunpack.c.l.b16 %v1859
  %v2011 = vunpack.c.l.b16 %v1860
  %v2012 = vunpack.c.l.b16 %v1861
  %v2013 = vunpack.c.l.b16 %v1862
  %v2014 = vunpack.c.l.b16 %v1863
  %v2015 = vunpack.c.l.b16 %v1864
  %v2016 = vunpack.c.l.b16 %v1865
  %v2017 = vunpack.c.l.b16 %v1866
  %v2018 = vunpack.c.l.b16 %v1867
  %v2019 = vunpack.c.l.b16 %v1868
  %v2020 = vunpack.c.l.b16 %v1869
  %v2021 = vunpack.c.l.b16 %v1870
  %v2022 = vunpack.c.l.b16 %v1871
  %v2023 = vunpack.c.l.b16 %v1872
  %v2024 = vunpack.c.l.b16 %v1873
  %v2025 = vunpack.c.l.b16 %v1874
  %v2026 = vpack.c.b16 %v1995, %v1994
  %v2027 = vpack.c.b16 %v1997, %v1996
  %v2028 = vpack.c.b16 %v1999, %v1998
  %v2029 = vpack.c.b16 %v2001, %v2000
  %v2030 = vpack.c.b16 %v2003, %v2002
  %v2031 = vpack.c.b16 %v2005, %v2004
  %v2032 = vpack.c.b16 %v2007, %v2006
  %v2033 = vpack.c.b16 %v2009, %v2008
  %v2034 = vpack.c.b16 %v2011, %v2010
  %v2035 = vpack.c.b16 %v2013, %v2012
  %v2036 = vpack.c.b16 %v2015, %v2014
  %v2037 = vpack.c.b16 %v2017, %v2016
  %v2038 = vpack.c.b16 %v2019, %v2018
  %v2039 = vpack.c.b16 %v2021, %v2020
  %v2040 = vpack.c.b16 %v2023, %v2022
  %v2041 = vpack.c.b16 %v2025, %v2024
  %2058 = vmatprep.subr.bf16.mxu0 0
  %2059 = vmatpush1.bf16.msra.mxu0 %v2026
  %2060 = vmatprep.subr.bf16.mxu0 0
  %2061 = vmatpush1.bf16.msra.mxu0 %v2027
  %2062 = vmatprep.subr.bf16.mxu0 0
  %2063 = vmatpush1.bf16.msra.mxu0 %v2028
  %2064 = vmatprep.subr.bf16.mxu0 0
  %2065 = vmatpush1.bf16.msra.mxu0 %v2029
  %2066 = vmatprep.subr.bf16.mxu0 0
  %2067 = vmatpush1.bf16.msra.mxu0 %v2030
  %2068 = vmatprep.subr.bf16.mxu0 0
  %2069 = vmatpush1.bf16.msra.mxu0 %v2031
  %2070 = vmatprep.subr.bf16.mxu0 0
  %2071 = vmatpush1.bf16.msra.mxu0 %v2032
  %2072 = vmatprep.subr.bf16.mxu0 0
  %2073 = vmatpush1.bf16.msra.mxu0 %v2033
  %2074 = vmatprep.subr.bf16.mxu0 0
  %2075 = vmatpush1.bf16.msra.mxu0 %v2034
  %2076 = vmatprep.subr.bf16.mxu0 0
  %2077 = vmatpush1.bf16.msra.mxu0 %v2035
  %2078 = vmatprep.subr.bf16.mxu0 0
  %2079 = vmatpush1.bf16.msra.mxu0 %v2036
  %2080 = vmatprep.subr.bf16.mxu0 0
  %2081 = vmatpush1.bf16.msra.mxu0 %v2037
  %2082 = vmatprep.subr.bf16.mxu0 0
  %2083 = vmatpush1.bf16.msra.mxu0 %v2038
  %2084 = vmatprep.subr.bf16.mxu0 0
  %2085 = vmatpush1.bf16.msra.mxu0 %v2039
  %2086 = vmatprep.subr.bf16.mxu0 0
  %2087 = vmatpush1.bf16.msra.mxu0 %v2040
  %2088 = vmatprep.subr.bf16.mxu0 0
  %2089 = vmatpush1.bf16.msra.mxu0 %v2041
  %2090 = vmatprep.mubr.bf16.mxu0 %v1931
  %2091 = vmatmul.mubr.bf16.gmra.mrb[0].mxu0 %v1930
  %v2092 = vpop.f32.mrb[0].mxu0
  %v2093 = vadd.f32 %v1880, %v2092
  %v2094 = vpop.f32.mrb[0].mxu0
  %v2095 = vpop.f32.mrb[0].mxu0
  %v2096 = vadd.f32 %v1880, %v2095
  %v2097 = vpop.f32.mrb[0].mxu0
  %2098 = vmatprep.mubr.bf16.mxu0 %v1933
  %2099 = vmatmul.mubr.bf16.gmra.mrb[0].mxu0 %v1932
  %v2100 = vpop.f32.mrb[0].mxu0
  %v2101 = vadd.f32 %v1880, %v2100
  %v2102 = vpop.f32.mrb[0].mxu0
  %v2103 = vpop.f32.mrb[0].mxu0
  %v2104 = vadd.f32 %v1880, %v2103
  %v2105 = vpop.f32.mrb[0].mxu0
  %2106 = vmatprep.mubr.bf16.mxu0 %v1935
  %2107 = vmatmul.mubr.bf16.gmra.mrb[0].mxu0 %v1934
  %v2108 = vpop.f32.mrb[0].mxu0
  %v2109 = vadd.f32 %v1880, %v2108
  %v2110 = vpop.f32.mrb[0].mxu0
  %v2111 = vpop.f32.mrb[0].mxu0
  %v2112 = vadd.f32 %v1880, %v2111
  %v2113 = vpop.f32.mrb[0].mxu0
  %2114 = vmatprep.mubr.bf16.mxu0 %v1937
  %2115 = vmatmul.mubr.bf16.gmra.mrb[0].mxu0 %v1936
  %v2116 = vpop.f32.mrb[0].mxu0
  %v2117 = vadd.f32 %v1880, %v2116
  %v2118 = vpop.f32.mrb[0].mxu0
  %v2119 = vpop.f32.mrb[0].mxu0
  %v2120 = vadd.f32 %v1880, %v2119
  %v2121 = vpop.f32.mrb[0].mxu0
  %2122 = vmatprep.mubr.bf16.mxu0 %v1939
  %2123 = vmatmul.mubr.bf16.gmra.mrb[0].mxu0 %v1938
  %v2124 = vpop.f32.mrb[0].mxu0
  %v2125 = vadd.f32 %v1880, %v2124
  %v2126 = vpop.f32.mrb[0].mxu0
  %v2127 = vpop.f32.mrb[0].mxu0
  %v2128 = vadd.f32 %v1880, %v2127
  %v2129 = vpop.f32.mrb[0].mxu0
  %2130 = vmatprep.mubr.bf16.mxu0 %v1941
  %2131 = vmatmul.mubr.bf16.gmra.mrb[0].mxu0 %v1940
  %v2132 = vpop.f32.mrb[0].mxu0
  %v2133 = vadd.f32 %v1880, %v2132
  %v2134 = vpop.f32.mrb[0].mxu0
  %v2135 = vpop.f32.mrb[0].mxu0
  %v2136 = vadd.f32 %v1880, %v2135
  %v2137 = vpop.f32.mrb[0].mxu0
  %2138 = vmatprep.mubr.bf16.mxu0 %v1943
  %2139 = vmatmul.mubr.bf16.gmra.mrb[0].mxu0 %v1942
  %v2140 = vpop.f32.mrb[0].mxu0
  %v2141 = vadd.f32 %v1880, %v2140
  %v2142 = vpop.f32.mrb[0].mxu0
  %v2143 = vpop.f32.mrb[0].mxu0
  %v2144 = vadd.f32 %v1880, %v2143
  %v2145 = vpop.f32.mrb[0].mxu0
  %2146 = vmatprep.mubr.bf16.mxu0 %v1945
  %2147 = vmatmul.mubr.bf16.gmra.mrb[0].mxu0 %v1944
  %v2148 = vpop.f32.mrb[0].mxu0
  %v2149 = vadd.f32 %v1880, %v2148
  %v2150 = vpop.f32.mrb[0].mxu0
  %v2151 = vpop.f32.mrb[0].mxu0
  %v2152 = vadd.f32 %v1880, %v2151
  %v2153 = vpop.f32.mrb[0].mxu0
  %2154 = vdwg.mxu0
  %v2155 = vmax.f32 %v2093, 0.0
  %v2156 = vmax.f32 %v2096, 0.0
  %v2157 = vmax.f32 %v2101, 0.0
  %v2158 = vmax.f32 %v2104, 0.0
  %v2159 = vmax.f32 %v2109, 0.0
  %v2160 = vmax.f32 %v2112, 0.0
  %v2161 = vmax.f32 %v2117, 0.0
  %v2162 = vmax.f32 %v2120, 0.0
  %v2163 = vmax.f32 %v2125, 0.0
  %v2164 = vmax.f32 %v2128, 0.0
  %v2165 = vmax.f32 %v2133, 0.0
  %v2166 = vmax.f32 %v2136, 0.0
  %v2167 = vmax.f32 %v2141, 0.0
  %v2168 = vmax.f32 %v2144, 0.0
  %v2169 = vmax.f32 %v2149, 0.0
  %v2170 = vmax.f32 %v2152, 0.0
  %v2171 = vpack.c.bf16 %v2156, %v2155
  %v2172 = vpack.c.bf16 %v2158, %v2157
  %v2173 = vpack.c.bf16 %v2160, %v2159
  %v2174 = vpack.c.bf16 %v2162, %v2161
  %v2175 = vpack.c.bf16 %v2164, %v2163
  %v2176 = vpack.c.bf16 %v2166, %v2165
  %v2177 = vpack.c.bf16 %v2168, %v2167
  %v2178 = vpack.c.bf16 %v2170, %v2169
  %v2187 = vunpack.c.l.b16 %v2171
  %v2188 = vunpack.c.h.b16 %v2171
  %v2189 = vunpack.c.l.b16 %v2172
  %v2190 = vunpack.c.h.b16 %v2172
  %v2191 = vunpack.c.l.b16 %v2173
  %v2192 = vunpack.c.h.b16 %v2173
  %v2193 = vunpack.c.l.b16 %v2174
  %v2194 = vunpack.c.h.b16 %v2174
  %v2195 = vunpack.c.l.b16 %v2175
  %v2196 = vunpack.c.h.b16 %v2175
  %v2197 = vunpack.c.l.b16 %v2176
  %v2198 = vunpack.c.h.b16 %v2176
  %v2199 = vunpack.c.l.b16 %v2177
  %v2200 = vunpack.c.h.b16 %v2177
  %v2201 = vunpack.c.l.b16 %v2178
  %v2202 = vunpack.c.h.b16 %v2178
  %v2203 = vpack.c.b16 %v2187, %v2187
  %v2204 = vpack.c.b16 %v2188, %v2188
  %v2205 = vpack.c.b16 %v2189, %v2189
  %v2206 = vpack.c.b16 %v2190, %v2190
  %v2207 = vpack.c.b16 %v2191, %v2191
  %v2208 = vpack.c.b16 %v2192, %v2192
  %v2209 = vpack.c.b16 %v2193, %v2193
  %v2210 = vpack.c.b16 %v2194, %v2194
  %v2211 = vpack.c.b16 %v2195, %v2195
  %v2212 = vpack.c.b16 %v2196, %v2196
  %v2213 = vpack.c.b16 %v2197, %v2197
  %v2214 = vpack.c.b16 %v2198, %v2198
  %v2215 = vpack.c.b16 %v2199, %v2199
  %v2216 = vpack.c.b16 %v2200, %v2200
  %v2217 = vpack.c.b16 %v2201, %v2201
  %v2218 = vpack.c.b16 %v2202, %v2202
  %2235 = vst [vmem:[%s7] sm:$0xf] %v2203
  %2236 = vst [vmem:[%s7 + $0x4] sm:$0xf] %v2204
  %2237 = vst [vmem:[%s7 + $0x8] sm:$0xf] %v2205
  %2238 = vst [vmem:[%s7 + $0xc] sm:$0xf] %v2206
  %2239 = vst [vmem:[%s7 + $0x10] sm:$0xf] %v2207
  %2240 = vst [vmem:[%s7 + $0x14] sm:$0xf] %v2208
  %2241 = vst [vmem:[%s7 + $0x18] sm:$0xf] %v2209
  %2242 = vst [vmem:[%s7 + $0x1c] sm:$0xf] %v2210
  %2243 = vst [vmem:[%s7 + $0x20] sm:$0xf] %v2211
  %2244 = vst [vmem:[%s7 + $0x24] sm:$0xf] %v2212
  %2245 = vst [vmem:[%s7 + $0x28] sm:$0xf] %v2213
  %2246 = vst [vmem:[%s7 + $0x2c] sm:$0xf] %v2214
  %2247 = vst [vmem:[%s7 + $0x30] sm:$0xf] %v2215
  %2248 = vst [vmem:[%s7 + $0x34] sm:$0xf] %v2216
  %2249 = vst [vmem:[%s7 + $0x38] sm:$0xf] %v2217
  %2250 = vst [vmem:[%s7 + $0x3c] sm:$0xf] %v2218
  // Predicated region
  $region26: #{forward.5} parent=0 // pred_check
    _
  $region27: #{forward.5} parent=0 // pred_check_branch
    %2252 = sbr.rel (0) target = $region29
  $region28: #{forward.5} parent=0 // pred_region
    _
  $region29: #{forward.5} parent=0 // pred_fallthru
    _
  // Predicated region
  $region30: #{forward.5} parent=0 // pred_check
    _
  $region31: #{forward.5} parent=0 // pred_check_branch
    %2254 = sbr.rel (0) target = $region33
  $region32: #{forward.5} parent=0 // pred_region
    _
  $region33: #{forward.5} parent=0 // pred_fallthru
    _
  // Predicated region
  $region34: #{forward.5} parent=0 // pred_check
    _
  $region35: #{forward.5} parent=0 // pred_check_branch
    %2256 = sbr.rel (0) target = $region37
  $region36: #{forward.5} parent=0 // pred_region
    _
  $region37: #{forward.5} parent=0 // pred_fallthru
    _
  // Predicated region
  $region38: #{forward.5} parent=0 // pred_check
    _
  $region39: #{forward.5} parent=0 // pred_check_branch
    %2258 = sbr.rel (0) target = $region41
  $region40: #{forward.5} parent=0 // pred_region
    _
  $region41: #{forward.5} parent=0 // pred_fallthru
    _

// kernel: forward.6
$region0: #{forward.6}
  #allocation0 [shape = 'u32[]', space=smem, size = 0x4, offset = 0x4, fixed_abs, tag = 'smem constant byte address 0x4 - core index']
  #allocation1 [shape = 'u32[144,128]{1,0:T(1,128)}', space=vmem, size = 0x12000, scoped, tag = 'internal scratch']
  %s0 = inlined_call_operand.vmem [shape: bf16[128,384], index: 0, kind: input, shape index: {}]
  %s1 = inlined_call_operand.vmem [shape: bf16[384,128], index: 1, kind: input, shape index: {}]
  %s2 = inlined_call_operand.vmem [shape: f32[1,128], index: 2, kind: input, shape index: {}]
  %s3 = inlined_call_operand.vmem [shape: bf16[64,256], index: 3, kind: input, shape index: {}]
  %s4 = inlined_call_operand.vmem [shape: bf16[256,128], index: 4, kind: input, shape index: {}]
  %s5 = inlined_call_operand.vmem [shape: f32[1,128], index: 5, kind: input, shape index: {}]
  %s6 = inlined_call_operand.vmem [shape: bf16[128,128], index: 6, kind: output, shape index: {0}]
  %s7 = inlined_call_operand.vmem [shape: bf16[64,128], index: 7, kind: output, shape index: {1}]
  %8 = xla_tuple %s6, %s7
  %s9 = sld [smem:[#allocation0]]
  $region42: #{forward.6} parent=0
    _
  %s11 = ssub.s32 1, %s9
  %s12 = scalar_select 0, %s11, %s9
  // Predicated region
  $region2: #{forward.6} parent=0 // pred_check
    _
  $region3: #{forward.6} parent=0 // pred_check_branch
    %14 = sbr.rel (0) target = $region5
  $region4: #{forward.6} parent=0 // pred_region
    _
  $region5: #{forward.6} parent=0 // pred_fallthru
    _
  // Predicated region
  $region6: #{forward.6} parent=0 // pred_check
    _
  $region7: #{forward.6} parent=0 // pred_check_branch
    %16 = sbr.rel (0) target = $region9
  $region8: #{forward.6} parent=0 // pred_region
    _
  $region9: #{forward.6} parent=0 // pred_fallthru
    _
  // Predicated region
  $region10: #{forward.6} parent=0 // pred_check
    _
  $region11: #{forward.6} parent=0 // pred_check_branch
    %18 = sbr.rel (0) target = $region13
  $region12: #{forward.6} parent=0 // pred_region
    _
  $region13: #{forward.6} parent=0 // pred_fallthru
    _
  // Predicated region
  $region14: #{forward.6} parent=0 // pred_check
    _
  $region15: #{forward.6} parent=0 // pred_check_branch
    %20 = sbr.rel (0) target = $region17
  $region16: #{forward.6} parent=0 // pred_region
    _
  $region17: #{forward.6} parent=0 // pred_fallthru
    _
  // Predicated region
  $region18: #{forward.6} parent=0 // pred_check
    _
  $region19: #{forward.6} parent=0 // pred_check_branch
    %22 = sbr.rel (0) target = $region21
  $region20: #{forward.6} parent=0 // pred_region
    _
  $region21: #{forward.6} parent=0 // pred_fallthru
    _
  // Predicated region
  $region22: #{forward.6} parent=0 // pred_check
    _
  $region23: #{forward.6} parent=0 // pred_check_branch
    %24 = sbr.rel (0) target = $region25
  $region24: #{forward.6} parent=0 // pred_region
    _
  $region25: #{forward.6} parent=0 // pred_fallthru
    _
  %v26 = vld [vmem:[%s0] sm:$0xff]
  %v27 = vld [vmem:[%s0 + $0x8] sm:$0xf]
  %v28 = vld [vmem:[%s0 + $0xc] sm:$0xff]
  %v29 = vld [vmem:[%s0 + $0x14] sm:$0xf]
  %v30 = vld [vmem:[%s0 + $0x18] sm:$0xff]
  %v31 = vld [vmem:[%s0 + $0x20] sm:$0xf]
  %v32 = vld [vmem:[%s0 + $0x24] sm:$0xff]
  %v33 = vld [vmem:[%s0 + $0x2c] sm:$0xf]
  %v34 = vld [vmem:[%s0 + $0x30] sm:$0xff]
  %v35 = vld [vmem:[%s0 + $0x38] sm:$0xf]
  %v36 = vld [vmem:[%s0 + $0x3c] sm:$0xff]
  %v37 = vld [vmem:[%s0 + $0x44] sm:$0xf]
  %v38 = vld [vmem:[%s0 + $0x48] sm:$0xff]
  %v39 = vld [vmem:[%s0 + $0x50] sm:$0xf]
  %v40 = vld [vmem:[%s0 + $0x54] sm:$0xff]
  %v41 = vld [vmem:[%s0 + $0x5c] sm:$0xf]
  %v42 = vld [vmem:[%s0 + $0x60] sm:$0xff]
  %v43 = vld [vmem:[%s0 + $0x68] sm:$0xf]
  %v44 = vld [vmem:[%s0 + $0x6c] sm:$0xff]
  %v45 = vld [vmem:[%s0 + $0x74] sm:$0xf]
  %v46 = vld [vmem:[%s0 + $0x78] sm:$0xff]
  %v47 = vld [vmem:[%s0 + $0x80] sm:$0xf]
  %v48 = vld [vmem:[%s0 + $0x84] sm:$0xff]
  %v49 = vld [vmem:[%s0 + $0x8c] sm:$0xf]
  %v50 = vld [vmem:[%s0 + $0x90] sm:$0xff]
  %v51 = vld [vmem:[%s0 + $0x98] sm:$0xf]
  %v52 = vld [vmem:[%s0 + $0x9c] sm:$0xff]
  %v53 = vld [vmem:[%s0 + $0xa4] sm:$0xf]
  %v54 = vld [vmem:[%s0 + $0xa8] sm:$0xff]
  %v55 = vld [vmem:[%s0 + $0xb0] sm:$0xf]
  %v56 = vld [vmem:[%s0 + $0xb4] sm:$0xff]
  %v57 = vld [vmem:[%s0 + $0xbc] sm:$0xf]
  %v58 = vld [vmem:[%s1] sm:$0xf]
  %v59 = vld [vmem:[%s1 + $0x4] sm:$0xf]
  %v60 = vld [vmem:[%s1 + $0x8] sm:$0xf]
  %v61 = vld [vmem:[%s1 + $0xc] sm:$0xf]
  %v62 = vld [vmem:[%s1 + $0x10] sm:$0xf]
  %v63 = vld [vmem:[%s1 + $0x14] sm:$0xf]
  %v64 = vld [vmem:[%s1 + $0x18] sm:$0xf]
  %v65 = vld [vmem:[%s1 + $0x1c] sm:$0xf]
  %v66 = vld [vmem:[%s1 + $0x20] sm:$0xf]
  %v67 = vld [vmem:[%s1 + $0x24] sm:$0xf]
  %v68 = vld [vmem:[%s1 + $0x28] sm:$0xf]
  %v69 = vld [vmem:[%s1 + $0x2c] sm:$0xf]
  %v70 = vld [vmem:[%s1 + $0x30] sm:$0xf]
  %v71 = vld [vmem:[%s1 + $0x34] sm:$0xf]
  %v72 = vld [vmem:[%s1 + $0x38] sm:$0xf]
  %v73 = vld [vmem:[%s1 + $0x3c] sm:$0xf]
  %v74 = vld [vmem:[%s1 + $0x40] sm:$0xf]
  %v75 = vld [vmem:[%s1 + $0x44] sm:$0xf]
  %v76 = vld [vmem:[%s1 + $0x48] sm:$0xf]
  %v77 = vld [vmem:[%s1 + $0x4c] sm:$0xf]
  %v78 = vld [vmem:[%s1 + $0x50] sm:$0xf]
  %v79 = vld [vmem:[%s1 + $0x54] sm:$0xf]
  %v80 = vld [vmem:[%s1 + $0x58] sm:$0xf]
  %v81 = vld [vmem:[%s1 + $0x5c] sm:$0xf]
  %v82 = vld [vmem:[%s1 + $0x60] sm:$0xf]
  %v83 = vld [vmem:[%s1 + $0x64] sm:$0xf]
  %v84 = vld [vmem:[%s1 + $0x68] sm:$0xf]
  %v85 = vld [vmem:[%s1 + $0x6c] sm:$0xf]
  %v86 = vld [vmem:[%s1 + $0x70] sm:$0xf]
  %v87 = vld [vmem:[%s1 + $0x74] sm:$0xf]
  %v88 = vld [vmem:[%s1 + $0x78] sm:$0xf]
  %v89 = vld [vmem:[%s1 + $0x7c] sm:$0xf]
  %v90 = vld [vmem:[%s1 + $0x80] sm:$0xf]
  %v91 = vld [vmem:[%s1 + $0x84] sm:$0xf]
  %v92 = vld [vmem:[%s1 + $0x88] sm:$0xf]
  %v93 = vld [vmem:[%s1 + $0x8c] sm:$0xf]
  %v94 = vld [vmem:[%s1 + $0x90] sm:$0xf]
  %v95 = vld [vmem:[%s1 + $0x94] sm:$0xf]
  %v96 = vld [vmem:[%s1 + $0x98] sm:$0xf]
  %v97 = vld [vmem:[%s1 + $0x9c] sm:$0xf]
  %v98 = vld [vmem:[%s1 + $0xa0] sm:$0xf]
  %v99 = vld [vmem:[%s1 + $0xa4] sm:$0xf]
  %v100 = vld [vmem:[%s1 + $0xa8] sm:$0xf]
  %v101 = vld [vmem:[%s1 + $0xac] sm:$0xf]
  %v102 = vld [vmem:[%s1 + $0xb0] sm:$0xf]
  %v103 = vld [vmem:[%s1 + $0xb4] sm:$0xf]
  %v104 = vld [vmem:[%s1 + $0xb8] sm:$0xf]
  %v105 = vld [vmem:[%s1 + $0xbc] sm:$0xf]
  %v106 = vld [vmem:[%s2] sm:$0x1]
  %v108 = vlaneseq
  %v109 = vshrl.u32 %v108, 7
  %v110 = vsub.s32 0, %v109
  %v111 = vrot.slane %v106, %v110
  %v145 = vunpack.c.l.b16 %v26
  %v146 = vunpack.c.h.b16 %v26
  %v147 = vunpack.c.l.b16 %v27
  %v148 = vunpack.c.l.b16 %v28
  %v149 = vunpack.c.h.b16 %v28
  %v150 = vunpack.c.l.b16 %v29
  %v151 = vunpack.c.l.b16 %v30
  %v152 = vunpack.c.h.b16 %v30
  %v153 = vunpack.c.l.b16 %v31
  %v154 = vunpack.c.l.b16 %v32
  %v155 = vunpack.c.h.b16 %v32
  %v156 = vunpack.c.l.b16 %v33
  %v157 = vunpack.c.l.b16 %v34
  %v158 = vunpack.c.h.b16 %v34
  %v159 = vunpack.c.l.b16 %v35
  %v160 = vunpack.c.l.b16 %v36
  %v161 = vunpack.c.h.b16 %v36
  %v162 = vunpack.c.l.b16 %v37
  %v163 = vunpack.c.l.b16 %v38
  %v164 = vunpack.c.h.b16 %v38
  %v165 = vunpack.c.l.b16 %v39
  %v166 = vunpack.c.l.b16 %v40
  %v167 = vunpack.c.h.b16 %v40
  %v168 = vunpack.c.l.b16 %v41
  %v169 = vunpack.c.l.b16 %v42
  %v170 = vunpack.c.h.b16 %v42
  %v171 = vunpack.c.l.b16 %v43
  %v172 = vunpack.c.l.b16 %v44
  %v173 = vunpack.c.h.b16 %v44
  %v174 = vunpack.c.l.b16 %v45
  %v175 = vunpack.c.l.b16 %v46
  %v176 = vunpack.c.h.b16 %v46
  %v177 = vunpack.c.l.b16 %v47
  %v178 = vunpack.c.l.b16 %v48
  %v179 = vunpack.c.h.b16 %v48
  %v180 = vunpack.c.l.b16 %v49
  %v181 = vunpack.c.l.b16 %v50
  %v182 = vunpack.c.h.b16 %v50
  %v183 = vunpack.c.l.b16 %v51
  %v184 = vunpack.c.l.b16 %v52
  %v185 = vunpack.c.h.b16 %v52
  %v186 = vunpack.c.l.b16 %v53
  %v187 = vunpack.c.l.b16 %v54
  %v188 = vunpack.c.h.b16 %v54
  %v189 = vunpack.c.l.b16 %v55
  %v190 = vunpack.c.l.b16 %v56
  %v191 = vunpack.c.h.b16 %v56
  %v192 = vunpack.c.l.b16 %v57
  %v193 = vpack.c.b16 %v148, %v145
  %v194 = vpack.c.b16 %v149, %v146
  %v195 = vpack.c.b16 %v150, %v147
  %v196 = vpack.c.b16 %v154, %v151
  %v197 = vpack.c.b16 %v155, %v152
  %v198 = vpack.c.b16 %v156, %v153
  %v199 = vpack.c.b16 %v160, %v157
  %v200 = vpack.c.b16 %v161, %v158
  %v201 = vpack.c.b16 %v162, %v159
  %v202 = vpack.c.b16 %v166, %v163
  %v203 = vpack.c.b16 %v167, %v164
  %v204 = vpack.c.b16 %v168, %v165
  %v205 = vpack.c.b16 %v172, %v169
  %v206 = vpack.c.b16 %v173, %v170
  %v207 = vpack.c.b16 %v174, %v171
  %v208 = vpack.c.b16 %v178, %v175
  %v209 = vpack.c.b16 %v179, %v176
  %v210 = vpack.c.b16 %v180, %v177
  %v211 = vpack.c.b16 %v184, %v181
  %v212 = vpack.c.b16 %v185, %v182
  %v213 = vpack.c.b16 %v186, %v183
  %v214 = vpack.c.b16 %v190, %v187
  %v215 = vpack.c.b16 %v191, %v188
  %v216 = vpack.c.b16 %v192, %v189
  %v289 = vunpack.c.l.b16 %v58
  %v290 = vunpack.c.l.b16 %v59
  %v291 = vunpack.c.l.b16 %v60
  %v292 = vunpack.c.l.b16 %v61
  %v293 = vunpack.c.l.b16 %v62
  %v294 = vunpack.c.l.b16 %v63
  %v295 = vunpack.c.l.b16 %v64
  %v296 = vunpack.c.l.b16 %v65
  %v297 = vunpack.c.l.b16 %v66
  %v298 = vunpack.c.l.b16 %v67
  %v299 = vunpack.c.l.b16 %v68
  %v300 = vunpack.c.l.b16 %v69
  %v301 = vunpack.c.l.b16 %v70
  %v302 = vunpack.c.l.b16 %v71
  %v303 = vunpack.c.l.b16 %v72
  %v304 = vunpack.c.l.b16 %v73
  %v305 = vunpack.c.l.b16 %v74
  %v306 = vunpack.c.l.b16 %v75
  %v307 = vunpack.c.l.b16 %v76
  %v308 = vunpack.c.l.b16 %v77
  %v309 = vunpack.c.l.b16 %v78
  %v310 = vunpack.c.l.b16 %v79
  %v311 = vunpack.c.l.b16 %v80
  %v312 = vunpack.c.l.b16 %v81
  %v313 = vunpack.c.l.b16 %v82
  %v314 = vunpack.c.l.b16 %v83
  %v315 = vunpack.c.l.b16 %v84
  %v316 = vunpack.c.l.b16 %v85
  %v317 = vunpack.c.l.b16 %v86
  %v318 = vunpack.c.l.b16 %v87
  %v319 = vunpack.c.l.b16 %v88
  %v320 = vunpack.c.l.b16 %v89
  %v321 = vunpack.c.l.b16 %v90
  %v322 = vunpack.c.l.b16 %v91
  %v323 = vunpack.c.l.b16 %v92
  %v324 = vunpack.c.l.b16 %v93
  %v325 = vunpack.c.l.b16 %v94
  %v326 = vunpack.c.l.b16 %v95
  %v327 = vunpack.c.l.b16 %v96
  %v328 = vunpack.c.l.b16 %v97
  %v329 = vunpack.c.l.b16 %v98
  %v330 = vunpack.c.l.b16 %v99
  %v331 = vunpack.c.l.b16 %v100
  %v332 = vunpack.c.l.b16 %v101
  %v333 = vunpack.c.l.b16 %v102
  %v334 = vunpack.c.l.b16 %v103
  %v335 = vunpack.c.l.b16 %v104
  %v336 = vunpack.c.l.b16 %v105
  %v337 = vpack.c.b16 %v290, %v289
  %v338 = vpack.c.b16 %v292, %v291
  %v339 = vpack.c.b16 %v294, %v293
  %v340 = vpack.c.b16 %v296, %v295
  %v341 = vpack.c.b16 %v298, %v297
  %v342 = vpack.c.b16 %v300, %v299
  %v343 = vpack.c.b16 %v302, %v301
  %v344 = vpack.c.b16 %v304, %v303
  %v345 = vpack.c.b16 %v306, %v305
  %v346 = vpack.c.b16 %v308, %v307
  %v347 = vpack.c.b16 %v310, %v309
  %v348 = vpack.c.b16 %v312, %v311
  %v349 = vpack.c.b16 %v314, %v313
  %v350 = vpack.c.b16 %v316, %v315
  %v351 = vpack.c.b16 %v318, %v317
  %v352 = vpack.c.b16 %v320, %v319
  %v353 = vpack.c.b16 %v322, %v321
  %v354 = vpack.c.b16 %v324, %v323
  %v355 = vpack.c.b16 %v326, %v325
  %v356 = vpack.c.b16 %v328, %v327
  %v357 = vpack.c.b16 %v330, %v329
  %v358 = vpack.c.b16 %v332, %v331
  %v359 = vpack.c.b16 %v334, %v333
  %v360 = vpack.c.b16 %v336, %v335
  %385 = vmatprep.subr.bf16.mxu0 0
  %386 = vmatpush1.bf16.msra.mxu0 %v337
  %387 = vmatprep.subr.bf16.mxu0 0
  %388 = vmatpush1.bf16.msra.mxu0 %v338
  %389 = vmatprep.subr.bf16.mxu0 0
  %390 = vmatpush1.bf16.msra.mxu0 %v339
  %391 = vmatprep.subr.bf16.mxu0 0
  %392 = vmatpush1.bf16.msra.mxu0 %v340
  %393 = vmatprep.subr.bf16.mxu0 0
  %394 = vmatpush1.bf16.msra.mxu0 %v341
  %395 = vmatprep.subr.bf16.mxu0 0
  %396 = vmatpush1.bf16.msra.mxu0 %v342
  %397 = vmatprep.subr.bf16.mxu0 0
  %398 = vmatpush1.bf16.msra.mxu0 %v343
  %399 = vmatprep.subr.bf16.mxu0 0
  %400 = vmatpush1.bf16.msra.mxu0 %v344
  %401 = vmatprep.subr.bf16.mxu0 0
  %402 = vmatpush1.bf16.msra.mxu0 %v345
  %403 = vmatprep.subr.bf16.mxu0 0
  %404 = vmatpush1.bf16.msra.mxu0 %v346
  %405 = vmatprep.subr.bf16.mxu0 0
  %406 = vmatpush1.bf16.msra.mxu0 %v347
  %407 = vmatprep.subr.bf16.mxu0 0
  %408 = vmatpush1.bf16.msra.mxu0 %v348
  %409 = vmatprep.subr.bf16.mxu0 0
  %410 = vmatpush1.bf16.msra.mxu0 %v349
  %411 = vmatprep.subr.bf16.mxu0 0
  %412 = vmatpush1.bf16.msra.mxu0 %v350
  %413 = vmatprep.subr.bf16.mxu0 0
  %414 = vmatpush1.bf16.msra.mxu0 %v351
  %415 = vmatprep.subr.bf16.mxu0 0
  %416 = vmatpush1.bf16.msra.mxu0 %v352
  %417 = vmatprep.mubr.bf16.mxu0 %v194
  %418 = vmatmul.mubr.bf16.gmra.mrb[0].mxu0 %v193
  %v419 = vpop.f32.mrb[0].mxu0
  %v420 = vadd.f32 %v111, %v419
  %v421 = vpop.f32.mrb[0].mxu0
  %v422 = vpop.f32.mrb[0].mxu0
  %v423 = vadd.f32 %v111, %v422
  %v424 = vpop.f32.mrb[0].mxu0
  %425 = vmatprep.mubr.bf16.mxu0 %v197
  %426 = vmatmul.mubr.bf16.gmra.mrb[0].mxu0 %v196
  %v427 = vpop.f32.mrb[0].mxu0
  %v428 = vadd.f32 %v111, %v427
  %v429 = vpop.f32.mrb[0].mxu0
  %v430 = vpop.f32.mrb[0].mxu0
  %v431 = vadd.f32 %v111, %v430
  %v432 = vpop.f32.mrb[0].mxu0
  %433 = vmatprep.mubr.bf16.mxu0 %v200
  %434 = vmatmul.mubr.bf16.gmra.mrb[0].mxu0 %v199
  %v435 = vpop.f32.mrb[0].mxu0
  %v436 = vadd.f32 %v111, %v435
  %v437 = vpop.f32.mrb[0].mxu0
  %v438 = vpop.f32.mrb[0].mxu0
  %v439 = vadd.f32 %v111, %v438
  %v440 = vpop.f32.mrb[0].mxu0
  %441 = vmatprep.mubr.bf16.mxu0 %v203
  %442 = vmatmul.mubr.bf16.gmra.mrb[0].mxu0 %v202
  %v443 = vpop.f32.mrb[0].mxu0
  %v444 = vadd.f32 %v111, %v443
  %v445 = vpop.f32.mrb[0].mxu0
  %v446 = vpop.f32.mrb[0].mxu0
  %v447 = vadd.f32 %v111, %v446
  %v448 = vpop.f32.mrb[0].mxu0
  %449 = vmatprep.mubr.bf16.mxu0 %v206
  %450 = vmatmul.mubr.bf16.gmra.mrb[0].mxu0 %v205
  %v451 = vpop.f32.mrb[0].mxu0
  %v452 = vadd.f32 %v111, %v451
  %v453 = vpop.f32.mrb[0].mxu0
  %v454 = vpop.f32.mrb[0].mxu0
  %v455 = vadd.f32 %v111, %v454
  %v456 = vpop.f32.mrb[0].mxu0
  %457 = vmatprep.mubr.bf16.mxu0 %v209
  %458 = vmatmul.mubr.bf16.gmra.mrb[0].mxu0 %v208
  %v459 = vpop.f32.mrb[0].mxu0
  %v460 = vadd.f32 %v111, %v459
  %v461 = vpop.f32.mrb[0].mxu0
  %v462 = vpop.f32.mrb[0].mxu0
  %v463 = vadd.f32 %v111, %v462
  %v464 = vpop.f32.mrb[0].mxu0
  %465 = vmatprep.mubr.bf16.mxu0 %v212
  %466 = vmatmul.mubr.bf16.gmra.mrb[0].mxu0 %v211
  %v467 = vpop.f32.mrb[0].mxu0
  %v468 = vadd.f32 %v111, %v467
  %v469 = vpop.f32.mrb[0].mxu0
  %v470 = vpop.f32.mrb[0].mxu0
  %v471 = vadd.f32 %v111, %v470
  %v472 = vpop.f32.mrb[0].mxu0
  %473 = vmatprep.mubr.bf16.mxu0 %v215
  %474 = vmatmul.mubr.bf16.gmra.mrb[0].mxu0 %v214
  %v475 = vpop.f32.mrb[0].mxu0
  %v476 = vadd.f32 %v111, %v475
  %v477 = vpop.f32.mrb[0].mxu0
  %v478 = vpop.f32.mrb[0].mxu0
  %v479 = vadd.f32 %v111, %v478
  %v480 = vpop.f32.mrb[0].mxu0
  %481 = vdwg.mxu0
  %482 = vmatprep.subr.bf16.mxu0 0
  %483 = vmatpush1.bf16.msra.mxu0 %v353
  %484 = vmatprep.subr.bf16.mxu0 0
  %485 = vmatpush1.bf16.msra.mxu0 %v354
  %486 = vmatprep.subr.bf16.mxu0 0
  %487 = vmatpush1.bf16.msra.mxu0 %v355
  %488 = vmatprep.subr.bf16.mxu0 0
  %489 = vmatpush1.bf16.msra.mxu0 %v356
  %490 = vmatprep.subr.bf16.mxu0 0
  %491 = vmatpush1.bf16.msra.mxu0 %v357
  %492 = vmatprep.subr.bf16.mxu0 0
  %493 = vmatpush1.bf16.msra.mxu0 %v358
  %494 = vmatprep.subr.bf16.mxu0 0
  %495 = vmatpush1.bf16.msra.mxu0 %v359
  %496 = vmatprep.subr.bf16.mxu0 0
  %497 = vmatpush1.bf16.msra.mxu0 %v360
  %498 = vmatprep.subr.bf16.mxu0 0
  %499 = vmatpush1.bf16.msra.mxu0 0
  %500 = vmatprep.subr.bf16.mxu0 0
  %501 = vmatpush1.bf16.msra.mxu0 0
  %502 = vmatprep.subr.bf16.mxu0 0
  %503 = vmatpush1.bf16.msra.mxu0 0
  %504 = vmatprep.subr.bf16.mxu0 0
  %505 = vmatpush1.bf16.msra.mxu0 0
  %506 = vmatprep.subr.bf16.mxu0 0
  %507 = vmatpush1.bf16.msra.mxu0 0
  %508 = vmatprep.subr.bf16.mxu0 0
  %509 = vmatpush1.bf16.msra.mxu0 0
  %510 = vmatprep.subr.bf16.mxu0 0
  %511 = vmatpush1.bf16.msra.mxu0 0
  %512 = vmatprep.subr.bf16.mxu0 0
  %513 = vmatpush1.bf16.msra.mxu0 0
  %514 = vmatprep.mubr.bf16.mxu0 0
  %515 = vmatmul.mubr.bf16.gmra.mrb[0].mxu0 %v195
  %v516 = vpop.f32.mrb[0].mxu0
  %v517 = vadd.f32 %v420, %v516
  %v518 = vpop.f32.mrb[0].mxu0
  %v519 = vpop.f32.mrb[0].mxu0
  %v520 = vadd.f32 %v423, %v519
  %v521 = vpop.f32.mrb[0].mxu0
  %522 = vmatprep.mubr.bf16.mxu0 0
  %523 = vmatmul.mubr.bf16.gmra.mrb[0].mxu0 %v198
  %v524 = vpop.f32.mrb[0].mxu0
  %v525 = vadd.f32 %v428, %v524
  %v526 = vpop.f32.mrb[0].mxu0
  %v527 = vpop.f32.mrb[0].mxu0
  %v528 = vadd.f32 %v431, %v527
  %v529 = vpop.f32.mrb[0].mxu0
  %530 = vmatprep.mubr.bf16.mxu0 0
  %531 = vmatmul.mubr.bf16.gmra.mrb[0].mxu0 %v201
  %v532 = vpop.f32.mrb[0].mxu0
  %v533 = vadd.f32 %v436, %v532
  %v534 = vpop.f32.mrb[0].mxu0
  %v535 = vpop.f32.mrb[0].mxu0
  %v536 = vadd.f32 %v439, %v535
  %v537 = vpop.f32.mrb[0].mxu0
  %538 = vmatprep.mubr.bf16.mxu0 0
  %539 = vmatmul.mubr.bf16.gmra.mrb[0].mxu0 %v204
  %v540 = vpop.f32.mrb[0].mxu0
  %v541 = vadd.f32 %v444, %v540
  %v542 = vpop.f32.mrb[0].mxu0
  %v543 = vpop.f32.mrb[0].mxu0
  %v544 = vadd.f32 %v447, %v543
  %v545 = vpop.f32.mrb[0].mxu0
  %546 = vmatprep.mubr.bf16.mxu0 0
  %547 = vmatmul.mubr.bf16.gmra.mrb[0].mxu0 %v207
  %v548 = vpop.f32.mrb[0].mxu0
  %v549 = vadd.f32 %v452, %v548
  %v550 = vpop.f32.mrb[0].mxu0
  %v551 = vpop.f32.mrb[0].mxu0
  %v552 = vadd.f32 %v455, %v551
  %v553 = vpop.f32.mrb[0].mxu0
  %554 = vmatprep.mubr.bf16.mxu0 0
  %555 = vmatmul.mubr.bf16.gmra.mrb[0].mxu0 %v210
  %v556 = vpop.f32.mrb[0].mxu0
  %v557 = vadd.f32 %v460, %v556
  %v558 = vpop.f32.mrb[0].mxu0
  %v559 = vpop.f32.mrb[0].mxu0
  %v560 = vadd.f32 %v463, %v559
  %v561 = vpop.f32.mrb[0].mxu0
  %562 = vmatprep.mubr.bf16.mxu0 0
  %563 = vmatmul.mubr.bf16.gmra.mrb[0].mxu0 %v213
  %v564 = vpop.f32.mrb[0].mxu0
  %v565 = vadd.f32 %v468, %v564
  %v566 = vpop.f32.mrb[0].mxu0
  %v567 = vpop.f32.mrb[0].mxu0
  %v568 = vadd.f32 %v471, %v567
  %v569 = vpop.f32.mrb[0].mxu0
  %570 = vmatprep.mubr.bf16.mxu0 0
  %571 = vmatmul.mubr.bf16.gmra.mrb[0].mxu0 %v216
  %v572 = vpop.f32.mrb[0].mxu0
  %v573 = vadd.f32 %v476, %v572
  %v574 = vpop.f32.mrb[0].mxu0
  %v575 = vpop.f32.mrb[0].mxu0
  %v576 = vadd.f32 %v479, %v575
  %v577 = vpop.f32.mrb[0].mxu0
  %578 = vdwg.mxu0
  %v579 = vmax.f32 %v517, 0.0
  %v580 = vmax.f32 %v520, 0.0
  %v581 = vmax.f32 %v525, 0.0
  %v582 = vmax.f32 %v528, 0.0
  %v583 = vmax.f32 %v533, 0.0
  %v584 = vmax.f32 %v536, 0.0
  %v585 = vmax.f32 %v541, 0.0
  %v586 = vmax.f32 %v544, 0.0
  %v587 = vmax.f32 %v549, 0.0
  %v588 = vmax.f32 %v552, 0.0
  %v589 = vmax.f32 %v557, 0.0
  %v590 = vmax.f32 %v560, 0.0
  %v591 = vmax.f32 %v565, 0.0
  %v592 = vmax.f32 %v568, 0.0
  %v593 = vmax.f32 %v573, 0.0
  %v594 = vmax.f32 %v576, 0.0
  %v595 = vpack.c.bf16 %v580, %v579
  %v596 = vpack.c.bf16 %v582, %v581
  %v597 = vpack.c.bf16 %v584, %v583
  %v598 = vpack.c.bf16 %v586, %v585
  %v599 = vpack.c.bf16 %v588, %v587
  %v600 = vpack.c.bf16 %v590, %v589
  %v601 = vpack.c.bf16 %v592, %v591
  %v602 = vpack.c.bf16 %v594, %v593
  %v611 = vunpack.c.l.b16 %v595
  %v612 = vunpack.c.h.b16 %v595
  %v613 = vunpack.c.l.b16 %v596
  %v614 = vunpack.c.h.b16 %v596
  %v615 = vunpack.c.l.b16 %v597
  %v616 = vunpack.c.h.b16 %v597
  %v617 = vunpack.c.l.b16 %v598
  %v618 = vunpack.c.h.b16 %v598
  %v619 = vunpack.c.l.b16 %v599
  %v620 = vunpack.c.h.b16 %v599
  %v621 = vunpack.c.l.b16 %v600
  %v622 = vunpack.c.h.b16 %v600
  %v623 = vunpack.c.l.b16 %v601
  %v624 = vunpack.c.h.b16 %v601
  %v625 = vunpack.c.l.b16 %v602
  %v626 = vunpack.c.h.b16 %v602
  %v627 = vpack.c.b16 %v611, %v611
  %v628 = vpack.c.b16 %v612, %v612
  %v629 = vpack.c.b16 %v613, %v613
  %v630 = vpack.c.b16 %v614, %v614
  %v631 = vpack.c.b16 %v615, %v615
  %v632 = vpack.c.b16 %v616, %v616
  %v633 = vpack.c.b16 %v617, %v617
  %v634 = vpack.c.b16 %v618, %v618
  %v635 = vpack.c.b16 %v619, %v619
  %v636 = vpack.c.b16 %v620, %v620
  %v637 = vpack.c.b16 %v621, %v621
  %v638 = vpack.c.b16 %v622, %v622
  %v639 = vpack.c.b16 %v623, %v623
  %v640 = vpack.c.b16 %v624, %v624
  %v641 = vpack.c.b16 %v625, %v625
  %v642 = vpack.c.b16 %v626, %v626
  %659 = vst [vmem:[%s6] sm:$0xf] %v627
  %660 = vst [vmem:[%s6 + $0x4] sm:$0xf] %v628
  %661 = vst [vmem:[%s6 + $0x8] sm:$0xf] %v629
  %662 = vst [vmem:[%s6 + $0xc] sm:$0xf] %v630
  %663 = vst [vmem:[%s6 + $0x10] sm:$0xf] %v631
  %664 = vst [vmem:[%s6 + $0x14] sm:$0xf] %v632
  %665 = vst [vmem:[%s6 + $0x18] sm:$0xf] %v633
  %666 = vst [vmem:[%s6 + $0x1c] sm:$0xf] %v634
  %667 = vst [vmem:[%s6 + $0x20] sm:$0xf] %v635
  %668 = vst [vmem:[%s6 + $0x24] sm:$0xf] %v636
  %669 = vst [vmem:[%s6 + $0x28] sm:$0xf] %v637
  %670 = vst [vmem:[%s6 + $0x2c] sm:$0xf] %v638
  %671 = vst [vmem:[%s6 + $0x30] sm:$0xf] %v639
  %672 = vst [vmem:[%s6 + $0x34] sm:$0xf] %v640
  %673 = vst [vmem:[%s6 + $0x38] sm:$0xf] %v641
  %674 = vst [vmem:[%s6 + $0x3c] sm:$0xf] %v642
  %v675 = vld [vmem:[%s3] sm:$0xff]
  %v676 = vld [vmem:[%s3 + $0x8] sm:$0xff]
  %v677 = vld [vmem:[%s3 + $0x10] sm:$0xff]
  %v678 = vld [vmem:[%s3 + $0x18] sm:$0xff]
  %v679 = vld [vmem:[%s3 + $0x20] sm:$0xff]
  %v680 = vld [vmem:[%s3 + $0x28] sm:$0xff]
  %v681 = vld [vmem:[%s3 + $0x30] sm:$0xff]
  %v682 = vld [vmem:[%s3 + $0x38] sm:$0xff]
  %v683 = vld [vmem:[%s4] sm:$0xf]
  %v684 = vld [vmem:[%s4 + $0x4] sm:$0xf]
  %v685 = vld [vmem:[%s4 + $0x8] sm:$0xf]
  %v686 = vld [vmem:[%s4 + $0xc] sm:$0xf]
  %v687 = vld [vmem:[%s4 + $0x10] sm:$0xf]
  %v688 = vld [vmem:[%s4 + $0x14] sm:$0xf]
  %v689 = vld [vmem:[%s4 + $0x18] sm:$0xf]
  %v690 = vld [vmem:[%s4 + $0x1c] sm:$0xf]
  %v691 = vld [vmem:[%s4 + $0x20] sm:$0xf]
  %v692 = vld [vmem:[%s4 + $0x24] sm:$0xf]
  %v693 = vld [vmem:[%s4 + $0x28] sm:$0xf]
  %v694 = vld [vmem:[%s4 + $0x2c] sm:$0xf]
  %v695 = vld [vmem:[%s4 + $0x30] sm:$0xf]
  %v696 = vld [vmem:[%s4 + $0x34] sm:$0xf]
  %v697 = vld [vmem:[%s4 + $0x38] sm:$0xf]
  %v698 = vld [vmem:[%s4 + $0x3c] sm:$0xf]
  %v699 = vld [vmem:[%s4 + $0x40] sm:$0xf]
  %v700 = vld [vmem:[%s4 + $0x44] sm:$0xf]
  %v701 = vld [vmem:[%s4 + $0x48] sm:$0xf]
  %v702 = vld [vmem:[%s4 + $0x4c] sm:$0xf]
  %v703 = vld [vmem:[%s4 + $0x50] sm:$0xf]
  %v704 = vld [vmem:[%s4 + $0x54] sm:$0xf]
  %v705 = vld [vmem:[%s4 + $0x58] sm:$0xf]
  %v706 = vld [vmem:[%s4 + $0x5c] sm:$0xf]
  %v707 = vld [vmem:[%s4 + $0x60] sm:$0xf]
  %v708 = vld [vmem:[%s4 + $0x64] sm:$0xf]
  %v709 = vld [vmem:[%s4 + $0x68] sm:$0xf]
  %v710 = vld [vmem:[%s4 + $0x6c] sm:$0xf]
  %v711 = vld [vmem:[%s4 + $0x70] sm:$0xf]
  %v712 = vld [vmem:[%s4 + $0x74] sm:$0xf]
  %v713 = vld [vmem:[%s4 + $0x78] sm:$0xf]
  %v714 = vld [vmem:[%s4 + $0x7c] sm:$0xf]
  %v715 = vld [vmem:[%s5] sm:$0x1]
  %v717 = vlaneseq
  %v718 = vshrl.u32 %v717, 7
  %v719 = vsub.s32 0, %v718
  %v720 = vrot.slane %v715, %v719
  %v730 = vunpack.c.l.b16 %v675
  %v731 = vunpack.c.h.b16 %v675
  %v732 = vunpack.c.l.b16 %v676
  %v733 = vunpack.c.h.b16 %v676
  %v734 = vunpack.c.l.b16 %v677
  %v735 = vunpack.c.h.b16 %v677
  %v736 = vunpack.c.l.b16 %v678
  %v737 = vunpack.c.h.b16 %v678
  %v738 = vunpack.c.l.b16 %v679
  %v739 = vunpack.c.h.b16 %v679
  %v740 = vunpack.c.l.b16 %v680
  %v741 = vunpack.c.h.b16 %v680
  %v742 = vunpack.c.l.b16 %v681
  %v743 = vunpack.c.h.b16 %v681
  %v744 = vunpack.c.l.b16 %v682
  %v745 = vunpack.c.h.b16 %v682
  %v746 = vpack.c.b16 %v732, %v730
  %v747 = vpack.c.b16 %v733, %v731
  %v748 = vpack.c.b16 %v736, %v734
  %v749 = vpack.c.b16 %v737, %v735
  %v750 = vpack.c.b16 %v740, %v738
  %v751 = vpack.c.b16 %v741, %v739
  %v752 = vpack.c.b16 %v744, %v742
  %v753 = vpack.c.b16 %v745, %v743
  %v794 = vunpack.c.l.b16 %v683
  %v795 = vunpack.c.l.b16 %v684
  %v796 = vunpack.c.l.b16 %v685
  %v797 = vunpack.c.l.b16 %v686
  %v798 = vunpack.c.l.b16 %v687
  %v799 = vunpack.c.l.b16 %v688
  %v800 = vunpack.c.l.b16 %v689
  %v801 = vunpack.c.l.b16 %v690
  %v802 = vunpack.c.l.b16 %v691
  %v803 = vunpack.c.l.b16 %v692
  %v804 = vunpack.c.l.b16 %v693
  %v805 = vunpack.c.l.b16 %v694
  %v806 = vunpack.c.l.b16 %v695
  %v807 = vunpack.c.l.b16 %v696
  %v808 = vunpack.c.l.b16 %v697
  %v809 = vunpack.c.l.b16 %v698
  %v810 = vunpack.c.l.b16 %v699
  %v811 = vunpack.c.l.b16 %v700
  %v812 = vunpack.c.l.b16 %v701
  %v813 = vunpack.c.l.b16 %v702
  %v814 = vunpack.c.l.b16 %v703
  %v815 = vunpack.c.l.b16 %v704
  %v816 = vunpack.c.l.b16 %v705
  %v817 = vunpack.c.l.b16 %v706
  %v818 = vunpack.c.l.b16 %v707
  %v819 = vunpack.c.l.b16 %v708
  %v820 = vunpack.c.l.b16 %v709
  %v821 = vunpack.c.l.b16 %v710
  %v822 = vunpack.c.l.b16 %v711
  %v823 = vunpack.c.l.b16 %v712
  %v824 = vunpack.c.l.b16 %v713
  %v825 = vunpack.c.l.b16 %v714
  %v826 = vpack.c.b16 %v795, %v794
  %v827 = vpack.c.b16 %v797, %v796
  %v828 = vpack.c.b16 %v799, %v798
  %v829 = vpack.c.b16 %v801, %v800
  %v830 = vpack.c.b16 %v803, %v802
  %v831 = vpack.c.b16 %v805, %v804
  %v832 = vpack.c.b16 %v807, %v806
  %v833 = vpack.c.b16 %v809, %v808
  %v834 = vpack.c.b16 %v811, %v810
  %v835 = vpack.c.b16 %v813, %v812
  %v836 = vpack.c.b16 %v815, %v814
  %v837 = vpack.c.b16 %v817, %v816
  %v838 = vpack.c.b16 %v819, %v818
  %v839 = vpack.c.b16 %v821, %v820
  %v840 = vpack.c.b16 %v823, %v822
  %v841 = vpack.c.b16 %v825, %v824
  %858 = vmatprep.subr.bf16.mxu0 0
  %859 = vmatpush1.bf16.msra.mxu0 %v826
  %860 = vmatprep.subr.bf16.mxu0 0
  %861 = vmatpush1.bf16.msra.mxu0 %v827
  %862 = vmatprep.subr.bf16.mxu0 0
  %863 = vmatpush1.bf16.msra.mxu0 %v828
  %864 = vmatprep.subr.bf16.mxu0 0
  %865 = vmatpush1.bf16.msra.mxu0 %v829
  %866 = vmatprep.subr.bf16.mxu0 0
  %867 = vmatpush1.bf16.msra.mxu0 %v830
  %868 = vmatprep.subr.bf16.mxu0 0
  %869 = vmatpush1.bf16.msra.mxu0 %v831
  %870 = vmatprep.subr.bf16.mxu0 0
  %871 = vmatpush1.bf16.msra.mxu0 %v832
  %872 = vmatprep.subr.bf16.mxu0 0
  %873 = vmatpush1.bf16.msra.mxu0 %v833
  %874 = vmatprep.subr.bf16.mxu0 0
  %875 = vmatpush1.bf16.msra.mxu0 %v834
  %876 = vmatprep.subr.bf16.mxu0 0
  %877 = vmatpush1.bf16.msra.mxu0 %v835
  %878 = vmatprep.subr.bf16.mxu0 0
  %879 = vmatpush1.bf16.msra.mxu0 %v836
  %880 = vmatprep.subr.bf16.mxu0 0
  %881 = vmatpush1.bf16.msra.mxu0 %v837
  %882 = vmatprep.subr.bf16.mxu0 0
  %883 = vmatpush1.bf16.msra.mxu0 %v838
  %884 = vmatprep.subr.bf16.mxu0 0
  %885 = vmatpush1.bf16.msra.mxu0 %v839
  %886 = vmatprep.subr.bf16.mxu0 0
  %887 = vmatpush1.bf16.msra.mxu0 %v840
  %888 = vmatprep.subr.bf16.mxu0 0
  %889 = vmatpush1.bf16.msra.mxu0 %v841
  %890 = vmatprep.mubr.bf16.mxu0 %v747
  %891 = vmatmul.mubr.bf16.gmra.mrb[0].mxu0 %v746
  %v892 = vpop.f32.mrb[0].mxu0
  %v893 = vadd.f32 %v720, %v892
  %v894 = vpop.f32.mrb[0].mxu0
  %v895 = vpop.f32.mrb[0].mxu0
  %v896 = vadd.f32 %v720, %v895
  %v897 = vpop.f32.mrb[0].mxu0
  %898 = vmatprep.mubr.bf16.mxu0 %v749
  %899 = vmatmul.mubr.bf16.gmra.mrb[0].mxu0 %v748
  %v900 = vpop.f32.mrb[0].mxu0
  %v901 = vadd.f32 %v720, %v900
  %v902 = vpop.f32.mrb[0].mxu0
  %v903 = vpop.f32.mrb[0].mxu0
  %v904 = vadd.f32 %v720, %v903
  %v905 = vpop.f32.mrb[0].mxu0
  %906 = vmatprep.mubr.bf16.mxu0 %v751
  %907 = vmatmul.mubr.bf16.gmra.mrb[0].mxu0 %v750
  %v908 = vpop.f32.mrb[0].mxu0
  %v909 = vadd.f32 %v720, %v908
  %v910 = vpop.f32.mrb[0].mxu0
  %v911 = vpop.f32.mrb[0].mxu0
  %v912 = vadd.f32 %v720, %v911
  %v913 = vpop.f32.mrb[0].mxu0
  %914 = vmatprep.mubr.bf16.mxu0 %v753
  %915 = vmatmul.mubr.bf16.gmra.mrb[0].mxu0 %v752
  %v916 = vpop.f32.mrb[0].mxu0
  %v917 = vadd.f32 %v720, %v916
  %v918 = vpop.f32.mrb[0].mxu0
  %v919 = vpop.f32.mrb[0].mxu0
  %v920 = vadd.f32 %v720, %v919
  %v921 = vpop.f32.mrb[0].mxu0
  %922 = vdwg.mxu0
  %v923 = vmax.f32 %v893, 0.0
  %v924 = vmax.f32 %v896, 0.0
  %v925 = vmax.f32 %v901, 0.0
  %v926 = vmax.f32 %v904, 0.0
  %v927 = vmax.f32 %v909, 0.0
  %v928 = vmax.f32 %v912, 0.0
  %v929 = vmax.f32 %v917, 0.0
  %v930 = vmax.f32 %v920, 0.0
  %v931 = vpack.c.bf16 %v924, %v923
  %v932 = vpack.c.bf16 %v926, %v925
  %v933 = vpack.c.bf16 %v928, %v927
  %v934 = vpack.c.bf16 %v930, %v929
  %v939 = vunpack.c.l.b16 %v931
  %v940 = vunpack.c.h.b16 %v931
  %v941 = vunpack.c.l.b16 %v932
  %v942 = vunpack.c.h.b16 %v932
  %v943 = vunpack.c.l.b16 %v933
  %v944 = vunpack.c.h.b16 %v933
  %v945 = vunpack.c.l.b16 %v934
  %v946 = vunpack.c.h.b16 %v934
  %v947 = vpack.c.b16 %v939, %v939
  %v948 = vpack.c.b16 %v940, %v940
  %v949 = vpack.c.b16 %v941, %v941
  %v950 = vpack.c.b16 %v942, %v942
  %v951 = vpack.c.b16 %v943, %v943
  %v952 = vpack.c.b16 %v944, %v944
  %v953 = vpack.c.b16 %v945, %v945
  %v954 = vpack.c.b16 %v946, %v946
  %963 = vst [vmem:[%s7] sm:$0xf] %v947
  %964 = vst [vmem:[%s7 + $0x4] sm:$0xf] %v948
  %965 = vst [vmem:[%s7 + $0x8] sm:$0xf] %v949
  %966 = vst [vmem:[%s7 + $0xc] sm:$0xf] %v950
  %967 = vst [vmem:[%s7 + $0x10] sm:$0xf] %v951
  %968 = vst [vmem:[%s7 + $0x14] sm:$0xf] %v952
  %969 = vst [vmem:[%s7 + $0x18] sm:$0xf] %v953
  %970 = vst [vmem:[%s7 + $0x1c] sm:$0xf] %v954
  // Predicated region
  $region26: #{forward.6} parent=0 // pred_check
    _
  $region27: #{forward.6} parent=0 // pred_check_branch
    %972 = sbr.rel (0) target = $region29
  $region28: #{forward.6} parent=0 // pred_region
    _
  $region29: #{forward.6} parent=0 // pred_fallthru
    _
  // Predicated region
  $region30: #{forward.6} parent=0 // pred_check
    _
  $region31: #{forward.6} parent=0 // pred_check_branch
    %974 = sbr.rel (0) target = $region33
  $region32: #{forward.6} parent=0 // pred_region
    _
  $region33: #{forward.6} parent=0 // pred_fallthru
    _
  // Predicated region
  $region34: #{forward.6} parent=0 // pred_check
    _
  $region35: #{forward.6} parent=0 // pred_check_branch
    %976 = sbr.rel (0) target = $region37
  $region36: #{forward.6} parent=0 // pred_region
    _
  $region37: #{forward.6} parent=0 // pred_fallthru
    _
  // Predicated region
  $region38: #{forward.6} parent=0 // pred_check
    _
  $region39: #{forward.6} parent=0 // pred_check_branch
    %978 = sbr.rel (0) target = $region41
  $region40: #{forward.6} parent=0 // pred_region
    _
  $region41: #{forward.6} parent=0 // pred_fallthru
    _

// kernel: forward.7
$region0: #{forward.7}
  #allocation0 [shape = 'u32[]', space=smem, size = 0x4, offset = 0x4, fixed_abs, tag = 'smem constant byte address 0x4 - core index']
  #allocation1 [shape = 'u32[144,128]{1,0:T(1,128)}', space=vmem, size = 0x12000, scoped, tag = 'internal scratch']
  %s0 = inlined_call_operand.vmem [shape: bf16[16,1024], index: 0, kind: input, shape index: {}]
  %s1 = inlined_call_operand.vmem [shape: bf16[16,256], index: 1, kind: input, shape index: {}]
  %s2 = inlined_call_operand.vmem [shape: bf16[1024,512], index: 2, kind: input, shape index: {}]
  %s3 = inlined_call_operand.vmem [shape: bf16[256,512], index: 3, kind: input, shape index: {}]
  %s4 = inlined_call_operand.vmem [shape: f32[1,512], index: 4, kind: input, shape index: {}]
  %s5 = inlined_call_operand.vmem [shape: bf16[512,256], index: 5, kind: input, shape index: {}]
  %s6 = inlined_call_operand.vmem [shape: f32[1,256], index: 6, kind: input, shape index: {}]
  %s7 = inlined_call_operand.vmem [shape: bf16[256,128], index: 7, kind: input, shape index: {}]
  %s8 = inlined_call_operand.vmem [shape: f32[1,128], index: 8, kind: input, shape index: {}]
  %s9 = inlined_call_operand.vmem [shape: f32[16,128], index: 9, kind: output, shape index: {}]
  %s10 = sld [smem:[#allocation0]]
  $region46: #{forward.7} parent=0
    _
  %s12 = ssub.s32 1, %s10
  %s13 = scalar_select 0, %s12, %s10
  // Predicated region
  $region2: #{forward.7} parent=0 // pred_check
    _
  $region3: #{forward.7} parent=0 // pred_check_branch
    %15 = sbr.rel (0) target = $region5
  $region4: #{forward.7} parent=0 // pred_region
    _
  $region5: #{forward.7} parent=0 // pred_fallthru
    _
  // Predicated region
  $region6: #{forward.7} parent=0 // pred_check
    _
  $region7: #{forward.7} parent=0 // pred_check_branch
    %17 = sbr.rel (0) target = $region9
  $region8: #{forward.7} parent=0 // pred_region
    _
  $region9: #{forward.7} parent=0 // pred_fallthru
    _
  // Predicated region
  $region10: #{forward.7} parent=0 // pred_check
    _
  $region11: #{forward.7} parent=0 // pred_check_branch
    %19 = sbr.rel (0) target = $region13
  $region12: #{forward.7} parent=0 // pred_region
    _
  $region13: #{forward.7} parent=0 // pred_fallthru
    _
  // Predicated region
  $region14: #{forward.7} parent=0 // pred_check
    _
  $region15: #{forward.7} parent=0 // pred_check_branch
    %21 = sbr.rel (0) target = $region17
  $region16: #{forward.7} parent=0 // pred_region
    _
  $region17: #{forward.7} parent=0 // pred_fallthru
    _
  // Predicated region
  $region18: #{forward.7} parent=0 // pred_check
    _
  $region19: #{forward.7} parent=0 // pred_check_branch
    %23 = sbr.rel (0) target = $region21
  $region20: #{forward.7} parent=0 // pred_region
    _
  $region21: #{forward.7} parent=0 // pred_fallthru
    _
  // Predicated region
  $region22: #{forward.7} parent=0 // pred_check
    _
  $region23: #{forward.7} parent=0 // pred_check_branch
    %25 = sbr.rel (0) target = $region25
  $region24: #{forward.7} parent=0 // pred_region
    _
  $region25: #{forward.7} parent=0 // pred_fallthru
    _
  // Predicated region
  $region26: #{forward.7} parent=0 // pred_check
    _
  $region27: #{forward.7} parent=0 // pred_check_branch
    %27 = sbr.rel (0) target = $region29
  $region28: #{forward.7} parent=0 // pred_region
    _
  $region29: #{forward.7} parent=0 // pred_fallthru
    _
  // Predicated region
  $region30: #{forward.7} parent=0 // pred_check
    _
  $region31: #{forward.7} parent=0 // pred_check_branch
    %29 = sbr.rel (0) target = $region33
  $region32: #{forward.7} parent=0 // pred_region
    _
  $region33: #{forward.7} parent=0 // pred_fallthru
    _
  // Predicated region
  $region34: #{forward.7} parent=0 // pred_check
    _
  $region35: #{forward.7} parent=0 // pred_check_branch
    %31 = sbr.rel (0) target = $region37
  $region36: #{forward.7} parent=0 // pred_region
    _
  $region37: #{forward.7} parent=0 // pred_fallthru
    _
  %v33 = vld [vmem:[%s0] sm:$0xff]
  %v34 = vld [vmem:[%s0 + $0x8] sm:$0xff]
  %v35 = vld [vmem:[%s0 + $0x10] sm:$0xff]
  %v36 = vld [vmem:[%s0 + $0x18] sm:$0xff]
  %v37 = vld [vmem:[%s0 + $0x20] sm:$0xff]
  %v38 = vld [vmem:[%s0 + $0x28] sm:$0xff]
  %v39 = vld [vmem:[%s0 + $0x30] sm:$0xff]
  %v40 = vld [vmem:[%s0 + $0x38] sm:$0xff]
  %v41 = vld [vmem:[%s2] sm:$0xff]
  %v42 = vld [vmem:[%s2 + $0x8] sm:$0xff]
  %v43 = vld [vmem:[%s2 + $0x10] sm:$0xff]
  %v44 = vld [vmem:[%s2 + $0x18] sm:$0xff]
  %v45 = vld [vmem:[%s2 + $0x20] sm:$0xff]
  %v46 = vld [vmem:[%s2 + $0x28] sm:$0xff]
  %v47 = vld [vmem:[%s2 + $0x30] sm:$0xff]
  %v48 = vld [vmem:[%s2 + $0x38] sm:$0xff]
  %v49 = vld [vmem:[%s2 + $0x40] sm:$0xff]
  %v50 = vld [vmem:[%s2 + $0x48] sm:$0xff]
  %v51 = vld [vmem:[%s2 + $0x50] sm:$0xff]
  %v52 = vld [vmem:[%s2 + $0x58] sm:$0xff]
  %v53 = vld [vmem:[%s2 + $0x60] sm:$0xff]
  %v54 = vld [vmem:[%s2 + $0x68] sm:$0xff]
  %v55 = vld [vmem:[%s2 + $0x70] sm:$0xff]
  %v56 = vld [vmem:[%s2 + $0x78] sm:$0xff]
  %v57 = vld [vmem:[%s2 + $0x80] sm:$0xff]
  %v58 = vld [vmem:[%s2 + $0x88] sm:$0xff]
  %v59 = vld [vmem:[%s2 + $0x90] sm:$0xff]
  %v60 = vld [vmem:[%s2 + $0x98] sm:$0xff]
  %v61 = vld [vmem:[%s2 + $0xa0] sm:$0xff]
  %v62 = vld [vmem:[%s2 + $0xa8] sm:$0xff]
  %v63 = vld [vmem:[%s2 + $0xb0] sm:$0xff]
  %v64 = vld [vmem:[%s2 + $0xb8] sm:$0xff]
  %v65 = vld [vmem:[%s2 + $0xc0] sm:$0xff]
  %v66 = vld [vmem:[%s2 + $0xc8] sm:$0xff]
  %v67 = vld [vmem:[%s2 + $0xd0] sm:$0xff]
  %v68 = vld [vmem:[%s2 + $0xd8] sm:$0xff]
  %v69 = vld [vmem:[%s2 + $0xe0] sm:$0xff]
  %v70 = vld [vmem:[%s2 + $0xe8] sm:$0xff]
  %v71 = vld [vmem:[%s2 + $0xf0] sm:$0xff]
  %v72 = vld [vmem:[%s2 + $0xf8] sm:$0xff]
  %v73 = vld [vmem:[%s2 + $0x100] sm:$0xff]
  %v74 = vld [vmem:[%s2 + $0x108] sm:$0xff]
  %v75 = vld [vmem:[%s2 + $0x110] sm:$0xff]
  %v76 = vld [vmem:[%s2 + $0x118] sm:$0xff]
  %v77 = vld [vmem:[%s2 + $0x120] sm:$0xff]
  %v78 = vld [vmem:[%s2 + $0x128] sm:$0xff]
  %v79 = vld [vmem:[%s2 + $0x130] sm:$0xff]
  %v80 = vld [vmem:[%s2 + $0x138] sm:$0xff]
  %v81 = vld [vmem:[%s2 + $0x140] sm:$0xff]
  %v82 = vld [vmem:[%s2 + $0x148] sm:$0xff]
  %v83 = vld [vmem:[%s2 + $0x150] sm:$0xff]
  %v84 = vld [vmem:[%s2 + $0x158] sm:$0xff]
  %v85 = vld [vmem:[%s2 + $0x160] sm:$0xff]
  %v86 = vld [vmem:[%s2 + $0x168] sm:$0xff]
  %v87 = vld [vmem:[%s2 + $0x170] sm:$0xff]
  %v88 = vld [vmem:[%s2 + $0x178] sm:$0xff]
  %v89 = vld [vmem:[%s2 + $0x180] sm:$0xff]
  %v90 = vld [vmem:[%s2 + $0x188] sm:$0xff]
  %v91 = vld [vmem:[%s2 + $0x190] sm:$0xff]
  %v92 = vld [vmem:[%s2 + $0x198] sm:$0xff]
  %v93 = vld [vmem:[%s2 + $0x1a0] sm:$0xff]
  %v94 = vld [vmem:[%s2 + $0x1a8] sm:$0xff]
  %v95 = vld [vmem:[%s2 + $0x1b0] sm:$0xff]
  %v96 = vld [vmem:[%s2 + $0x1b8] sm:$0xff]
  %v97 = vld [vmem:[%s2 + $0x1c0] sm:$0xff]
  %v98 = vld [vmem:[%s2 + $0x1c8] sm:$0xff]
  %v99 = vld [vmem:[%s2 + $0x1d0] sm:$0xff]
  %v100 = vld [vmem:[%s2 + $0x1d8] sm:$0xff]
  %v101 = vld [vmem:[%s2 + $0x1e0] sm:$0xff]
  %v102 = vld [vmem:[%s2 + $0x1e8] sm:$0xff]
  %v103 = vld [vmem:[%s2 + $0x1f0] sm:$0xff]
  %v104 = vld [vmem:[%s2 + $0x1f8] sm:$0xff]
  %v105 = vld [vmem:[%s2 + $0x200] sm:$0xff]
  %v106 = vld [vmem:[%s2 + $0x208] sm:$0xff]
  %v107 = vld [vmem:[%s2 + $0x210] sm:$0xff]
  %v108 = vld [vmem:[%s2 + $0x218] sm:$0xff]
  %v109 = vld [vmem:[%s2 + $0x220] sm:$0xff]
  %v110 = vld [vmem:[%s2 + $0x228] sm:$0xff]
  %v111 = vld [vmem:[%s2 + $0x230] sm:$0xff]
  %v112 = vld [vmem:[%s2 + $0x238] sm:$0xff]
  %v113 = vld [vmem:[%s2 + $0x240] sm:$0xff]
  %v114 = vld [vmem:[%s2 + $0x248] sm:$0xff]
  %v115 = vld [vmem:[%s2 + $0x250] sm:$0xff]
  %v116 = vld [vmem:[%s2 + $0x258] sm:$0xff]
  %v117 = vld [vmem:[%s2 + $0x260] sm:$0xff]
  %v118 = vld [vmem:[%s2 + $0x268] sm:$0xff]
  %v119 = vld [vmem:[%s2 + $0x270] sm:$0xff]
  %v120 = vld [vmem:[%s2 + $0x278] sm:$0xff]
  %v121 = vld [vmem:[%s2 + $0x280] sm:$0xff]
  %v122 = vld [vmem:[%s2 + $0x288] sm:$0xff]
  %v123 = vld [vmem:[%s2 + $0x290] sm:$0xff]
  %v124 = vld [vmem:[%s2 + $0x298] sm:$0xff]
  %v125 = vld [vmem:[%s2 + $0x2a0] sm:$0xff]
  %v126 = vld [vmem:[%s2 + $0x2a8] sm:$0xff]
  %v127 = vld [vmem:[%s2 + $0x2b0] sm:$0xff]
  %v128 = vld [vmem:[%s2 + $0x2b8] sm:$0xff]
  %v129 = vld [vmem:[%s2 + $0x2c0] sm:$0xff]
  %v130 = vld [vmem:[%s2 + $0x2c8] sm:$0xff]
  %v131 = vld [vmem:[%s2 + $0x2d0] sm:$0xff]
  %v132 = vld [vmem:[%s2 + $0x2d8] sm:$0xff]
  %v133 = vld [vmem:[%s2 + $0x2e0] sm:$0xff]
  %v134 = vld [vmem:[%s2 + $0x2e8] sm:$0xff]
  %v135 = vld [vmem:[%s2 + $0x2f0] sm:$0xff]
  %v136 = vld [vmem:[%s2 + $0x2f8] sm:$0xff]
  %v137 = vld [vmem:[%s2 + $0x300] sm:$0xff]
  %v138 = vld [vmem:[%s2 + $0x308] sm:$0xff]
  %v139 = vld [vmem:[%s2 + $0x310] sm:$0xff]
  %v140 = vld [vmem:[%s2 + $0x318] sm:$0xff]
  %v141 = vld [vmem:[%s2 + $0x320] sm:$0xff]
  %v142 = vld [vmem:[%s2 + $0x328] sm:$0xff]
  %v143 = vld [vmem:[%s2 + $0x330] sm:$0xff]
  %v144 = vld [vmem:[%s2 + $0x338] sm:$0xff]
  %v145 = vld [vmem:[%s2 + $0x340] sm:$0xff]
  %v146 = vld [vmem:[%s2 + $0x348] sm:$0xff]
  %v147 = vld [vmem:[%s2 + $0x350] sm:$0xff]
  %v148 = vld [vmem:[%s2 + $0x358] sm:$0xff]
  %v149 = vld [vmem:[%s2 + $0x360] sm:$0xff]
  %v150 = vld [vmem:[%s2 + $0x368] sm:$0xff]
  %v151 = vld [vmem:[%s2 + $0x370] sm:$0xff]
  %v152 = vld [vmem:[%s2 + $0x378] sm:$0xff]
  %v153 = vld [vmem:[%s2 + $0x380] sm:$0xff]
  %v154 = vld [vmem:[%s2 + $0x388] sm:$0xff]
  %v155 = vld [vmem:[%s2 + $0x390] sm:$0xff]
  %v156 = vld [vmem:[%s2 + $0x398] sm:$0xff]
  %v157 = vld [vmem:[%s2 + $0x3a0] sm:$0xff]
  %v158 = vld [vmem:[%s2 + $0x3a8] sm:$0xff]
  %v159 = vld [vmem:[%s2 + $0x3b0] sm:$0xff]
  %v160 = vld [vmem:[%s2 + $0x3b8] sm:$0xff]
  %v161 = vld [vmem:[%s2 + $0x3c0] sm:$0xff]
  %v162 = vld [vmem:[%s2 + $0x3c8] sm:$0xff]
  %v163 = vld [vmem:[%s2 + $0x3d0] sm:$0xff]
  %v164 = vld [vmem:[%s2 + $0x3d8] sm:$0xff]
  %v165 = vld [vmem:[%s2 + $0x3e0] sm:$0xff]
  %v166 = vld [vmem:[%s2 + $0x3e8] sm:$0xff]
  %v167 = vld [vmem:[%s2 + $0x3f0] sm:$0xff]
  %v168 = vld [vmem:[%s2 + $0x3f8] sm:$0xff]
  %v169 = vld [vmem:[%s2 + $0x400] sm:$0xff]
  %v170 = vld [vmem:[%s2 + $0x408] sm:$0xff]
  %v171 = vld [vmem:[%s2 + $0x410] sm:$0xff]
  %v172 = vld [vmem:[%s2 + $0x418] sm:$0xff]
  %v173 = vld [vmem:[%s2 + $0x420] sm:$0xff]
  %v174 = vld [vmem:[%s2 + $0x428] sm:$0xff]
  %v175 = vld [vmem:[%s2 + $0x430] sm:$0xff]
  %v176 = vld [vmem:[%s2 + $0x438] sm:$0xff]
  %v177 = vld [vmem:[%s2 + $0x440] sm:$0xff]
  %v178 = vld [vmem:[%s2 + $0x448] sm:$0xff]
  %v179 = vld [vmem:[%s2 + $0x450] sm:$0xff]
  %v180 = vld [vmem:[%s2 + $0x458] sm:$0xff]
  %v181 = vld [vmem:[%s2 + $0x460] sm:$0xff]
  %v182 = vld [vmem:[%s2 + $0x468] sm:$0xff]
  %v183 = vld [vmem:[%s2 + $0x470] sm:$0xff]
  %v184 = vld [vmem:[%s2 + $0x478] sm:$0xff]
  %v185 = vld [vmem:[%s2 + $0x480] sm:$0xff]
  %v186 = vld [vmem:[%s2 + $0x488] sm:$0xff]
  %v187 = vld [vmem:[%s2 + $0x490] sm:$0xff]
  %v188 = vld [vmem:[%s2 + $0x498] sm:$0xff]
  %v189 = vld [vmem:[%s2 + $0x4a0] sm:$0xff]
  %v190 = vld [vmem:[%s2 + $0x4a8] sm:$0xff]
  %v191 = vld [vmem:[%s2 + $0x4b0] sm:$0xff]
  %v192 = vld [vmem:[%s2 + $0x4b8] sm:$0xff]
  %v193 = vld [vmem:[%s2 + $0x4c0] sm:$0xff]
  %v194 = vld [vmem:[%s2 + $0x4c8] sm:$0xff]
  %v195 = vld [vmem:[%s2 + $0x4d0] sm:$0xff]
  %v196 = vld [vmem:[%s2 + $0x4d8] sm:$0xff]
  %v197 = vld [vmem:[%s2 + $0x4e0] sm:$0xff]
  %v198 = vld [vmem:[%s2 + $0x4e8] sm:$0xff]
  %v199 = vld [vmem:[%s2 + $0x4f0] sm:$0xff]
  %v200 = vld [vmem:[%s2 + $0x4f8] sm:$0xff]
  %v201 = vld [vmem:[%s2 + $0x500] sm:$0xff]
  %v202 = vld [vmem:[%s2 + $0x508] sm:$0xff]
  %v203 = vld [vmem:[%s2 + $0x510] sm:$0xff]
  %v204 = vld [vmem:[%s2 + $0x518] sm:$0xff]
  %v205 = vld [vmem:[%s2 + $0x520] sm:$0xff]
  %v206 = vld [vmem:[%s2 + $0x528] sm:$0xff]
  %v207 = vld [vmem:[%s2 + $0x530] sm:$0xff]
  %v208 = vld [vmem:[%s2 + $0x538] sm:$0xff]
  %v209 = vld [vmem:[%s2 + $0x540] sm:$0xff]
  %v210 = vld [vmem:[%s2 + $0x548] sm:$0xff]
  %v211 = vld [vmem:[%s2 + $0x550] sm:$0xff]
  %v212 = vld [vmem:[%s2 + $0x558] sm:$0xff]
  %v213 = vld [vmem:[%s2 + $0x560] sm:$0xff]
  %v214 = vld [vmem:[%s2 + $0x568] sm:$0xff]
  %v215 = vld [vmem:[%s2 + $0x570] sm:$0xff]
  %v216 = vld [vmem:[%s2 + $0x578] sm:$0xff]
  %v217 = vld [vmem:[%s2 + $0x580] sm:$0xff]
  %v218 = vld [vmem:[%s2 + $0x588] sm:$0xff]
  %v219 = vld [vmem:[%s2 + $0x590] sm:$0xff]
  %v220 = vld [vmem:[%s2 + $0x598] sm:$0xff]
  %v221 = vld [vmem:[%s2 + $0x5a0] sm:$0xff]
  %v222 = vld [vmem:[%s2 + $0x5a8] sm:$0xff]
  %v223 = vld [vmem:[%s2 + $0x5b0] sm:$0xff]
  %v224 = vld [vmem:[%s2 + $0x5b8] sm:$0xff]
  %v225 = vld [vmem:[%s2 + $0x5c0] sm:$0xff]
  %v226 = vld [vmem:[%s2 + $0x5c8] sm:$0xff]
  %v227 = vld [vmem:[%s2 + $0x5d0] sm:$0xff]
  %v228 = vld [vmem:[%s2 + $0x5d8] sm:$0xff]
  %v229 = vld [vmem:[%s2 + $0x5e0] sm:$0xff]
  %v230 = vld [vmem:[%s2 + $0x5e8] sm:$0xff]
  %v231 = vld [vmem:[%s2 + $0x5f0] sm:$0xff]
  %v232 = vld [vmem:[%s2 + $0x5f8] sm:$0xff]
  %v233 = vld [vmem:[%s2 + $0x600] sm:$0xff]
  %v234 = vld [vmem:[%s2 + $0x608] sm:$0xff]
  %v235 = vld [vmem:[%s2 + $0x610] sm:$0xff]
  %v236 = vld [vmem:[%s2 + $0x618] sm:$0xff]
  %v237 = vld [vmem:[%s2 + $0x620] sm:$0xff]
  %v238 = vld [vmem:[%s2 + $0x628] sm:$0xff]
  %v239 = vld [vmem:[%s2 + $0x630] sm:$0xff]
  %v240 = vld [vmem:[%s2 + $0x638] sm:$0xff]
  %v241 = vld [vmem:[%s2 + $0x640] sm:$0xff]
  %v242 = vld [vmem:[%s2 + $0x648] sm:$0xff]
  %v243 = vld [vmem:[%s2 + $0x650] sm:$0xff]
  %v244 = vld [vmem:[%s2 + $0x658] sm:$0xff]
  %v245 = vld [vmem:[%s2 + $0x660] sm:$0xff]
  %v246 = vld [vmem:[%s2 + $0x668] sm:$0xff]
  %v247 = vld [vmem:[%s2 + $0x670] sm:$0xff]
  %v248 = vld [vmem:[%s2 + $0x678] sm:$0xff]
  %v249 = vld [vmem:[%s2 + $0x680] sm:$0xff]
  %v250 = vld [vmem:[%s2 + $0x688] sm:$0xff]
  %v251 = vld [vmem:[%s2 + $0x690] sm:$0xff]
  %v252 = vld [vmem:[%s2 + $0x698] sm:$0xff]
  %v253 = vld [vmem:[%s2 + $0x6a0] sm:$0xff]
  %v254 = vld [vmem:[%s2 + $0x6a8] sm:$0xff]
  %v255 = vld [vmem:[%s2 + $0x6b0] sm:$0xff]
  %v256 = vld [vmem:[%s2 + $0x6b8] sm:$0xff]
  %v257 = vld [vmem:[%s2 + $0x6c0] sm:$0xff]
  %v258 = vld [vmem:[%s2 + $0x6c8] sm:$0xff]
  %v259 = vld [vmem:[%s2 + $0x6d0] sm:$0xff]
  %v260 = vld [vmem:[%s2 + $0x6d8] sm:$0xff]
  %v261 = vld [vmem:[%s2 + $0x6e0] sm:$0xff]
  %v262 = vld [vmem:[%s2 + $0x6e8] sm:$0xff]
  %v263 = vld [vmem:[%s2 + $0x6f0] sm:$0xff]
  %v264 = vld [vmem:[%s2 + $0x6f8] sm:$0xff]
  %v265 = vld [vmem:[%s2 + $0x700] sm:$0xff]
  %v266 = vld [vmem:[%s2 + $0x708] sm:$0xff]
  %v267 = vld [vmem:[%s2 + $0x710] sm:$0xff]
  %v268 = vld [vmem:[%s2 + $0x718] sm:$0xff]
  %v269 = vld [vmem:[%s2 + $0x720] sm:$0xff]
  %v270 = vld [vmem:[%s2 + $0x728] sm:$0xff]
  %v271 = vld [vmem:[%s2 + $0x730] sm:$0xff]
  %v272 = vld [vmem:[%s2 + $0x738] sm:$0xff]
  %v273 = vld [vmem:[%s2 + $0x740] sm:$0xff]
  %v274 = vld [vmem:[%s2 + $0x748] sm:$0xff]
  %v275 = vld [vmem:[%s2 + $0x750] sm:$0xff]
  %v276 = vld [vmem:[%s2 + $0x758] sm:$0xff]
  %v277 = vld [vmem:[%s2 + $0x760] sm:$0xff]
  %v278 = vld [vmem:[%s2 + $0x768] sm:$0xff]
  %v279 = vld [vmem:[%s2 + $0x770] sm:$0xff]
  %v280 = vld [vmem:[%s2 + $0x778] sm:$0xff]
  %v281 = vld [vmem:[%s2 + $0x780] sm:$0xff]
  %v282 = vld [vmem:[%s2 + $0x788] sm:$0xff]
  %v283 = vld [vmem:[%s2 + $0x790] sm:$0xff]
  %v284 = vld [vmem:[%s2 + $0x798] sm:$0xff]
  %v285 = vld [vmem:[%s2 + $0x7a0] sm:$0xff]
  %v286 = vld [vmem:[%s2 + $0x7a8] sm:$0xff]
  %v287 = vld [vmem:[%s2 + $0x7b0] sm:$0xff]
  %v288 = vld [vmem:[%s2 + $0x7b8] sm:$0xff]
  %v289 = vld [vmem:[%s2 + $0x7c0] sm:$0xff]
  %v290 = vld [vmem:[%s2 + $0x7c8] sm:$0xff]
  %v291 = vld [vmem:[%s2 + $0x7d0] sm:$0xff]
  %v292 = vld [vmem:[%s2 + $0x7d8] sm:$0xff]
  %v293 = vld [vmem:[%s2 + $0x7e0] sm:$0xff]
  %v294 = vld [vmem:[%s2 + $0x7e8] sm:$0xff]
  %v295 = vld [vmem:[%s2 + $0x7f0] sm:$0xff]
  %v296 = vld [vmem:[%s2 + $0x7f8] sm:$0xff]
  %v297 = vld [vmem:[%s1] sm:$0xff]
  %v298 = vld [vmem:[%s1 + $0x8] sm:$0xff]
  %v299 = vld [vmem:[%s3] sm:$0xff]
  %v300 = vld [vmem:[%s3 + $0x8] sm:$0xff]
  %v301 = vld [vmem:[%s3 + $0x10] sm:$0xff]
  %v302 = vld [vmem:[%s3 + $0x18] sm:$0xff]
  %v303 = vld [vmem:[%s3 + $0x20] sm:$0xff]
  %v304 = vld [vmem:[%s3 + $0x28] sm:$0xff]
  %v305 = vld [vmem:[%s3 + $0x30] sm:$0xff]
  %v306 = vld [vmem:[%s3 + $0x38] sm:$0xff]
  %v307 = vld [vmem:[%s3 + $0x40] sm:$0xff]
  %v308 = vld [vmem:[%s3 + $0x48] sm:$0xff]
  %v309 = vld [vmem:[%s3 + $0x50] sm:$0xff]
  %v310 = vld [vmem:[%s3 + $0x58] sm:$0xff]
  %v311 = vld [vmem:[%s3 + $0x60] sm:$0xff]
  %v312 = vld [vmem:[%s3 + $0x68] sm:$0xff]
  %v313 = vld [vmem:[%s3 + $0x70] sm:$0xff]
  %v314 = vld [vmem:[%s3 + $0x78] sm:$0xff]
  %v315 = vld [vmem:[%s3 + $0x80] sm:$0xff]
  %v316 = vld [vmem:[%s3 + $0x88] sm:$0xff]
  %v317 = vld [vmem:[%s3 + $0x90] sm:$0xff]
  %v318 = vld [vmem:[%s3 + $0x98] sm:$0xff]
  %v319 = vld [vmem:[%s3 + $0xa0] sm:$0xff]
  %v320 = vld [vmem:[%s3 + $0xa8] sm:$0xff]
  %v321 = vld [vmem:[%s3 + $0xb0] sm:$0xff]
  %v322 = vld [vmem:[%s3 + $0xb8] sm:$0xff]
  %v323 = vld [vmem:[%s3 + $0xc0] sm:$0xff]
  %v324 = vld [vmem:[%s3 + $0xc8] sm:$0xff]
  %v325 = vld [vmem:[%s3 + $0xd0] sm:$0xff]
  %v326 = vld [vmem:[%s3 + $0xd8] sm:$0xff]
  %v327 = vld [vmem:[%s3 + $0xe0] sm:$0xff]
  %v328 = vld [vmem:[%s3 + $0xe8] sm:$0xff]
  %v329 = vld [vmem:[%s3 + $0xf0] sm:$0xff]
  %v330 = vld [vmem:[%s3 + $0xf8] sm:$0xff]
  %v331 = vld [vmem:[%s3 + $0x100] sm:$0xff]
  %v332 = vld [vmem:[%s3 + $0x108] sm:$0xff]
  %v333 = vld [vmem:[%s3 + $0x110] sm:$0xff]
  %v334 = vld [vmem:[%s3 + $0x118] sm:$0xff]
  %v335 = vld [vmem:[%s3 + $0x120] sm:$0xff]
  %v336 = vld [vmem:[%s3 + $0x128] sm:$0xff]
  %v337 = vld [vmem:[%s3 + $0x130] sm:$0xff]
  %v338 = vld [vmem:[%s3 + $0x138] sm:$0xff]
  %v339 = vld [vmem:[%s3 + $0x140] sm:$0xff]
  %v340 = vld [vmem:[%s3 + $0x148] sm:$0xff]
  %v341 = vld [vmem:[%s3 + $0x150] sm:$0xff]
  %v342 = vld [vmem:[%s3 + $0x158] sm:$0xff]
  %v343 = vld [vmem:[%s3 + $0x160] sm:$0xff]
  %v344 = vld [vmem:[%s3 + $0x168] sm:$0xff]
  %v345 = vld [vmem:[%s3 + $0x170] sm:$0xff]
  %v346 = vld [vmem:[%s3 + $0x178] sm:$0xff]
  %v347 = vld [vmem:[%s3 + $0x180] sm:$0xff]
  %v348 = vld [vmem:[%s3 + $0x188] sm:$0xff]
  %v349 = vld [vmem:[%s3 + $0x190] sm:$0xff]
  %v350 = vld [vmem:[%s3 + $0x198] sm:$0xff]
  %v351 = vld [vmem:[%s3 + $0x1a0] sm:$0xff]
  %v352 = vld [vmem:[%s3 + $0x1a8] sm:$0xff]
  %v353 = vld [vmem:[%s3 + $0x1b0] sm:$0xff]
  %v354 = vld [vmem:[%s3 + $0x1b8] sm:$0xff]
  %v355 = vld [vmem:[%s3 + $0x1c0] sm:$0xff]
  %v356 = vld [vmem:[%s3 + $0x1c8] sm:$0xff]
  %v357 = vld [vmem:[%s3 + $0x1d0] sm:$0xff]
  %v358 = vld [vmem:[%s3 + $0x1d8] sm:$0xff]
  %v359 = vld [vmem:[%s3 + $0x1e0] sm:$0xff]
  %v360 = vld [vmem:[%s3 + $0x1e8] sm:$0xff]
  %v361 = vld [vmem:[%s3 + $0x1f0] sm:$0xff]
  %v362 = vld [vmem:[%s3 + $0x1f8] sm:$0xff]
  %v365 = vunpack.c.l.b16 %v297
  %v366 = vunpack.c.h.b16 %v297
  %v367 = vunpack.c.l.b16 %v298
  %v368 = vunpack.c.h.b16 %v298
  %v369 = vpack.c.b16 %v367, %v365
  %v370 = vpack.c.b16 %v368, %v366
  %v437 = vunpack.c.l.b16 %v299
  %v438 = vunpack.c.h.b16 %v299
  %v439 = vunpack.c.l.b16 %v300
  %v440 = vunpack.c.h.b16 %v300
  %v441 = vunpack.c.l.b16 %v301
  %v442 = vunpack.c.h.b16 %v301
  %v443 = vunpack.c.l.b16 %v302
  %v444 = vunpack.c.h.b16 %v302
  %v445 = vunpack.c.l.b16 %v303
  %v446 = vunpack.c.h.b16 %v303
  %v447 = vunpack.c.l.b16 %v304
  %v448 = vunpack.c.h.b16 %v304
  %v449 = vunpack.c.l.b16 %v305
  %v450 = vunpack.c.h.b16 %v305
  %v451 = vunpack.c.l.b16 %v306
  %v452 = vunpack.c.h.b16 %v306
  %v453 = vunpack.c.l.b16 %v307
  %v454 = vunpack.c.h.b16 %v307
  %v455 = vunpack.c.l.b16 %v308
  %v456 = vunpack.c.h.b16 %v308
  %v457 = vunpack.c.l.b16 %v309
  %v458 = vunpack.c.h.b16 %v309
  %v459 = vunpack.c.l.b16 %v310
  %v460 = vunpack.c.h.b16 %v310
  %v461 = vunpack.c.l.b16 %v311
  %v462 = vunpack.c.h.b16 %v311
  %v463 = vunpack.c.l.b16 %v312
  %v464 = vunpack.c.h.b16 %v312
  %v465 = vunpack.c.l.b16 %v313
  %v466 = vunpack.c.h.b16 %v313
  %v467 = vunpack.c.l.b16 %v314
  %v468 = vunpack.c.h.b16 %v314
  %v469 = vunpack.c.l.b16 %v315
  %v470 = vunpack.c.h.b16 %v315
  %v471 = vunpack.c.l.b16 %v316
  %v472 = vunpack.c.h.b16 %v316
  %v473 = vunpack.c.l.b16 %v317
  %v474 = vunpack.c.h.b16 %v317
  %v475 = vunpack.c.l.b16 %v318
  %v476 = vunpack.c.h.b16 %v318
  %v477 = vunpack.c.l.b16 %v319
  %v478 = vunpack.c.h.b16 %v319
  %v479 = vunpack.c.l.b16 %v320
  %v480 = vunpack.c.h.b16 %v320
  %v481 = vunpack.c.l.b16 %v321
  %v482 = vunpack.c.h.b16 %v321
  %v483 = vunpack.c.l.b16 %v322
  %v484 = vunpack.c.h.b16 %v322
  %v485 = vunpack.c.l.b16 %v323
  %v486 = vunpack.c.h.b16 %v323
  %v487 = vunpack.c.l.b16 %v324
  %v488 = vunpack.c.h.b16 %v324
  %v489 = vunpack.c.l.b16 %v325
  %v490 = vunpack.c.h.b16 %v325
  %v491 = vunpack.c.l.b16 %v326
  %v492 = vunpack.c.h.b16 %v326
  %v493 = vunpack.c.l.b16 %v327
  %v494 = vunpack.c.h.b16 %v327
  %v495 = vunpack.c.l.b16 %v328
  %v496 = vunpack.c.h.b16 %v328
  %v497 = vunpack.c.l.b16 %v329
  %v498 = vunpack.c.h.b16 %v329
  %v499 = vunpack.c.l.b16 %v330
  %v500 = vunpack.c.h.b16 %v330
  %v501 = vunpack.c.l.b16 %v331
  %v502 = vunpack.c.h.b16 %v331
  %v503 = vunpack.c.l.b16 %v332
  %v504 = vunpack.c.h.b16 %v332
  %v505 = vunpack.c.l.b16 %v333
  %v506 = vunpack.c.h.b16 %v333
  %v507 = vunpack.c.l.b16 %v334
  %v508 = vunpack.c.h.b16 %v334
  %v509 = vunpack.c.l.b16 %v335
  %v510 = vunpack.c.h.b16 %v335
  %v511 = vunpack.c.l.b16 %v336
  %v512 = vunpack.c.h.b16 %v336
  %v513 = vunpack.c.l.b16 %v337
  %v514 = vunpack.c.h.b16 %v337
  %v515 = vunpack.c.l.b16 %v338
  %v516 = vunpack.c.h.b16 %v338
  %v517 = vunpack.c.l.b16 %v339
  %v518 = vunpack.c.h.b16 %v339
  %v519 = vunpack.c.l.b16 %v340
  %v520 = vunpack.c.h.b16 %v340
  %v521 = vunpack.c.l.b16 %v341
  %v522 = vunpack.c.h.b16 %v341
  %v523 = vunpack.c.l.b16 %v342
  %v524 = vunpack.c.h.b16 %v342
  %v525 = vunpack.c.l.b16 %v343
  %v526 = vunpack.c.h.b16 %v343
  %v527 = vunpack.c.l.b16 %v344
  %v528 = vunpack.c.h.b16 %v344
  %v529 = vunpack.c.l.b16 %v345
  %v530 = vunpack.c.h.b16 %v345
  %v531 = vunpack.c.l.b16 %v346
  %v532 = vunpack.c.h.b16 %v346
  %v533 = vunpack.c.l.b16 %v347
  %v534 = vunpack.c.h.b16 %v347
  %v535 = vunpack.c.l.b16 %v348
  %v536 = vunpack.c.h.b16 %v348
  %v537 = vunpack.c.l.b16 %v349
  %v538 = vunpack.c.h.b16 %v349
  %v539 = vunpack.c.l.b16 %v350
  %v540 = vunpack.c.h.b16 %v350
  %v541 = vunpack.c.l.b16 %v351
  %v542 = vunpack.c.h.b16 %v351
  %v543 = vunpack.c.l.b16 %v352
  %v544 = vunpack.c.h.b16 %v352
  %v545 = vunpack.c.l.b16 %v353
  %v546 = vunpack.c.h.b16 %v353
  %v547 = vunpack.c.l.b16 %v354
  %v548 = vunpack.c.h.b16 %v354
  %v549 = vunpack.c.l.b16 %v355
  %v550 = vunpack.c.h.b16 %v355
  %v551 = vunpack.c.l.b16 %v356
  %v552 = vunpack.c.h.b16 %v356
  %v553 = vunpack.c.l.b16 %v357
  %v554 = vunpack.c.h.b16 %v357
  %v555 = vunpack.c.l.b16 %v358
  %v556 = vunpack.c.h.b16 %v358
  %v557 = vunpack.c.l.b16 %v359
  %v558 = vunpack.c.h.b16 %v359
  %v559 = vunpack.c.l.b16 %v360
  %v560 = vunpack.c.h.b16 %v360
  %v561 = vunpack.c.l.b16 %v361
  %v562 = vunpack.c.h.b16 %v361
  %v563 = vunpack.c.l.b16 %v362
  %v564 = vunpack.c.h.b16 %v362
  %v565 = vpack.c.b16 %v441, %v437
  %v566 = vpack.c.b16 %v442, %v438
  %v567 = vpack.c.b16 %v443, %v439
  %v568 = vpack.c.b16 %v444, %v440
  %v569 = vpack.c.b16 %v449, %v445
  %v570 = vpack.c.b16 %v450, %v446
  %v571 = vpack.c.b16 %v451, %v447
  %v572 = vpack.c.b16 %v452, %v448
  %v573 = vpack.c.b16 %v457, %v453
  %v574 = vpack.c.b16 %v458, %v454
  %v575 = vpack.c.b16 %v459, %v455
  %v576 = vpack.c.b16 %v460, %v456
  %v577 = vpack.c.b16 %v465, %v461
  %v578 = vpack.c.b16 %v466, %v462
  %v579 = vpack.c.b16 %v467, %v463
  %v580 = vpack.c.b16 %v468, %v464
  %v581 = vpack.c.b16 %v473, %v469
  %v582 = vpack.c.b16 %v474, %v470
  %v583 = vpack.c.b16 %v475, %v471
  %v584 = vpack.c.b16 %v476, %v472
  %v585 = vpack.c.b16 %v481, %v477
  %v586 = vpack.c.b16 %v482, %v478
  %v587 = vpack.c.b16 %v483, %v479
  %v588 = vpack.c.b16 %v484, %v480
  %v589 = vpack.c.b16 %v489, %v485
  %v590 = vpack.c.b16 %v490, %v486
  %v591 = vpack.c.b16 %v491, %v487
  %v592 = vpack.c.b16 %v492, %v488
  %v593 = vpack.c.b16 %v497, %v493
  %v594 = vpack.c.b16 %v498, %v494
  %v595 = vpack.c.b16 %v499, %v495
  %v596 = vpack.c.b16 %v500, %v496
  %v597 = vpack.c.b16 %v505, %v501
  %v598 = vpack.c.b16 %v506, %v502
  %v599 = vpack.c.b16 %v507, %v503
  %v600 = vpack.c.b16 %v508, %v504
  %v601 = vpack.c.b16 %v513, %v509
  %v602 = vpack.c.b16 %v514, %v510
  %v603 = vpack.c.b16 %v515, %v511
  %v604 = vpack.c.b16 %v516, %v512
  %v605 = vpack.c.b16 %v521, %v517
  %v606 = vpack.c.b16 %v522, %v518
  %v607 = vpack.c.b16 %v523, %v519
  %v608 = vpack.c.b16 %v524, %v520
  %v609 = vpack.c.b16 %v529, %v525
  %v610 = vpack.c.b16 %v530, %v526
  %v611 = vpack.c.b16 %v531, %v527
  %v612 = vpack.c.b16 %v532, %v528
  %v613 = vpack.c.b16 %v537, %v533
  %v614 = vpack.c.b16 %v538, %v534
  %v615 = vpack.c.b16 %v539, %v535
  %v616 = vpack.c.b16 %v540, %v536
  %v617 = vpack.c.b16 %v545, %v541
  %v618 = vpack.c.b16 %v546, %v542
  %v619 = vpack.c.b16 %v547, %v543
  %v620 = vpack.c.b16 %v548, %v544
  %v621 = vpack.c.b16 %v553, %v549
  %v622 = vpack.c.b16 %v554, %v550
  %v623 = vpack.c.b16 %v555, %v551
  %v624 = vpack.c.b16 %v556, %v552
  %v625 = vpack.c.b16 %v561, %v557
  %v626 = vpack.c.b16 %v562, %v558
  %v627 = vpack.c.b16 %v563, %v559
  %v628 = vpack.c.b16 %v564, %v560
  %693 = vmatprep.subr.bf16.mxu0 %v566
  %694 = vmatpush1.bf16.msra.mxu0 %v565
  %695 = vmatprep.subr.bf16.mxu0 %v570
  %696 = vmatpush1.bf16.msra.mxu0 %v569
  %697 = vmatprep.subr.bf16.mxu0 %v574
  %698 = vmatpush1.bf16.msra.mxu0 %v573
  %699 = vmatprep.subr.bf16.mxu0 %v578
  %700 = vmatpush1.bf16.msra.mxu0 %v577
  %701 = vmatprep.subr.bf16.mxu0 %v582
  %702 = vmatpush1.bf16.msra.mxu0 %v581
  %703 = vmatprep.subr.bf16.mxu0 %v586
  %704 = vmatpush1.bf16.msra.mxu0 %v585
  %705 = vmatprep.subr.bf16.mxu0 %v590
  %706 = vmatpush1.bf16.msra.mxu0 %v589
  %707 = vmatprep.subr.bf16.mxu0 %v594
  %708 = vmatpush1.bf16.msra.mxu0 %v593
  %709 = vmatprep.subr.bf16.mxu0 %v598
  %710 = vmatpush1.bf16.msra.mxu0 %v597
  %711 = vmatprep.subr.bf16.mxu0 %v602
  %712 = vmatpush1.bf16.msra.mxu0 %v601
  %713 = vmatprep.subr.bf16.mxu0 %v606
  %714 = vmatpush1.bf16.msra.mxu0 %v605
  %715 = vmatprep.subr.bf16.mxu0 %v610
  %716 = vmatpush1.bf16.msra.mxu0 %v609
  %717 = vmatprep.subr.bf16.mxu0 %v614
  %718 = vmatpush1.bf16.msra.mxu0 %v613
  %719 = vmatprep.subr.bf16.mxu0 %v618
  %720 = vmatpush1.bf16.msra.mxu0 %v617
  %721 = vmatprep.subr.bf16.mxu0 %v622
  %722 = vmatpush1.bf16.msra.mxu0 %v621
  %723 = vmatprep.subr.bf16.mxu0 %v626
  %724 = vmatpush1.bf16.msra.mxu0 %v625
  %725 = vmatprep.mubr.bf16.mxu0 %v370
  %726 = vmatmul.mubr.bf16.gmra.mrb[0].mxu0 %v369
  %v727 = vpop.f32.mrb[0].mxu0
  %v728 = vadd.f32 0.0, %v727
  %v729 = vpop.f32.mrb[0].mxu0
  %v730 = vadd.f32 0.0, %v729
  %v731 = vpop.f32.mrb[0].mxu0
  %v732 = vadd.f32 0.0, %v731
  %v733 = vpop.f32.mrb[0].mxu0
  %v734 = vadd.f32 0.0, %v733
  %735 = vdwg.mxu0
  %736 = vmatprep.subr.bf16.mxu0 %v568
  %737 = vmatpush1.bf16.msra.mxu0 %v567
  %738 = vmatprep.subr.bf16.mxu0 %v572
  %739 = vmatpush1.bf16.msra.mxu0 %v571
  %740 = vmatprep.subr.bf16.mxu0 %v576
  %741 = vmatpush1.bf16.msra.mxu0 %v575
  %742 = vmatprep.subr.bf16.mxu0 %v580
  %743 = vmatpush1.bf16.msra.mxu0 %v579
  %744 = vmatprep.subr.bf16.mxu0 %v584
  %745 = vmatpush1.bf16.msra.mxu0 %v583
  %746 = vmatprep.subr.bf16.mxu0 %v588
  %747 = vmatpush1.bf16.msra.mxu0 %v587
  %748 = vmatprep.subr.bf16.mxu0 %v592
  %749 = vmatpush1.bf16.msra.mxu0 %v591
  %750 = vmatprep.subr.bf16.mxu0 %v596
  %751 = vmatpush1.bf16.msra.mxu0 %v595
  %752 = vmatprep.subr.bf16.mxu0 %v600
  %753 = vmatpush1.bf16.msra.mxu0 %v599
  %754 = vmatprep.subr.bf16.mxu0 %v604
  %755 = vmatpush1.bf16.msra.mxu0 %v603
  %756 = vmatprep.subr.bf16.mxu0 %v608
  %757 = vmatpush1.bf16.msra.mxu0 %v607
  %758 = vmatprep.subr.bf16.mxu0 %v612
  %759 = vmatpush1.bf16.msra.mxu0 %v611
  %760 = vmatprep.subr.bf16.mxu0 %v616
  %761 = vmatpush1.bf16.msra.mxu0 %v615
  %762 = vmatprep.subr.bf16.mxu0 %v620
  %763 = vmatpush1.bf16.msra.mxu0 %v619
  %764 = vmatprep.subr.bf16.mxu0 %v624
  %765 = vmatpush1.bf16.msra.mxu0 %v623
  %766 = vmatprep.subr.bf16.mxu0 %v628
  %767 = vmatpush1.bf16.msra.mxu0 %v627
  %768 = vmatprep.mubr.bf16.mxu0 %v370
  %769 = vmatmul.mubr.bf16.gmra.mrb[0].mxu0 %v369
  %v770 = vpop.f32.mrb[0].mxu0
  %v771 = vadd.f32 0.0, %v770
  %v772 = vpop.f32.mrb[0].mxu0
  %v773 = vadd.f32 0.0, %v772
  %v774 = vpop.f32.mrb[0].mxu0
  %v775 = vadd.f32 0.0, %v774
  %v776 = vpop.f32.mrb[0].mxu0
  %v777 = vadd.f32 0.0, %v776
  %778 = vdwg.mxu0
  %v787 = vunpack.c.l.b16 %v33
  %v788 = vunpack.c.h.b16 %v33
  %v789 = vunpack.c.l.b16 %v34
  %v790 = vunpack.c.h.b16 %v34
  %v791 = vunpack.c.l.b16 %v35
  %v792 = vunpack.c.h.b16 %v35
  %v793 = vunpack.c.l.b16 %v36
  %v794 = vunpack.c.h.b16 %v36
  %v795 = vunpack.c.l.b16 %v37
  %v796 = vunpack.c.h.b16 %v37
  %v797 = vunpack.c.l.b16 %v38
  %v798 = vunpack.c.h.b16 %v38
  %v799 = vunpack.c.l.b16 %v39
  %v800 = vunpack.c.h.b16 %v39
  %v801 = vunpack.c.l.b16 %v40
  %v802 = vunpack.c.h.b16 %v40
  %v803 = vpack.c.b16 %v795, %v787
  %v804 = vpack.c.b16 %v796, %v788
  %v805 = vpack.c.b16 %v797, %v789
  %v806 = vpack.c.b16 %v798, %v790
  %v807 = vpack.c.b16 %v799, %v791
  %v808 = vpack.c.b16 %v800, %v792
  %v809 = vpack.c.b16 %v801, %v793
  %v810 = vpack.c.b16 %v802, %v794
  %v1075 = vunpack.c.l.b16 %v41
  %v1076 = vunpack.c.h.b16 %v41
  %v1077 = vunpack.c.l.b16 %v42
  %v1078 = vunpack.c.h.b16 %v42
  %v1079 = vunpack.c.l.b16 %v43
  %v1080 = vunpack.c.h.b16 %v43
  %v1081 = vunpack.c.l.b16 %v44
  %v1082 = vunpack.c.h.b16 %v44
  %v1083 = vunpack.c.l.b16 %v45
  %v1084 = vunpack.c.h.b16 %v45
  %v1085 = vunpack.c.l.b16 %v46
  %v1086 = vunpack.c.h.b16 %v46
  %v1087 = vunpack.c.l.b16 %v47
  %v1088 = vunpack.c.h.b16 %v47
  %v1089 = vunpack.c.l.b16 %v48
  %v1090 = vunpack.c.h.b16 %v48
  %v1091 = vunpack.c.l.b16 %v49
  %v1092 = vunpack.c.h.b16 %v49
  %v1093 = vunpack.c.l.b16 %v50
  %v1094 = vunpack.c.h.b16 %v50
  %v1095 = vunpack.c.l.b16 %v51
  %v1096 = vunpack.c.h.b16 %v51
  %v1097 = vunpack.c.l.b16 %v52
  %v1098 = vunpack.c.h.b16 %v52
  %v1099 = vunpack.c.l.b16 %v53
  %v1100 = vunpack.c.h.b16 %v53
  %v1101 = vunpack.c.l.b16 %v54
  %v1102 = vunpack.c.h.b16 %v54
  %v1103 = vunpack.c.l.b16 %v55
  %v1104 = vunpack.c.h.b16 %v55
  %v1105 = vunpack.c.l.b16 %v56
  %v1106 = vunpack.c.h.b16 %v56
  %v1107 = vunpack.c.l.b16 %v57
  %v1108 = vunpack.c.h.b16 %v57
  %v1109 = vunpack.c.l.b16 %v58
  %v1110 = vunpack.c.h.b16 %v58
  %v1111 = vunpack.c.l.b16 %v59
  %v1112 = vunpack.c.h.b16 %v59
  %v1113 = vunpack.c.l.b16 %v60
  %v1114 = vunpack.c.h.b16 %v60
  %v1115 = vunpack.c.l.b16 %v61
  %v1116 = vunpack.c.h.b16 %v61
  %v1117 = vunpack.c.l.b16 %v62
  %v1118 = vunpack.c.h.b16 %v62
  %v1119 = vunpack.c.l.b16 %v63
  %v1120 = vunpack.c.h.b16 %v63
  %v1121 = vunpack.c.l.b16 %v64
  %v1122 = vunpack.c.h.b16 %v64
  %v1123 = vunpack.c.l.b16 %v65
  %v1124 = vunpack.c.h.b16 %v65
  %v1125 = vunpack.c.l.b16 %v66
  %v1126 = vunpack.c.h.b16 %v66
  %v1127 = vunpack.c.l.b16 %v67
  %v1128 = vunpack.c.h.b16 %v67
  %v1129 = vunpack.c.l.b16 %v68
  %v1130 = vunpack.c.h.b16 %v68
  %v1131 = vunpack.c.l.b16 %v69
  %v1132 = vunpack.c.h.b16 %v69
  %v1133 = vunpack.c.l.b16 %v70
  %v1134 = vunpack.c.h.b16 %v70
  %v1135 = vunpack.c.l.b16 %v71
  %v1136 = vunpack.c.h.b16 %v71
  %v1137 = vunpack.c.l.b16 %v72
  %v1138 = vunpack.c.h.b16 %v72
  %v1139 = vunpack.c.l.b16 %v73
  %v1140 = vunpack.c.h.b16 %v73
  %v1141 = vunpack.c.l.b16 %v74
  %v1142 = vunpack.c.h.b16 %v74
  %v1143 = vunpack.c.l.b16 %v75
  %v1144 = vunpack.c.h.b16 %v75
  %v1145 = vunpack.c.l.b16 %v76
  %v1146 = vunpack.c.h.b16 %v76
  %v1147 = vunpack.c.l.b16 %v77
  %v1148 = vunpack.c.h.b16 %v77
  %v1149 = vunpack.c.l.b16 %v78
  %v1150 = vunpack.c.h.b16 %v78
  %v1151 = vunpack.c.l.b16 %v79
  %v1152 = vunpack.c.h.b16 %v79
  %v1153 = vunpack.c.l.b16 %v80
  %v1154 = vunpack.c.h.b16 %v80
  %v1155 = vunpack.c.l.b16 %v81
  %v1156 = vunpack.c.h.b16 %v81
  %v1157 = vunpack.c.l.b16 %v82
  %v1158 = vunpack.c.h.b16 %v82
  %v1159 = vunpack.c.l.b16 %v83
  %v1160 = vunpack.c.h.b16 %v83
  %v1161 = vunpack.c.l.b16 %v84
  %v1162 = vunpack.c.h.b16 %v84
  %v1163 = vunpack.c.l.b16 %v85
  %v1164 = vunpack.c.h.b16 %v85
  %v1165 = vunpack.c.l.b16 %v86
  %v1166 = vunpack.c.h.b16 %v86
  %v1167 = vunpack.c.l.b16 %v87
  %v1168 = vunpack.c.h.b16 %v87
  %v1169 = vunpack.c.l.b16 %v88
  %v1170 = vunpack.c.h.b16 %v88
  %v1171 = vunpack.c.l.b16 %v89
  %v1172 = vunpack.c.h.b16 %v89
  %v1173 = vunpack.c.l.b16 %v90
  %v1174 = vunpack.c.h.b16 %v90
  %v1175 = vunpack.c.l.b16 %v91
  %v1176 = vunpack.c.h.b16 %v91
  %v1177 = vunpack.c.l.b16 %v92
  %v1178 = vunpack.c.h.b16 %v92
  %v1179 = vunpack.c.l.b16 %v93
  %v1180 = vunpack.c.h.b16 %v93
  %v1181 = vunpack.c.l.b16 %v94
  %v1182 = vunpack.c.h.b16 %v94
  %v1183 = vunpack.c.l.b16 %v95
  %v1184 = vunpack.c.h.b16 %v95
  %v1185 = vunpack.c.l.b16 %v96
  %v1186 = vunpack.c.h.b16 %v96
  %v1187 = vunpack.c.l.b16 %v97
  %v1188 = vunpack.c.h.b16 %v97
  %v1189 = vunpack.c.l.b16 %v98
  %v1190 = vunpack.c.h.b16 %v98
  %v1191 = vunpack.c.l.b16 %v99
  %v1192 = vunpack.c.h.b16 %v99
  %v1193 = vunpack.c.l.b16 %v100
  %v1194 = vunpack.c.h.b16 %v100
  %v1195 = vunpack.c.l.b16 %v101
  %v1196 = vunpack.c.h.b16 %v101
  %v1197 = vunpack.c.l.b16 %v102
  %v1198 = vunpack.c.h.b16 %v102
  %v1199 = vunpack.c.l.b16 %v103
  %v1200 = vunpack.c.h.b16 %v103
  %v1201 = vunpack.c.l.b16 %v104
  %v1202 = vunpack.c.h.b16 %v104
  %v1203 = vunpack.c.l.b16 %v105
  %v1204 = vunpack.c.h.b16 %v105
  %v1205 = vunpack.c.l.b16 %v106
  %v1206 = vunpack.c.h.b16 %v106
  %v1207 = vunpack.c.l.b16 %v107
  %v1208 = vunpack.c.h.b16 %v107
  %v1209 = vunpack.c.l.b16 %v108
  %v1210 = vunpack.c.h.b16 %v108
  %v1211 = vunpack.c.l.b16 %v109
  %v1212 = vunpack.c.h.b16 %v109
  %v1213 = vunpack.c.l.b16 %v110
  %v1214 = vunpack.c.h.b16 %v110
  %v1215 = vunpack.c.l.b16 %v111
  %v1216 = vunpack.c.h.b16 %v111
  %v1217 = vunpack.c.l.b16 %v112
  %v1218 = vunpack.c.h.b16 %v112
  %v1219 = vunpack.c.l.b16 %v113
  %v1220 = vunpack.c.h.b16 %v113
  %v1221 = vunpack.c.l.b16 %v114
  %v1222 = vunpack.c.h.b16 %v114
  %v1223 = vunpack.c.l.b16 %v115
  %v1224 = vunpack.c.h.b16 %v115
  %v1225 = vunpack.c.l.b16 %v116
  %v1226 = vunpack.c.h.b16 %v116
  %v1227 = vunpack.c.l.b16 %v117
  %v1228 = vunpack.c.h.b16 %v117
  %v1229 = vunpack.c.l.b16 %v118
  %v1230 = vunpack.c.h.b16 %v118
  %v1231 = vunpack.c.l.b16 %v119
  %v1232 = vunpack.c.h.b16 %v119
  %v1233 = vunpack.c.l.b16 %v120
  %v1234 = vunpack.c.h.b16 %v120
  %v1235 = vunpack.c.l.b16 %v121
  %v1236 = vunpack.c.h.b16 %v121
  %v1237 = vunpack.c.l.b16 %v122
  %v1238 = vunpack.c.h.b16 %v122
  %v1239 = vunpack.c.l.b16 %v123
  %v1240 = vunpack.c.h.b16 %v123
  %v1241 = vunpack.c.l.b16 %v124
  %v1242 = vunpack.c.h.b16 %v124
  %v1243 = vunpack.c.l.b16 %v125
  %v1244 = vunpack.c.h.b16 %v125
  %v1245 = vunpack.c.l.b16 %v126
  %v1246 = vunpack.c.h.b16 %v126
  %v1247 = vunpack.c.l.b16 %v127
  %v1248 = vunpack.c.h.b16 %v127
  %v1249 = vunpack.c.l.b16 %v128
  %v1250 = vunpack.c.h.b16 %v128
  %v1251 = vunpack.c.l.b16 %v129
  %v1252 = vunpack.c.h.b16 %v129
  %v1253 = vunpack.c.l.b16 %v130
  %v1254 = vunpack.c.h.b16 %v130
  %v1255 = vunpack.c.l.b16 %v131
  %v1256 = vunpack.c.h.b16 %v131
  %v1257 = vunpack.c.l.b16 %v132
  %v1258 = vunpack.c.h.b16 %v132
  %v1259 = vunpack.c.l.b16 %v133
  %v1260 = vunpack.c.h.b16 %v133
  %v1261 = vunpack.c.l.b16 %v134
  %v1262 = vunpack.c.h.b16 %v134
  %v1263 = vunpack.c.l.b16 %v135
  %v1264 = vunpack.c.h.b16 %v135
  %v1265 = vunpack.c.l.b16 %v136
  %v1266 = vunpack.c.h.b16 %v136
  %v1267 = vunpack.c.l.b16 %v137
  %v1268 = vunpack.c.h.b16 %v137
  %v1269 = vunpack.c.l.b16 %v138
  %v1270 = vunpack.c.h.b16 %v138
  %v1271 = vunpack.c.l.b16 %v139
  %v1272 = vunpack.c.h.b16 %v139
  %v1273 = vunpack.c.l.b16 %v140
  %v1274 = vunpack.c.h.b16 %v140
  %v1275 = vunpack.c.l.b16 %v141
  %v1276 = vunpack.c.h.b16 %v141
  %v1277 = vunpack.c.l.b16 %v142
  %v1278 = vunpack.c.h.b16 %v142
  %v1279 = vunpack.c.l.b16 %v143
  %v1280 = vunpack.c.h.b16 %v143
  %v1281 = vunpack.c.l.b16 %v144
  %v1282 = vunpack.c.h.b16 %v144
  %v1283 = vunpack.c.l.b16 %v145
  %v1284 = vunpack.c.h.b16 %v145
  %v1285 = vunpack.c.l.b16 %v146
  %v1286 = vunpack.c.h.b16 %v146
  %v1287 = vunpack.c.l.b16 %v147
  %v1288 = vunpack.c.h.b16 %v147
  %v1289 = vunpack.c.l.b16 %v148
  %v1290 = vunpack.c.h.b16 %v148
  %v1291 = vunpack.c.l.b16 %v149
  %v1292 = vunpack.c.h.b16 %v149
  %v1293 = vunpack.c.l.b16 %v150
  %v1294 = vunpack.c.h.b16 %v150
  %v1295 = vunpack.c.l.b16 %v151
  %v1296 = vunpack.c.h.b16 %v151
  %v1297 = vunpack.c.l.b16 %v152
  %v1298 = vunpack.c.h.b16 %v152
  %v1299 = vunpack.c.l.b16 %v153
  %v1300 = vunpack.c.h.b16 %v153
  %v1301 = vunpack.c.l.b16 %v154
  %v1302 = vunpack.c.h.b16 %v154
  %v1303 = vunpack.c.l.b16 %v155
  %v1304 = vunpack.c.h.b16 %v155
  %v1305 = vunpack.c.l.b16 %v156
  %v1306 = vunpack.c.h.b16 %v156
  %v1307 = vunpack.c.l.b16 %v157
  %v1308 = vunpack.c.h.b16 %v157
  %v1309 = vunpack.c.l.b16 %v158
  %v1310 = vunpack.c.h.b16 %v158
  %v1311 = vunpack.c.l.b16 %v159
  %v1312 = vunpack.c.h.b16 %v159
  %v1313 = vunpack.c.l.b16 %v160
  %v1314 = vunpack.c.h.b16 %v160
  %v1315 = vunpack.c.l.b16 %v161
  %v1316 = vunpack.c.h.b16 %v161
  %v1317 = vunpack.c.l.b16 %v162
  %v1318 = vunpack.c.h.b16 %v162
  %v1319 = vunpack.c.l.b16 %v163
  %v1320 = vunpack.c.h.b16 %v163
  %v1321 = vunpack.c.l.b16 %v164
  %v1322 = vunpack.c.h.b16 %v164
  %v1323 = vunpack.c.l.b16 %v165
  %v1324 = vunpack.c.h.b16 %v165
  %v1325 = vunpack.c.l.b16 %v166
  %v1326 = vunpack.c.h.b16 %v166
  %v1327 = vunpack.c.l.b16 %v167
  %v1328 = vunpack.c.h.b16 %v167
  %v1329 = vunpack.c.l.b16 %v168
  %v1330 = vunpack.c.h.b16 %v168
  %v1331 = vunpack.c.l.b16 %v169
  %v1332 = vunpack.c.h.b16 %v169
  %v1333 = vunpack.c.l.b16 %v170
  %v1334 = vunpack.c.h.b16 %v170
  %v1335 = vunpack.c.l.b16 %v171
  %v1336 = vunpack.c.h.b16 %v171
  %v1337 = vunpack.c.l.b16 %v172
  %v1338 = vunpack.c.h.b16 %v172
  %v1339 = vunpack.c.l.b16 %v173
  %v1340 = vunpack.c.h.b16 %v173
  %v1341 = vunpack.c.l.b16 %v174
  %v1342 = vunpack.c.h.b16 %v174
  %v1343 = vunpack.c.l.b16 %v175
  %v1344 = vunpack.c.h.b16 %v175
  %v1345 = vunpack.c.l.b16 %v176
  %v1346 = vunpack.c.h.b16 %v176
  %v1347 = vunpack.c.l.b16 %v177
  %v1348 = vunpack.c.h.b16 %v177
  %v1349 = vunpack.c.l.b16 %v178
  %v1350 = vunpack.c.h.b16 %v178
  %v1351 = vunpack.c.l.b16 %v179
  %v1352 = vunpack.c.h.b16 %v179
  %v1353 = vunpack.c.l.b16 %v180
  %v1354 = vunpack.c.h.b16 %v180
  %v1355 = vunpack.c.l.b16 %v181
  %v1356 = vunpack.c.h.b16 %v181
  %v1357 = vunpack.c.l.b16 %v182
  %v1358 = vunpack.c.h.b16 %v182
  %v1359 = vunpack.c.l.b16 %v183
  %v1360 = vunpack.c.h.b16 %v183
  %v1361 = vunpack.c.l.b16 %v184
  %v1362 = vunpack.c.h.b16 %v184
  %v1363 = vunpack.c.l.b16 %v185
  %v1364 = vunpack.c.h.b16 %v185
  %v1365 = vunpack.c.l.b16 %v186
  %v1366 = vunpack.c.h.b16 %v186
  %v1367 = vunpack.c.l.b16 %v187
  %v1368 = vunpack.c.h.b16 %v187
  %v1369 = vunpack.c.l.b16 %v188
  %v1370 = vunpack.c.h.b16 %v188
  %v1371 = vunpack.c.l.b16 %v189
  %v1372 = vunpack.c.h.b16 %v189
  %v1373 = vunpack.c.l.b16 %v190
  %v1374 = vunpack.c.h.b16 %v190
  %v1375 = vunpack.c.l.b16 %v191
  %v1376 = vunpack.c.h.b16 %v191
  %v1377 = vunpack.c.l.b16 %v192
  %v1378 = vunpack.c.h.b16 %v192
  %v1379 = vunpack.c.l.b16 %v193
  %v1380 = vunpack.c.h.b16 %v193
  %v1381 = vunpack.c.l.b16 %v194
  %v1382 = vunpack.c.h.b16 %v194
  %v1383 = vunpack.c.l.b16 %v195
  %v1384 = vunpack.c.h.b16 %v195
  %v1385 = vunpack.c.l.b16 %v196
  %v1386 = vunpack.c.h.b16 %v196
  %v1387 = vunpack.c.l.b16 %v197
  %v1388 = vunpack.c.h.b16 %v197
  %v1389 = vunpack.c.l.b16 %v198
  %v1390 = vunpack.c.h.b16 %v198
  %v1391 = vunpack.c.l.b16 %v199
  %v1392 = vunpack.c.h.b16 %v199
  %v1393 = vunpack.c.l.b16 %v200
  %v1394 = vunpack.c.h.b16 %v200
  %v1395 = vunpack.c.l.b16 %v201
  %v1396 = vunpack.c.h.b16 %v201
  %v1397 = vunpack.c.l.b16 %v202
  %v1398 = vunpack.c.h.b16 %v202
  %v1399 = vunpack.c.l.b16 %v203
  %v1400 = vunpack.c.h.b16 %v203
  %v1401 = vunpack.c.l.b16 %v204
  %v1402 = vunpack.c.h.b16 %v204
  %v1403 = vunpack.c.l.b16 %v205
  %v1404 = vunpack.c.h.b16 %v205
  %v1405 = vunpack.c.l.b16 %v206
  %v1406 = vunpack.c.h.b16 %v206
  %v1407 = vunpack.c.l.b16 %v207
  %v1408 = vunpack.c.h.b16 %v207
  %v1409 = vunpack.c.l.b16 %v208
  %v1410 = vunpack.c.h.b16 %v208
  %v1411 = vunpack.c.l.b16 %v209
  %v1412 = vunpack.c.h.b16 %v209
  %v1413 = vunpack.c.l.b16 %v210
  %v1414 = vunpack.c.h.b16 %v210
  %v1415 = vunpack.c.l.b16 %v211
  %v1416 = vunpack.c.h.b16 %v211
  %v1417 = vunpack.c.l.b16 %v212
  %v1418 = vunpack.c.h.b16 %v212
  %v1419 = vunpack.c.l.b16 %v213
  %v1420 = vunpack.c.h.b16 %v213
  %v1421 = vunpack.c.l.b16 %v214
  %v1422 = vunpack.c.h.b16 %v214
  %v1423 = vunpack.c.l.b16 %v215
  %v1424 = vunpack.c.h.b16 %v215
  %v1425 = vunpack.c.l.b16 %v216
  %v1426 = vunpack.c.h.b16 %v216
  %v1427 = vunpack.c.l.b16 %v217
  %v1428 = vunpack.c.h.b16 %v217
  %v1429 = vunpack.c.l.b16 %v218
  %v1430 = vunpack.c.h.b16 %v218
  %v1431 = vunpack.c.l.b16 %v219
  %v1432 = vunpack.c.h.b16 %v219
  %v1433 = vunpack.c.l.b16 %v220
  %v1434 = vunpack.c.h.b16 %v220
  %v1435 = vunpack.c.l.b16 %v221
  %v1436 = vunpack.c.h.b16 %v221
  %v1437 = vunpack.c.l.b16 %v222
  %v1438 = vunpack.c.h.b16 %v222
  %v1439 = vunpack.c.l.b16 %v223
  %v1440 = vunpack.c.h.b16 %v223
  %v1441 = vunpack.c.l.b16 %v224
  %v1442 = vunpack.c.h.b16 %v224
  %v1443 = vunpack.c.l.b16 %v225
  %v1444 = vunpack.c.h.b16 %v225
  %v1445 = vunpack.c.l.b16 %v226
  %v1446 = vunpack.c.h.b16 %v226
  %v1447 = vunpack.c.l.b16 %v227
  %v1448 = vunpack.c.h.b16 %v227
  %v1449 = vunpack.c.l.b16 %v228
  %v1450 = vunpack.c.h.b16 %v228
  %v1451 = vunpack.c.l.b16 %v229
  %v1452 = vunpack.c.h.b16 %v229
  %v1453 = vunpack.c.l.b16 %v230
  %v1454 = vunpack.c.h.b16 %v230
  %v1455 = vunpack.c.l.b16 %v231
  %v1456 = vunpack.c.h.b16 %v231
  %v1457 = vunpack.c.l.b16 %v232
  %v1458 = vunpack.c.h.b16 %v232
  %v1459 = vunpack.c.l.b16 %v233
  %v1460 = vunpack.c.h.b16 %v233
  %v1461 = vunpack.c.l.b16 %v234
  %v1462 = vunpack.c.h.b16 %v234
  %v1463 = vunpack.c.l.b16 %v235
  %v1464 = vunpack.c.h.b16 %v235
  %v1465 = vunpack.c.l.b16 %v236
  %v1466 = vunpack.c.h.b16 %v236
  %v1467 = vunpack.c.l.b16 %v237
  %v1468 = vunpack.c.h.b16 %v237
  %v1469 = vunpack.c.l.b16 %v238
  %v1470 = vunpack.c.h.b16 %v238
  %v1471 = vunpack.c.l.b16 %v239
  %v1472 = vunpack.c.h.b16 %v239
  %v1473 = vunpack.c.l.b16 %v240
  %v1474 = vunpack.c.h.b16 %v240
  %v1475 = vunpack.c.l.b16 %v241
  %v1476 = vunpack.c.h.b16 %v241
  %v1477 = vunpack.c.l.b16 %v242
  %v1478 = vunpack.c.h.b16 %v242
  %v1479 = vunpack.c.l.b16 %v243
  %v1480 = vunpack.c.h.b16 %v243
  %v1481 = vunpack.c.l.b16 %v244
  %v1482 = vunpack.c.h.b16 %v244
  %v1483 = vunpack.c.l.b16 %v245
  %v1484 = vunpack.c.h.b16 %v245
  %v1485 = vunpack.c.l.b16 %v246
  %v1486 = vunpack.c.h.b16 %v246
  %v1487 = vunpack.c.l.b16 %v247
  %v1488 = vunpack.c.h.b16 %v247
  %v1489 = vunpack.c.l.b16 %v248
  %v1490 = vunpack.c.h.b16 %v248
  %v1491 = vunpack.c.l.b16 %v249
  %v1492 = vunpack.c.h.b16 %v249
  %v1493 = vunpack.c.l.b16 %v250
  %v1494 = vunpack.c.h.b16 %v250
  %v1495 = vunpack.c.l.b16 %v251
  %v1496 = vunpack.c.h.b16 %v251
  %v1497 = vunpack.c.l.b16 %v252
  %v1498 = vunpack.c.h.b16 %v252
  %v1499 = vunpack.c.l.b16 %v253
  %v1500 = vunpack.c.h.b16 %v253
  %v1501 = vunpack.c.l.b16 %v254
  %v1502 = vunpack.c.h.b16 %v254
  %v1503 = vunpack.c.l.b16 %v255
  %v1504 = vunpack.c.h.b16 %v255
  %v1505 = vunpack.c.l.b16 %v256
  %v1506 = vunpack.c.h.b16 %v256
  %v1507 = vunpack.c.l.b16 %v257
  %v1508 = vunpack.c.h.b16 %v257
  %v1509 = vunpack.c.l.b16 %v258
  %v1510 = vunpack.c.h.b16 %v258
  %v1511 = vunpack.c.l.b16 %v259
  %v1512 = vunpack.c.h.b16 %v259
  %v1513 = vunpack.c.l.b16 %v260
  %v1514 = vunpack.c.h.b16 %v260
  %v1515 = vunpack.c.l.b16 %v261
  %v1516 = vunpack.c.h.b16 %v261
  %v1517 = vunpack.c.l.b16 %v262
  %v1518 = vunpack.c.h.b16 %v262
  %v1519 = vunpack.c.l.b16 %v263
  %v1520 = vunpack.c.h.b16 %v263
  %v1521 = vunpack.c.l.b16 %v264
  %v1522 = vunpack.c.h.b16 %v264
  %v1523 = vunpack.c.l.b16 %v265
  %v1524 = vunpack.c.h.b16 %v265
  %v1525 = vunpack.c.l.b16 %v266
  %v1526 = vunpack.c.h.b16 %v266
  %v1527 = vunpack.c.l.b16 %v267
  %v1528 = vunpack.c.h.b16 %v267
  %v1529 = vunpack.c.l.b16 %v268
  %v1530 = vunpack.c.h.b16 %v268
  %v1531 = vunpack.c.l.b16 %v269
  %v1532 = vunpack.c.h.b16 %v269
  %v1533 = vunpack.c.l.b16 %v270
  %v1534 = vunpack.c.h.b16 %v270
  %v1535 = vunpack.c.l.b16 %v271
  %v1536 = vunpack.c.h.b16 %v271
  %v1537 = vunpack.c.l.b16 %v272
  %v1538 = vunpack.c.h.b16 %v272
  %v1539 = vunpack.c.l.b16 %v273
  %v1540 = vunpack.c.h.b16 %v273
  %v1541 = vunpack.c.l.b16 %v274
  %v1542 = vunpack.c.h.b16 %v274
  %v1543 = vunpack.c.l.b16 %v275
  %v1544 = vunpack.c.h.b16 %v275
  %v1545 = vunpack.c.l.b16 %v276
  %v1546 = vunpack.c.h.b16 %v276
  %v1547 = vunpack.c.l.b16 %v277
  %v1548 = vunpack.c.h.b16 %v277
  %v1549 = vunpack.c.l.b16 %v278
  %v1550 = vunpack.c.h.b16 %v278
  %v1551 = vunpack.c.l.b16 %v279
  %v1552 = vunpack.c.h.b16 %v279
  %v1553 = vunpack.c.l.b16 %v280
  %v1554 = vunpack.c.h.b16 %v280
  %v1555 = vunpack.c.l.b16 %v281
  %v1556 = vunpack.c.h.b16 %v281
  %v1557 = vunpack.c.l.b16 %v282
  %v1558 = vunpack.c.h.b16 %v282
  %v1559 = vunpack.c.l.b16 %v283
  %v1560 = vunpack.c.h.b16 %v283
  %v1561 = vunpack.c.l.b16 %v284
  %v1562 = vunpack.c.h.b16 %v284
  %v1563 = vunpack.c.l.b16 %v285
  %v1564 = vunpack.c.h.b16 %v285
  %v1565 = vunpack.c.l.b16 %v286
  %v1566 = vunpack.c.h.b16 %v286
  %v1567 = vunpack.c.l.b16 %v287
  %v1568 = vunpack.c.h.b16 %v287
  %v1569 = vunpack.c.l.b16 %v288
  %v1570 = vunpack.c.h.b16 %v288
  %v1571 = vunpack.c.l.b16 %v289
  %v1572 = vunpack.c.h.b16 %v289
  %v1573 = vunpack.c.l.b16 %v290
  %v1574 = vunpack.c.h.b16 %v290
  %v1575 = vunpack.c.l.b16 %v291
  %v1576 = vunpack.c.h.b16 %v291
  %v1577 = vunpack.c.l.b16 %v292
  %v1578 = vunpack.c.h.b16 %v292
  %v1579 = vunpack.c.l.b16 %v293
  %v1580 = vunpack.c.h.b16 %v293
  %v1581 = vunpack.c.l.b16 %v294
  %v1582 = vunpack.c.h.b16 %v294
  %v1583 = vunpack.c.l.b16 %v295
  %v1584 = vunpack.c.h.b16 %v295
  %v1585 = vunpack.c.l.b16 %v296
  %v1586 = vunpack.c.h.b16 %v296
  %v1587 = vpack.c.b16 %v1079, %v1075
  %v1588 = vpack.c.b16 %v1080, %v1076
  %v1589 = vpack.c.b16 %v1081, %v1077
  %v1590 = vpack.c.b16 %v1082, %v1078
  %v1591 = vpack.c.b16 %v1087, %v1083
  %v1592 = vpack.c.b16 %v1088, %v1084
  %v1593 = vpack.c.b16 %v1089, %v1085
  %v1594 = vpack.c.b16 %v1090, %v1086
  %v1595 = vpack.c.b16 %v1095, %v1091
  %v1596 = vpack.c.b16 %v1096, %v1092
  %v1597 = vpack.c.b16 %v1097, %v1093
  %v1598 = vpack.c.b16 %v1098, %v1094
  %v1599 = vpack.c.b16 %v1103, %v1099
  %v1600 = vpack.c.b16 %v1104, %v1100
  %v1601 = vpack.c.b16 %v1105, %v1101
  %v1602 = vpack.c.b16 %v1106, %v1102
  %v1603 = vpack.c.b16 %v1111, %v1107
  %v1604 = vpack.c.b16 %v1112, %v1108
  %v1605 = vpack.c.b16 %v1113, %v1109
  %v1606 = vpack.c.b16 %v1114, %v1110
  %v1607 = vpack.c.b16 %v1119, %v1115
  %v1608 = vpack.c.b16 %v1120, %v1116
  %v1609 = vpack.c.b16 %v1121, %v1117
  %v1610 = vpack.c.b16 %v1122, %v1118
  %v1611 = vpack.c.b16 %v1127, %v1123
  %v1612 = vpack.c.b16 %v1128, %v1124
  %v1613 = vpack.c.b16 %v1129, %v1125
  %v1614 = vpack.c.b16 %v1130, %v1126
  %v1615 = vpack.c.b16 %v1135, %v1131
  %v1616 = vpack.c.b16 %v1136, %v1132
  %v1617 = vpack.c.b16 %v1137, %v1133
  %v1618 = vpack.c.b16 %v1138, %v1134
  %v1619 = vpack.c.b16 %v1143, %v1139
  %v1620 = vpack.c.b16 %v1144, %v1140
  %v1621 = vpack.c.b16 %v1145, %v1141
  %v1622 = vpack.c.b16 %v1146, %v1142
  %v1623 = vpack.c.b16 %v1151, %v1147
  %v1624 = vpack.c.b16 %v1152, %v1148
  %v1625 = vpack.c.b16 %v1153, %v1149
  %v1626 = vpack.c.b16 %v1154, %v1150
  %v1627 = vpack.c.b16 %v1159, %v1155
  %v1628 = vpack.c.b16 %v1160, %v1156
  %v1629 = vpack.c.b16 %v1161, %v1157
  %v1630 = vpack.c.b16 %v1162, %v1158
  %v1631 = vpack.c.b16 %v1167, %v1163
  %v1632 = vpack.c.b16 %v1168, %v1164
  %v1633 = vpack.c.b16 %v1169, %v1165
  %v1634 = vpack.c.b16 %v1170, %v1166
  %v1635 = vpack.c.b16 %v1175, %v1171
  %v1636 = vpack.c.b16 %v1176, %v1172
  %v1637 = vpack.c.b16 %v1177, %v1173
  %v1638 = vpack.c.b16 %v1178, %v1174
  %v1639 = vpack.c.b16 %v1183, %v1179
  %v1640 = vpack.c.b16 %v1184, %v1180
  %v1641 = vpack.c.b16 %v1185, %v1181
  %v1642 = vpack.c.b16 %v1186, %v1182
  %v1643 = vpack.c.b16 %v1191, %v1187
  %v1644 = vpack.c.b16 %v1192, %v1188
  %v1645 = vpack.c.b16 %v1193, %v1189
  %v1646 = vpack.c.b16 %v1194, %v1190
  %v1647 = vpack.c.b16 %v1199, %v1195
  %v1648 = vpack.c.b16 %v1200, %v1196
  %v1649 = vpack.c.b16 %v1201, %v1197
  %v1650 = vpack.c.b16 %v1202, %v1198
  %v1651 = vpack.c.b16 %v1207, %v1203
  %v1652 = vpack.c.b16 %v1208, %v1204
  %v1653 = vpack.c.b16 %v1209, %v1205
  %v1654 = vpack.c.b16 %v1210, %v1206
  %v1655 = vpack.c.b16 %v1215, %v1211
  %v1656 = vpack.c.b16 %v1216, %v1212
  %v1657 = vpack.c.b16 %v1217, %v1213
  %v1658 = vpack.c.b16 %v1218, %v1214
  %v1659 = vpack.c.b16 %v1223, %v1219
  %v1660 = vpack.c.b16 %v1224, %v1220
  %v1661 = vpack.c.b16 %v1225, %v1221
  %v1662 = vpack.c.b16 %v1226, %v1222
  %v1663 = vpack.c.b16 %v1231, %v1227
  %v1664 = vpack.c.b16 %v1232, %v1228
  %v1665 = vpack.c.b16 %v1233, %v1229
  %v1666 = vpack.c.b16 %v1234, %v1230
  %v1667 = vpack.c.b16 %v1239, %v1235
  %v1668 = vpack.c.b16 %v1240, %v1236
  %v1669 = vpack.c.b16 %v1241, %v1237
  %v1670 = vpack.c.b16 %v1242, %v1238
  %v1671 = vpack.c.b16 %v1247, %v1243
  %v1672 = vpack.c.b16 %v1248, %v1244
  %v1673 = vpack.c.b16 %v1249, %v1245
  %v1674 = vpack.c.b16 %v1250, %v1246
  %v1675 = vpack.c.b16 %v1255, %v1251
  %v1676 = vpack.c.b16 %v1256, %v1252
  %v1677 = vpack.c.b16 %v1257, %v1253
  %v1678 = vpack.c.b16 %v1258, %v1254
  %v1679 = vpack.c.b16 %v1263, %v1259
  %v1680 = vpack.c.b16 %v1264, %v1260
  %v1681 = vpack.c.b16 %v1265, %v1261
  %v1682 = vpack.c.b16 %v1266, %v1262
  %v1683 = vpack.c.b16 %v1271, %v1267
  %v1684 = vpack.c.b16 %v1272, %v1268
  %v1685 = vpack.c.b16 %v1273, %v1269
  %v1686 = vpack.c.b16 %v1274, %v1270
  %v1687 = vpack.c.b16 %v1279, %v1275
  %v1688 = vpack.c.b16 %v1280, %v1276
  %v1689 = vpack.c.b16 %v1281, %v1277
  %v1690 = vpack.c.b16 %v1282, %v1278
  %v1691 = vpack.c.b16 %v1287, %v1283
  %v1692 = vpack.c.b16 %v1288, %v1284
  %v1693 = vpack.c.b16 %v1289, %v1285
  %v1694 = vpack.c.b16 %v1290, %v1286
  %v1695 = vpack.c.b16 %v1295, %v1291
  %v1696 = vpack.c.b16 %v1296, %v1292
  %v1697 = vpack.c.b16 %v1297, %v1293
  %v1698 = vpack.c.b16 %v1298, %v1294
  %v1699 = vpack.c.b16 %v1303, %v1299
  %v1700 = vpack.c.b16 %v1304, %v1300
  %v1701 = vpack.c.b16 %v1305, %v1301
  %v1702 = vpack.c.b16 %v1306, %v1302
  %v1703 = vpack.c.b16 %v1311, %v1307
  %v1704 = vpack.c.b16 %v1312, %v1308
  %v1705 = vpack.c.b16 %v1313, %v1309
  %v1706 = vpack.c.b16 %v1314, %v1310
  %v1707 = vpack.c.b16 %v1319, %v1315
  %v1708 = vpack.c.b16 %v1320, %v1316
  %v1709 = vpack.c.b16 %v1321, %v1317
  %v1710 = vpack.c.b16 %v1322, %v1318
  %v1711 = vpack.c.b16 %v1327, %v1323
  %v1712 = vpack.c.b16 %v1328, %v1324
  %v1713 = vpack.c.b16 %v1329, %v1325
  %v1714 = vpack.c.b16 %v1330, %v1326
  %v1715 = vpack.c.b16 %v1335, %v1331
  %v1716 = vpack.c.b16 %v1336, %v1332
  %v1717 = vpack.c.b16 %v1337, %v1333
  %v1718 = vpack.c.b16 %v1338, %v1334
  %v1719 = vpack.c.b16 %v1343, %v1339
  %v1720 = vpack.c.b16 %v1344, %v1340
  %v1721 = vpack.c.b16 %v1345, %v1341
  %v1722 = vpack.c.b16 %v1346, %v1342
  %v1723 = vpack.c.b16 %v1351, %v1347
  %v1724 = vpack.c.b16 %v1352, %v1348
  %v1725 = vpack.c.b16 %v1353, %v1349
  %v1726 = vpack.c.b16 %v1354, %v1350
  %v1727 = vpack.c.b16 %v1359, %v1355
  %v1728 = vpack.c.b16 %v1360, %v1356
  %v1729 = vpack.c.b16 %v1361, %v1357
  %v1730 = vpack.c.b16 %v1362, %v1358
  %v1731 = vpack.c.b16 %v1367, %v1363
  %v1732 = vpack.c.b16 %v1368, %v1364
  %v1733 = vpack.c.b16 %v1369, %v1365
  %v1734 = vpack.c.b16 %v1370, %v1366
  %v1735 = vpack.c.b16 %v1375, %v1371
  %v1736 = vpack.c.b16 %v1376, %v1372
  %v1737 = vpack.c.b16 %v1377, %v1373
  %v1738 = vpack.c.b16 %v1378, %v1374
  %v1739 = vpack.c.b16 %v1383, %v1379
  %v1740 = vpack.c.b16 %v1384, %v1380
  %v1741 = vpack.c.b16 %v1385, %v1381
  %v1742 = vpack.c.b16 %v1386, %v1382
  %v1743 = vpack.c.b16 %v1391, %v1387
  %v1744 = vpack.c.b16 %v1392, %v1388
  %v1745 = vpack.c.b16 %v1393, %v1389
  %v1746 = vpack.c.b16 %v1394, %v1390
  %v1747 = vpack.c.b16 %v1399, %v1395
  %v1748 = vpack.c.b16 %v1400, %v1396
  %v1749 = vpack.c.b16 %v1401, %v1397
  %v1750 = vpack.c.b16 %v1402, %v1398
  %v1751 = vpack.c.b16 %v1407, %v1403
  %v1752 = vpack.c.b16 %v1408, %v1404
  %v1753 = vpack.c.b16 %v1409, %v1405
  %v1754 = vpack.c.b16 %v1410, %v1406
  %v1755 = vpack.c.b16 %v1415, %v1411
  %v1756 = vpack.c.b16 %v1416, %v1412
  %v1757 = vpack.c.b16 %v1417, %v1413
  %v1758 = vpack.c.b16 %v1418, %v1414
  %v1759 = vpack.c.b16 %v1423, %v1419
  %v1760 = vpack.c.b16 %v1424, %v1420
  %v1761 = vpack.c.b16 %v1425, %v1421
  %v1762 = vpack.c.b16 %v1426, %v1422
  %v1763 = vpack.c.b16 %v1431, %v1427
  %v1764 = vpack.c.b16 %v1432, %v1428
  %v1765 = vpack.c.b16 %v1433, %v1429
  %v1766 = vpack.c.b16 %v1434, %v1430
  %v1767 = vpack.c.b16 %v1439, %v1435
  %v1768 = vpack.c.b16 %v1440, %v1436
  %v1769 = vpack.c.b16 %v1441, %v1437
  %v1770 = vpack.c.b16 %v1442, %v1438
  %v1771 = vpack.c.b16 %v1447, %v1443
  %v1772 = vpack.c.b16 %v1448, %v1444
  %v1773 = vpack.c.b16 %v1449, %v1445
  %v1774 = vpack.c.b16 %v1450, %v1446
  %v1775 = vpack.c.b16 %v1455, %v1451
  %v1776 = vpack.c.b16 %v1456, %v1452
  %v1777 = vpack.c.b16 %v1457, %v1453
  %v1778 = vpack.c.b16 %v1458, %v1454
  %v1779 = vpack.c.b16 %v1463, %v1459
  %v1780 = vpack.c.b16 %v1464, %v1460
  %v1781 = vpack.c.b16 %v1465, %v1461
  %v1782 = vpack.c.b16 %v1466, %v1462
  %v1783 = vpack.c.b16 %v1471, %v1467
  %v1784 = vpack.c.b16 %v1472, %v1468
  %v1785 = vpack.c.b16 %v1473, %v1469
  %v1786 = vpack.c.b16 %v1474, %v1470
  %v1787 = vpack.c.b16 %v1479, %v1475
  %v1788 = vpack.c.b16 %v1480, %v1476
  %v1789 = vpack.c.b16 %v1481, %v1477
  %v1790 = vpack.c.b16 %v1482, %v1478
  %v1791 = vpack.c.b16 %v1487, %v1483
  %v1792 = vpack.c.b16 %v1488, %v1484
  %v1793 = vpack.c.b16 %v1489, %v1485
  %v1794 = vpack.c.b16 %v1490, %v1486
  %v1795 = vpack.c.b16 %v1495, %v1491
  %v1796 = vpack.c.b16 %v1496, %v1492
  %v1797 = vpack.c.b16 %v1497, %v1493
  %v1798 = vpack.c.b16 %v1498, %v1494
  %v1799 = vpack.c.b16 %v1503, %v1499
  %v1800 = vpack.c.b16 %v1504, %v1500
  %v1801 = vpack.c.b16 %v1505, %v1501
  %v1802 = vpack.c.b16 %v1506, %v1502
  %v1803 = vpack.c.b16 %v1511, %v1507
  %v1804 = vpack.c.b16 %v1512, %v1508
  %v1805 = vpack.c.b16 %v1513, %v1509
  %v1806 = vpack.c.b16 %v1514, %v1510
  %v1807 = vpack.c.b16 %v1519, %v1515
  %v1808 = vpack.c.b16 %v1520, %v1516
  %v1809 = vpack.c.b16 %v1521, %v1517
  %v1810 = vpack.c.b16 %v1522, %v1518
  %v1811 = vpack.c.b16 %v1527, %v1523
  %v1812 = vpack.c.b16 %v1528, %v1524
  %v1813 = vpack.c.b16 %v1529, %v1525
  %v1814 = vpack.c.b16 %v1530, %v1526
  %v1815 = vpack.c.b16 %v1535, %v1531
  %v1816 = vpack.c.b16 %v1536, %v1532
  %v1817 = vpack.c.b16 %v1537, %v1533
  %v1818 = vpack.c.b16 %v1538, %v1534
  %v1819 = vpack.c.b16 %v1543, %v1539
  %v1820 = vpack.c.b16 %v1544, %v1540
  %v1821 = vpack.c.b16 %v1545, %v1541
  %v1822 = vpack.c.b16 %v1546, %v1542
  %v1823 = vpack.c.b16 %v1551, %v1547
  %v1824 = vpack.c.b16 %v1552, %v1548
  %v1825 = vpack.c.b16 %v1553, %v1549
  %v1826 = vpack.c.b16 %v1554, %v1550
  %v1827 = vpack.c.b16 %v1559, %v1555
  %v1828 = vpack.c.b16 %v1560, %v1556
  %v1829 = vpack.c.b16 %v1561, %v1557
  %v1830 = vpack.c.b16 %v1562, %v1558
  %v1831 = vpack.c.b16 %v1567, %v1563
  %v1832 = vpack.c.b16 %v1568, %v1564
  %v1833 = vpack.c.b16 %v1569, %v1565
  %v1834 = vpack.c.b16 %v1570, %v1566
  %v1835 = vpack.c.b16 %v1575, %v1571
  %v1836 = vpack.c.b16 %v1576, %v1572
  %v1837 = vpack.c.b16 %v1577, %v1573
  %v1838 = vpack.c.b16 %v1578, %v1574
  %v1839 = vpack.c.b16 %v1583, %v1579
  %v1840 = vpack.c.b16 %v1584, %v1580
  %v1841 = vpack.c.b16 %v1585, %v1581
  %v1842 = vpack.c.b16 %v1586, %v1582
  %2099 = vmatprep.subr.bf16.mxu0 %v1588
  %2100 = vmatpush1.bf16.msra.mxu0 %v1587
  %2101 = vmatprep.subr.bf16.mxu0 %v1592
  %2102 = vmatpush1.bf16.msra.mxu0 %v1591
  %2103 = vmatprep.subr.bf16.mxu0 %v1596
  %2104 = vmatpush1.bf16.msra.mxu0 %v1595
  %2105 = vmatprep.subr.bf16.mxu0 %v1600
  %2106 = vmatpush1.bf16.msra.mxu0 %v1599
  %2107 = vmatprep.subr.bf16.mxu0 %v1604
  %2108 = vmatpush1.bf16.msra.mxu0 %v1603
  %2109 = vmatprep.subr.bf16.mxu0 %v1608
  %2110 = vmatpush1.bf16.msra.mxu0 %v1607
  %2111 = vmatprep.subr.bf16.mxu0 %v1612
  %2112 = vmatpush1.bf16.msra.mxu0 %v1611
  %2113 = vmatprep.subr.bf16.mxu0 %v1616
  %2114 = vmatpush1.bf16.msra.mxu0 %v1615
  %2115 = vmatprep.subr.bf16.mxu0 %v1620
  %2116 = vmatpush1.bf16.msra.mxu0 %v1619
  %2117 = vmatprep.subr.bf16.mxu0 %v1624
  %2118 = vmatpush1.bf16.msra.mxu0 %v1623
  %2119 = vmatprep.subr.bf16.mxu0 %v1628
  %2120 = vmatpush1.bf16.msra.mxu0 %v1627
  %2121 = vmatprep.subr.bf16.mxu0 %v1632
  %2122 = vmatpush1.bf16.msra.mxu0 %v1631
  %2123 = vmatprep.subr.bf16.mxu0 %v1636
  %2124 = vmatpush1.bf16.msra.mxu0 %v1635
  %2125 = vmatprep.subr.bf16.mxu0 %v1640
  %2126 = vmatpush1.bf16.msra.mxu0 %v1639
  %2127 = vmatprep.subr.bf16.mxu0 %v1644
  %2128 = vmatpush1.bf16.msra.mxu0 %v1643
  %2129 = vmatprep.subr.bf16.mxu0 %v1648
  %2130 = vmatpush1.bf16.msra.mxu0 %v1647
  %2131 = vmatprep.mubr.bf16.mxu0 %v804
  %2132 = vmatmul.mubr.bf16.gmra.mrb[0].mxu0 %v803
  %v2133 = vpop.f32.mrb[0].mxu0
  %v2134 = vadd.f32 %v728, %v2133
  %v2135 = vpop.f32.mrb[0].mxu0
  %v2136 = vadd.f32 %v730, %v2135
  %v2137 = vpop.f32.mrb[0].mxu0
  %v2138 = vadd.f32 %v732, %v2137
  %v2139 = vpop.f32.mrb[0].mxu0
  %v2140 = vadd.f32 %v734, %v2139
  %2141 = vdwg.mxu0
  %2142 = vmatprep.subr.bf16.mxu0 %v1652
  %2143 = vmatpush1.bf16.msra.mxu0 %v1651
  %2144 = vmatprep.subr.bf16.mxu0 %v1656
  %2145 = vmatpush1.bf16.msra.mxu0 %v1655
  %2146 = vmatprep.subr.bf16.mxu0 %v1660
  %2147 = vmatpush1.bf16.msra.mxu0 %v1659
  %2148 = vmatprep.subr.bf16.mxu0 %v1664
  %2149 = vmatpush1.bf16.msra.mxu0 %v1663
  %2150 = vmatprep.subr.bf16.mxu0 %v1668
  %2151 = vmatpush1.bf16.msra.mxu0 %v1667
  %2152 = vmatprep.subr.bf16.mxu0 %v1672
  %2153 = vmatpush1.bf16.msra.mxu0 %v1671
  %2154 = vmatprep.subr.bf16.mxu0 %v1676
  %2155 = vmatpush1.bf16.msra.mxu0 %v1675
  %2156 = vmatprep.subr.bf16.mxu0 %v1680
  %2157 = vmatpush1.bf16.msra.mxu0 %v1679
  %2158 = vmatprep.subr.bf16.mxu0 %v1684
  %2159 = vmatpush1.bf16.msra.mxu0 %v1683
  %2160 = vmatprep.subr.bf16.mxu0 %v1688
  %2161 = vmatpush1.bf16.msra.mxu0 %v1687
  %2162 = vmatprep.subr.bf16.mxu0 %v1692
  %2163 = vmatpush1.bf16.msra.mxu0 %v1691
  %2164 = vmatprep.subr.bf16.mxu0 %v1696
  %2165 = vmatpush1.bf16.msra.mxu0 %v1695
  %2166 = vmatprep.subr.bf16.mxu0 %v1700
  %2167 = vmatpush1.bf16.msra.mxu0 %v1699
  %2168 = vmatprep.subr.bf16.mxu0 %v1704
  %2169 = vmatpush1.bf16.msra.mxu0 %v1703
  %2170 = vmatprep.subr.bf16.mxu0 %v1708
  %2171 = vmatpush1.bf16.msra.mxu0 %v1707
  %2172 = vmatprep.subr.bf16.mxu0 %v1712
  %2173 = vmatpush1.bf16.msra.mxu0 %v1711
  %2174 = vmatprep.mubr.bf16.mxu0 %v806
  %2175 = vmatmul.mubr.bf16.gmra.mrb[0].mxu0 %v805
  %v2176 = vpop.f32.mrb[0].mxu0
  %v2177 = vadd.f32 %v2134, %v2176
  %v2178 = vpop.f32.mrb[0].mxu0
  %v2179 = vadd.f32 %v2136, %v2178
  %v2180 = vpop.f32.mrb[0].mxu0
  %v2181 = vadd.f32 %v2138, %v2180
  %v2182 = vpop.f32.mrb[0].mxu0
  %v2183 = vadd.f32 %v2140, %v2182
  %2184 = vdwg.mxu0
  %2185 = vmatprep.subr.bf16.mxu0 %v1716
  %2186 = vmatpush1.bf16.msra.mxu0 %v1715
  %2187 = vmatprep.subr.bf16.mxu0 %v1720
  %2188 = vmatpush1.bf16.msra.mxu0 %v1719
  %2189 = vmatprep.subr.bf16.mxu0 %v1724
  %2190 = vmatpush1.bf16.msra.mxu0 %v1723
  %2191 = vmatprep.subr.bf16.mxu0 %v1728
  %2192 = vmatpush1.bf16.msra.mxu0 %v1727
  %2193 = vmatprep.subr.bf16.mxu0 %v1732
  %2194 = vmatpush1.bf16.msra.mxu0 %v1731
  %2195 = vmatprep.subr.bf16.mxu0 %v1736
  %2196 = vmatpush1.bf16.msra.mxu0 %v1735
  %2197 = vmatprep.subr.bf16.mxu0 %v1740
  %2198 = vmatpush1.bf16.msra.mxu0 %v1739
  %2199 = vmatprep.subr.bf16.mxu0 %v1744
  %2200 = vmatpush1.bf16.msra.mxu0 %v1743
  %2201 = vmatprep.subr.bf16.mxu0 %v1748
  %2202 = vmatpush1.bf16.msra.mxu0 %v1747
  %2203 = vmatprep.subr.bf16.mxu0 %v1752
  %2204 = vmatpush1.bf16.msra.mxu0 %v1751
  %2205 = vmatprep.subr.bf16.mxu0 %v1756
  %2206 = vmatpush1.bf16.msra.mxu0 %v1755
  %2207 = vmatprep.subr.bf16.mxu0 %v1760
  %2208 = vmatpush1.bf16.msra.mxu0 %v1759
  %2209 = vmatprep.subr.bf16.mxu0 %v1764
  %2210 = vmatpush1.bf16.msra.mxu0 %v1763
  %2211 = vmatprep.subr.bf16.mxu0 %v1768
  %2212 = vmatpush1.bf16.msra.mxu0 %v1767
  %2213 = vmatprep.subr.bf16.mxu0 %v1772
  %2214 = vmatpush1.bf16.msra.mxu0 %v1771
  %2215 = vmatprep.subr.bf16.mxu0 %v1776
  %2216 = vmatpush1.bf16.msra.mxu0 %v1775
  %2217 = vmatprep.mubr.bf16.mxu0 %v808
  %2218 = vmatmul.mubr.bf16.gmra.mrb[0].mxu0 %v807
  %v2219 = vpop.f32.mrb[0].mxu0
  %v2220 = vadd.f32 %v2177, %v2219
  %v2221 = vpop.f32.mrb[0].mxu0
  %v2222 = vadd.f32 %v2179, %v2221
  %v2223 = vpop.f32.mrb[0].mxu0
  %v2224 = vadd.f32 %v2181, %v2223
  %v2225 = vpop.f32.mrb[0].mxu0
  %v2226 = vadd.f32 %v2183, %v2225
  %2227 = vdwg.mxu0
  %2228 = vmatprep.subr.bf16.mxu0 %v1780
  %2229 = vmatpush1.bf16.msra.mxu0 %v1779
  %2230 = vmatprep.subr.bf16.mxu0 %v1784
  %2231 = vmatpush1.bf16.msra.mxu0 %v1783
  %2232 = vmatprep.subr.bf16.mxu0 %v1788
  %2233 = vmatpush1.bf16.msra.mxu0 %v1787
  %2234 = vmatprep.subr.bf16.mxu0 %v1792
  %2235 = vmatpush1.bf16.msra.mxu0 %v1791
  %2236 = vmatprep.subr.bf16.mxu0 %v1796
  %2237 = vmatpush1.bf16.msra.mxu0 %v1795
  %2238 = vmatprep.subr.bf16.mxu0 %v1800
  %2239 = vmatpush1.bf16.msra.mxu0 %v1799
  %2240 = vmatprep.subr.bf16.mxu0 %v1804
  %2241 = vmatpush1.bf16.msra.mxu0 %v1803
  %2242 = vmatprep.subr.bf16.mxu0 %v1808
  %2243 = vmatpush1.bf16.msra.mxu0 %v1807
  %2244 = vmatprep.subr.bf16.mxu0 %v1812
  %2245 = vmatpush1.bf16.msra.mxu0 %v1811
  %2246 = vmatprep.subr.bf16.mxu0 %v1816
  %2247 = vmatpush1.bf16.msra.mxu0 %v1815
  %2248 = vmatprep.subr.bf16.mxu0 %v1820
  %2249 = vmatpush1.bf16.msra.mxu0 %v1819
  %2250 = vmatprep.subr.bf16.mxu0 %v1824
  %2251 = vmatpush1.bf16.msra.mxu0 %v1823
  %2252 = vmatprep.subr.bf16.mxu0 %v1828
  %2253 = vmatpush1.bf16.msra.mxu0 %v1827
  %2254 = vmatprep.subr.bf16.mxu0 %v1832
  %2255 = vmatpush1.bf16.msra.mxu0 %v1831
  %2256 = vmatprep.subr.bf16.mxu0 %v1836
  %2257 = vmatpush1.bf16.msra.mxu0 %v1835
  %2258 = vmatprep.subr.bf16.mxu0 %v1840
  %2259 = vmatpush1.bf16.msra.mxu0 %v1839
  %2260 = vmatprep.mubr.bf16.mxu0 %v810
  %2261 = vmatmul.mubr.bf16.gmra.mrb[0].mxu0 %v809
  %v2262 = vpop.f32.mrb[0].mxu0
  %v2263 = vadd.f32 %v2220, %v2262
  %v2264 = vpop.f32.mrb[0].mxu0
  %v2265 = vadd.f32 %v2222, %v2264
  %v2266 = vpop.f32.mrb[0].mxu0
  %v2267 = vadd.f32 %v2224, %v2266
  %v2268 = vpop.f32.mrb[0].mxu0
  %v2269 = vadd.f32 %v2226, %v2268
  %2270 = vdwg.mxu0
  %2271 = vmatprep.subr.bf16.mxu0 %v1590
  %2272 = vmatpush1.bf16.msra.mxu0 %v1589
  %2273 = vmatprep.subr.bf16.mxu0 %v1594
  %2274 = vmatpush1.bf16.msra.mxu0 %v1593
  %2275 = vmatprep.subr.bf16.mxu0 %v1598
  %2276 = vmatpush1.bf16.msra.mxu0 %v1597
  %2277 = vmatprep.subr.bf16.mxu0 %v1602
  %2278 = vmatpush1.bf16.msra.mxu0 %v1601
  %2279 = vmatprep.subr.bf16.mxu0 %v1606
  %2280 = vmatpush1.bf16.msra.mxu0 %v1605
  %2281 = vmatprep.subr.bf16.mxu0 %v1610
  %2282 = vmatpush1.bf16.msra.mxu0 %v1609
  %2283 = vmatprep.subr.bf16.mxu0 %v1614
  %2284 = vmatpush1.bf16.msra.mxu0 %v1613
  %2285 = vmatprep.subr.bf16.mxu0 %v1618
  %2286 = vmatpush1.bf16.msra.mxu0 %v1617
  %2287 = vmatprep.subr.bf16.mxu0 %v1622
  %2288 = vmatpush1.bf16.msra.mxu0 %v1621
  %2289 = vmatprep.subr.bf16.mxu0 %v1626
  %2290 = vmatpush1.bf16.msra.mxu0 %v1625
  %2291 = vmatprep.subr.bf16.mxu0 %v1630
  %2292 = vmatpush1.bf16.msra.mxu0 %v1629
  %2293 = vmatprep.subr.bf16.mxu0 %v1634
  %2294 = vmatpush1.bf16.msra.mxu0 %v1633
  %2295 = vmatprep.subr.bf16.mxu0 %v1638
  %2296 = vmatpush1.bf16.msra.mxu0 %v1637
  %2297 = vmatprep.subr.bf16.mxu0 %v1642
  %2298 = vmatpush1.bf16.msra.mxu0 %v1641
  %2299 = vmatprep.subr.bf16.mxu0 %v1646
  %2300 = vmatpush1.bf16.msra.mxu0 %v1645
  %2301 = vmatprep.subr.bf16.mxu0 %v1650
  %2302 = vmatpush1.bf16.msra.mxu0 %v1649
  %2303 = vmatprep.mubr.bf16.mxu0 %v804
  %2304 = vmatmul.mubr.bf16.gmra.mrb[0].mxu0 %v803
  %v2305 = vpop.f32.mrb[0].mxu0
  %v2306 = vadd.f32 %v771, %v2305
  %v2307 = vpop.f32.mrb[0].mxu0
  %v2308 = vadd.f32 %v773, %v2307
  %v2309 = vpop.f32.mrb[0].mxu0
  %v2310 = vadd.f32 %v775, %v2309
  %v2311 = vpop.f32.mrb[0].mxu0
  %v2312 = vadd.f32 %v777, %v2311
  %2313 = vdwg.mxu0
  %2314 = vmatprep.subr.bf16.mxu0 %v1654
  %2315 = vmatpush1.bf16.msra.mxu0 %v1653
  %2316 = vmatprep.subr.bf16.mxu0 %v1658
  %2317 = vmatpush1.bf16.msra.mxu0 %v1657
  %2318 = vmatprep.subr.bf16.mxu0 %v1662
  %2319 = vmatpush1.bf16.msra.mxu0 %v1661
  %2320 = vmatprep.subr.bf16.mxu0 %v1666
  %2321 = vmatpush1.bf16.msra.mxu0 %v1665
  %2322 = vmatprep.subr.bf16.mxu0 %v1670
  %2323 = vmatpush1.bf16.msra.mxu0 %v1669
  %2324 = vmatprep.subr.bf16.mxu0 %v1674
  %2325 = vmatpush1.bf16.msra.mxu0 %v1673
  %2326 = vmatprep.subr.bf16.mxu0 %v1678
  %2327 = vmatpush1.bf16.msra.mxu0 %v1677
  %2328 = vmatprep.subr.bf16.mxu0 %v1682
  %2329 = vmatpush1.bf16.msra.mxu0 %v1681
  %2330 = vmatprep.subr.bf16.mxu0 %v1686
  %2331 = vmatpush1.bf16.msra.mxu0 %v1685
  %2332 = vmatprep.subr.bf16.mxu0 %v1690
  %2333 = vmatpush1.bf16.msra.mxu0 %v1689
  %2334 = vmatprep.subr.bf16.mxu0 %v1694
  %2335 = vmatpush1.bf16.msra.mxu0 %v1693
  %2336 = vmatprep.subr.bf16.mxu0 %v1698
  %2337 = vmatpush1.bf16.msra.mxu0 %v1697
  %2338 = vmatprep.subr.bf16.mxu0 %v1702
  %2339 = vmatpush1.bf16.msra.mxu0 %v1701
  %2340 = vmatprep.subr.bf16.mxu0 %v1706
  %2341 = vmatpush1.bf16.msra.mxu0 %v1705
  %2342 = vmatprep.subr.bf16.mxu0 %v1710
  %2343 = vmatpush1.bf16.msra.mxu0 %v1709
  %2344 = vmatprep.subr.bf16.mxu0 %v1714
  %2345 = vmatpush1.bf16.msra.mxu0 %v1713
  %2346 = vmatprep.mubr.bf16.mxu0 %v806
  %2347 = vmatmul.mubr.bf16.gmra.mrb[0].mxu0 %v805
  %v2348 = vpop.f32.mrb[0].mxu0
  %v2349 = vadd.f32 %v2306, %v2348
  %v2350 = vpop.f32.mrb[0].mxu0
  %v2351 = vadd.f32 %v2308, %v2350
  %v2352 = vpop.f32.mrb[0].mxu0
  %v2353 = vadd.f32 %v2310, %v2352
  %v2354 = vpop.f32.mrb[0].mxu0
  %v2355 = vadd.f32 %v2312, %v2354
  %2356 = vdwg.mxu0
  %2357 = vmatprep.subr.bf16.mxu0 %v1718
  %2358 = vmatpush1.bf16.msra.mxu0 %v1717
  %2359 = vmatprep.subr.bf16.mxu0 %v1722
  %2360 = vmatpush1.bf16.msra.mxu0 %v1721
  %2361 = vmatprep.subr.bf16.mxu0 %v1726
  %2362 = vmatpush1.bf16.msra.mxu0 %v1725
  %2363 = vmatprep.subr.bf16.mxu0 %v1730
  %2364 = vmatpush1.bf16.msra.mxu0 %v1729
  %2365 = vmatprep.subr.bf16.mxu0 %v1734
  %2366 = vmatpush1.bf16.msra.mxu0 %v1733
  %2367 = vmatprep.subr.bf16.mxu0 %v1738
  %2368 = vmatpush1.bf16.msra.mxu0 %v1737
  %2369 = vmatprep.subr.bf16.mxu0 %v1742
  %2370 = vmatpush1.bf16.msra.mxu0 %v1741
  %2371 = vmatprep.subr.bf16.mxu0 %v1746
  %2372 = vmatpush1.bf16.msra.mxu0 %v1745
  %2373 = vmatprep.subr.bf16.mxu0 %v1750
  %2374 = vmatpush1.bf16.msra.mxu0 %v1749
  %2375 = vmatprep.subr.bf16.mxu0 %v1754
  %2376 = vmatpush1.bf16.msra.mxu0 %v1753
  %2377 = vmatprep.subr.bf16.mxu0 %v1758
  %2378 = vmatpush1.bf16.msra.mxu0 %v1757
  %2379 = vmatprep.subr.bf16.mxu0 %v1762
  %2380 = vmatpush1.bf16.msra.mxu0 %v1761
  %2381 = vmatprep.subr.bf16.mxu0 %v1766
  %2382 = vmatpush1.bf16.msra.mxu0 %v1765
  %2383 = vmatprep.subr.bf16.mxu0 %v1770
  %2384 = vmatpush1.bf16.msra.mxu0 %v1769
  %2385 = vmatprep.subr.bf16.mxu0 %v1774
  %2386 = vmatpush1.bf16.msra.mxu0 %v1773
  %2387 = vmatprep.subr.bf16.mxu0 %v1778
  %2388 = vmatpush1.bf16.msra.mxu0 %v1777
  %2389 = vmatprep.mubr.bf16.mxu0 %v808
  %2390 = vmatmul.mubr.bf16.gmra.mrb[0].mxu0 %v807
  %v2391 = vpop.f32.mrb[0].mxu0
  %v2392 = vadd.f32 %v2349, %v2391
  %v2393 = vpop.f32.mrb[0].mxu0
  %v2394 = vadd.f32 %v2351, %v2393
  %v2395 = vpop.f32.mrb[0].mxu0
  %v2396 = vadd.f32 %v2353, %v2395
  %v2397 = vpop.f32.mrb[0].mxu0
  %v2398 = vadd.f32 %v2355, %v2397
  %2399 = vdwg.mxu0
  %2400 = vmatprep.subr.bf16.mxu0 %v1782
  %2401 = vmatpush1.bf16.msra.mxu0 %v1781
  %2402 = vmatprep.subr.bf16.mxu0 %v1786
  %2403 = vmatpush1.bf16.msra.mxu0 %v1785
  %2404 = vmatprep.subr.bf16.mxu0 %v1790
  %2405 = vmatpush1.bf16.msra.mxu0 %v1789
  %2406 = vmatprep.subr.bf16.mxu0 %v1794
  %2407 = vmatpush1.bf16.msra.mxu0 %v1793
  %2408 = vmatprep.subr.bf16.mxu0 %v1798
  %2409 = vmatpush1.bf16.msra.mxu0 %v1797
  %2410 = vmatprep.subr.bf16.mxu0 %v1802
  %2411 = vmatpush1.bf16.msra.mxu0 %v1801
  %2412 = vmatprep.subr.bf16.mxu0 %v1806
  %2413 = vmatpush1.bf16.msra.mxu0 %v1805
  %2414 = vmatprep.subr.bf16.mxu0 %v1810
  %2415 = vmatpush1.bf16.msra.mxu0 %v1809
  %2416 = vmatprep.subr.bf16.mxu0 %v1814
  %2417 = vmatpush1.bf16.msra.mxu0 %v1813
  %2418 = vmatprep.subr.bf16.mxu0 %v1818
  %2419 = vmatpush1.bf16.msra.mxu0 %v1817
  %2420 = vmatprep.subr.bf16.mxu0 %v1822
  %2421 = vmatpush1.bf16.msra.mxu0 %v1821
  %2422 = vmatprep.subr.bf16.mxu0 %v1826
  %2423 = vmatpush1.bf16.msra.mxu0 %v1825
  %2424 = vmatprep.subr.bf16.mxu0 %v1830
  %2425 = vmatpush1.bf16.msra.mxu0 %v1829
  %2426 = vmatprep.subr.bf16.mxu0 %v1834
  %2427 = vmatpush1.bf16.msra.mxu0 %v1833
  %2428 = vmatprep.subr.bf16.mxu0 %v1838
  %2429 = vmatpush1.bf16.msra.mxu0 %v1837
  %2430 = vmatprep.subr.bf16.mxu0 %v1842
  %2431 = vmatpush1.bf16.msra.mxu0 %v1841
  %2432 = vmatprep.mubr.bf16.mxu0 %v810
  %2433 = vmatmul.mubr.bf16.gmra.mrb[0].mxu0 %v809
  %v2434 = vpop.f32.mrb[0].mxu0
  %v2435 = vadd.f32 %v2392, %v2434
  %v2436 = vpop.f32.mrb[0].mxu0
  %v2437 = vadd.f32 %v2394, %v2436
  %v2438 = vpop.f32.mrb[0].mxu0
  %v2439 = vadd.f32 %v2396, %v2438
  %v2440 = vpop.f32.mrb[0].mxu0
  %v2441 = vadd.f32 %v2398, %v2440
  %2442 = vdwg.mxu0
  %v2443 = vld [vmem:[%s4] sm:$0xf]
  %v2445 = vlaneseq
  %v2446 = vshrl.u32 %v2445, 7
  %v2447 = vsub.s32 0, %v2446
  %v2448 = vrot.slane %v2443, %v2447
  %v2449 = vlaneseq
  %v2450 = vshrl.u32 %v2449, 7
  %v2451 = vsub.s32 1, %v2450
  %v2452 = vrot.slane %v2443, %v2451
  %v2453 = vlaneseq
  %v2454 = vshrl.u32 %v2453, 7
  %v2455 = vsub.s32 2, %v2454
  %v2456 = vrot.slane %v2443, %v2455
  %v2457 = vlaneseq
  %v2458 = vshrl.u32 %v2457, 7
  %v2459 = vsub.s32 3, %v2458
  %v2460 = vrot.slane %v2443, %v2459
  %v2465 = vadd.f32 %v2263, %v2448
  %v2466 = vadd.f32 %v2265, %v2452
  %v2467 = vadd.f32 %v2435, %v2456
  %v2468 = vadd.f32 %v2437, %v2460
  %v2469 = vadd.f32 %v2267, %v2448
  %v2470 = vadd.f32 %v2269, %v2452
  %v2471 = vadd.f32 %v2439, %v2456
  %v2472 = vadd.f32 %v2441, %v2460
  %v2473 = vmax.f32 %v2465, 0.0
  %v2474 = vmax.f32 %v2466, 0.0
  %v2475 = vmax.f32 %v2467, 0.0
  %v2476 = vmax.f32 %v2468, 0.0
  %v2477 = vmax.f32 %v2469, 0.0
  %v2478 = vmax.f32 %v2470, 0.0
  %v2479 = vmax.f32 %v2471, 0.0
  %v2480 = vmax.f32 %v2472, 0.0
  %v2481 = vpack.c.bf16 %v2477, %v2473
  %v2482 = vpack.c.bf16 %v2478, %v2474
  %v2483 = vpack.c.bf16 %v2479, %v2475
  %v2484 = vpack.c.bf16 %v2480, %v2476
  %v2485 = vld [vmem:[%s5] sm:$0xff]
  %v2486 = vld [vmem:[%s5 + $0x8] sm:$0xff]
  %v2487 = vld [vmem:[%s5 + $0x10] sm:$0xff]
  %v2488 = vld [vmem:[%s5 + $0x18] sm:$0xff]
  %v2489 = vld [vmem:[%s5 + $0x20] sm:$0xff]
  %v2490 = vld [vmem:[%s5 + $0x28] sm:$0xff]
  %v2491 = vld [vmem:[%s5 + $0x30] sm:$0xff]
  %v2492 = vld [vmem:[%s5 + $0x38] sm:$0xff]
  %v2493 = vld [vmem:[%s5 + $0x40] sm:$0xff]
  %v2494 = vld [vmem:[%s5 + $0x48] sm:$0xff]
  %v2495 = vld [vmem:[%s5 + $0x50] sm:$0xff]
  %v2496 = vld [vmem:[%s5 + $0x58] sm:$0xff]
  %v2497 = vld [vmem:[%s5 + $0x60] sm:$0xff]
  %v2498 = vld [vmem:[%s5 + $0x68] sm:$0xff]
  %v2499 = vld [vmem:[%s5 + $0x70] sm:$0xff]
  %v2500 = vld [vmem:[%s5 + $0x78] sm:$0xff]
  %v2501 = vld [vmem:[%s5 + $0x80] sm:$0xff]
  %v2502 = vld [vmem:[%s5 + $0x88] sm:$0xff]
  %v2503 = vld [vmem:[%s5 + $0x90] sm:$0xff]
  %v2504 = vld [vmem:[%s5 + $0x98] sm:$0xff]
  %v2505 = vld [vmem:[%s5 + $0xa0] sm:$0xff]
  %v2506 = vld [vmem:[%s5 + $0xa8] sm:$0xff]
  %v2507 = vld [vmem:[%s5 + $0xb0] sm:$0xff]
  %v2508 = vld [vmem:[%s5 + $0xb8] sm:$0xff]
  %v2509 = vld [vmem:[%s5 + $0xc0] sm:$0xff]
  %v2510 = vld [vmem:[%s5 + $0xc8] sm:$0xff]
  %v2511 = vld [vmem:[%s5 + $0xd0] sm:$0xff]
  %v2512 = vld [vmem:[%s5 + $0xd8] sm:$0xff]
  %v2513 = vld [vmem:[%s5 + $0xe0] sm:$0xff]
  %v2514 = vld [vmem:[%s5 + $0xe8] sm:$0xff]
  %v2515 = vld [vmem:[%s5 + $0xf0] sm:$0xff]
  %v2516 = vld [vmem:[%s5 + $0xf8] sm:$0xff]
  %v2517 = vld [vmem:[%s5 + $0x100] sm:$0xff]
  %v2518 = vld [vmem:[%s5 + $0x108] sm:$0xff]
  %v2519 = vld [vmem:[%s5 + $0x110] sm:$0xff]
  %v2520 = vld [vmem:[%s5 + $0x118] sm:$0xff]
  %v2521 = vld [vmem:[%s5 + $0x120] sm:$0xff]
  %v2522 = vld [vmem:[%s5 + $0x128] sm:$0xff]
  %v2523 = vld [vmem:[%s5 + $0x130] sm:$0xff]
  %v2524 = vld [vmem:[%s5 + $0x138] sm:$0xff]
  %v2525 = vld [vmem:[%s5 + $0x140] sm:$0xff]
  %v2526 = vld [vmem:[%s5 + $0x148] sm:$0xff]
  %v2527 = vld [vmem:[%s5 + $0x150] sm:$0xff]
  %v2528 = vld [vmem:[%s5 + $0x158] sm:$0xff]
  %v2529 = vld [vmem:[%s5 + $0x160] sm:$0xff]
  %v2530 = vld [vmem:[%s5 + $0x168] sm:$0xff]
  %v2531 = vld [vmem:[%s5 + $0x170] sm:$0xff]
  %v2532 = vld [vmem:[%s5 + $0x178] sm:$0xff]
  %v2533 = vld [vmem:[%s5 + $0x180] sm:$0xff]
  %v2534 = vld [vmem:[%s5 + $0x188] sm:$0xff]
  %v2535 = vld [vmem:[%s5 + $0x190] sm:$0xff]
  %v2536 = vld [vmem:[%s5 + $0x198] sm:$0xff]
  %v2537 = vld [vmem:[%s5 + $0x1a0] sm:$0xff]
  %v2538 = vld [vmem:[%s5 + $0x1a8] sm:$0xff]
  %v2539 = vld [vmem:[%s5 + $0x1b0] sm:$0xff]
  %v2540 = vld [vmem:[%s5 + $0x1b8] sm:$0xff]
  %v2541 = vld [vmem:[%s5 + $0x1c0] sm:$0xff]
  %v2542 = vld [vmem:[%s5 + $0x1c8] sm:$0xff]
  %v2543 = vld [vmem:[%s5 + $0x1d0] sm:$0xff]
  %v2544 = vld [vmem:[%s5 + $0x1d8] sm:$0xff]
  %v2545 = vld [vmem:[%s5 + $0x1e0] sm:$0xff]
  %v2546 = vld [vmem:[%s5 + $0x1e8] sm:$0xff]
  %v2547 = vld [vmem:[%s5 + $0x1f0] sm:$0xff]
  %v2548 = vld [vmem:[%s5 + $0x1f8] sm:$0xff]
  %v2549 = vld [vmem:[%s6] sm:$0x3]
  %v2551 = vlaneseq
  %v2552 = vshrl.u32 %v2551, 7
  %v2553 = vsub.s32 0, %v2552
  %v2554 = vrot.slane %v2549, %v2553
  %v2555 = vlaneseq
  %v2556 = vshrl.u32 %v2555, 7
  %v2557 = vsub.s32 1, %v2556
  %v2558 = vrot.slane %v2549, %v2557
  %v2625 = vunpack.c.l.b16 %v2485
  %v2626 = vunpack.c.h.b16 %v2485
  %v2627 = vunpack.c.l.b16 %v2486
  %v2628 = vunpack.c.h.b16 %v2486
  %v2629 = vunpack.c.l.b16 %v2487
  %v2630 = vunpack.c.h.b16 %v2487
  %v2631 = vunpack.c.l.b16 %v2488
  %v2632 = vunpack.c.h.b16 %v2488
  %v2633 = vunpack.c.l.b16 %v2489
  %v2634 = vunpack.c.h.b16 %v2489
  %v2635 = vunpack.c.l.b16 %v2490
  %v2636 = vunpack.c.h.b16 %v2490
  %v2637 = vunpack.c.l.b16 %v2491
  %v2638 = vunpack.c.h.b16 %v2491
  %v2639 = vunpack.c.l.b16 %v2492
  %v2640 = vunpack.c.h.b16 %v2492
  %v2641 = vunpack.c.l.b16 %v2493
  %v2642 = vunpack.c.h.b16 %v2493
  %v2643 = vunpack.c.l.b16 %v2494
  %v2644 = vunpack.c.h.b16 %v2494
  %v2645 = vunpack.c.l.b16 %v2495
  %v2646 = vunpack.c.h.b16 %v2495
  %v2647 = vunpack.c.l.b16 %v2496
  %v2648 = vunpack.c.h.b16 %v2496
  %v2649 = vunpack.c.l.b16 %v2497
  %v2650 = vunpack.c.h.b16 %v2497
  %v2651 = vunpack.c.l.b16 %v2498
  %v2652 = vunpack.c.h.b16 %v2498
  %v2653 = vunpack.c.l.b16 %v2499
  %v2654 = vunpack.c.h.b16 %v2499
  %v2655 = vunpack.c.l.b16 %v2500
  %v2656 = vunpack.c.h.b16 %v2500
  %v2657 = vunpack.c.l.b16 %v2501
  %v2658 = vunpack.c.h.b16 %v2501
  %v2659 = vunpack.c.l.b16 %v2502
  %v2660 = vunpack.c.h.b16 %v2502
  %v2661 = vunpack.c.l.b16 %v2503
  %v2662 = vunpack.c.h.b16 %v2503
  %v2663 = vunpack.c.l.b16 %v2504
  %v2664 = vunpack.c.h.b16 %v2504
  %v2665 = vunpack.c.l.b16 %v2505
  %v2666 = vunpack.c.h.b16 %v2505
  %v2667 = vunpack.c.l.b16 %v2506
  %v2668 = vunpack.c.h.b16 %v2506
  %v2669 = vunpack.c.l.b16 %v2507
  %v2670 = vunpack.c.h.b16 %v2507
  %v2671 = vunpack.c.l.b16 %v2508
  %v2672 = vunpack.c.h.b16 %v2508
  %v2673 = vunpack.c.l.b16 %v2509
  %v2674 = vunpack.c.h.b16 %v2509
  %v2675 = vunpack.c.l.b16 %v2510
  %v2676 = vunpack.c.h.b16 %v2510
  %v2677 = vunpack.c.l.b16 %v2511
  %v2678 = vunpack.c.h.b16 %v2511
  %v2679 = vunpack.c.l.b16 %v2512
  %v2680 = vunpack.c.h.b16 %v2512
  %v2681 = vunpack.c.l.b16 %v2513
  %v2682 = vunpack.c.h.b16 %v2513
  %v2683 = vunpack.c.l.b16 %v2514
  %v2684 = vunpack.c.h.b16 %v2514
  %v2685 = vunpack.c.l.b16 %v2515
  %v2686 = vunpack.c.h.b16 %v2515
  %v2687 = vunpack.c.l.b16 %v2516
  %v2688 = vunpack.c.h.b16 %v2516
  %v2689 = vunpack.c.l.b16 %v2517
  %v2690 = vunpack.c.h.b16 %v2517
  %v2691 = vunpack.c.l.b16 %v2518
  %v2692 = vunpack.c.h.b16 %v2518
  %v2693 = vunpack.c.l.b16 %v2519
  %v2694 = vunpack.c.h.b16 %v2519
  %v2695 = vunpack.c.l.b16 %v2520
  %v2696 = vunpack.c.h.b16 %v2520
  %v2697 = vunpack.c.l.b16 %v2521
  %v2698 = vunpack.c.h.b16 %v2521
  %v2699 = vunpack.c.l.b16 %v2522
  %v2700 = vunpack.c.h.b16 %v2522
  %v2701 = vunpack.c.l.b16 %v2523
  %v2702 = vunpack.c.h.b16 %v2523
  %v2703 = vunpack.c.l.b16 %v2524
  %v2704 = vunpack.c.h.b16 %v2524
  %v2705 = vunpack.c.l.b16 %v2525
  %v2706 = vunpack.c.h.b16 %v2525
  %v2707 = vunpack.c.l.b16 %v2526
  %v2708 = vunpack.c.h.b16 %v2526
  %v2709 = vunpack.c.l.b16 %v2527
  %v2710 = vunpack.c.h.b16 %v2527
  %v2711 = vunpack.c.l.b16 %v2528
  %v2712 = vunpack.c.h.b16 %v2528
  %v2713 = vunpack.c.l.b16 %v2529
  %v2714 = vunpack.c.h.b16 %v2529
  %v2715 = vunpack.c.l.b16 %v2530
  %v2716 = vunpack.c.h.b16 %v2530
  %v2717 = vunpack.c.l.b16 %v2531
  %v2718 = vunpack.c.h.b16 %v2531
  %v2719 = vunpack.c.l.b16 %v2532
  %v2720 = vunpack.c.h.b16 %v2532
  %v2721 = vunpack.c.l.b16 %v2533
  %v2722 = vunpack.c.h.b16 %v2533
  %v2723 = vunpack.c.l.b16 %v2534
  %v2724 = vunpack.c.h.b16 %v2534
  %v2725 = vunpack.c.l.b16 %v2535
  %v2726 = vunpack.c.h.b16 %v2535
  %v2727 = vunpack.c.l.b16 %v2536
  %v2728 = vunpack.c.h.b16 %v2536
  %v2729 = vunpack.c.l.b16 %v2537
  %v2730 = vunpack.c.h.b16 %v2537
  %v2731 = vunpack.c.l.b16 %v2538
  %v2732 = vunpack.c.h.b16 %v2538
  %v2733 = vunpack.c.l.b16 %v2539
  %v2734 = vunpack.c.h.b16 %v2539
  %v2735 = vunpack.c.l.b16 %v2540
  %v2736 = vunpack.c.h.b16 %v2540
  %v2737 = vunpack.c.l.b16 %v2541
  %v2738 = vunpack.c.h.b16 %v2541
  %v2739 = vunpack.c.l.b16 %v2542
  %v2740 = vunpack.c.h.b16 %v2542
  %v2741 = vunpack.c.l.b16 %v2543
  %v2742 = vunpack.c.h.b16 %v2543
  %v2743 = vunpack.c.l.b16 %v2544
  %v2744 = vunpack.c.h.b16 %v2544
  %v2745 = vunpack.c.l.b16 %v2545
  %v2746 = vunpack.c.h.b16 %v2545
  %v2747 = vunpack.c.l.b16 %v2546
  %v2748 = vunpack.c.h.b16 %v2546
  %v2749 = vunpack.c.l.b16 %v2547
  %v2750 = vunpack.c.h.b16 %v2547
  %v2751 = vunpack.c.l.b16 %v2548
  %v2752 = vunpack.c.h.b16 %v2548
  %v2753 = vpack.c.b16 %v2627, %v2625
  %v2754 = vpack.c.b16 %v2628, %v2626
  %v2755 = vpack.c.b16 %v2631, %v2629
  %v2756 = vpack.c.b16 %v2632, %v2630
  %v2757 = vpack.c.b16 %v2635, %v2633
  %v2758 = vpack.c.b16 %v2636, %v2634
  %v2759 = vpack.c.b16 %v2639, %v2637
  %v2760 = vpack.c.b16 %v2640, %v2638
  %v2761 = vpack.c.b16 %v2643, %v2641
  %v2762 = vpack.c.b16 %v2644, %v2642
  %v2763 = vpack.c.b16 %v2647, %v2645
  %v2764 = vpack.c.b16 %v2648, %v2646
  %v2765 = vpack.c.b16 %v2651, %v2649
  %v2766 = vpack.c.b16 %v2652, %v2650
  %v2767 = vpack.c.b16 %v2655, %v2653
  %v2768 = vpack.c.b16 %v2656, %v2654
  %v2769 = vpack.c.b16 %v2659, %v2657
  %v2770 = vpack.c.b16 %v2660, %v2658
  %v2771 = vpack.c.b16 %v2663, %v2661
  %v2772 = vpack.c.b16 %v2664, %v2662
  %v2773 = vpack.c.b16 %v2667, %v2665
  %v2774 = vpack.c.b16 %v2668, %v2666
  %v2775 = vpack.c.b16 %v2671, %v2669
  %v2776 = vpack.c.b16 %v2672, %v2670
  %v2777 = vpack.c.b16 %v2675, %v2673
  %v2778 = vpack.c.b16 %v2676, %v2674
  %v2779 = vpack.c.b16 %v2679, %v2677
  %v2780 = vpack.c.b16 %v2680, %v2678
  %v2781 = vpack.c.b16 %v2683, %v2681
  %v2782 = vpack.c.b16 %v2684, %v2682
  %v2783 = vpack.c.b16 %v2687, %v2685
  %v2784 = vpack.c.b16 %v2688, %v2686
  %v2785 = vpack.c.b16 %v2691, %v2689
  %v2786 = vpack.c.b16 %v2692, %v2690
  %v2787 = vpack.c.b16 %v2695, %v2693
  %v2788 = vpack.c.b16 %v2696, %v2694
  %v2789 = vpack.c.b16 %v2699, %v2697
  %v2790 = vpack.c.b16 %v2700, %v2698
  %v2791 = vpack.c.b16 %v2703, %v2701
  %v2792 = vpack.c.b16 %v2704, %v2702
  %v2793 = vpack.c.b16 %v2707, %v2705
  %v2794 = vpack.c.b16 %v2708, %v2706
  %v2795 = vpack.c.b16 %v2711, %v2709
  %v2796 = vpack.c.b16 %v2712, %v2710
  %v2797 = vpack.c.b16 %v2715, %v2713
  %v2798 = vpack.c.b16 %v2716, %v2714
  %v2799 = vpack.c.b16 %v2719, %v2717
  %v2800 = vpack.c.b16 %v2720, %v2718
  %v2801 = vpack.c.b16 %v2723, %v2721
  %v2802 = vpack.c.b16 %v2724, %v2722
  %v2803 = vpack.c.b16 %v2727, %v2725
  %v2804 = vpack.c.b16 %v2728, %v2726
  %v2805 = vpack.c.b16 %v2731, %v2729
  %v2806 = vpack.c.b16 %v2732, %v2730
  %v2807 = vpack.c.b16 %v2735, %v2733
  %v2808 = vpack.c.b16 %v2736, %v2734
  %v2809 = vpack.c.b16 %v2739, %v2737
  %v2810 = vpack.c.b16 %v2740, %v2738
  %v2811 = vpack.c.b16 %v2743, %v2741
  %v2812 = vpack.c.b16 %v2744, %v2742
  %v2813 = vpack.c.b16 %v2747, %v2745
  %v2814 = vpack.c.b16 %v2748, %v2746
  %v2815 = vpack.c.b16 %v2751, %v2749
  %v2816 = vpack.c.b16 %v2752, %v2750
  %2881 = vmatprep.subr.bf16.mxu0 %v2754
  %2882 = vmatpush1.bf16.msra.mxu0 %v2753
  %2883 = vmatprep.subr.bf16.mxu0 %v2756
  %2884 = vmatpush1.bf16.msra.mxu0 %v2755
  %2885 = vmatprep.subr.bf16.mxu0 %v2758
  %2886 = vmatpush1.bf16.msra.mxu0 %v2757
  %2887 = vmatprep.subr.bf16.mxu0 %v2760
  %2888 = vmatpush1.bf16.msra.mxu0 %v2759
  %2889 = vmatprep.subr.bf16.mxu0 %v2762
  %2890 = vmatpush1.bf16.msra.mxu0 %v2761
  %2891 = vmatprep.subr.bf16.mxu0 %v2764
  %2892 = vmatpush1.bf16.msra.mxu0 %v2763
  %2893 = vmatprep.subr.bf16.mxu0 %v2766
  %2894 = vmatpush1.bf16.msra.mxu0 %v2765
  %2895 = vmatprep.subr.bf16.mxu0 %v2768
  %2896 = vmatpush1.bf16.msra.mxu0 %v2767
  %2897 = vmatprep.subr.bf16.mxu0 %v2770
  %2898 = vmatpush1.bf16.msra.mxu0 %v2769
  %2899 = vmatprep.subr.bf16.mxu0 %v2772
  %2900 = vmatpush1.bf16.msra.mxu0 %v2771
  %2901 = vmatprep.subr.bf16.mxu0 %v2774
  %2902 = vmatpush1.bf16.msra.mxu0 %v2773
  %2903 = vmatprep.subr.bf16.mxu0 %v2776
  %2904 = vmatpush1.bf16.msra.mxu0 %v2775
  %2905 = vmatprep.subr.bf16.mxu0 %v2778
  %2906 = vmatpush1.bf16.msra.mxu0 %v2777
  %2907 = vmatprep.subr.bf16.mxu0 %v2780
  %2908 = vmatpush1.bf16.msra.mxu0 %v2779
  %2909 = vmatprep.subr.bf16.mxu0 %v2782
  %2910 = vmatpush1.bf16.msra.mxu0 %v2781
  %2911 = vmatprep.subr.bf16.mxu0 %v2784
  %2912 = vmatpush1.bf16.msra.mxu0 %v2783
  %2913 = vmatprep.mubr.bf16.mxu0 %v2482
  %2914 = vmatmul.mubr.bf16.gmra.mrb[0].mxu0 %v2481
  %v2915 = vpop.f32.mrb[0].mxu0
  %v2916 = vadd.f32 %v2554, %v2915
  %v2917 = vpop.f32.mrb[0].mxu0
  %v2918 = vadd.f32 %v2558, %v2917
  %v2919 = vpop.f32.mrb[0].mxu0
  %v2920 = vadd.f32 %v2554, %v2919
  %v2921 = vpop.f32.mrb[0].mxu0
  %v2922 = vadd.f32 %v2558, %v2921
  %2923 = vdwg.mxu0
  %2924 = vmatprep.subr.bf16.mxu0 %v2786
  %2925 = vmatpush1.bf16.msra.mxu0 %v2785
  %2926 = vmatprep.subr.bf16.mxu0 %v2788
  %2927 = vmatpush1.bf16.msra.mxu0 %v2787
  %2928 = vmatprep.subr.bf16.mxu0 %v2790
  %2929 = vmatpush1.bf16.msra.mxu0 %v2789
  %2930 = vmatprep.subr.bf16.mxu0 %v2792
  %2931 = vmatpush1.bf16.msra.mxu0 %v2791
  %2932 = vmatprep.subr.bf16.mxu0 %v2794
  %2933 = vmatpush1.bf16.msra.mxu0 %v2793
  %2934 = vmatprep.subr.bf16.mxu0 %v2796
  %2935 = vmatpush1.bf16.msra.mxu0 %v2795
  %2936 = vmatprep.subr.bf16.mxu0 %v2798
  %2937 = vmatpush1.bf16.msra.mxu0 %v2797
  %2938 = vmatprep.subr.bf16.mxu0 %v2800
  %2939 = vmatpush1.bf16.msra.mxu0 %v2799
  %2940 = vmatprep.subr.bf16.mxu0 %v2802
  %2941 = vmatpush1.bf16.msra.mxu0 %v2801
  %2942 = vmatprep.subr.bf16.mxu0 %v2804
  %2943 = vmatpush1.bf16.msra.mxu0 %v2803
  %2944 = vmatprep.subr.bf16.mxu0 %v2806
  %2945 = vmatpush1.bf16.msra.mxu0 %v2805
  %2946 = vmatprep.subr.bf16.mxu0 %v2808
  %2947 = vmatpush1.bf16.msra.mxu0 %v2807
  %2948 = vmatprep.subr.bf16.mxu0 %v2810
  %2949 = vmatpush1.bf16.msra.mxu0 %v2809
  %2950 = vmatprep.subr.bf16.mxu0 %v2812
  %2951 = vmatpush1.bf16.msra.mxu0 %v2811
  %2952 = vmatprep.subr.bf16.mxu0 %v2814
  %2953 = vmatpush1.bf16.msra.mxu0 %v2813
  %2954 = vmatprep.subr.bf16.mxu0 %v2816
  %2955 = vmatpush1.bf16.msra.mxu0 %v2815
  %2956 = vmatprep.mubr.bf16.mxu0 %v2484
  %2957 = vmatmul.mubr.bf16.gmra.mrb[0].mxu0 %v2483
  %v2958 = vpop.f32.mrb[0].mxu0
  %v2959 = vadd.f32 %v2916, %v2958
  %v2960 = vpop.f32.mrb[0].mxu0
  %v2961 = vadd.f32 %v2918, %v2960
  %v2962 = vpop.f32.mrb[0].mxu0
  %v2963 = vadd.f32 %v2920, %v2962
  %v2964 = vpop.f32.mrb[0].mxu0
  %v2965 = vadd.f32 %v2922, %v2964
  %2966 = vdwg.mxu0
  %v2967 = vmax.f32 %v2959, 0.0
  %v2968 = vmax.f32 %v2961, 0.0
  %v2969 = vmax.f32 %v2963, 0.0
  %v2970 = vmax.f32 %v2965, 0.0
  %v2971 = vpack.c.bf16 %v2969, %v2967
  %v2972 = vpack.c.bf16 %v2970, %v2968
  %v2973 = vld [vmem:[%s7] sm:$0xf]
  %v2974 = vld [vmem:[%s7 + $0x4] sm:$0xf]
  %v2975 = vld [vmem:[%s7 + $0x8] sm:$0xf]
  %v2976 = vld [vmem:[%s7 + $0xc] sm:$0xf]
  %v2977 = vld [vmem:[%s7 + $0x10] sm:$0xf]
  %v2978 = vld [vmem:[%s7 + $0x14] sm:$0xf]
  %v2979 = vld [vmem:[%s7 + $0x18] sm:$0xf]
  %v2980 = vld [vmem:[%s7 + $0x1c] sm:$0xf]
  %v2981 = vld [vmem:[%s7 + $0x20] sm:$0xf]
  %v2982 = vld [vmem:[%s7 + $0x24] sm:$0xf]
  %v2983 = vld [vmem:[%s7 + $0x28] sm:$0xf]
  %v2984 = vld [vmem:[%s7 + $0x2c] sm:$0xf]
  %v2985 = vld [vmem:[%s7 + $0x30] sm:$0xf]
  %v2986 = vld [vmem:[%s7 + $0x34] sm:$0xf]
  %v2987 = vld [vmem:[%s7 + $0x38] sm:$0xf]
  %v2988 = vld [vmem:[%s7 + $0x3c] sm:$0xf]
  %v2989 = vld [vmem:[%s7 + $0x40] sm:$0xf]
  %v2990 = vld [vmem:[%s7 + $0x44] sm:$0xf]
  %v2991 = vld [vmem:[%s7 + $0x48] sm:$0xf]
  %v2992 = vld [vmem:[%s7 + $0x4c] sm:$0xf]
  %v2993 = vld [vmem:[%s7 + $0x50] sm:$0xf]
  %v2994 = vld [vmem:[%s7 + $0x54] sm:$0xf]
  %v2995 = vld [vmem:[%s7 + $0x58] sm:$0xf]
  %v2996 = vld [vmem:[%s7 + $0x5c] sm:$0xf]
  %v2997 = vld [vmem:[%s7 + $0x60] sm:$0xf]
  %v2998 = vld [vmem:[%s7 + $0x64] sm:$0xf]
  %v2999 = vld [vmem:[%s7 + $0x68] sm:$0xf]
  %v3000 = vld [vmem:[%s7 + $0x6c] sm:$0xf]
  %v3001 = vld [vmem:[%s7 + $0x70] sm:$0xf]
  %v3002 = vld [vmem:[%s7 + $0x74] sm:$0xf]
  %v3003 = vld [vmem:[%s7 + $0x78] sm:$0xf]
  %v3004 = vld [vmem:[%s7 + $0x7c] sm:$0xf]
  %v3005 = vld [vmem:[%s8] sm:$0x1]
  %v3007 = vlaneseq
  %v3008 = vshrl.u32 %v3007, 7
  %v3009 = vsub.s32 0, %v3008
  %v3010 = vrot.slane %v3005, %v3009
  %v3044 = vunpack.c.l.b16 %v2973
  %v3045 = vunpack.c.l.b16 %v2974
  %v3046 = vunpack.c.l.b16 %v2975
  %v3047 = vunpack.c.l.b16 %v2976
  %v3048 = vunpack.c.l.b16 %v2977
  %v3049 = vunpack.c.l.b16 %v2978
  %v3050 = vunpack.c.l.b16 %v2979
  %v3051 = vunpack.c.l.b16 %v2980
  %v3052 = vunpack.c.l.b16 %v2981
  %v3053 = vunpack.c.l.b16 %v2982
  %v3054 = vunpack.c.l.b16 %v2983
  %v3055 = vunpack.c.l.b16 %v2984
  %v3056 = vunpack.c.l.b16 %v2985
  %v3057 = vunpack.c.l.b16 %v2986
  %v3058 = vunpack.c.l.b16 %v2987
  %v3059 = vunpack.c.l.b16 %v2988
  %v3060 = vunpack.c.l.b16 %v2989
  %v3061 = vunpack.c.l.b16 %v2990
  %v3062 = vunpack.c.l.b16 %v2991
  %v3063 = vunpack.c.l.b16 %v2992
  %v3064 = vunpack.c.l.b16 %v2993
  %v3065 = vunpack.c.l.b16 %v2994
  %v3066 = vunpack.c.l.b16 %v2995
  %v3067 = vunpack.c.l.b16 %v2996
  %v3068 = vunpack.c.l.b16 %v2997
  %v3069 = vunpack.c.l.b16 %v2998
  %v3070 = vunpack.c.l.b16 %v2999
  %v3071 = vunpack.c.l.b16 %v3000
  %v3072 = vunpack.c.l.b16 %v3001
  %v3073 = vunpack.c.l.b16 %v3002
  %v3074 = vunpack.c.l.b16 %v3003
  %v3075 = vunpack.c.l.b16 %v3004
  %v3076 = vpack.c.b16 %v3045, %v3044
  %v3077 = vpack.c.b16 %v3047, %v3046
  %v3078 = vpack.c.b16 %v3049, %v3048
  %v3079 = vpack.c.b16 %v3051, %v3050
  %v3080 = vpack.c.b16 %v3053, %v3052
  %v3081 = vpack.c.b16 %v3055, %v3054
  %v3082 = vpack.c.b16 %v3057, %v3056
  %v3083 = vpack.c.b16 %v3059, %v3058
  %v3084 = vpack.c.b16 %v3061, %v3060
  %v3085 = vpack.c.b16 %v3063, %v3062
  %v3086 = vpack.c.b16 %v3065, %v3064
  %v3087 = vpack.c.b16 %v3067, %v3066
  %v3088 = vpack.c.b16 %v3069, %v3068
  %v3089 = vpack.c.b16 %v3071, %v3070
  %v3090 = vpack.c.b16 %v3073, %v3072
  %v3091 = vpack.c.b16 %v3075, %v3074
  %3108 = vmatprep.subr.bf16.mxu0 0
  %3109 = vmatpush1.bf16.msra.mxu0 %v3076
  %3110 = vmatprep.subr.bf16.mxu0 0
  %3111 = vmatpush1.bf16.msra.mxu0 %v3077
  %3112 = vmatprep.subr.bf16.mxu0 0
  %3113 = vmatpush1.bf16.msra.mxu0 %v3078
  %3114 = vmatprep.subr.bf16.mxu0 0
  %3115 = vmatpush1.bf16.msra.mxu0 %v3079
  %3116 = vmatprep.subr.bf16.mxu0 0
  %3117 = vmatpush1.bf16.msra.mxu0 %v3080
  %3118 = vmatprep.subr.bf16.mxu0 0
  %3119 = vmatpush1.bf16.msra.mxu0 %v3081
  %3120 = vmatprep.subr.bf16.mxu0 0
  %3121 = vmatpush1.bf16.msra.mxu0 %v3082
  %3122 = vmatprep.subr.bf16.mxu0 0
  %3123 = vmatpush1.bf16.msra.mxu0 %v3083
  %3124 = vmatprep.subr.bf16.mxu0 0
  %3125 = vmatpush1.bf16.msra.mxu0 %v3084
  %3126 = vmatprep.subr.bf16.mxu0 0
  %3127 = vmatpush1.bf16.msra.mxu0 %v3085
  %3128 = vmatprep.subr.bf16.mxu0 0
  %3129 = vmatpush1.bf16.msra.mxu0 %v3086
  %3130 = vmatprep.subr.bf16.mxu0 0
  %3131 = vmatpush1.bf16.msra.mxu0 %v3087
  %3132 = vmatprep.subr.bf16.mxu0 0
  %3133 = vmatpush1.bf16.msra.mxu0 %v3088
  %3134 = vmatprep.subr.bf16.mxu0 0
  %3135 = vmatpush1.bf16.msra.mxu0 %v3089
  %3136 = vmatprep.subr.bf16.mxu0 0
  %3137 = vmatpush1.bf16.msra.mxu0 %v3090
  %3138 = vmatprep.subr.bf16.mxu0 0
  %3139 = vmatpush1.bf16.msra.mxu0 %v3091
  %3140 = vmatprep.mubr.bf16.mxu0 %v2972
  %3141 = vmatmul.mubr.bf16.gmra.mrb[0].mxu0 %v2971
  %v3142 = vpop.f32.mrb[0].mxu0
  %v3143 = vadd.f32 %v3010, %v3142
  %v3144 = vpop.f32.mrb[0].mxu0
  %v3145 = vpop.f32.mrb[0].mxu0
  %v3146 = vadd.f32 %v3010, %v3145
  %v3147 = vpop.f32.mrb[0].mxu0
  %3148 = vdwg.mxu0
  %3149 = vst [vmem:[%s9] sm:$0xff] %v3143
  %3150 = vst [vmem:[%s9 + $0x8] sm:$0xff] %v3146
  // Predicated region
  $region38: #{forward.7} parent=0 // pred_check
    _
  $region39: #{forward.7} parent=0 // pred_check_branch
    %3152 = sbr.rel (0) target = $region41
  $region40: #{forward.7} parent=0 // pred_region
    _
  $region41: #{forward.7} parent=0 // pred_fallthru
    _
  // Predicated region
  $region42: #{forward.7} parent=0 // pred_check
    _
  $region43: #{forward.7} parent=0 // pred_check_branch
    %3154 = sbr.rel (0) target = $region45
  $region44: #{forward.7} parent=0 // pred_region
    _
  $region45: #{forward.7} parent=0 // pred_fallthru
    _

</llo_original>
